<compile_context>
chip_gen: v6e
topology: v6e:2x2x1
jax: 0.10.0
libtpu: 0.0.40
codegen_flags: <defaults>
</compile_context>

<pallas_src>
import functools

import jax
import jax.numpy as jnp
import numpy as np
from jax.experimental import pallas as pl
from jax.experimental.pallas import tpu as pltpu

EPS = 1e-5                      # nn.BatchNorm2d default eps
LANE = 128                      # TPU lane width; channel axes zero-padded to this
_VMEM_LIMIT = 32 * 1024 * 1024  # safe on v5e/v6e/v7x


def _round_up(n, m):
    return ((n + m - 1) // m) * m


def _pick_row_tile(m, pref):
    """Largest multiple-of-8 divisor of m that is <= pref (fallback: m)."""
    best = None
    t = 8
    while t <= min(pref, m):
        if m % t == 0:
            best = t
        t += 8
    return best if best is not None else m


# ----------------------------- Pallas kernels ------------------------------

def _conv1_stats_kernel(x_ref, w1_ref, y1_ref, ss_ref, sq_ref):
    # 1x1 conv as row-tile matmul + per-channel sum / sumsq accumulation.
    @pl.when(pl.program_id(0) == 0)
    def _():
        ss_ref[...] = jnp.zeros_like(ss_ref)
        sq_ref[...] = jnp.zeros_like(sq_ref)
    y = jnp.dot(x_ref[...], w1_ref[...], preferred_element_type=jnp.float32)
    y1_ref[...] = y.astype(y1_ref.dtype)
    ss_ref[...] += jnp.sum(y, axis=0, keepdims=True)
    sq_ref[...] += jnp.sum(y * y, axis=0, keepdims=True)


def _conv1_down_stats_kernel(x_ref, w1_ref, wd_ref,
                             y1_ref, ss1_ref, sq1_ref, yd_ref, ssd_ref, sqd_ref):
    # conv1 and the downsample 1x1 conv share the same x tile -> fused pass.
    @pl.when(pl.program_id(0) == 0)
    def _():
        ss1_ref[...] = jnp.zeros_like(ss1_ref)
        sq1_ref[...] = jnp.zeros_like(sq1_ref)
        ssd_ref[...] = jnp.zeros_like(ssd_ref)
        sqd_ref[...] = jnp.zeros_like(sqd_ref)
    x = x_ref[...]
    y = jnp.dot(x, w1_ref[...], preferred_element_type=jnp.float32)
    y1_ref[...] = y.astype(y1_ref.dtype)
    ss1_ref[...] += jnp.sum(y, axis=0, keepdims=True)
    sq1_ref[...] += jnp.sum(y * y, axis=0, keepdims=True)
    yd = jnp.dot(x, wd_ref[...], preferred_element_type=jnp.float32)
    yd_ref[...] = yd.astype(yd_ref.dtype)
    ssd_ref[...] += jnp.sum(yd, axis=0, keepdims=True)
    sqd_ref[...] += jnp.sum(yd * yd, axis=0, keepdims=True)


def _bn_relu_conv3x3_stats_kernel(y1_ref, sc1_ref, sh1_ref, w2_ref,
                                  y2_ref, ss2_ref, sq2_ref, pad_ref, *, h, w):
    # Apply bn1 + ReLU, stage into a zero-padded VMEM image, then 3x3 conv as
    # nine accumulating matmuls over shifted windows; accumulate bn2 stats.
    c = y1_ref.shape[-1]

    @pl.when(pl.program_id(0) == 0)
    def _():
        pad_ref[...] = jnp.zeros_like(pad_ref)   # zero border persists
        ss2_ref[...] = jnp.zeros_like(ss2_ref)
        sq2_ref[...] = jnp.zeros_like(sq2_ref)

    a = jnp.maximum(y1_ref[...].astype(jnp.float32) * sc1_ref[...] + sh1_ref[...], 0.0)
    pad_ref[1:h + 1, 1:w + 1, :] = a.reshape(h, w, c)

    acc = None
    for t in range(9):
        ky, kx = divmod(t, 3)
        tap = pad_ref[ky:ky + h, kx:kx + w, :].reshape(h * w, c).astype(w2_ref.dtype)
        part = jnp.dot(tap, w2_ref[t], preferred_element_type=jnp.float32)
        acc = part if acc is None else acc + part

    y2_ref[...] = acc.astype(y2_ref.dtype)
    ss2_ref[...] += jnp.sum(acc, axis=0, keepdims=True)
    sq2_ref[...] += jnp.sum(acc * acc, axis=0, keepdims=True)


def _bn_relu_conv1x1_stats_kernel(y2_ref, sc2_ref, sh2_ref, w3_ref,
                                  y3_ref, ss3_ref, sq3_ref):
    # Apply bn2 + ReLU, then conv3 (1x1) matmul + bn3 stats accumulation.
    @pl.when(pl.program_id(0) == 0)
    def _():
        ss3_ref[...] = jnp.zeros_like(ss3_ref)
        sq3_ref[...] = jnp.zeros_like(sq3_ref)
    a = jnp.maximum(y2_ref[...].astype(jnp.float32) * sc2_ref[...] + sh2_ref[...], 0.0)
    y = jnp.dot(a.astype(w3_ref.dtype), w3_ref[...], preferred_element_type=jnp.float32)
    y3_ref[...] = y.astype(y3_ref.dtype)
    ss3_ref[...] += jnp.sum(y, axis=0, keepdims=True)
    sq3_ref[...] += jnp.sum(y * y, axis=0, keepdims=True)


def _bn_add_relu_kernel(y3_ref, sc3_ref, sh3_ref, yd_ref, scd_ref, shd_ref, o_ref):
    # bn3 + bn_downsample(residual) + add + ReLU (pure elementwise, parallel).
    out = y3_ref[...].astype(jnp.float32) * sc3_ref[...] + sh3_ref[...]
    res = yd_ref[...].astype(jnp.float32) * scd_ref[...] + shd_ref[...]
    o_ref[...] = jnp.maximum(out + res, 0.0)


def _bn_addx_relu_kernel(y3_ref, sc3_ref, sh3_ref, x_ref, o_ref):
    # bn3 + identity residual + ReLU.
    out = y3_ref[...].astype(jnp.float32) * sc3_ref[...] + sh3_ref[...]
    o_ref[...] = jnp.maximum(out + x_ref[...].astype(jnp.float32), 0.0)


# --------------------------- parameter packing -----------------------------

def prepare_params(params, inplanes, planes, outplanes, compute_dtype=jnp.bfloat16):
    """Pack PyTorch-layout weights into padded matmul layout once (hoisted)."""
    cin_p = _round_up(inplanes, LANE)
    c1_p = _round_up(planes, LANE)
    c3_p = _round_up(outplanes, LANE)

    def pad_vec(v, cp):
        return jnp.pad(v.astype(jnp.float32), (0, cp - v.shape[0]))

    def w_1x1(w, ci_p, co_p):          # (cout, cin, 1, 1) -> (ci_p, co_p)
        cout, cin = w.shape[0], w.shape[1]
        m = jnp.zeros((ci_p, co_p), jnp.float32)
        m = m.at[:cin, :cout].set(jnp.transpose(w[:, :, 0, 0], (1, 0)))
        return m.astype(compute_dtype)

    def w_3x3(w, ci_p, co_p):          # (cout, cin, 3, 3) -> (9, ci_p, co_p)
        cout, cin = w.shape[0], w.shape[1]
        wt = jnp.transpose(w, (2, 3, 1, 0)).reshape(9, cin, cout)
        m = jnp.zeros((9, ci_p, co_p), jnp.float32)
        m = m.at[:, :cin, :cout].set(wt)
        return m.astype(compute_dtype)

    prep = {
        "cin_p": cin_p, "c1_p": c1_p, "c3_p": c3_p, "outplanes": outplanes,
        "compute_dtype": compute_dtype,
        "with_down": "wd" in params,
        "w1": w_1x1(params["w1"], cin_p, c1_p),
        "w2": w_3x3(params["w2"], c1_p, c1_p),
        "w3": w_1x1(params["w3"], c1_p, c3_p),
        "g1": pad_vec(params["g1"], c1_p), "b1": pad_vec(params["b1"], c1_p),
        "g2": pad_vec(params["g2"], c1_p), "b2": pad_vec(params["b2"], c1_p),
        "g3": pad_vec(params["g3"], c3_p), "b3": pad_vec(params["b3"], c3_p),
    }
    if prep["with_down"]:
        prep["wd"] = w_1x1(params["wd"], cin_p, c3_p)
        prep["gd"] = pad_vec(params["gd"], c3_p)
        prep["bd"] = pad_vec(params["bd"], c3_p)
    return prep


# ------------------------------ forward pass -------------------------------

def residual_block_forward(x_nchw, prep, *, row_tile=1024):
    n, cin, h, w = x_nchw.shape
    assert w % 8 == 0, "TODO(synk): W not multiple of 8 needs a relayout-aware conv2 kernel"
    cin_p, c1_p, c3_p = prep["cin_p"], prep["c1_p"], prep["c3_p"]
    cd = prep["compute_dtype"]
    m, hw = n * h * w, h * w
    tm = _pick_row_tile(m, row_tile)
    grid_rows = m // tm
    inv_m = 1.0 / float(m)

    # NCHW -> channels-last flattened rows, channels zero-padded to lane width.
    x_rows = jnp.transpose(x_nchw, (0, 2, 3, 1)).reshape(m, cin)
    x_rows = jnp.pad(x_rows, ((0, 0), (0, cin_p - cin)))
    x_bf = x_rows.astype(cd)

    def bn_coeffs(ssum, ssq, gamma, beta):
        mean = ssum * inv_m                                   # (1, c)
        var = ssq * inv_m - mean * mean                       # biased (training) var
        scale = gamma.reshape(1, -1) * jax.lax.rsqrt(var + EPS)
        shift = beta.reshape(1, -1) - mean * scale
        return scale, shift

    row_spec = lambda c: pl.BlockSpec((tm, c), lambda i: (i, 0))
    stat_spec = lambda c: pl.BlockSpec((1, c), lambda i: (0, 0))
    full2 = lambda a, b: pl.BlockSpec((a, b), lambda i: (0, 0))
    stat_shape = lambda c: jax.ShapeDtypeStruct((1, c), jnp.float32)

    arb = pltpu.CompilerParams(dimension_semantics=("arbitrary",),
                               vmem_limit_bytes=_VMEM_LIMIT)
    par = pltpu.CompilerParams(dimension_semantics=("parallel",),
                               vmem_limit_bytes=_VMEM_LIMIT)

    # -- pass 1: conv1 (+ downsample conv) matmul + per-channel sum / sumsq --
    if prep["with_down"]:
        y1, ss1, sq1, yd, ssd, sqd = pl.pallas_call(
            _conv1_down_stats_kernel,
            grid=(grid_rows,),
            in_specs=[row_spec(cin_p), full2(cin_p, c1_p), full2(cin_p, c3_p)],
            out_specs=(row_spec(c1_p), stat_spec(c1_p), stat_spec(c1_p),
                       row_spec(c3_p), stat_spec(c3_p), stat_spec(c3_p)),
            out_shape=(jax.ShapeDtypeStruct((m, c1_p), cd), stat_shape(c1_p), stat_shape(c1_p),
                       jax.ShapeDtypeStruct((m, c3_p), cd), stat_shape(c3_p), stat_shape(c3_p)),
            compiler_params=arb,
        )(x_bf, prep["w1"], prep["wd"])
    else:
        y1, ss1, sq1 = pl.pallas_call(
            _conv1_stats_kernel,
            grid=(grid_rows,),
            in_specs=[row_spec(cin_p), full2(cin_p, c1_p)],
            out_specs=(row_spec(c1_p), stat_spec(c1_p), stat_spec(c1_p)),
            out_shape=(jax.ShapeDtypeStruct((m, c1_p), cd),
                       stat_shape(c1_p), stat_shape(c1_p)),
            compiler_params=arb,
        )(x_bf, prep["w1"])

    sc1, sh1 = bn_coeffs(ss1, sq1, prep["g1"], prep["b1"])

    # -- pass 2: bn1+ReLU fused with 3x3 conv (halo in VMEM scratch) + stats --
    y2, ss2, sq2 = pl.pallas_call(
        functools.partial(_bn_relu_conv3x3_stats_kernel, h=h, w=w),
        grid=(n,),
        in_specs=[pl.BlockSpec((hw, c1_p), lambda i: (i, 0)),
                  full2(1, c1_p), full2(1, c1_p),
                  pl.BlockSpec((9, c1_p, c1_p), lambda i: (0, 0, 0))],
        out_specs=(pl.BlockSpec((hw, c1_p), lambda i: (i, 0)),
                   stat_spec(c1_p), stat_spec(c1_p)),
        out_shape=(jax.ShapeDtypeStruct((m, c1_p), cd),
                   stat_shape(c1_p), stat_shape(c1_p)),
        scratch_shapes=[pltpu.VMEM((h + 2, w + 2, c1_p), jnp.float32)],
        compiler_params=arb,
    )(y1, sc1, sh1, prep["w2"])

    sc2, sh2 = bn_coeffs(ss2, sq2, prep["g2"], prep["b2"])

    # -- pass 3: bn2+ReLU fused with conv3 (1x1) matmul + bn3 stats --
    y3, ss3, sq3 = pl.pallas_call(
        _bn_relu_conv1x1_stats_kernel,
        grid=(grid_rows,),
        in_specs=[row_spec(c1_p), full2(1, c1_p), full2(1, c1_p), full2(c1_p, c3_p)],
        out_specs=(row_spec(c3_p), stat_spec(c3_p), stat_spec(c3_p)),
        out_shape=(jax.ShapeDtypeStruct((m, c3_p), cd),
                   stat_shape(c3_p), stat_shape(c3_p)),
        compiler_params=arb,
    )(y2, sc2, sh2, prep["w3"])

    sc3, sh3 = bn_coeffs(ss3, sq3, prep["g3"], prep["b3"])

    # -- pass 4: bn3 + residual + ReLU (pure elementwise, parallel rows) --
    if prep["with_down"]:
        scd, shd = bn_coeffs(ssd, sqd, prep["gd"], prep["bd"])
        out_rows = pl.pallas_call(
            _bn_add_relu_kernel,
            grid=(grid_rows,),
            in_specs=[row_spec(c3_p), full2(1, c3_p), full2(1, c3_p),
                      row_spec(c3_p), full2(1, c3_p), full2(1, c3_p)],
            out_specs=row_spec(c3_p),
            out_shape=jax.ShapeDtypeStruct((m, c3_p), jnp.float32),
            compiler_params=par,
        )(y3, sc3, sh3, yd, scd, shd)
    else:
        assert cin_p == c3_p
        out_rows = pl.pallas_call(
            _bn_addx_relu_kernel,
            grid=(grid_rows,),
            in_specs=[row_spec(c3_p), full2(1, c3_p), full2(1, c3_p), row_spec(c3_p)],
            out_specs=row_spec(c3_p),
            out_shape=jax.ShapeDtypeStruct((m, c3_p), jnp.float32),
            compiler_params=par,
        )(y3, sc3, sh3, x_rows)

    # Back to NCHW to match the PyTorch module's interface.  (If the consumer
    # accepts NHWC this transpose + channel slice should be dropped.)
    out = out_rows.reshape(n, h, w, c3_p)[..., :prep["outplanes"]]
    return jnp.transpose(out, (0, 3, 1, 2))


# --------------------------- reference & params ----------------------------

def reference_forward(x, params):
    def conv(a, w, padding):
        return jax.lax.conv_general_dilated(
            a, w, (1, 1), padding, dimension_numbers=("NCHW", "OIHW", "NCHW"))

    def bn(a, gm, bt):
        mean = jnp.mean(a, axis=(0, 2, 3), keepdims=True)
        var = jnp.mean(jnp.square(a - mean), axis=(0, 2, 3), keepdims=True)
        return (a - mean) * jax.lax.rsqrt(var + EPS) * gm.reshape(1, -1, 1, 1) \
            + bt.reshape(1, -1, 1, 1)

    out = jax.nn.relu(bn(conv(x, params["w1"], "VALID"), params["g1"], params["b1"]))
    out = jax.nn.relu(bn(conv(out, params["w2"], ((1, 1), (1, 1))), params["g2"], params["b2"]))
    out = bn(conv(out, params["w3"], "VALID"), params["g3"], params["b3"])
    residual = x
    if "wd" in params:
        residual = bn(conv(x, params["wd"], "VALID"), params["gd"], params["bd"])
    return jax.nn.relu(out + residual)


def init_params(key, inplanes, planes, outplanes):
    ks = jax.random.split(key, 4)

    def xavier(k, shape):  # xavier_uniform_ on OIHW conv weight
        cout, cin, kh, kw = shape
        bound = (6.0 / (cin * kh * kw + cout * kh * kw)) ** 0.5
        return jax.random.uniform(k, shape, jnp.float32, -bound, bound)

    p = {
        "w1": xavier(ks[0], (planes, inplanes, 1, 1)),
        "g1": jnp.ones((planes,), jnp.float32), "b1": jnp.zeros((planes,), jnp.float32),
        "w2": xavier(ks[1], (planes, planes, 3, 3)),
        "g2": jnp.ones((planes,), jnp.float32), "b2": jnp.zeros((planes,), jnp.float32),
        "w3": xavier(ks[2], (outplanes, planes, 1, 1)),
        "g3": jnp.ones((outplanes,), jnp.float32), "b3": jnp.zeros((outplanes,), jnp.float32),
    }
    if inplanes != outplanes:
        p["wd"] = xavier(ks[3], (outplanes, inplanes, 1, 1))
        p["gd"] = jnp.ones((outplanes,), jnp.float32)
        p["bd"] = jnp.zeros((outplanes,), jnp.float32)
    return p


if __name__ == "__main__":
    key = jax.random.PRNGKey(0)
    kx, kp, kp2 = jax.random.split(key, 3)

    # Tolerances are set for bf16 MXU operands / intermediates (f32 accumulate).
    RTOL, ATOL = 5e-2, 5e-2

    # Case 1: inplanes != outplanes -> downsample (1x1 conv + BN) residual.
    inplanes, planes, outplanes = 4, 8, 16
    x = jax.random.normal(kx, (2, inplanes, 16, 16), jnp.float32)
    params = init_params(kp, inplanes, planes, outplanes)
    prep = prepare_params(params, inplanes, planes, outplanes)
    fwd = jax.jit(functools.partial(residual_block_forward, prep=prep, row_tile=128))
    out = jax.block_until_ready(fwd(x))
    ref = reference_forward(x, params)
    np.testing.assert_allclose(np.asarray(out), np.asarray(ref), rtol=RTOL, atol=ATOL)

    # Case 2: inplanes == outplanes -> identity residual.
    inplanes2, planes2, outplanes2 = 16, 8, 16
    x2 = jax.random.normal(kx, (2, inplanes2, 16, 16), jnp.float32)
    params2 = init_params(kp2, inplanes2, planes2, outplanes2)
    prep2 = prepare_params(params2, inplanes2, planes2, outplanes2)
    fwd2 = jax.jit(functools.partial(residual_block_forward, prep=prep2, row_tile=128))
    out2 = jax.block_until_ready(fwd2(x2))
    ref2 = reference_forward(x2, params2)
    np.testing.assert_allclose(np.asarray(out2), np.asarray(ref2), rtol=RTOL, atol=ATOL)

    print("KERNEL_OK")
</pallas_src>

<mosaic_0001>
module attributes {stable_mosaic.version = 11 : i64} {
  func.func @_conv1_down_stats_kernel(%arg0: i32, %arg1: memref<128x128xbf16, #tpu.memory_space<vmem>>, %arg2: memref<128x128xbf16, #tpu.memory_space<vmem>>, %arg3: memref<128x128xbf16, #tpu.memory_space<vmem>>, %arg4: memref<128x128xbf16, #tpu.memory_space<vmem>>, %arg5: memref<1x128xf32, #tpu.memory_space<vmem>>, %arg6: memref<1x128xf32, #tpu.memory_space<vmem>>, %arg7: memref<128x128xbf16, #tpu.memory_space<vmem>>, %arg8: memref<1x128xf32, #tpu.memory_space<vmem>>, %arg9: memref<1x128xf32, #tpu.memory_space<vmem>>) attributes {dimension_semantics = [#tpu.dimension_semantics<arbitrary>], iteration_bounds = array<i64: 4>, scalar_prefetch = 0 : i64, scratch_operands = 0 : i64, tpu.core_type = #tpu.core_type<tc>, window_params = [{transform_indices = @transform_0, window_bounds = array<i64: 128, 128>}, {pipeline_mode = #tpu.pipeline_mode<synchronous>, transform_indices = @transform_1, window_bounds = array<i64: 128, 128>}, {pipeline_mode = #tpu.pipeline_mode<synchronous>, transform_indices = @transform_2, window_bounds = array<i64: 128, 128>}, {transform_indices = @transform_3, window_bounds = array<i64: 128, 128>}, {pipeline_mode = #tpu.pipeline_mode<synchronous>, transform_indices = @transform_4, window_bounds = array<i64: 1, 128>}, {pipeline_mode = #tpu.pipeline_mode<synchronous>, transform_indices = @transform_5, window_bounds = array<i64: 1, 128>}, {transform_indices = @transform_6, window_bounds = array<i64: 128, 128>}, {pipeline_mode = #tpu.pipeline_mode<synchronous>, transform_indices = @transform_7, window_bounds = array<i64: 1, 128>}, {pipeline_mode = #tpu.pipeline_mode<synchronous>, transform_indices = @transform_8, window_bounds = array<i64: 1, 128>}]} {
    %c0_i32 = arith.constant 0 : i32
    %0 = arith.cmpi eq, %arg0, %c0_i32 : i32
    %1 = arith.extui %0 : i1 to i32
    %c0_i32_0 = arith.constant 0 : i32
    %2 = arith.cmpi ne, %1, %c0_i32_0 : i32
    scf.if %2 {
      %cst_31 = arith.constant 0.000000e+00 : f32
      %34 = vector.broadcast %cst_31 : f32 to vector<1x128xf32>
      %c0_32 = arith.constant 0 : index
      %c0_33 = arith.constant 0 : index
      %35 = vector.load %arg5[%c0_32, %c0_33] : memref<1x128xf32, #tpu.memory_space<vmem>>, vector<1x128xf32>
      tpu.vector_store %arg5[%c0_32, %c0_33], %34 {strides = array<i32>} : memref<1x128xf32, #tpu.memory_space<vmem>>, vector<1x128xf32>,
      %cst_34 = arith.constant 0.000000e+00 : f32
      %36 = vector.broadcast %cst_34 : f32 to vector<1x128xf32>
      %c0_35 = arith.constant 0 : index
      %c0_36 = arith.constant 0 : index
      %37 = vector.load %arg6[%c0_35, %c0_36] : memref<1x128xf32, #tpu.memory_space<vmem>>, vector<1x128xf32>
      tpu.vector_store %arg6[%c0_35, %c0_36], %36 {strides = array<i32>} : memref<1x128xf32, #tpu.memory_space<vmem>>, vector<1x128xf32>,
      %cst_37 = arith.constant 0.000000e+00 : f32
      %38 = vector.broadcast %cst_37 : f32 to vector<1x128xf32>
      %c0_38 = arith.constant 0 : index
      %c0_39 = arith.constant 0 : index
      %39 = vector.load %arg8[%c0_38, %c0_39] : memref<1x128xf32, #tpu.memory_space<vmem>>, vector<1x128xf32>
      tpu.vector_store %arg8[%c0_38, %c0_39], %38 {strides = array<i32>} : memref<1x128xf32, #tpu.memory_space<vmem>>, vector<1x128xf32>,
      %cst_40 = arith.constant 0.000000e+00 : f32
      %40 = vector.broadcast %cst_40 : f32 to vector<1x128xf32>
      %c0_41 = arith.constant 0 : index
      %c0_42 = arith.constant 0 : index
      %41 = vector.load %arg9[%c0_41, %c0_42] : memref<1x128xf32, #tpu.memory_space<vmem>>, vector<1x128xf32>
      tpu.vector_store %arg9[%c0_41, %c0_42], %40 {strides = array<i32>} : memref<1x128xf32, #tpu.memory_space<vmem>>, vector<1x128xf32>,
    } else {
    }
    %c0 = arith.constant 0 : index
    %c0_1 = arith.constant 0 : index
    %3 = vector.load %arg1[%c0, %c0_1] : memref<128x128xbf16, #tpu.memory_space<vmem>>, vector<128x128xbf16>
    %c0_2 = arith.constant 0 : index
    %c0_3 = arith.constant 0 : index
    %4 = vector.load %arg2[%c0_2, %c0_3] : memref<128x128xbf16, #tpu.memory_space<vmem>>, vector<128x128xbf16>
    %cst = arith.constant dense<0.000000e+00> : vector<128x128xf32>
    %5 = tpu.matmul %3, %4, %cst {dimension_numbers = #tpu.dot_dimension_numbers<[1], [0], [0], [1], [0, 0, 1, 1], [], []>} : vector<128x128xbf16>, vector<128x128xbf16>, vector<128x128xf32> -> vector<128x128xf32>
    %6 = arith.truncf %5 : vector<128x128xf32> to vector<128x128xbf16>
    %c0_4 = arith.constant 0 : index
    %c0_5 = arith.constant 0 : index
    %7 = vector.load %arg4[%c0_4, %c0_5] : memref<128x128xbf16, #tpu.memory_space<vmem>>, vector<128x128xbf16>
    tpu.vector_store %arg4[%c0_4, %c0_5], %6 {strides = array<i32>} : memref<128x128xbf16, #tpu.memory_space<vmem>>, vector<128x128xbf16>,
    %c0_6 = arith.constant 0 : index
    %c0_7 = arith.constant 0 : index
    %8 = vector.load %arg5[%c0_6, %c0_7] : memref<1x128xf32, #tpu.memory_space<vmem>>, vector<1x128xf32>
    %cst_8 = arith.constant dense<0.000000e+00> : vector<128xf32>
    %9 = vector.multi_reduction <add>, %5, %cst_8 [0] : vector<128x128xf32> to vector<128xf32>
    %10 = vector.shape_cast %9 : vector<128xf32> to vector<1x128xf32>
    %11 = arith.addf %8, %10 : vector<1x128xf32>
    %c0_9 = arith.constant 0 : index
    %c0_10 = arith.constant 0 : index
    %12 = vector.load %arg5[%c0_9, %c0_10] : memref<1x128xf32, #tpu.memory_space<vmem>>, vector<1x128xf32>
    tpu.vector_store %arg5[%c0_9, %c0_10], %11 {strides = array<i32>} : memref<1x128xf32, #tpu.memory_space<vmem>>, vector<1x128xf32>,
    %c0_11 = arith.constant 0 : index
    %c0_12 = arith.constant 0 : index
    %13 = vector.load %arg6[%c0_11, %c0_12] : memref<1x128xf32, #tpu.memory_space<vmem>>, vector<1x128xf32>
    %14 = arith.mulf %5, %5 : vector<128x128xf32>
    %cst_13 = arith.constant dense<0.000000e+00> : vector<128xf32>
    %15 = vector.multi_reduction <add>, %14, %cst_13 [0] : vector<128x128xf32> to vector<128xf32>
    %16 = vector.shape_cast %15 : vector<128xf32> to vector<1x128xf32>
    %17 = arith.addf %13, %16 : vector<1x128xf32>
    %c0_14 = arith.constant 0 : index
    %c0_15 = arith.constant 0 : index
    %18 = vector.load %arg6[%c0_14, %c0_15] : memref<1x128xf32, #tpu.memory_space<vmem>>, vector<1x128xf32>
    tpu.vector_store %arg6[%c0_14, %c0_15], %17 {strides = array<i32>} : memref<1x128xf32, #tpu.memory_space<vmem>>, vector<1x128xf32>,
    %c0_16 = arith.constant 0 : index
    %c0_17 = arith.constant 0 : index
    %19 = vector.load %arg3[%c0_16, %c0_17] : memref<128x128xbf16, #tpu.memory_space<vmem>>, vector<128x128xbf16>
    %cst_18 = arith.constant dense<0.000000e+00> : vector<128x128xf32>
    %20 = tpu.matmul %3, %19, %cst_18 {dimension_numbers = #tpu.dot_dimension_numbers<[1], [0], [0], [1], [0, 0, 1, 1], [], []>} : vector<128x128xbf16>, vector<128x128xbf16>, vector<128x128xf32> -> vector<128x128xf32>
    %21 = arith.truncf %20 : vector<128x128xf32> to vector<128x128xbf16>
    %c0_19 = arith.constant 0 : index
    %c0_20 = arith.constant 0 : index
    %22 = vector.load %arg7[%c0_19, %c0_20] : memref<128x128xbf16, #tpu.memory_space<vmem>>, vector<128x128xbf16>
    tpu.vector_store %arg7[%c0_19, %c0_20], %21 {strides = array<i32>} : memref<128x128xbf16, #tpu.memory_space<vmem>>, vector<128x128xbf16>,
    %c0_21 = arith.constant 0 : index
    %c0_22 = arith.constant 0 : index
    %23 = vector.load %arg8[%c0_21, %c0_22] : memref<1x128xf32, #tpu.memory_space<vmem>>, vector<1x128xf32>
    %cst_23 = arith.constant dense<0.000000e+00> : vector<128xf32>
    %24 = vector.multi_reduction <add>, %20, %cst_23 [0] : vector<128x128xf32> to vector<128xf32>
    %25 = vector.shape_cast %24 : vector<128xf32> to vector<1x128xf32>
    %26 = arith.addf %23, %25 : vector<1x128xf32>
    %c0_24 = arith.constant 0 : index
    %c0_25 = arith.constant 0 : index
    %27 = vector.load %arg8[%c0_24, %c0_25] : memref<1x128xf32, #tpu.memory_space<vmem>>, vector<1x128xf32>
    tpu.vector_store %arg8[%c0_24, %c0_25], %26 {strides = array<i32>} : memref<1x128xf32, #tpu.memory_space<vmem>>, vector<1x128xf32>,
    %c0_26 = arith.constant 0 : index
    %c0_27 = arith.constant 0 : index
    %28 = vector.load %arg9[%c0_26, %c0_27] : memref<1x128xf32, #tpu.memory_space<vmem>>, vector<1x128xf32>
    %29 = arith.mulf %20, %20 : vector<128x128xf32>
    %cst_28 = arith.constant dense<0.000000e+00> : vector<128xf32>
    %30 = vector.multi_reduction <add>, %29, %cst_28 [0] : vector<128x128xf32> to vector<128xf32>
    %31 = vector.shape_cast %30 : vector<128xf32> to vector<1x128xf32>
    %32 = arith.addf %28, %31 : vector<1x128xf32>
    %c0_29 = arith.constant 0 : index
    %c0_30 = arith.constant 0 : index
    %33 = vector.load %arg9[%c0_29, %c0_30] : memref<1x128xf32, #tpu.memory_space<vmem>>, vector<1x128xf32>
    tpu.vector_store %arg9[%c0_29, %c0_30], %32 {strides = array<i32>} : memref<1x128xf32, #tpu.memory_space<vmem>>, vector<1x128xf32>,
    return
  }
  func.func @transform_0(%arg0: i32) -> (i32, i32) {
    %c0_i32 = arith.constant 0 : i32
    %c0_i32_0 = arith.constant 0 : i32
    return %arg0, %c0_i32 : i32, i32
  }
  func.func @transform_1(%arg0: i32) -> (i32, i32) {
    %c0_i32 = arith.constant 0 : i32
    %c0_i32_0 = arith.constant 0 : i32
    %c0_i32_1 = arith.constant 0 : i32
    return %c0_i32, %c0_i32_0 : i32, i32
  }
  func.func @transform_2(%arg0: i32) -> (i32, i32) {
    %c0_i32 = arith.constant 0 : i32
    %c0_i32_0 = arith.constant 0 : i32
    %c0_i32_1 = arith.constant 0 : i32
    return %c0_i32, %c0_i32_0 : i32, i32
  }
  func.func @transform_3(%arg0: i32) -> (i32, i32) {
    %c0_i32 = arith.constant 0 : i32
    %c0_i32_0 = arith.constant 0 : i32
    return %arg0, %c0_i32 : i32, i32
  }
  func.func @transform_4(%arg0: i32) -> (i32, i32) {
    %c0_i32 = arith.constant 0 : i32
    %c0_i32_0 = arith.constant 0 : i32
    %c0_i32_1 = arith.constant 0 : i32
    return %c0_i32, %c0_i32_0 : i32, i32
  }
  func.func @transform_5(%arg0: i32) -> (i32, i32) {
    %c0_i32 = arith.constant 0 : i32
    %c0_i32_0 = arith.constant 0 : i32
    %c0_i32_1 = arith.constant 0 : i32
    return %c0_i32, %c0_i32_0 : i32, i32
  }
  func.func @transform_6(%arg0: i32) -> (i32, i32) {
    %c0_i32 = arith.constant 0 : i32
    %c0_i32_0 = arith.constant 0 : i32
    return %arg0, %c0_i32 : i32, i32
  }
  func.func @transform_7(%arg0: i32) -> (i32, i32) {
    %c0_i32 = arith.constant 0 : i32
    %c0_i32_0 = arith.constant 0 : i32
    %c0_i32_1 = arith.constant 0 : i32
    return %c0_i32, %c0_i32_0 : i32, i32
  }
  func.func @transform_8(%arg0: i32) -> (i32, i32) {
    %c0_i32 = arith.constant 0 : i32
    %c0_i32_0 = arith.constant 0 : i32
    %c0_i32_1 = arith.constant 0 : i32
    return %c0_i32, %c0_i32_0 : i32, i32
  }
}

module attributes {stable_mosaic.version = 11 : i64} {
  func.func @_bn_relu_conv1x1_stats_kernel(%arg0: i32, %arg1: memref<128x128xbf16, #tpu.memory_space<vmem>>, %arg2: memref<1x128xf32, #tpu.memory_space<vmem>>, %arg3: memref<1x128xf32, #tpu.memory_space<vmem>>, %arg4: memref<128x128xbf16, #tpu.memory_space<vmem>>, %arg5: memref<128x128xbf16, #tpu.memory_space<vmem>>, %arg6: memref<1x128xf32, #tpu.memory_space<vmem>>, %arg7: memref<1x128xf32, #tpu.memory_space<vmem>>) attributes {dimension_semantics = [#tpu.dimension_semantics<arbitrary>], iteration_bounds = array<i64: 4>, scalar_prefetch = 0 : i64, scratch_operands = 0 : i64, tpu.core_type = #tpu.core_type<tc>, window_params = [{transform_indices = @transform_0, window_bounds = array<i64: 128, 128>}, {pipeline_mode = #tpu.pipeline_mode<synchronous>, transform_indices = @transform_1, window_bounds = array<i64: 1, 128>}, {pipeline_mode = #tpu.pipeline_mode<synchronous>, transform_indices = @transform_2, window_bounds = array<i64: 1, 128>}, {pipeline_mode = #tpu.pipeline_mode<synchronous>, transform_indices = @transform_3, window_bounds = array<i64: 128, 128>}, {transform_indices = @transform_4, window_bounds = array<i64: 128, 128>}, {pipeline_mode = #tpu.pipeline_mode<synchronous>, transform_indices = @transform_5, window_bounds = array<i64: 1, 128>}, {pipeline_mode = #tpu.pipeline_mode<synchronous>, transform_indices = @transform_6, window_bounds = array<i64: 1, 128>}]} {
    %c0_i32 = arith.constant 0 : i32
    %0 = arith.cmpi eq, %arg0, %c0_i32 : i32
    %1 = arith.extui %0 : i1 to i32
    %c0_i32_0 = arith.constant 0 : i32
    %2 = arith.cmpi ne, %1, %c0_i32_0 : i32
    scf.if %2 {
      %cst_21 = arith.constant 0.000000e+00 : f32
      %29 = vector.broadcast %cst_21 : f32 to vector<1x128xf32>
      %c0_22 = arith.constant 0 : index
      %c0_23 = arith.constant 0 : index
      %30 = vector.load %arg6[%c0_22, %c0_23] : memref<1x128xf32, #tpu.memory_space<vmem>>, vector<1x128xf32>
      tpu.vector_store %arg6[%c0_22, %c0_23], %29 {strides = array<i32>} : memref<1x128xf32, #tpu.memory_space<vmem>>, vector<1x128xf32>,
      %cst_24 = arith.constant 0.000000e+00 : f32
      %31 = vector.broadcast %cst_24 : f32 to vector<1x128xf32>
      %c0_25 = arith.constant 0 : index
      %c0_26 = arith.constant 0 : index
      %32 = vector.load %arg7[%c0_25, %c0_26] : memref<1x128xf32, #tpu.memory_space<vmem>>, vector<1x128xf32>
      tpu.vector_store %arg7[%c0_25, %c0_26], %31 {strides = array<i32>} : memref<1x128xf32, #tpu.memory_space<vmem>>, vector<1x128xf32>,
    } else {
    }
    %c0 = arith.constant 0 : index
    %c0_1 = arith.constant 0 : index
    %3 = vector.load %arg1[%c0, %c0_1] : memref<128x128xbf16, #tpu.memory_space<vmem>>, vector<128x128xbf16>
    %4 = arith.extf %3 : vector<128x128xbf16> to vector<128x128xf32>
    %c0_2 = arith.constant 0 : index
    %c0_3 = arith.constant 0 : index
    %5 = vector.load %arg2[%c0_2, %c0_3] : memref<1x128xf32, #tpu.memory_space<vmem>>, vector<1x128xf32>
    %6 = vector.broadcast %5 : vector<1x128xf32> to vector<128x128xf32>
    %7 = arith.mulf %4, %6 : vector<128x128xf32>
    %c0_4 = arith.constant 0 : index
    %c0_5 = arith.constant 0 : index
    %8 = vector.load %arg3[%c0_4, %c0_5] : memref<1x128xf32, #tpu.memory_space<vmem>>, vector<1x128xf32>
    %9 = vector.broadcast %8 : vector<1x128xf32> to vector<128x128xf32>
    %10 = arith.addf %7, %9 : vector<128x128xf32>
    %cst = arith.constant 0.000000e+00 : f32
    %11 = vector.broadcast %cst : f32 to vector<128x128xf32>
    %12 = arith.maximumf %10, %11 : vector<128x128xf32>
    %13 = arith.truncf %12 : vector<128x128xf32> to vector<128x128xbf16>
    %c0_6 = arith.constant 0 : index
    %c0_7 = arith.constant 0 : index
    %14 = vector.load %arg4[%c0_6, %c0_7] : memref<128x128xbf16, #tpu.memory_space<vmem>>, vector<128x128xbf16>
    %cst_8 = arith.constant dense<0.000000e+00> : vector<128x128xf32>
    %15 = tpu.matmul %13, %14, %cst_8 {dimension_numbers = #tpu.dot_dimension_numbers<[1], [0], [0], [1], [0, 0, 1, 1], [], []>} : vector<128x128xbf16>, vector<128x128xbf16>, vector<128x128xf32> -> vector<128x128xf32>
    %16 = arith.truncf %15 : vector<128x128xf32> to vector<128x128xbf16>
    %c0_9 = arith.constant 0 : index
    %c0_10 = arith.constant 0 : index
    %17 = vector.load %arg5[%c0_9, %c0_10] : memref<128x128xbf16, #tpu.memory_space<vmem>>, vector<128x128xbf16>
    tpu.vector_store %arg5[%c0_9, %c0_10], %16 {strides = array<i32>} : memref<128x128xbf16, #tpu.memory_space<vmem>>, vector<128x128xbf16>,
    %c0_11 = arith.constant 0 : index
    %c0_12 = arith.constant 0 : index
    %18 = vector.load %arg6[%c0_11, %c0_12] : memref<1x128xf32, #tpu.memory_space<vmem>>, vector<1x128xf32>
    %cst_13 = arith.constant dense<0.000000e+00> : vector<128xf32>
    %19 = vector.multi_reduction <add>, %15, %cst_13 [0] : vector<128x128xf32> to vector<128xf32>
    %20 = vector.shape_cast %19 : vector<128xf32> to vector<1x128xf32>
    %21 = arith.addf %18, %20 : vector<1x128xf32>
    %c0_14 = arith.constant 0 : index
    %c0_15 = arith.constant 0 : index
    %22 = vector.load %arg6[%c0_14, %c0_15] : memref<1x128xf32, #tpu.memory_space<vmem>>, vector<1x128xf32>
    tpu.vector_store %arg6[%c0_14, %c0_15], %21 {strides = array<i32>} : memref<1x128xf32, #tpu.memory_space<vmem>>, vector<1x128xf32>,
    %c0_16 = arith.constant 0 : index
    %c0_17 = arith.constant 0 : index
    %23 = vector.load %arg7[%c0_16, %c0_17] : memref<1x128xf32, #tpu.memory_space<vmem>>, vector<1x128xf32>
    %24 = arith.mulf %15, %15 : vector<128x128xf32>
    %cst_18 = arith.constant dense<0.000000e+00> : vector<128xf32>
    %25 = vector.multi_reduction <add>, %24, %cst_18 [0] : vector<128x128xf32> to vector<128xf32>
    %26 = vector.shape_cast %25 : vector<128xf32> to vector<1x128xf32>
    %27 = arith.addf %23, %26 : vector<1x128xf32>
    %c0_19 = arith.constant 0 : index
    %c0_20 = arith.constant 0 : index
    %28 = vector.load %arg7[%c0_19, %c0_20] : memref<1x128xf32, #tpu.memory_space<vmem>>, vector<1x128xf32>
    tpu.vector_store %arg7[%c0_19, %c0_20], %27 {strides = array<i32>} : memref<1x128xf32, #tpu.memory_space<vmem>>, vector<1x128xf32>,
    return
  }
  func.func @transform_0(%arg0: i32) -> (i32, i32) {
    %c0_i32 = arith.constant 0 : i32
    %c0_i32_0 = arith.constant 0 : i32
    return %arg0, %c0_i32 : i32, i32
  }
  func.func @transform_1(%arg0: i32) -> (i32, i32) {
    %c0_i32 = arith.constant 0 : i32
    %c0_i32_0 = arith.constant 0 : i32
    %c0_i32_1 = arith.constant 0 : i32
    return %c0_i32, %c0_i32_0 : i32, i32
  }
  func.func @transform_2(%arg0: i32) -> (i32, i32) {
    %c0_i32 = arith.constant 0 : i32
    %c0_i32_0 = arith.constant 0 : i32
    %c0_i32_1 = arith.constant 0 : i32
    return %c0_i32, %c0_i32_0 : i32, i32
  }
  func.func @transform_3(%arg0: i32) -> (i32, i32) {
    %c0_i32 = arith.constant 0 : i32
    %c0_i32_0 = arith.constant 0 : i32
    %c0_i32_1 = arith.constant 0 : i32
    return %c0_i32, %c0_i32_0 : i32, i32
  }
  func.func @transform_4(%arg0: i32) -> (i32, i32) {
    %c0_i32 = arith.constant 0 : i32
    %c0_i32_0 = arith.constant 0 : i32
    return %arg0, %c0_i32 : i32, i32
  }
  func.func @transform_5(%arg0: i32) -> (i32, i32) {
    %c0_i32 = arith.constant 0 : i32
    %c0_i32_0 = arith.constant 0 : i32
    %c0_i32_1 = arith.constant 0 : i32
    return %c0_i32, %c0_i32_0 : i32, i32
  }
  func.func @transform_6(%arg0: i32) -> (i32, i32) {
    %c0_i32 = arith.constant 0 : i32
    %c0_i32_0 = arith.constant 0 : i32
    %c0_i32_1 = arith.constant 0 : i32
    return %c0_i32, %c0_i32_0 : i32, i32
  }
}

module attributes {stable_mosaic.version = 11 : i64} {
  func.func @_bn_relu_conv3x3_stats_kernel(%arg0: i32, %arg1: memref<256x128xbf16, #tpu.memory_space<vmem>>, %arg2: memref<1x128xf32, #tpu.memory_space<vmem>>, %arg3: memref<1x128xf32, #tpu.memory_space<vmem>>, %arg4: memref<9x128x128xbf16, #tpu.memory_space<vmem>>, %arg5: memref<256x128xbf16, #tpu.memory_space<vmem>>, %arg6: memref<1x128xf32, #tpu.memory_space<vmem>>, %arg7: memref<1x128xf32, #tpu.memory_space<vmem>>, %arg8: memref<18x18x128xf32, #tpu.memory_space<vmem>>) attributes {dimension_semantics = [#tpu.dimension_semantics<arbitrary>], iteration_bounds = array<i64: 2>, scalar_prefetch = 0 : i64, scratch_operands = 1 : i64, tpu.core_type = #tpu.core_type<tc>, window_params = [{transform_indices = @transform_0, window_bounds = array<i64: 256, 128>}, {pipeline_mode = #tpu.pipeline_mode<synchronous>, transform_indices = @transform_1, window_bounds = array<i64: 1, 128>}, {pipeline_mode = #tpu.pipeline_mode<synchronous>, transform_indices = @transform_2, window_bounds = array<i64: 1, 128>}, {pipeline_mode = #tpu.pipeline_mode<synchronous>, transform_indices = @transform_3, window_bounds = array<i64: 9, 128, 128>}, {transform_indices = @transform_4, window_bounds = array<i64: 256, 128>}, {pipeline_mode = #tpu.pipeline_mode<synchronous>, transform_indices = @transform_5, window_bounds = array<i64: 1, 128>}, {pipeline_mode = #tpu.pipeline_mode<synchronous>, transform_indices = @transform_6, window_bounds = array<i64: 1, 128>}]} {
    %c0_i32 = arith.constant 0 : i32
    %0 = arith.cmpi eq, %arg0, %c0_i32 : i32
    %1 = arith.extui %0 : i1 to i32
    %c0_i32_0 = arith.constant 0 : i32
    %2 = arith.cmpi ne, %1, %c0_i32_0 : i32
    scf.if %2 {
      %cst_76 = arith.constant 0.000000e+00 : f32
      %90 = vector.broadcast %cst_76 : f32 to vector<18x18x128xf32>
      %c0_77 = arith.constant 0 : index
      %c0_78 = arith.constant 0 : index
      %c0_79 = arith.constant 0 : index
      %91 = vector.load %arg8[%c0_77, %c0_78, %c0_79] : memref<18x18x128xf32, #tpu.memory_space<vmem>>, vector<18x18x128xf32>
      tpu.vector_store %arg8[%c0_77, %c0_78, %c0_79], %90 {strides = array<i32>} : memref<18x18x128xf32, #tpu.memory_space<vmem>>, vector<18x18x128xf32>,
      %cst_80 = arith.constant 0.000000e+00 : f32
      %92 = vector.broadcast %cst_80 : f32 to vector<1x128xf32>
      %c0_81 = arith.constant 0 : index
      %c0_82 = arith.constant 0 : index
      %93 = vector.load %arg6[%c0_81, %c0_82] : memref<1x128xf32, #tpu.memory_space<vmem>>, vector<1x128xf32>
      tpu.vector_store %arg6[%c0_81, %c0_82], %92 {strides = array<i32>} : memref<1x128xf32, #tpu.memory_space<vmem>>, vector<1x128xf32>,
      %cst_83 = arith.constant 0.000000e+00 : f32
      %94 = vector.broadcast %cst_83 : f32 to vector<1x128xf32>
      %c0_84 = arith.constant 0 : index
      %c0_85 = arith.constant 0 : index
      %95 = vector.load %arg7[%c0_84, %c0_85] : memref<1x128xf32, #tpu.memory_space<vmem>>, vector<1x128xf32>
      tpu.vector_store %arg7[%c0_84, %c0_85], %94 {strides = array<i32>} : memref<1x128xf32, #tpu.memory_space<vmem>>, vector<1x128xf32>,
    } else {
    }
    %c0 = arith.constant 0 : index
    %c0_1 = arith.constant 0 : index
    %3 = vector.load %arg1[%c0, %c0_1] : memref<256x128xbf16, #tpu.memory_space<vmem>>, vector<256x128xbf16>
    %4 = arith.extf %3 : vector<256x128xbf16> to vector<256x128xf32>
    %c0_2 = arith.constant 0 : index
    %c0_3 = arith.constant 0 : index
    %5 = vector.load %arg2[%c0_2, %c0_3] : memref<1x128xf32, #tpu.memory_space<vmem>>, vector<1x128xf32>
    %6 = vector.broadcast %5 : vector<1x128xf32> to vector<256x128xf32>
    %7 = arith.mulf %4, %6 : vector<256x128xf32>
    %c0_4 = arith.constant 0 : index
    %c0_5 = arith.constant 0 : index
    %8 = vector.load %arg3[%c0_4, %c0_5] : memref<1x128xf32, #tpu.memory_space<vmem>>, vector<1x128xf32>
    %9 = vector.broadcast %8 : vector<1x128xf32> to vector<256x128xf32>
    %10 = arith.addf %7, %9 : vector<256x128xf32>
    %cst = arith.constant 0.000000e+00 : f32
    %11 = vector.broadcast %cst : f32 to vector<256x128xf32>
    %12 = arith.maximumf %10, %11 : vector<256x128xf32>
    %13 = vector.shape_cast %12 : vector<256x128xf32> to vector<16x16x128xf32>
    %c1 = arith.constant 1 : index
    %c1_6 = arith.constant 1 : index
    %c0_7 = arith.constant 0 : index
    %14 = vector.load %arg8[%c1, %c1_6, %c0_7] : memref<18x18x128xf32, #tpu.memory_space<vmem>>, vector<16x16x128xf32>
    tpu.vector_store %arg8[%c1, %c1_6, %c0_7], %13 {strides = array<i32>} : memref<18x18x128xf32, #tpu.memory_space<vmem>>, vector<16x16x128xf32>,
    %c0_8 = arith.constant 0 : index
    %c0_9 = arith.constant 0 : index
    %c0_10 = arith.constant 0 : index
    %15 = vector.load %arg8[%c0_8, %c0_9, %c0_10] : memref<18x18x128xf32, #tpu.memory_space<vmem>>, vector<16x16x128xf32>
    %16 = vector.shape_cast %15 : vector<16x16x128xf32> to vector<256x128xf32>
    %17 = arith.truncf %16 : vector<256x128xf32> to vector<256x128xbf16>
    %c0_11 = arith.constant 0 : index
    %c0_12 = arith.constant 0 : index
    %c0_13 = arith.constant 0 : index
    %18 = vector.load %arg4[%c0_11, %c0_12, %c0_13] : memref<9x128x128xbf16, #tpu.memory_space<vmem>>, vector<1x128x128xbf16>
    %19 = vector.shape_cast %18 : vector<1x128x128xbf16> to vector<128x128xbf16>
    %cst_14 = arith.constant dense<0.000000e+00> : vector<256x128xf32>
    %20 = tpu.matmul %17, %19, %cst_14 {dimension_numbers = #tpu.dot_dimension_numbers<[1], [0], [0], [1], [0, 0, 1, 1], [], []>} : vector<256x128xbf16>, vector<128x128xbf16>, vector<256x128xf32> -> vector<256x128xf32>
    %c0_15 = arith.constant 0 : index
    %c1_16 = arith.constant 1 : index
    %c0_17 = arith.constant 0 : index
    %21 = vector.load %arg8[%c0_15, %c1_16, %c0_17] : memref<18x18x128xf32, #tpu.memory_space<vmem>>, vector<16x16x128xf32>
    %22 = vector.shape_cast %21 : vector<16x16x128xf32> to vector<256x128xf32>
    %23 = arith.truncf %22 : vector<256x128xf32> to vector<256x128xbf16>
    %c1_18 = arith.constant 1 : index
    %c0_19 = arith.constant 0 : index
    %c0_20 = arith.constant 0 : index
    %24 = vector.load %arg4[%c1_18, %c0_19, %c0_20] : memref<9x128x128xbf16, #tpu.memory_space<vmem>>, vector<1x128x128xbf16>
    %25 = vector.shape_cast %24 : vector<1x128x128xbf16> to vector<128x128xbf16>
    %cst_21 = arith.constant dense<0.000000e+00> : vector<256x128xf32>
    %26 = tpu.matmul %23, %25, %cst_21 {dimension_numbers = #tpu.dot_dimension_numbers<[1], [0], [0], [1], [0, 0, 1, 1], [], []>} : vector<256x128xbf16>, vector<128x128xbf16>, vector<256x128xf32> -> vector<256x128xf32>
    %27 = arith.addf %20, %26 : vector<256x128xf32>
    %c0_22 = arith.constant 0 : index
    %c2 = arith.constant 2 : index
    %c0_23 = arith.constant 0 : index
    %28 = vector.load %arg8[%c0_22, %c2, %c0_23] : memref<18x18x128xf32, #tpu.memory_space<vmem>>, vector<16x16x128xf32>
    %29 = vector.shape_cast %28 : vector<16x16x128xf32> to vector<256x128xf32>
    %30 = arith.truncf %29 : vector<256x128xf32> to vector<256x128xbf16>
    %c2_24 = arith.constant 2 : index
    %c0_25 = arith.constant 0 : index
    %c0_26 = arith.constant 0 : index
    %31 = vector.load %arg4[%c2_24, %c0_25, %c0_26] : memref<9x128x128xbf16, #tpu.memory_space<vmem>>, vector<1x128x128xbf16>
    %32 = vector.shape_cast %31 : vector<1x128x128xbf16> to vector<128x128xbf16>
    %cst_27 = arith.constant dense<0.000000e+00> : vector<256x128xf32>
    %33 = tpu.matmul %30, %32, %cst_27 {dimension_numbers = #tpu.dot_dimension_numbers<[1], [0], [0], [1], [0, 0, 1, 1], [], []>} : vector<256x128xbf16>, vector<128x128xbf16>, vector<256x128xf32> -> vector<256x128xf32>
    %34 = arith.addf %27, %33 : vector<256x128xf32>
    %c1_28 = arith.constant 1 : index
    %c0_29 = arith.constant 0 : index
    %c0_30 = arith.constant 0 : index
    %35 = vector.load %arg8[%c1_28, %c0_29, %c0_30] : memref<18x18x128xf32, #tpu.memory_space<vmem>>, vector<16x16x128xf32>
    %36 = vector.shape_cast %35 : vector<16x16x128xf32> to vector<256x128xf32>
    %37 = arith.truncf %36 : vector<256x128xf32> to vector<256x128xbf16>
    %c3 = arith.constant 3 : index
    %c0_31 = arith.constant 0 : index
    %c0_32 = arith.constant 0 : index
    %38 = vector.load %arg4[%c3, %c0_31, %c0_32] : memref<9x128x128xbf16, #tpu.memory_space<vmem>>, vector<1x128x128xbf16>
    %39 = vector.shape_cast %38 : vector<1x128x128xbf16> to vector<128x128xbf16>
    %cst_33 = arith.constant dense<0.000000e+00> : vector<256x128xf32>
    %40 = tpu.matmul %37, %39, %cst_33 {dimension_numbers = #tpu.dot_dimension_numbers<[1], [0], [0], [1], [0, 0, 1, 1], [], []>} : vector<256x128xbf16>, vector<128x128xbf16>, vector<256x128xf32> -> vector<256x128xf32>
    %41 = arith.addf %34, %40 : vector<256x128xf32>
    %c1_34 = arith.constant 1 : index
    %c1_35 = arith.constant 1 : index
    %c0_36 = arith.constant 0 : index
    %42 = vector.load %arg8[%c1_34, %c1_35, %c0_36] : memref<18x18x128xf32, #tpu.memory_space<vmem>>, vector<16x16x128xf32>
    %43 = vector.shape_cast %42 : vector<16x16x128xf32> to vector<256x128xf32>
    %44 = arith.truncf %43 : vector<256x128xf32> to vector<256x128xbf16>
    %c4 = arith.constant 4 : index
    %c0_37 = arith.constant 0 : index
    %c0_38 = arith.constant 0 : index
    %45 = vector.load %arg4[%c4, %c0_37, %c0_38] : memref<9x128x128xbf16, #tpu.memory_space<vmem>>, vector<1x128x128xbf16>
    %46 = vector.shape_cast %45 : vector<1x128x128xbf16> to vector<128x128xbf16>
    %cst_39 = arith.constant dense<0.000000e+00> : vector<256x128xf32>
    %47 = tpu.matmul %44, %46, %cst_39 {dimension_numbers = #tpu.dot_dimension_numbers<[1], [0], [0], [1], [0, 0, 1, 1], [], []>} : vector<256x128xbf16>, vector<128x128xbf16>, vector<256x128xf32> -> vector<256x128xf32>
    %48 = arith.addf %41, %47 : vector<256x128xf32>
    %c1_40 = arith.constant 1 : index
    %c2_41 = arith.constant 2 : index
    %c0_42 = arith.constant 0 : index
    %49 = vector.load %arg8[%c1_40, %c2_41, %c0_42] : memref<18x18x128xf32, #tpu.memory_space<vmem>>, vector<16x16x128xf32>
    %50 = vector.shape_cast %49 : vector<16x16x128xf32> to vector<256x128xf32>
    %51 = arith.truncf %50 : vector<256x128xf32> to vector<256x128xbf16>
    %c5 = arith.constant 5 : index
    %c0_43 = arith.constant 0 : index
    %c0_44 = arith.constant 0 : index
    %52 = vector.load %arg4[%c5, %c0_43, %c0_44] : memref<9x128x128xbf16, #tpu.memory_space<vmem>>, vector<1x128x128xbf16>
    %53 = vector.shape_cast %52 : vector<1x128x128xbf16> to vector<128x128xbf16>
    %cst_45 = arith.constant dense<0.000000e+00> : vector<256x128xf32>
    %54 = tpu.matmul %51, %53, %cst_45 {dimension_numbers = #tpu.dot_dimension_numbers<[1], [0], [0], [1], [0, 0, 1, 1], [], []>} : vector<256x128xbf16>, vector<128x128xbf16>, vector<256x128xf32> -> vector<256x128xf32>
    %55 = arith.addf %48, %54 : vector<256x128xf32>
    %c2_46 = arith.constant 2 : index
    %c0_47 = arith.constant 0 : index
    %c0_48 = arith.constant 0 : index
    %56 = vector.load %arg8[%c2_46, %c0_47, %c0_48] : memref<18x18x128xf32, #tpu.memory_space<vmem>>, vector<16x16x128xf32>
    %57 = vector.shape_cast %56 : vector<16x16x128xf32> to vector<256x128xf32>
    %58 = arith.truncf %57 : vector<256x128xf32> to vector<256x128xbf16>
    %c6 = arith.constant 6 : index
    %c0_49 = arith.constant 0 : index
    %c0_50 = arith.constant 0 : index
    %59 = vector.load %arg4[%c6, %c0_49, %c0_50] : memref<9x128x128xbf16, #tpu.memory_space<vmem>>, vector<1x128x128xbf16>
    %60 = vector.shape_cast %59 : vector<1x128x128xbf16> to vector<128x128xbf16>
    %cst_51 = arith.constant dense<0.000000e+00> : vector<256x128xf32>
    %61 = tpu.matmul %58, %60, %cst_51 {dimension_numbers = #tpu.dot_dimension_numbers<[1], [0], [0], [1], [0, 0, 1, 1], [], []>} : vector<256x128xbf16>, vector<128x128xbf16>, vector<256x128xf32> -> vector<256x128xf32>
    %62 = arith.addf %55, %61 : vector<256x128xf32>
    %c2_52 = arith.constant 2 : index
    %c1_53 = arith.constant 1 : index
    %c0_54 = arith.constant 0 : index
    %63 = vector.load %arg8[%c2_52, %c1_53, %c0_54] : memref<18x18x128xf32, #tpu.memory_space<vmem>>, vector<16x16x128xf32>
    %64 = vector.shape_cast %63 : vector<16x16x128xf32> to vector<256x128xf32>
    %65 = arith.truncf %64 : vector<256x128xf32> to vector<256x128xbf16>
    %c7 = arith.constant 7 : index
    %c0_55 = arith.constant 0 : index
    %c0_56 = arith.constant 0 : index
    %66 = vector.load %arg4[%c7, %c0_55, %c0_56] : memref<9x128x128xbf16, #tpu.memory_space<vmem>>, vector<1x128x128xbf16>
    %67 = vector.shape_cast %66 : vector<1x128x128xbf16> to vector<128x128xbf16>
    %cst_57 = arith.constant dense<0.000000e+00> : vector<256x128xf32>
    %68 = tpu.matmul %65, %67, %cst_57 {dimension_numbers = #tpu.dot_dimension_numbers<[1], [0], [0], [1], [0, 0, 1, 1], [], []>} : vector<256x128xbf16>, vector<128x128xbf16>, vector<256x128xf32> -> vector<256x128xf32>
    %69 = arith.addf %62, %68 : vector<256x128xf32>
    %c2_58 = arith.constant 2 : index
    %c2_59 = arith.constant 2 : index
    %c0_60 = arith.constant 0 : index
    %70 = vector.load %arg8[%c2_58, %c2_59, %c0_60] : memref<18x18x128xf32, #tpu.memory_space<vmem>>, vector<16x16x128xf32>
    %71 = vector.shape_cast %70 : vector<16x16x128xf32> to vector<256x128xf32>
    %72 = arith.truncf %71 : vector<256x128xf32> to vector<256x128xbf16>
    %c8 = arith.constant 8 : index
    %c0_61 = arith.constant 0 : index
    %c0_62 = arith.constant 0 : index
    %73 = vector.load %arg4[%c8, %c0_61, %c0_62] : memref<9x128x128xbf16, #tpu.memory_space<vmem>>, vector<1x128x128xbf16>
    %74 = vector.shape_cast %73 : vector<1x128x128xbf16> to vector<128x128xbf16>
    %cst_63 = arith.constant dense<0.000000e+00> : vector<256x128xf32>
    %75 = tpu.matmul %72, %74, %cst_63 {dimension_numbers = #tpu.dot_dimension_numbers<[1], [0], [0], [1], [0, 0, 1, 1], [], []>} : vector<256x128xbf16>, vector<128x128xbf16>, vector<256x128xf32> -> vector<256x128xf32>
    %76 = arith.addf %69, %75 : vector<256x128xf32>
    %77 = arith.truncf %76 : vector<256x128xf32> to vector<256x128xbf16>
    %c0_64 = arith.constant 0 : index
    %c0_65 = arith.constant 0 : index
    %78 = vector.load %arg5[%c0_64, %c0_65] : memref<256x128xbf16, #tpu.memory_space<vmem>>, vector<256x128xbf16>
    tpu.vector_store %arg5[%c0_64, %c0_65], %77 {strides = array<i32>} : memref<256x128xbf16, #tpu.memory_space<vmem>>, vector<256x128xbf16>,
    %c0_66 = arith.constant 0 : index
    %c0_67 = arith.constant 0 : index
    %79 = vector.load %arg6[%c0_66, %c0_67] : memref<1x128xf32, #tpu.memory_space<vmem>>, vector<1x128xf32>
    %cst_68 = arith.constant dense<0.000000e+00> : vector<128xf32>
    %80 = vector.multi_reduction <add>, %76, %cst_68 [0] : vector<256x128xf32> to vector<128xf32>
    %81 = vector.shape_cast %80 : vector<128xf32> to vector<1x128xf32>
    %82 = arith.addf %79, %81 : vector<1x128xf32>
    %c0_69 = arith.constant 0 : index
    %c0_70 = arith.constant 0 : index
    %83 = vector.load %arg6[%c0_69, %c0_70] : memref<1x128xf32, #tpu.memory_space<vmem>>, vector<1x128xf32>
    tpu.vector_store %arg6[%c0_69, %c0_70], %82 {strides = array<i32>} : memref<1x128xf32, #tpu.memory_space<vmem>>, vector<1x128xf32>,
    %c0_71 = arith.constant 0 : index
    %c0_72 = arith.constant 0 : index
    %84 = vector.load %arg7[%c0_71, %c0_72] : memref<1x128xf32, #tpu.memory_space<vmem>>, vector<1x128xf32>
    %85 = arith.mulf %76, %76 : vector<256x128xf32>
    %cst_73 = arith.constant dense<0.000000e+00> : vector<128xf32>
    %86 = vector.multi_reduction <add>, %85, %cst_73 [0] : vector<256x128xf32> to vector<128xf32>
    %87 = vector.shape_cast %86 : vector<128xf32> to vector<1x128xf32>
    %88 = arith.addf %84, %87 : vector<1x128xf32>
    %c0_74 = arith.constant 0 : index
    %c0_75 = arith.constant 0 : index
    %89 = vector.load %arg7[%c0_74, %c0_75] : memref<1x128xf32, #tpu.memory_space<vmem>>, vector<1x128xf32>
    tpu.vector_store %arg7[%c0_74, %c0_75], %88 {strides = array<i32>} : memref<1x128xf32, #tpu.memory_space<vmem>>, vector<1x128xf32>,
    return
  }
  func.func @transform_0(%arg0: i32) -> (i32, i32) {
    %c0_i32 = arith.constant 0 : i32
    %c0_i32_0 = arith.constant 0 : i32
    return %arg0, %c0_i32 : i32, i32
  }
  func.func @transform_1(%arg0: i32) -> (i32, i32) {
    %c0_i32 = arith.constant 0 : i32
    %c0_i32_0 = arith.constant 0 : i32
    %c0_i32_1 = arith.constant 0 : i32
    return %c0_i32, %c0_i32_0 : i32, i32
  }
  func.func @transform_2(%arg0: i32) -> (i32, i32) {
    %c0_i32 = arith.constant 0 : i32
    %c0_i32_0 = arith.constant 0 : i32
    %c0_i32_1 = arith.constant 0 : i32
    return %c0_i32, %c0_i32_0 : i32, i32
  }
  func.func @transform_3(%arg0: i32) -> (i32, i32, i32) {
    %c0_i32 = arith.constant 0 : i32
    %c0_i32_0 = arith.constant 0 : i32
    %c0_i32_1 = arith.constant 0 : i32
    %c0_i32_2 = arith.constant 0 : i32
    return %c0_i32, %c0_i32_0, %c0_i32_1 : i32, i32, i32
  }
  func.func @transform_4(%arg0: i32) -> (i32, i32) {
    %c0_i32 = arith.constant 0 : i32
    %c0_i32_0 = arith.constant 0 : i32
    return %arg0, %c0_i32 : i32, i32
  }
  func.func @transform_5(%arg0: i32) -> (i32, i32) {
    %c0_i32 = arith.constant 0 : i32
    %c0_i32_0 = arith.constant 0 : i32
    %c0_i32_1 = arith.constant 0 : i32
    return %c0_i32, %c0_i32_0 : i32, i32
  }
  func.func @transform_6(%arg0: i32) -> (i32, i32) {
    %c0_i32 = arith.constant 0 : i32
    %c0_i32_0 = arith.constant 0 : i32
    %c0_i32_1 = arith.constant 0 : i32
    return %c0_i32, %c0_i32_0 : i32, i32
  }
}

module attributes {stable_mosaic.version = 11 : i64} {
  func.func @_bn_add_relu_kernel(%arg0: i32, %arg1: memref<128x128xbf16, #tpu.memory_space<vmem>>, %arg2: memref<1x128xf32, #tpu.memory_space<vmem>>, %arg3: memref<1x128xf32, #tpu.memory_space<vmem>>, %arg4: memref<128x128xbf16, #tpu.memory_space<vmem>>, %arg5: memref<1x128xf32, #tpu.memory_space<vmem>>, %arg6: memref<1x128xf32, #tpu.memory_space<vmem>>, %arg7: memref<128x128xf32, #tpu.memory_space<vmem>>) attributes {dimension_semantics = [#tpu.dimension_semantics<parallel>], iteration_bounds = array<i64: 4>, scalar_prefetch = 0 : i64, scratch_operands = 0 : i64, tpu.core_type = #tpu.core_type<tc>, window_params = [{transform_indices = @transform_0, window_bounds = array<i64: 128, 128>}, {pipeline_mode = #tpu.pipeline_mode<synchronous>, transform_indices = @transform_1, window_bounds = array<i64: 1, 128>}, {pipeline_mode = #tpu.pipeline_mode<synchronous>, transform_indices = @transform_2, window_bounds = array<i64: 1, 128>}, {transform_indices = @transform_3, window_bounds = array<i64: 128, 128>}, {pipeline_mode = #tpu.pipeline_mode<synchronous>, transform_indices = @transform_4, window_bounds = array<i64: 1, 128>}, {pipeline_mode = #tpu.pipeline_mode<synchronous>, transform_indices = @transform_5, window_bounds = array<i64: 1, 128>}, {transform_indices = @transform_6, window_bounds = array<i64: 128, 128>}]} {
    %c0 = arith.constant 0 : index
    %c0_0 = arith.constant 0 : index
    %0 = vector.load %arg1[%c0, %c0_0] : memref<128x128xbf16, #tpu.memory_space<vmem>>, vector<128x128xbf16>
    %1 = arith.extf %0 : vector<128x128xbf16> to vector<128x128xf32>
    %c0_1 = arith.constant 0 : index
    %c0_2 = arith.constant 0 : index
    %2 = vector.load %arg2[%c0_1, %c0_2] : memref<1x128xf32, #tpu.memory_space<vmem>>, vector<1x128xf32>
    %3 = vector.broadcast %2 : vector<1x128xf32> to vector<128x128xf32>
    %4 = arith.mulf %1, %3 : vector<128x128xf32>
    %c0_3 = arith.constant 0 : index
    %c0_4 = arith.constant 0 : index
    %5 = vector.load %arg3[%c0_3, %c0_4] : memref<1x128xf32, #tpu.memory_space<vmem>>, vector<1x128xf32>
    %6 = vector.broadcast %5 : vector<1x128xf32> to vector<128x128xf32>
    %7 = arith.addf %4, %6 : vector<128x128xf32>
    %c0_5 = arith.constant 0 : index
    %c0_6 = arith.constant 0 : index
    %8 = vector.load %arg4[%c0_5, %c0_6] : memref<128x128xbf16, #tpu.memory_space<vmem>>, vector<128x128xbf16>
    %9 = arith.extf %8 : vector<128x128xbf16> to vector<128x128xf32>
    %c0_7 = arith.constant 0 : index
    %c0_8 = arith.constant 0 : index
    %10 = vector.load %arg5[%c0_7, %c0_8] : memref<1x128xf32, #tpu.memory_space<vmem>>, vector<1x128xf32>
    %11 = vector.broadcast %10 : vector<1x128xf32> to vector<128x128xf32>
    %12 = arith.mulf %9, %11 : vector<128x128xf32>
    %c0_9 = arith.constant 0 : index
    %c0_10 = arith.constant 0 : index
    %13 = vector.load %arg6[%c0_9, %c0_10] : memref<1x128xf32, #tpu.memory_space<vmem>>, vector<1x128xf32>
    %14 = vector.broadcast %13 : vector<1x128xf32> to vector<128x128xf32>
    %15 = arith.addf %12, %14 : vector<128x128xf32>
    %16 = arith.addf %7, %15 : vector<128x128xf32>
    %cst = arith.constant 0.000000e+00 : f32
    %17 = vector.broadcast %cst : f32 to vector<128x128xf32>
    %18 = arith.maximumf %16, %17 : vector<128x128xf32>
    %c0_11 = arith.constant 0 : index
    %c0_12 = arith.constant 0 : index
    %19 = vector.load %arg7[%c0_11, %c0_12] : memref<128x128xf32, #tpu.memory_space<vmem>>, vector<128x128xf32>
    tpu.vector_store %arg7[%c0_11, %c0_12], %18 {strides = array<i32>} : memref<128x128xf32, #tpu.memory_space<vmem>>, vector<128x128xf32>,
    return
  }
  func.func @transform_0(%arg0: i32) -> (i32, i32) {
    %c0_i32 = arith.constant 0 : i32
    %c0_i32_0 = arith.constant 0 : i32
    return %arg0, %c0_i32 : i32, i32
  }
  func.func @transform_1(%arg0: i32) -> (i32, i32) {
    %c0_i32 = arith.constant 0 : i32
    %c0_i32_0 = arith.constant 0 : i32
    %c0_i32_1 = arith.constant 0 : i32
    return %c0_i32, %c0_i32_0 : i32, i32
  }
  func.func @transform_2(%arg0: i32) -> (i32, i32) {
    %c0_i32 = arith.constant 0 : i32
    %c0_i32_0 = arith.constant 0 : i32
    %c0_i32_1 = arith.constant 0 : i32
    return %c0_i32, %c0_i32_0 : i32, i32
  }
  func.func @transform_3(%arg0: i32) -> (i32, i32) {
    %c0_i32 = arith.constant 0 : i32
    %c0_i32_0 = arith.constant 0 : i32
    return %arg0, %c0_i32 : i32, i32
  }
  func.func @transform_4(%arg0: i32) -> (i32, i32) {
    %c0_i32 = arith.constant 0 : i32
    %c0_i32_0 = arith.constant 0 : i32
    %c0_i32_1 = arith.constant 0 : i32
    return %c0_i32, %c0_i32_0 : i32, i32
  }
  func.func @transform_5(%arg0: i32) -> (i32, i32) {
    %c0_i32 = arith.constant 0 : i32
    %c0_i32_0 = arith.constant 0 : i32
    %c0_i32_1 = arith.constant 0 : i32
    return %c0_i32, %c0_i32_0 : i32, i32
  }
  func.func @transform_6(%arg0: i32) -> (i32, i32) {
    %c0_i32 = arith.constant 0 : i32
    %c0_i32_0 = arith.constant 0 : i32
    return %arg0, %c0_i32 : i32, i32
  }
}

</mosaic_0001>

<llo_original>
// kernel: residual_block_forward.7
$region0: #{residual_block_forward.7}
  #allocation0 [shape = 'u32[]', space=smem, size = 0x4, offset = 0x4, fixed_abs, tag = 'smem constant byte address 0x4 - core index']
  #allocation1 [shape = 'u32[144,128]{1,0:T(1,128)}', space=vmem, size = 0x12000, scoped, tag = 'internal scratch']
  %s0 = inlined_call_operand.vmem [shape: bf16[512,128], index: 0, kind: input, shape index: {}]
  %s1 = inlined_call_operand.vmem [shape: f32[1,128], index: 1, kind: input, shape index: {}]
  %s2 = inlined_call_operand.vmem [shape: f32[1,128], index: 2, kind: input, shape index: {}]
  %s3 = inlined_call_operand.vmem [shape: bf16[512,128], index: 3, kind: input, shape index: {}]
  %s4 = inlined_call_operand.vmem [shape: f32[1,128], index: 4, kind: input, shape index: {}]
  %s5 = inlined_call_operand.vmem [shape: f32[1,128], index: 5, kind: input, shape index: {}]
  %s6 = inlined_call_operand.vmem [shape: f32[512,128], index: 6, kind: output, shape index: {}]
  %s7 = sld [smem:[#allocation0]]
  $region57: #{residual_block_forward.7} parent=0
    _
  %s9 = ssub.s32 1, %s7
  %s10 = scalar_select 0, %s9, %s7
  loop: start=0, step=1, limit=6
  $region2: #{residual_block_forward.7} parent=0 // loop_pre_header
    _
  $region3: #{residual_block_forward.7} parent=0 // loop_header
    %s12 = sphi 0, %s16
    %p13 = scmp.ge.s32.totalorder %s12, 6
    %s22 = sphi 0, %s24
    %s25 = sphi 0, %s22
    %s26 = sphi 0, %s25
    %s42 = sphi 0, %s26
    %s46 = sphi 0, %s46
    %s48 = sphi 0, %s46
    %s49 = sphi 0, %s48
    %s63 = sphi 0, %s49
    %s67 = sphi 0, %s67
    %s69 = sphi 0, %s67
    %s70 = sphi 0, %s69
    %s84 = sphi 0, %s70
    %s90 = sphi 0, %s92
    %s93 = sphi 0, %s90
    %s94 = sphi 0, %s93
    %s110 = sphi 0, %s94
    %s114 = sphi 0, %s114
    %s116 = sphi 0, %s114
    %s117 = sphi 0, %s116
    %s131 = sphi 0, %s117
    %s135 = sphi 0, %s135
    %s137 = sphi 0, %s135
    %s138 = sphi 0, %s137
    %s152 = sphi 0, %s138
    %s158 = sphi 0, %s160
    %s161 = sphi 0, %s158
    %s162 = sphi 0, %s161
    %s178 = sphi 0, %s162
  $region4: #{residual_block_forward.7} parent=0 // loop_header_branch
    %15 = sbr.rel (%p13) target = $region8
  $region5: #{residual_block_forward.7} parent=0 // loop_body
    %s17 = ssub.s32 %s12, 1
    %s18 = ssub.s32 %s12, 2
    %s19 = sadd.s32 %s12, 1
    %s20 = ssub.s32 %s12, %s19
    %p21 = scmp.eq.s32.totalorder %s20, 0
    %s23 = sadd.s32 %s22, 1
    %s24 = scalar_select %p21, %s22, %s23
    %p27 = pneg %p21
    %p28 = scmp.eq.s32.totalorder %s12, 3
    %p29 = por %p27, %p28
    %p30 = scmp.ne.s32.totalorder %s22, %s25
    %p31 = scmp.eq.s32.totalorder %s12, 0
    %p32 = por %p30, %p31
    %p33 = scmp.ne.s32.totalorder %s22, %s25
    %p34 = scmp.eq.s32.totalorder %s17, 3
    %p35 = por %p33, %p34
    %p36 = scmp.ne.s32.totalorder %s25, %s26
    %p37 = scmp.eq.s32.totalorder %s17, 0
    %p38 = por %p36, %p37
    %p39 = scmp.ne.s32.totalorder %s25, %s26
    %p40 = scmp.eq.s32.totalorder %s18, 3
    %p41 = por %p39, %p40
    %p43 = scmp.ne.s32.totalorder %s26, %s42
    %p44 = scmp.eq.s32.totalorder %s18, 0
    %p45 = por %p43, %p44
    %s47 = sadd.s32 %s46, 1
    %p50 = scmp.eq.s32.totalorder %s12, 3
    %p51 = scmp.ne.s32.totalorder %s46, %s48
    %p52 = scmp.eq.s32.totalorder %s12, 0
    %p53 = por %p51, %p52
    %p54 = scmp.ne.s32.totalorder %s46, %s48
    %p55 = scmp.eq.s32.totalorder %s17, 3
    %p56 = por %p54, %p55
    %p57 = scmp.ne.s32.totalorder %s48, %s49
    %p58 = scmp.eq.s32.totalorder %s17, 0
    %p59 = por %p57, %p58
    %p60 = scmp.ne.s32.totalorder %s48, %s49
    %p61 = scmp.eq.s32.totalorder %s18, 3
    %p62 = por %p60, %p61
    %p64 = scmp.ne.s32.totalorder %s49, %s63
    %p65 = scmp.eq.s32.totalorder %s18, 0
    %p66 = por %p64, %p65
    %s68 = sadd.s32 %s67, 1
    %p71 = scmp.eq.s32.totalorder %s12, 3
    %p72 = scmp.ne.s32.totalorder %s67, %s69
    %p73 = scmp.eq.s32.totalorder %s12, 0
    %p74 = por %p72, %p73
    %p75 = scmp.ne.s32.totalorder %s67, %s69
    %p76 = scmp.eq.s32.totalorder %s17, 3
    %p77 = por %p75, %p76
    %p78 = scmp.ne.s32.totalorder %s69, %s70
    %p79 = scmp.eq.s32.totalorder %s17, 0
    %p80 = por %p78, %p79
    %p81 = scmp.ne.s32.totalorder %s69, %s70
    %p82 = scmp.eq.s32.totalorder %s18, 3
    %p83 = por %p81, %p82
    %p85 = scmp.ne.s32.totalorder %s70, %s84
    %p86 = scmp.eq.s32.totalorder %s18, 0
    %p87 = por %p85, %p86
    %s88 = ssub.s32 %s12, %s19
    %p89 = scmp.eq.s32.totalorder %s88, 0
    %s91 = sadd.s32 %s90, 1
    %s92 = scalar_select %p89, %s90, %s91
    %p95 = pneg %p89
    %p96 = scmp.eq.s32.totalorder %s12, 3
    %p97 = por %p95, %p96
    %p98 = scmp.ne.s32.totalorder %s90, %s93
    %p99 = scmp.eq.s32.totalorder %s12, 0
    %p100 = por %p98, %p99
    %p101 = scmp.ne.s32.totalorder %s90, %s93
    %p102 = scmp.eq.s32.totalorder %s17, 3
    %p103 = por %p101, %p102
    %p104 = scmp.ne.s32.totalorder %s93, %s94
    %p105 = scmp.eq.s32.totalorder %s17, 0
    %p106 = por %p104, %p105
    %p107 = scmp.ne.s32.totalorder %s93, %s94
    %p108 = scmp.eq.s32.totalorder %s18, 3
    %p109 = por %p107, %p108
    %p111 = scmp.ne.s32.totalorder %s94, %s110
    %p112 = scmp.eq.s32.totalorder %s18, 0
    %p113 = por %p111, %p112
    %s115 = sadd.s32 %s114, 1
    %p118 = scmp.eq.s32.totalorder %s12, 3
    %p119 = scmp.ne.s32.totalorder %s114, %s116
    %p120 = scmp.eq.s32.totalorder %s12, 0
    %p121 = por %p119, %p120
    %p122 = scmp.ne.s32.totalorder %s114, %s116
    %p123 = scmp.eq.s32.totalorder %s17, 3
    %p124 = por %p122, %p123
    %p125 = scmp.ne.s32.totalorder %s116, %s117
    %p126 = scmp.eq.s32.totalorder %s17, 0
    %p127 = por %p125, %p126
    %p128 = scmp.ne.s32.totalorder %s116, %s117
    %p129 = scmp.eq.s32.totalorder %s18, 3
    %p130 = por %p128, %p129
    %p132 = scmp.ne.s32.totalorder %s117, %s131
    %p133 = scmp.eq.s32.totalorder %s18, 0
    %p134 = por %p132, %p133
    %s136 = sadd.s32 %s135, 1
    %p139 = scmp.eq.s32.totalorder %s12, 3
    %p140 = scmp.ne.s32.totalorder %s135, %s137
    %p141 = scmp.eq.s32.totalorder %s12, 0
    %p142 = por %p140, %p141
    %p143 = scmp.ne.s32.totalorder %s135, %s137
    %p144 = scmp.eq.s32.totalorder %s17, 3
    %p145 = por %p143, %p144
    %p146 = scmp.ne.s32.totalorder %s137, %s138
    %p147 = scmp.eq.s32.totalorder %s17, 0
    %p148 = por %p146, %p147
    %p149 = scmp.ne.s32.totalorder %s137, %s138
    %p150 = scmp.eq.s32.totalorder %s18, 3
    %p151 = por %p149, %p150
    %p153 = scmp.ne.s32.totalorder %s138, %s152
    %p154 = scmp.eq.s32.totalorder %s18, 0
    %p155 = por %p153, %p154
    %s156 = ssub.s32 %s12, %s19
    %p157 = scmp.eq.s32.totalorder %s156, 0
    %s159 = sadd.s32 %s158, 1
    %s160 = scalar_select %p157, %s158, %s159
    %p163 = pneg %p157
    %p164 = scmp.eq.s32.totalorder %s12, 3
    %p165 = por %p163, %p164
    %p166 = scmp.ne.s32.totalorder %s158, %s161
    %p167 = scmp.eq.s32.totalorder %s12, 0
    %p168 = por %p166, %p167
    %p169 = scmp.ne.s32.totalorder %s158, %s161
    %p170 = scmp.eq.s32.totalorder %s17, 3
    %p171 = por %p169, %p170
    %p172 = scmp.ne.s32.totalorder %s161, %s162
    %p173 = scmp.eq.s32.totalorder %s17, 0
    %p174 = por %p172, %p173
    %p175 = scmp.ne.s32.totalorder %s161, %s162
    %p176 = scmp.eq.s32.totalorder %s18, 3
    %p177 = por %p175, %p176
    %p179 = scmp.ne.s32.totalorder %s162, %s178
    %p180 = scmp.eq.s32.totalorder %s18, 0
    %p181 = por %p179, %p180
    %p182 = scmp.le.s32.totalorder 1, %s12
    %p183 = scmp.lt.s32.totalorder %s12, 5
    %p184 = pnand %p182, %p183
    %p185 = pneg %p184
    // Predicated region
    $region9: #{residual_block_forward.7} parent=5 // pred_check
      _
    $region10: #{residual_block_forward.7} parent=5 // pred_check_branch
      %187 = sbr.rel (%p184) target = $region12
    $region11: #{residual_block_forward.7} parent=5 // pred_region
      %s188 = ssub.s32 %s12, 1
      // Predicated region
      $region13: #{residual_block_forward.7} parent=11 // pred_check
        %p189 = pneg %p59
      $region14: #{residual_block_forward.7} parent=11 // pred_check_branch
        %191 = sbr.rel (%p189) target = $region16
      $region15: #{residual_block_forward.7} parent=11 // pred_region
        _
      $region16: #{residual_block_forward.7} parent=11 // pred_fallthru
        _
      // Predicated region
      $region17: #{residual_block_forward.7} parent=11 // pred_check
        %p192 = pneg %p80
      $region18: #{residual_block_forward.7} parent=11 // pred_check_branch
        %194 = sbr.rel (%p192) target = $region20
      $region19: #{residual_block_forward.7} parent=11 // pred_region
        _
      $region20: #{residual_block_forward.7} parent=11 // pred_fallthru
        _
      // Predicated region
      $region21: #{residual_block_forward.7} parent=11 // pred_check
        %p195 = pneg %p127
      $region22: #{residual_block_forward.7} parent=11 // pred_check_branch
        %197 = sbr.rel (%p195) target = $region24
      $region23: #{residual_block_forward.7} parent=11 // pred_region
        _
      $region24: #{residual_block_forward.7} parent=11 // pred_fallthru
        _
      // Predicated region
      $region25: #{residual_block_forward.7} parent=11 // pred_check
        %p198 = pneg %p148
      $region26: #{residual_block_forward.7} parent=11 // pred_check_branch
        %200 = sbr.rel (%p198) target = $region28
      $region27: #{residual_block_forward.7} parent=11 // pred_region
        _
      $region28: #{residual_block_forward.7} parent=11 // pred_fallthru
        _
    $region12: #{residual_block_forward.7} parent=5 // pred_fallthru
      _
    %p201 = scmp.lt.s32.totalorder %s12, 4
    // Predicated region
    $region29: #{residual_block_forward.7} parent=5 // pred_check
      %p202 = pneg %p201
    $region30: #{residual_block_forward.7} parent=5 // pred_check_branch
      %204 = sbr.rel (%p202) target = $region32
    $region31: #{residual_block_forward.7} parent=5 // pred_region
      // Predicated region
      $region33: #{residual_block_forward.7} parent=31 // pred_check
        %p205 = pneg %p32
      $region34: #{residual_block_forward.7} parent=31 // pred_check_branch
        %207 = sbr.rel (%p205) target = $region36
      $region35: #{residual_block_forward.7} parent=31 // pred_region
        %s208 = smul.u32 16, %s12
        %p209 = scmp.lt.s32.totalorder %s208, 63
        %s210 = scalar_select %p209, %s208, 63
        %s211 = smul.addr %s210, 4
        %s212 = scalar_lea.vmem %s0, %s211
        %s213 = smul.u32 16, %s12
      $region36: #{residual_block_forward.7} parent=31 // pred_fallthru
        _
      // Predicated region
      $region37: #{residual_block_forward.7} parent=31 // pred_check
        %p214 = pneg %p100
      $region38: #{residual_block_forward.7} parent=31 // pred_check_branch
        %216 = sbr.rel (%p214) target = $region40
      $region39: #{residual_block_forward.7} parent=31 // pred_region
        %s217 = smul.u32 16, %s12
        %p218 = scmp.lt.s32.totalorder %s217, 63
        %s219 = scalar_select %p218, %s217, 63
        %s220 = smul.addr %s219, 4
        %s221 = scalar_lea.vmem %s3, %s220
        %s222 = smul.u32 16, %s12
      $region40: #{residual_block_forward.7} parent=31 // pred_fallthru
        _
    $region32: #{residual_block_forward.7} parent=5 // pred_fallthru
      _
    %p223 = scmp.le.s32.totalorder 1, %s12
    %p224 = scmp.lt.s32.totalorder %s12, 5
    %p225 = pnand %p223, %p224
    %p226 = pneg %p225
    // Predicated region
    $region41: #{residual_block_forward.7} parent=5 // pred_check
      _
    $region42: #{residual_block_forward.7} parent=5 // pred_check_branch
      %228 = sbr.rel (%p225) target = $region44
    $region43: #{residual_block_forward.7} parent=5 // pred_region
      %s229 = ssub.s32 %s12, 1
      %s230 = smul.u32 16, %s17
      %p231 = scmp.lt.s32.totalorder %s230, 63
      %s232 = scalar_select %p231, %s230, 63
      %s233 = smul.addr %s232, 4
      %s234 = scalar_lea.vmem %s0, %s233
      %p235 = pneg %p38
      %p236 = pneg %p35
      %p237 = pneg %p59
      %p238 = pneg %p56
      %p239 = pneg %p80
      %p240 = pneg %p77
      %s241 = smul.u32 16, %s17
      %p242 = scmp.lt.s32.totalorder %s241, 63
      %s243 = scalar_select %p242, %s241, 63
      %s244 = smul.addr %s243, 4
      %s245 = scalar_lea.vmem %s3, %s244
      %p246 = pneg %p106
      %p247 = pneg %p103
      %p248 = pneg %p127
      %p249 = pneg %p124
      %p250 = pneg %p148
      %p251 = pneg %p145
      %p252 = pneg %p174
      %p253 = pneg %p171
      %s254 = smul.u32 16, %s17
      %p255 = scmp.lt.s32.totalorder %s254, 63
      %s256 = scalar_select %p255, %s254, 63
      %s257 = smul.addr %s256, 8
      %s258 = scalar_lea.vmem %s6, %s257
      %s259 = smul.u32 16, %s17
      %p260 = scmp.lt.s32.totalorder %s259, 63
      %s261 = scalar_select %p260, %s259, 63
      %s262 = smul.addr %s261, 4
      %s263 = scalar_lea.vmem %s0, %s262
      %s264 = smul.u32 16, %s17
      %s265 = smul.u32 16, %s17
      %p266 = scmp.lt.s32.totalorder %s265, 63
      %s267 = scalar_select %p266, %s265, 63
      %s268 = smul.addr %s267, 4
      %s269 = scalar_lea.vmem %s3, %s268
      %s270 = smul.u32 16, %s17
      %s271 = smul.u32 16, %s17
      %p272 = scmp.lt.s32.totalorder %s271, 63
      %s273 = scalar_select %p272, %s271, 63
      %s274 = smul.addr %s273, 8
      %s275 = scalar_lea.vmem %s6, %s274
      %s276 = smul.u32 16, %s17
      %v277 = vld [vmem:[%s263] sm:$0xf]
      %v278 = vld [vmem:[%s263 + $0x4] sm:$0xf]
      %v279 = vld [vmem:[%s263 + $0x8] sm:$0xf]
      %v280 = vld [vmem:[%s263 + $0xc] sm:$0xf]
      %v281 = vld [vmem:[%s263 + $0x10] sm:$0xf]
      %v282 = vld [vmem:[%s263 + $0x14] sm:$0xf]
      %v283 = vld [vmem:[%s263 + $0x18] sm:$0xf]
      %v284 = vld [vmem:[%s263 + $0x1c] sm:$0xf]
      %v285 = vld [vmem:[%s263 + $0x20] sm:$0xf]
      %v286 = vld [vmem:[%s263 + $0x24] sm:$0xf]
      %v287 = vld [vmem:[%s263 + $0x28] sm:$0xf]
      %v288 = vld [vmem:[%s263 + $0x2c] sm:$0xf]
      %v289 = vld [vmem:[%s263 + $0x30] sm:$0xf]
      %v290 = vld [vmem:[%s263 + $0x34] sm:$0xf]
      %v291 = vld [vmem:[%s263 + $0x38] sm:$0xf]
      %v292 = vld [vmem:[%s263 + $0x3c] sm:$0xf]
      %v293 = vunpack.c.l.bf16 %v277
      %v294 = vunpack.c.l.bf16 %v278
      %v295 = vunpack.c.l.bf16 %v279
      %v296 = vunpack.c.l.bf16 %v280
      %v297 = vunpack.c.l.bf16 %v281
      %v298 = vunpack.c.l.bf16 %v282
      %v299 = vunpack.c.l.bf16 %v283
      %v300 = vunpack.c.l.bf16 %v284
      %v301 = vunpack.c.l.bf16 %v285
      %v302 = vunpack.c.l.bf16 %v286
      %v303 = vunpack.c.l.bf16 %v287
      %v304 = vunpack.c.l.bf16 %v288
      %v305 = vunpack.c.l.bf16 %v289
      %v306 = vunpack.c.l.bf16 %v290
      %v307 = vunpack.c.l.bf16 %v291
      %v308 = vunpack.c.l.bf16 %v292
      %v309 = vld [vmem:[%s1] sm:$0x1]
      %v311 = vlaneseq
      %v312 = vshrl.u32 %v311, 7
      %v313 = vsub.s32 0, %v312
      %v314 = vrot.slane %v309, %v313
      %v316 = vmul.f32 %v293, %v314
      %v317 = vmul.f32 %v294, %v314
      %v318 = vmul.f32 %v295, %v314
      %v319 = vmul.f32 %v296, %v314
      %v320 = vmul.f32 %v297, %v314
      %v321 = vmul.f32 %v298, %v314
      %v322 = vmul.f32 %v299, %v314
      %v323 = vmul.f32 %v300, %v314
      %v324 = vmul.f32 %v301, %v314
      %v325 = vmul.f32 %v302, %v314
      %v326 = vmul.f32 %v303, %v314
      %v327 = vmul.f32 %v304, %v314
      %v328 = vmul.f32 %v305, %v314
      %v329 = vmul.f32 %v306, %v314
      %v330 = vmul.f32 %v307, %v314
      %v331 = vmul.f32 %v308, %v314
      %v332 = vld [vmem:[%s2] sm:$0x1]
      %v334 = vlaneseq
      %v335 = vshrl.u32 %v334, 7
      %v336 = vsub.s32 0, %v335
      %v337 = vrot.slane %v332, %v336
      %v339 = vadd.f32 %v316, %v337
      %v340 = vadd.f32 %v317, %v337
      %v341 = vadd.f32 %v318, %v337
      %v342 = vadd.f32 %v319, %v337
      %v343 = vadd.f32 %v320, %v337
      %v344 = vadd.f32 %v321, %v337
      %v345 = vadd.f32 %v322, %v337
      %v346 = vadd.f32 %v323, %v337
      %v347 = vadd.f32 %v324, %v337
      %v348 = vadd.f32 %v325, %v337
      %v349 = vadd.f32 %v326, %v337
      %v350 = vadd.f32 %v327, %v337
      %v351 = vadd.f32 %v328, %v337
      %v352 = vadd.f32 %v329, %v337
      %v353 = vadd.f32 %v330, %v337
      %v354 = vadd.f32 %v331, %v337
      %v355 = vld [vmem:[%s269] sm:$0xf]
      %v356 = vld [vmem:[%s269 + $0x4] sm:$0xf]
      %v357 = vld [vmem:[%s269 + $0x8] sm:$0xf]
      %v358 = vld [vmem:[%s269 + $0xc] sm:$0xf]
      %v359 = vld [vmem:[%s269 + $0x10] sm:$0xf]
      %v360 = vld [vmem:[%s269 + $0x14] sm:$0xf]
      %v361 = vld [vmem:[%s269 + $0x18] sm:$0xf]
      %v362 = vld [vmem:[%s269 + $0x1c] sm:$0xf]
      %v363 = vld [vmem:[%s269 + $0x20] sm:$0xf]
      %v364 = vld [vmem:[%s269 + $0x24] sm:$0xf]
      %v365 = vld [vmem:[%s269 + $0x28] sm:$0xf]
      %v366 = vld [vmem:[%s269 + $0x2c] sm:$0xf]
      %v367 = vld [vmem:[%s269 + $0x30] sm:$0xf]
      %v368 = vld [vmem:[%s269 + $0x34] sm:$0xf]
      %v369 = vld [vmem:[%s269 + $0x38] sm:$0xf]
      %v370 = vld [vmem:[%s269 + $0x3c] sm:$0xf]
      %v371 = vunpack.c.l.bf16 %v355
      %v372 = vunpack.c.l.bf16 %v356
      %v373 = vunpack.c.l.bf16 %v357
      %v374 = vunpack.c.l.bf16 %v358
      %v375 = vunpack.c.l.bf16 %v359
      %v376 = vunpack.c.l.bf16 %v360
      %v377 = vunpack.c.l.bf16 %v361
      %v378 = vunpack.c.l.bf16 %v362
      %v379 = vunpack.c.l.bf16 %v363
      %v380 = vunpack.c.l.bf16 %v364
      %v381 = vunpack.c.l.bf16 %v365
      %v382 = vunpack.c.l.bf16 %v366
      %v383 = vunpack.c.l.bf16 %v367
      %v384 = vunpack.c.l.bf16 %v368
      %v385 = vunpack.c.l.bf16 %v369
      %v386 = vunpack.c.l.bf16 %v370
      %v387 = vld [vmem:[%s4] sm:$0x1]
      %v389 = vlaneseq
      %v390 = vshrl.u32 %v389, 7
      %v391 = vsub.s32 0, %v390
      %v392 = vrot.slane %v387, %v391
      %v394 = vmul.f32 %v371, %v392
      %v395 = vmul.f32 %v372, %v392
      %v396 = vmul.f32 %v373, %v392
      %v397 = vmul.f32 %v374, %v392
      %v398 = vmul.f32 %v375, %v392
      %v399 = vmul.f32 %v376, %v392
      %v400 = vmul.f32 %v377, %v392
      %v401 = vmul.f32 %v378, %v392
      %v402 = vmul.f32 %v379, %v392
      %v403 = vmul.f32 %v380, %v392
      %v404 = vmul.f32 %v381, %v392
      %v405 = vmul.f32 %v382, %v392
      %v406 = vmul.f32 %v383, %v392
      %v407 = vmul.f32 %v384, %v392
      %v408 = vmul.f32 %v385, %v392
      %v409 = vmul.f32 %v386, %v392
      %v410 = vld [vmem:[%s5] sm:$0x1]
      %v412 = vlaneseq
      %v413 = vshrl.u32 %v412, 7
      %v414 = vsub.s32 0, %v413
      %v415 = vrot.slane %v410, %v414
      %v417 = vadd.f32 %v394, %v415
      %v418 = vadd.f32 %v395, %v415
      %v419 = vadd.f32 %v396, %v415
      %v420 = vadd.f32 %v397, %v415
      %v421 = vadd.f32 %v398, %v415
      %v422 = vadd.f32 %v399, %v415
      %v423 = vadd.f32 %v400, %v415
      %v424 = vadd.f32 %v401, %v415
      %v425 = vadd.f32 %v402, %v415
      %v426 = vadd.f32 %v403, %v415
      %v427 = vadd.f32 %v404, %v415
      %v428 = vadd.f32 %v405, %v415
      %v429 = vadd.f32 %v406, %v415
      %v430 = vadd.f32 %v407, %v415
      %v431 = vadd.f32 %v408, %v415
      %v432 = vadd.f32 %v409, %v415
      %v433 = vadd.f32 %v339, %v417
      %v434 = vadd.f32 %v340, %v418
      %v435 = vadd.f32 %v341, %v419
      %v436 = vadd.f32 %v342, %v420
      %v437 = vadd.f32 %v343, %v421
      %v438 = vadd.f32 %v344, %v422
      %v439 = vadd.f32 %v345, %v423
      %v440 = vadd.f32 %v346, %v424
      %v441 = vadd.f32 %v347, %v425
      %v442 = vadd.f32 %v348, %v426
      %v443 = vadd.f32 %v349, %v427
      %v444 = vadd.f32 %v350, %v428
      %v445 = vadd.f32 %v351, %v429
      %v446 = vadd.f32 %v352, %v430
      %v447 = vadd.f32 %v353, %v431
      %v448 = vadd.f32 %v354, %v432
      %v449 = vmax.f32 %v433, 0.0
      %v450 = vmax.f32 %v434, 0.0
      %v451 = vmax.f32 %v435, 0.0
      %v452 = vmax.f32 %v436, 0.0
      %v453 = vmax.f32 %v437, 0.0
      %v454 = vmax.f32 %v438, 0.0
      %v455 = vmax.f32 %v439, 0.0
      %v456 = vmax.f32 %v440, 0.0
      %v457 = vmax.f32 %v441, 0.0
      %v458 = vmax.f32 %v442, 0.0
      %v459 = vmax.f32 %v443, 0.0
      %v460 = vmax.f32 %v444, 0.0
      %v461 = vmax.f32 %v445, 0.0
      %v462 = vmax.f32 %v446, 0.0
      %v463 = vmax.f32 %v447, 0.0
      %v464 = vmax.f32 %v448, 0.0
      %465 = vst [vmem:[%s275] sm:$0xff] %v449
      %466 = vst [vmem:[%s275 + $0x8] sm:$0xff] %v450
      %467 = vst [vmem:[%s275 + $0x10] sm:$0xff] %v451
      %468 = vst [vmem:[%s275 + $0x18] sm:$0xff] %v452
      %469 = vst [vmem:[%s275 + $0x20] sm:$0xff] %v453
      %470 = vst [vmem:[%s275 + $0x28] sm:$0xff] %v454
      %471 = vst [vmem:[%s275 + $0x30] sm:$0xff] %v455
      %472 = vst [vmem:[%s275 + $0x38] sm:$0xff] %v456
      %473 = vst [vmem:[%s275 + $0x40] sm:$0xff] %v457
      %474 = vst [vmem:[%s275 + $0x48] sm:$0xff] %v458
      %475 = vst [vmem:[%s275 + $0x50] sm:$0xff] %v459
      %476 = vst [vmem:[%s275 + $0x58] sm:$0xff] %v460
      %477 = vst [vmem:[%s275 + $0x60] sm:$0xff] %v461
      %478 = vst [vmem:[%s275 + $0x68] sm:$0xff] %v462
      %479 = vst [vmem:[%s275 + $0x70] sm:$0xff] %v463
      %480 = vst [vmem:[%s275 + $0x78] sm:$0xff] %v464
      %s481 = smul.u32 16, %s17
      %p482 = scmp.lt.s32.totalorder %s481, 63
      %s483 = scalar_select %p482, %s481, 63
      %s484 = smul.addr %s483, 8
      %s485 = scalar_lea.vmem %s6, %s484
      // Predicated region
      $region45: #{residual_block_forward.7} parent=43 // pred_check
        %p486 = pneg %p171
      $region46: #{residual_block_forward.7} parent=43 // pred_check_branch
        %488 = sbr.rel (%p486) target = $region48
      $region47: #{residual_block_forward.7} parent=43 // pred_region
        %s489 = smul.u32 16, %s17
      $region48: #{residual_block_forward.7} parent=43 // pred_fallthru
        _
    $region44: #{residual_block_forward.7} parent=5 // pred_fallthru
      _
    %p490 = scmp.le.s32.totalorder 2, %s12
    // Predicated region
    $region49: #{residual_block_forward.7} parent=5 // pred_check
      %p491 = pneg %p490
    $region50: #{residual_block_forward.7} parent=5 // pred_check_branch
      %493 = sbr.rel (%p491) target = $region52
    $region51: #{residual_block_forward.7} parent=5 // pred_region
      %s494 = ssub.s32 %s12, 2
      // Predicated region
      $region53: #{residual_block_forward.7} parent=51 // pred_check
        %p495 = pneg %p177
      $region54: #{residual_block_forward.7} parent=51 // pred_check_branch
        %497 = sbr.rel (%p495) target = $region56
      $region55: #{residual_block_forward.7} parent=51 // pred_region
        %s498 = smul.u32 16, %s18
        %p499 = scmp.lt.s32.totalorder %s498, 63
        %s500 = scalar_select %p499, %s498, 63
        %s501 = smul.addr %s500, 8
        %s502 = scalar_lea.vmem %s6, %s501
      $region56: #{residual_block_forward.7} parent=51 // pred_fallthru
        _
    $region52: #{residual_block_forward.7} parent=5 // pred_fallthru
      _
  $region6: #{residual_block_forward.7} parent=0 // loop_footer
    %s16 = sadd.s32 1, %s12
  $region7: #{residual_block_forward.7} parent=0 // loop_footer_branch
    %11 = sbr.rel target = $region3
  $region8: #{residual_block_forward.7} parent=0 // loop_exit
    _

// kernel: residual_block_forward.6
$region0: #{residual_block_forward.6}
  #allocation0 [shape = 'u32[]', space=smem, size = 0x4, offset = 0x4, fixed_abs, tag = 'smem constant byte address 0x4 - core index']
  #allocation1 [shape = 'u32[144,128]{1,0:T(1,128)}', space=vmem, size = 0x12000, scoped, tag = 'internal scratch']
  %s0 = inlined_call_operand.vmem [shape: bf16[512,128], index: 0, kind: input, shape index: {}]
  %s1 = inlined_call_operand.vmem [shape: f32[1,128], index: 1, kind: input, shape index: {}]
  %s2 = inlined_call_operand.vmem [shape: f32[1,128], index: 2, kind: input, shape index: {}]
  %s3 = inlined_call_operand.vmem [shape: bf16[128,128], index: 3, kind: input, shape index: {}]
  %s4 = inlined_call_operand.vmem [shape: bf16[512,128], index: 4, kind: output, shape index: {0}]
  %s5 = inlined_call_operand.vmem [shape: f32[1,128], index: 5, kind: output, shape index: {1}]
  %s6 = inlined_call_operand.vmem [shape: f32[1,128], index: 6, kind: output, shape index: {2}]
  %7 = xla_tuple %s4, %s5, %s6
  %s8 = sld [smem:[#allocation0]]
  $region69: #{residual_block_forward.6} parent=0
    _
  %s10 = ssub.s32 1, %s8
  %s11 = scalar_select 0, %s10, %s8
  loop: start=0, step=1, limit=6
  $region2: #{residual_block_forward.6} parent=0 // loop_pre_header
    _
  $region3: #{residual_block_forward.6} parent=0 // loop_header
    %s13 = sphi 0, %s17
    %p14 = scmp.ge.s32.totalorder %s13, 6
    %s23 = sphi 0, %s25
    %s26 = sphi 0, %s23
    %s27 = sphi 0, %s26
    %s43 = sphi 0, %s27
    %s47 = sphi 0, %s47
    %s49 = sphi 0, %s47
    %s50 = sphi 0, %s49
    %s64 = sphi 0, %s50
    %s68 = sphi 0, %s68
    %s70 = sphi 0, %s68
    %s71 = sphi 0, %s70
    %s85 = sphi 0, %s71
    %s89 = sphi 0, %s89
    %s91 = sphi 0, %s89
    %s92 = sphi 0, %s91
    %s106 = sphi 0, %s92
    %s112 = sphi 0, %s114
    %s115 = sphi 0, %s112
    %s116 = sphi 0, %s115
    %s132 = sphi 0, %s116
    %s136 = sphi 0, %s136
    %s138 = sphi 0, %s136
    %s139 = sphi 0, %s138
    %s153 = sphi 0, %s139
    %s157 = sphi 0, %s157
    %s159 = sphi 0, %s157
    %s160 = sphi 0, %s159
    %s174 = sphi 0, %s160
  $region4: #{residual_block_forward.6} parent=0 // loop_header_branch
    %16 = sbr.rel (%p14) target = $region8
  $region5: #{residual_block_forward.6} parent=0 // loop_body
    %s18 = ssub.s32 %s13, 1
    %s19 = ssub.s32 %s13, 2
    %s20 = sadd.s32 %s13, 1
    %s21 = ssub.s32 %s13, %s20
    %p22 = scmp.eq.s32.totalorder %s21, 0
    %s24 = sadd.s32 %s23, 1
    %s25 = scalar_select %p22, %s23, %s24
    %p28 = pneg %p22
    %p29 = scmp.eq.s32.totalorder %s13, 3
    %p30 = por %p28, %p29
    %p31 = scmp.ne.s32.totalorder %s23, %s26
    %p32 = scmp.eq.s32.totalorder %s13, 0
    %p33 = por %p31, %p32
    %p34 = scmp.ne.s32.totalorder %s23, %s26
    %p35 = scmp.eq.s32.totalorder %s18, 3
    %p36 = por %p34, %p35
    %p37 = scmp.ne.s32.totalorder %s26, %s27
    %p38 = scmp.eq.s32.totalorder %s18, 0
    %p39 = por %p37, %p38
    %p40 = scmp.ne.s32.totalorder %s26, %s27
    %p41 = scmp.eq.s32.totalorder %s19, 3
    %p42 = por %p40, %p41
    %p44 = scmp.ne.s32.totalorder %s27, %s43
    %p45 = scmp.eq.s32.totalorder %s19, 0
    %p46 = por %p44, %p45
    %s48 = sadd.s32 %s47, 1
    %p51 = scmp.eq.s32.totalorder %s13, 3
    %p52 = scmp.ne.s32.totalorder %s47, %s49
    %p53 = scmp.eq.s32.totalorder %s13, 0
    %p54 = por %p52, %p53
    %p55 = scmp.ne.s32.totalorder %s47, %s49
    %p56 = scmp.eq.s32.totalorder %s18, 3
    %p57 = por %p55, %p56
    %p58 = scmp.ne.s32.totalorder %s49, %s50
    %p59 = scmp.eq.s32.totalorder %s18, 0
    %p60 = por %p58, %p59
    %p61 = scmp.ne.s32.totalorder %s49, %s50
    %p62 = scmp.eq.s32.totalorder %s19, 3
    %p63 = por %p61, %p62
    %p65 = scmp.ne.s32.totalorder %s50, %s64
    %p66 = scmp.eq.s32.totalorder %s19, 0
    %p67 = por %p65, %p66
    %s69 = sadd.s32 %s68, 1
    %p72 = scmp.eq.s32.totalorder %s13, 3
    %p73 = scmp.ne.s32.totalorder %s68, %s70
    %p74 = scmp.eq.s32.totalorder %s13, 0
    %p75 = por %p73, %p74
    %p76 = scmp.ne.s32.totalorder %s68, %s70
    %p77 = scmp.eq.s32.totalorder %s18, 3
    %p78 = por %p76, %p77
    %p79 = scmp.ne.s32.totalorder %s70, %s71
    %p80 = scmp.eq.s32.totalorder %s18, 0
    %p81 = por %p79, %p80
    %p82 = scmp.ne.s32.totalorder %s70, %s71
    %p83 = scmp.eq.s32.totalorder %s19, 3
    %p84 = por %p82, %p83
    %p86 = scmp.ne.s32.totalorder %s71, %s85
    %p87 = scmp.eq.s32.totalorder %s19, 0
    %p88 = por %p86, %p87
    %s90 = sadd.s32 %s89, 1
    %p93 = scmp.eq.s32.totalorder %s13, 3
    %p94 = scmp.ne.s32.totalorder %s89, %s91
    %p95 = scmp.eq.s32.totalorder %s13, 0
    %p96 = por %p94, %p95
    %p97 = scmp.ne.s32.totalorder %s89, %s91
    %p98 = scmp.eq.s32.totalorder %s18, 3
    %p99 = por %p97, %p98
    %p100 = scmp.ne.s32.totalorder %s91, %s92
    %p101 = scmp.eq.s32.totalorder %s18, 0
    %p102 = por %p100, %p101
    %p103 = scmp.ne.s32.totalorder %s91, %s92
    %p104 = scmp.eq.s32.totalorder %s19, 3
    %p105 = por %p103, %p104
    %p107 = scmp.ne.s32.totalorder %s92, %s106
    %p108 = scmp.eq.s32.totalorder %s19, 0
    %p109 = por %p107, %p108
    %s110 = ssub.s32 %s13, %s20
    %p111 = scmp.eq.s32.totalorder %s110, 0
    %s113 = sadd.s32 %s112, 1
    %s114 = scalar_select %p111, %s112, %s113
    %p117 = pneg %p111
    %p118 = scmp.eq.s32.totalorder %s13, 3
    %p119 = por %p117, %p118
    %p120 = scmp.ne.s32.totalorder %s112, %s115
    %p121 = scmp.eq.s32.totalorder %s13, 0
    %p122 = por %p120, %p121
    %p123 = scmp.ne.s32.totalorder %s112, %s115
    %p124 = scmp.eq.s32.totalorder %s18, 3
    %p125 = por %p123, %p124
    %p126 = scmp.ne.s32.totalorder %s115, %s116
    %p127 = scmp.eq.s32.totalorder %s18, 0
    %p128 = por %p126, %p127
    %p129 = scmp.ne.s32.totalorder %s115, %s116
    %p130 = scmp.eq.s32.totalorder %s19, 3
    %p131 = por %p129, %p130
    %p133 = scmp.ne.s32.totalorder %s116, %s132
    %p134 = scmp.eq.s32.totalorder %s19, 0
    %p135 = por %p133, %p134
    %s137 = sadd.s32 %s136, 1
    %p140 = scmp.eq.s32.totalorder %s13, 3
    %p141 = scmp.ne.s32.totalorder %s136, %s138
    %p142 = scmp.eq.s32.totalorder %s13, 0
    %p143 = por %p141, %p142
    %p144 = scmp.ne.s32.totalorder %s136, %s138
    %p145 = scmp.eq.s32.totalorder %s18, 3
    %p146 = por %p144, %p145
    %p147 = scmp.ne.s32.totalorder %s138, %s139
    %p148 = scmp.eq.s32.totalorder %s18, 0
    %p149 = por %p147, %p148
    %p150 = scmp.ne.s32.totalorder %s138, %s139
    %p151 = scmp.eq.s32.totalorder %s19, 3
    %p152 = por %p150, %p151
    %p154 = scmp.ne.s32.totalorder %s139, %s153
    %p155 = scmp.eq.s32.totalorder %s19, 0
    %p156 = por %p154, %p155
    %s158 = sadd.s32 %s157, 1
    %p161 = scmp.eq.s32.totalorder %s13, 3
    %p162 = scmp.ne.s32.totalorder %s157, %s159
    %p163 = scmp.eq.s32.totalorder %s13, 0
    %p164 = por %p162, %p163
    %p165 = scmp.ne.s32.totalorder %s157, %s159
    %p166 = scmp.eq.s32.totalorder %s18, 3
    %p167 = por %p165, %p166
    %p168 = scmp.ne.s32.totalorder %s159, %s160
    %p169 = scmp.eq.s32.totalorder %s18, 0
    %p170 = por %p168, %p169
    %p171 = scmp.ne.s32.totalorder %s159, %s160
    %p172 = scmp.eq.s32.totalorder %s19, 3
    %p173 = por %p171, %p172
    %p175 = scmp.ne.s32.totalorder %s160, %s174
    %p176 = scmp.eq.s32.totalorder %s19, 0
    %p177 = por %p175, %p176
    %p178 = scmp.le.s32.totalorder 1, %s13
    %p179 = scmp.lt.s32.totalorder %s13, 5
    %p180 = pnand %p178, %p179
    %p181 = pneg %p180
    // Predicated region
    $region9: #{residual_block_forward.6} parent=5 // pred_check
      _
    $region10: #{residual_block_forward.6} parent=5 // pred_check_branch
      %183 = sbr.rel (%p180) target = $region12
    $region11: #{residual_block_forward.6} parent=5 // pred_region
      %s184 = ssub.s32 %s13, 1
      // Predicated region
      $region13: #{residual_block_forward.6} parent=11 // pred_check
        %p185 = pneg %p60
      $region14: #{residual_block_forward.6} parent=11 // pred_check_branch
        %187 = sbr.rel (%p185) target = $region16
      $region15: #{residual_block_forward.6} parent=11 // pred_region
        _
      $region16: #{residual_block_forward.6} parent=11 // pred_fallthru
        _
      // Predicated region
      $region17: #{residual_block_forward.6} parent=11 // pred_check
        %p188 = pneg %p81
      $region18: #{residual_block_forward.6} parent=11 // pred_check_branch
        %190 = sbr.rel (%p188) target = $region20
      $region19: #{residual_block_forward.6} parent=11 // pred_region
        _
      $region20: #{residual_block_forward.6} parent=11 // pred_fallthru
        _
      // Predicated region
      $region21: #{residual_block_forward.6} parent=11 // pred_check
        %p191 = pneg %p102
      $region22: #{residual_block_forward.6} parent=11 // pred_check_branch
        %193 = sbr.rel (%p191) target = $region24
      $region23: #{residual_block_forward.6} parent=11 // pred_region
        _
      $region24: #{residual_block_forward.6} parent=11 // pred_fallthru
        _
    $region12: #{residual_block_forward.6} parent=5 // pred_fallthru
      _
    %p194 = scmp.lt.s32.totalorder %s13, 4
    // Predicated region
    $region25: #{residual_block_forward.6} parent=5 // pred_check
      %p195 = pneg %p194
    $region26: #{residual_block_forward.6} parent=5 // pred_check_branch
      %197 = sbr.rel (%p195) target = $region28
    $region27: #{residual_block_forward.6} parent=5 // pred_region
      // Predicated region
      $region29: #{residual_block_forward.6} parent=27 // pred_check
        %p198 = pneg %p33
      $region30: #{residual_block_forward.6} parent=27 // pred_check_branch
        %200 = sbr.rel (%p198) target = $region32
      $region31: #{residual_block_forward.6} parent=27 // pred_region
        %s201 = smul.u32 16, %s13
        %p202 = scmp.lt.s32.totalorder %s201, 63
        %s203 = scalar_select %p202, %s201, 63
        %s204 = smul.addr %s203, 4
        %s205 = scalar_lea.vmem %s0, %s204
        %s206 = smul.u32 16, %s13
      $region32: #{residual_block_forward.6} parent=27 // pred_fallthru
        _
    $region28: #{residual_block_forward.6} parent=5 // pred_fallthru
      _
    %p207 = scmp.le.s32.totalorder 1, %s13
    %p208 = scmp.lt.s32.totalorder %s13, 5
    %p209 = pnand %p207, %p208
    %p210 = pneg %p209
    // Predicated region
    $region33: #{residual_block_forward.6} parent=5 // pred_check
      _
    $region34: #{residual_block_forward.6} parent=5 // pred_check_branch
      %212 = sbr.rel (%p209) target = $region36
    $region35: #{residual_block_forward.6} parent=5 // pred_region
      %s213 = ssub.s32 %s13, 1
      %s214 = smul.u32 16, %s18
      %p215 = scmp.lt.s32.totalorder %s214, 63
      %s216 = scalar_select %p215, %s214, 63
      %s217 = smul.addr %s216, 4
      %s218 = scalar_lea.vmem %s0, %s217
      %p219 = pneg %p39
      %p220 = pneg %p36
      %p221 = pneg %p60
      %p222 = pneg %p57
      %p223 = pneg %p81
      %p224 = pneg %p78
      %p225 = pneg %p102
      %p226 = pneg %p99
      %p227 = pneg %p128
      %p228 = pneg %p125
      %s229 = smul.u32 16, %s18
      %p230 = scmp.lt.s32.totalorder %s229, 63
      %s231 = scalar_select %p230, %s229, 63
      %s232 = smul.addr %s231, 4
      %s233 = scalar_lea.vmem %s4, %s232
      %p234 = pneg %p149
      %p235 = pneg %p146
      %p236 = pneg %p170
      %p237 = pneg %p167
      %s238 = smul.u32 16, %s18
      %p239 = scmp.lt.s32.totalorder %s238, 63
      %s240 = scalar_select %p239, %s238, 63
      %s241 = smul.addr %s240, 4
      %s242 = scalar_lea.vmem %s0, %s241
      %s243 = smul.u32 16, %s18
      %s244 = smul.u32 16, %s18
      %p245 = scmp.lt.s32.totalorder %s244, 63
      %s246 = scalar_select %p245, %s244, 63
      %s247 = smul.addr %s246, 4
      %s248 = scalar_lea.vmem %s4, %s247
      %s249 = smul.u32 16, %s18
      %p251 = scmp.eq.s32.totalorder %s18, 0
      // Predicated region
      $region37: #{residual_block_forward.6} parent=35 // pred_check
        %p252 = pneg %p251
      $region38: #{residual_block_forward.6} parent=35 // pred_check_branch
        %254 = sbr.rel (%p252) target = $region40
      $region39: #{residual_block_forward.6} parent=35 // pred_region
        %255 = vst [vmem:[%s5] sm:$0x1] 0.0
        %256 = vst [vmem:[%s6] sm:$0x1] 0.0
      $region40: #{residual_block_forward.6} parent=35 // pred_fallthru
        _
      %v257 = vld [vmem:[%s242] sm:$0xf]
      %v258 = vld [vmem:[%s242 + $0x4] sm:$0xf]
      %v259 = vld [vmem:[%s242 + $0x8] sm:$0xf]
      %v260 = vld [vmem:[%s242 + $0xc] sm:$0xf]
      %v261 = vld [vmem:[%s242 + $0x10] sm:$0xf]
      %v262 = vld [vmem:[%s242 + $0x14] sm:$0xf]
      %v263 = vld [vmem:[%s242 + $0x18] sm:$0xf]
      %v264 = vld [vmem:[%s242 + $0x1c] sm:$0xf]
      %v265 = vld [vmem:[%s242 + $0x20] sm:$0xf]
      %v266 = vld [vmem:[%s242 + $0x24] sm:$0xf]
      %v267 = vld [vmem:[%s242 + $0x28] sm:$0xf]
      %v268 = vld [vmem:[%s242 + $0x2c] sm:$0xf]
      %v269 = vld [vmem:[%s242 + $0x30] sm:$0xf]
      %v270 = vld [vmem:[%s242 + $0x34] sm:$0xf]
      %v271 = vld [vmem:[%s242 + $0x38] sm:$0xf]
      %v272 = vld [vmem:[%s242 + $0x3c] sm:$0xf]
      %v273 = vunpack.c.l.bf16 %v257
      %v274 = vunpack.c.l.bf16 %v258
      %v275 = vunpack.c.l.bf16 %v259
      %v276 = vunpack.c.l.bf16 %v260
      %v277 = vunpack.c.l.bf16 %v261
      %v278 = vunpack.c.l.bf16 %v262
      %v279 = vunpack.c.l.bf16 %v263
      %v280 = vunpack.c.l.bf16 %v264
      %v281 = vunpack.c.l.bf16 %v265
      %v282 = vunpack.c.l.bf16 %v266
      %v283 = vunpack.c.l.bf16 %v267
      %v284 = vunpack.c.l.bf16 %v268
      %v285 = vunpack.c.l.bf16 %v269
      %v286 = vunpack.c.l.bf16 %v270
      %v287 = vunpack.c.l.bf16 %v271
      %v288 = vunpack.c.l.bf16 %v272
      %v289 = vld [vmem:[%s1] sm:$0x1]
      %v291 = vlaneseq
      %v292 = vshrl.u32 %v291, 7
      %v293 = vsub.s32 0, %v292
      %v294 = vrot.slane %v289, %v293
      %v296 = vmul.f32 %v273, %v294
      %v297 = vmul.f32 %v274, %v294
      %v298 = vmul.f32 %v275, %v294
      %v299 = vmul.f32 %v276, %v294
      %v300 = vmul.f32 %v277, %v294
      %v301 = vmul.f32 %v278, %v294
      %v302 = vmul.f32 %v279, %v294
      %v303 = vmul.f32 %v280, %v294
      %v304 = vmul.f32 %v281, %v294
      %v305 = vmul.f32 %v282, %v294
      %v306 = vmul.f32 %v283, %v294
      %v307 = vmul.f32 %v284, %v294
      %v308 = vmul.f32 %v285, %v294
      %v309 = vmul.f32 %v286, %v294
      %v310 = vmul.f32 %v287, %v294
      %v311 = vmul.f32 %v288, %v294
      %v312 = vld [vmem:[%s2] sm:$0x1]
      %v314 = vlaneseq
      %v315 = vshrl.u32 %v314, 7
      %v316 = vsub.s32 0, %v315
      %v317 = vrot.slane %v312, %v316
      %v319 = vadd.f32 %v296, %v317
      %v320 = vadd.f32 %v297, %v317
      %v321 = vadd.f32 %v298, %v317
      %v322 = vadd.f32 %v299, %v317
      %v323 = vadd.f32 %v300, %v317
      %v324 = vadd.f32 %v301, %v317
      %v325 = vadd.f32 %v302, %v317
      %v326 = vadd.f32 %v303, %v317
      %v327 = vadd.f32 %v304, %v317
      %v328 = vadd.f32 %v305, %v317
      %v329 = vadd.f32 %v306, %v317
      %v330 = vadd.f32 %v307, %v317
      %v331 = vadd.f32 %v308, %v317
      %v332 = vadd.f32 %v309, %v317
      %v333 = vadd.f32 %v310, %v317
      %v334 = vadd.f32 %v311, %v317
      %v335 = vmax.f32 %v319, 0.0
      %v336 = vmax.f32 %v320, 0.0
      %v337 = vmax.f32 %v321, 0.0
      %v338 = vmax.f32 %v322, 0.0
      %v339 = vmax.f32 %v323, 0.0
      %v340 = vmax.f32 %v324, 0.0
      %v341 = vmax.f32 %v325, 0.0
      %v342 = vmax.f32 %v326, 0.0
      %v343 = vmax.f32 %v327, 0.0
      %v344 = vmax.f32 %v328, 0.0
      %v345 = vmax.f32 %v329, 0.0
      %v346 = vmax.f32 %v330, 0.0
      %v347 = vmax.f32 %v331, 0.0
      %v348 = vmax.f32 %v332, 0.0
      %v349 = vmax.f32 %v333, 0.0
      %v350 = vmax.f32 %v334, 0.0
      %v351 = vpack.c.bf16 %v336, %v335
      %v352 = vpack.c.bf16 %v338, %v337
      %v353 = vpack.c.bf16 %v340, %v339
      %v354 = vpack.c.bf16 %v342, %v341
      %v355 = vpack.c.bf16 %v344, %v343
      %v356 = vpack.c.bf16 %v346, %v345
      %v357 = vpack.c.bf16 %v348, %v347
      %v358 = vpack.c.bf16 %v350, %v349
      %v359 = vld [vmem:[%s3] sm:$0xf]
      %v360 = vld [vmem:[%s3 + $0x4] sm:$0xf]
      %v361 = vld [vmem:[%s3 + $0x8] sm:$0xf]
      %v362 = vld [vmem:[%s3 + $0xc] sm:$0xf]
      %v363 = vld [vmem:[%s3 + $0x10] sm:$0xf]
      %v364 = vld [vmem:[%s3 + $0x14] sm:$0xf]
      %v365 = vld [vmem:[%s3 + $0x18] sm:$0xf]
      %v366 = vld [vmem:[%s3 + $0x1c] sm:$0xf]
      %v367 = vld [vmem:[%s3 + $0x20] sm:$0xf]
      %v368 = vld [vmem:[%s3 + $0x24] sm:$0xf]
      %v369 = vld [vmem:[%s3 + $0x28] sm:$0xf]
      %v370 = vld [vmem:[%s3 + $0x2c] sm:$0xf]
      %v371 = vld [vmem:[%s3 + $0x30] sm:$0xf]
      %v372 = vld [vmem:[%s3 + $0x34] sm:$0xf]
      %v373 = vld [vmem:[%s3 + $0x38] sm:$0xf]
      %v374 = vld [vmem:[%s3 + $0x3c] sm:$0xf]
      %v391 = vunpack.c.l.b16 %v359
      %v392 = vunpack.c.l.b16 %v360
      %v393 = vunpack.c.l.b16 %v361
      %v394 = vunpack.c.l.b16 %v362
      %v395 = vunpack.c.l.b16 %v363
      %v396 = vunpack.c.l.b16 %v364
      %v397 = vunpack.c.l.b16 %v365
      %v398 = vunpack.c.l.b16 %v366
      %v399 = vunpack.c.l.b16 %v367
      %v400 = vunpack.c.l.b16 %v368
      %v401 = vunpack.c.l.b16 %v369
      %v402 = vunpack.c.l.b16 %v370
      %v403 = vunpack.c.l.b16 %v371
      %v404 = vunpack.c.l.b16 %v372
      %v405 = vunpack.c.l.b16 %v373
      %v406 = vunpack.c.l.b16 %v374
      %v407 = vpack.c.b16 %v392, %v391
      %v408 = vpack.c.b16 %v394, %v393
      %v409 = vpack.c.b16 %v396, %v395
      %v410 = vpack.c.b16 %v398, %v397
      %v411 = vpack.c.b16 %v400, %v399
      %v412 = vpack.c.b16 %v402, %v401
      %v413 = vpack.c.b16 %v404, %v403
      %v414 = vpack.c.b16 %v406, %v405
      %423 = vmatprep.subr.bf16.mxu0 0
      %424 = vmatpush1.bf16.msra.mxu0 %v414
      %425 = vmatprep.subr.bf16.mxu0 0
      %426 = vmatpush1.bf16.msra.mxu0 %v413
      %427 = vmatprep.subr.bf16.mxu0 0
      %428 = vmatpush1.bf16.msra.mxu0 %v412
      %429 = vmatprep.subr.bf16.mxu0 0
      %430 = vmatpush1.bf16.msra.mxu0 %v411
      %431 = vmatprep.subr.bf16.mxu0 0
      %432 = vmatpush1.bf16.msra.mxu0 %v410
      %433 = vmatprep.subr.bf16.mxu0 0
      %434 = vmatpush1.bf16.msra.mxu0 %v409
      %435 = vmatprep.subr.bf16.mxu0 0
      %436 = vmatpush1.bf16.msra.mxu0 %v408
      %437 = vmatprep.subr.bf16.mxu0 0
      %438 = vmatpush1.bf16.msra.mxu0 %v407
      %439 = vmatprep.subr.bf16.mxu0 0
      %440 = vmatpush2.bf16.msra.mxu0 0
      %441 = vmatprep.subr.bf16.mxu0 0
      %442 = vmatpush2.bf16.msra.mxu0 0
      %443 = vmatprep.subr.bf16.mxu0 0
      %444 = vmatpush2.bf16.msra.mxu0 0
      %445 = vmatprep.subr.bf16.mxu0 0
      %446 = vmatpush2.bf16.msra.mxu0 0
      %447 = vmatprep.subr.bf16.mxu0 0
      %448 = vmatpush2.bf16.msra.mxu0 0
      %449 = vmatprep.subr.bf16.mxu0 0
      %450 = vmatpush2.bf16.msra.mxu0 0
      %451 = vmatprep.subr.bf16.mxu0 0
      %452 = vmatpush2.bf16.msra.mxu0 0
      %453 = vmatprep.subr.bf16.mxu0 0
      %454 = vmatpush2.bf16.msra.mxu0 0
      %455 = vmatprep.mubr.bf16.mxu0 0
      %456 = vmatmul.mubr.bf16.gmra.mxu0 %v351
      %v457 = vpop.f32.mrf.mxu0
      %v458 = vadd.f32 0.0, %v457
      %v459 = vpop.f32.mrf.mxu0
      %v460 = vpop.f32.mrf.mxu0
      %v461 = vadd.f32 0.0, %v460
      %v462 = vpop.f32.mrf.mxu0
      %463 = vmatprep.mubr.bf16.mxu0 0
      %464 = vmatmul.mubr.bf16.gmra.mxu0 %v352
      %v465 = vpop.f32.mrf.mxu0
      %v466 = vadd.f32 0.0, %v465
      %v467 = vpop.f32.mrf.mxu0
      %v468 = vpop.f32.mrf.mxu0
      %v469 = vadd.f32 0.0, %v468
      %v470 = vpop.f32.mrf.mxu0
      %471 = vmatprep.mubr.bf16.mxu0 0
      %472 = vmatmul.mubr.bf16.gmra.mxu0 %v353
      %v473 = vpop.f32.mrf.mxu0
      %v474 = vadd.f32 0.0, %v473
      %v475 = vpop.f32.mrf.mxu0
      %v476 = vpop.f32.mrf.mxu0
      %v477 = vadd.f32 0.0, %v476
      %v478 = vpop.f32.mrf.mxu0
      %479 = vmatprep.mubr.bf16.mxu0 0
      %480 = vmatmul.mubr.bf16.gmra.mxu0 %v354
      %v481 = vpop.f32.mrf.mxu0
      %v482 = vadd.f32 0.0, %v481
      %v483 = vpop.f32.mrf.mxu0
      %v484 = vpop.f32.mrf.mxu0
      %v485 = vadd.f32 0.0, %v484
      %v486 = vpop.f32.mrf.mxu0
      %487 = vmatprep.mubr.bf16.mxu0 0
      %488 = vmatmul.mubr.bf16.gmra.mxu0 %v355
      %v489 = vpop.f32.mrf.mxu0
      %v490 = vadd.f32 0.0, %v489
      %v491 = vpop.f32.mrf.mxu0
      %v492 = vpop.f32.mrf.mxu0
      %v493 = vadd.f32 0.0, %v492
      %v494 = vpop.f32.mrf.mxu0
      %495 = vmatprep.mubr.bf16.mxu0 0
      %496 = vmatmul.mubr.bf16.gmra.mxu0 %v356
      %v497 = vpop.f32.mrf.mxu0
      %v498 = vadd.f32 0.0, %v497
      %v499 = vpop.f32.mrf.mxu0
      %v500 = vpop.f32.mrf.mxu0
      %v501 = vadd.f32 0.0, %v500
      %v502 = vpop.f32.mrf.mxu0
      %503 = vmatprep.mubr.bf16.mxu0 0
      %504 = vmatmul.mubr.bf16.gmra.mxu0 %v357
      %v505 = vpop.f32.mrf.mxu0
      %v506 = vadd.f32 0.0, %v505
      %v507 = vpop.f32.mrf.mxu0
      %v508 = vpop.f32.mrf.mxu0
      %v509 = vadd.f32 0.0, %v508
      %v510 = vpop.f32.mrf.mxu0
      %511 = vmatprep.mubr.bf16.mxu0 0
      %512 = vmatmul.mubr.bf16.gmra.mxu0 %v358
      %v513 = vpop.f32.mrf.mxu0
      %v514 = vadd.f32 0.0, %v513
      %v515 = vpop.f32.mrf.mxu0
      %v516 = vpop.f32.mrf.mxu0
      %v517 = vadd.f32 0.0, %v516
      %v518 = vpop.f32.mrf.mxu0
      %519 = vdwg.mxu0
      %v520 = vpack.c.bf16 %v461, %v458
      %v521 = vpack.c.bf16 %v469, %v466
      %v522 = vpack.c.bf16 %v477, %v474
      %v523 = vpack.c.bf16 %v485, %v482
      %v524 = vpack.c.bf16 %v493, %v490
      %v525 = vpack.c.bf16 %v501, %v498
      %v526 = vpack.c.bf16 %v509, %v506
      %v527 = vpack.c.bf16 %v517, %v514
      %v536 = vunpack.c.l.b16 %v520
      %v537 = vunpack.c.h.b16 %v520
      %v538 = vunpack.c.l.b16 %v521
      %v539 = vunpack.c.h.b16 %v521
      %v540 = vunpack.c.l.b16 %v522
      %v541 = vunpack.c.h.b16 %v522
      %v542 = vunpack.c.l.b16 %v523
      %v543 = vunpack.c.h.b16 %v523
      %v544 = vunpack.c.l.b16 %v524
      %v545 = vunpack.c.h.b16 %v524
      %v546 = vunpack.c.l.b16 %v525
      %v547 = vunpack.c.h.b16 %v525
      %v548 = vunpack.c.l.b16 %v526
      %v549 = vunpack.c.h.b16 %v526
      %v550 = vunpack.c.l.b16 %v527
      %v551 = vunpack.c.h.b16 %v527
      %v552 = vpack.c.b16 %v536, %v536
      %v553 = vpack.c.b16 %v537, %v537
      %v554 = vpack.c.b16 %v538, %v538
      %v555 = vpack.c.b16 %v539, %v539
      %v556 = vpack.c.b16 %v540, %v540
      %v557 = vpack.c.b16 %v541, %v541
      %v558 = vpack.c.b16 %v542, %v542
      %v559 = vpack.c.b16 %v543, %v543
      %v560 = vpack.c.b16 %v544, %v544
      %v561 = vpack.c.b16 %v545, %v545
      %v562 = vpack.c.b16 %v546, %v546
      %v563 = vpack.c.b16 %v547, %v547
      %v564 = vpack.c.b16 %v548, %v548
      %v565 = vpack.c.b16 %v549, %v549
      %v566 = vpack.c.b16 %v550, %v550
      %v567 = vpack.c.b16 %v551, %v551
      %584 = vst [vmem:[%s248] sm:$0xf] %v552
      %585 = vst [vmem:[%s248 + $0x4] sm:$0xf] %v553
      %586 = vst [vmem:[%s248 + $0x8] sm:$0xf] %v554
      %587 = vst [vmem:[%s248 + $0xc] sm:$0xf] %v555
      %588 = vst [vmem:[%s248 + $0x10] sm:$0xf] %v556
      %589 = vst [vmem:[%s248 + $0x14] sm:$0xf] %v557
      %590 = vst [vmem:[%s248 + $0x18] sm:$0xf] %v558
      %591 = vst [vmem:[%s248 + $0x1c] sm:$0xf] %v559
      %592 = vst [vmem:[%s248 + $0x20] sm:$0xf] %v560
      %593 = vst [vmem:[%s248 + $0x24] sm:$0xf] %v561
      %594 = vst [vmem:[%s248 + $0x28] sm:$0xf] %v562
      %595 = vst [vmem:[%s248 + $0x2c] sm:$0xf] %v563
      %596 = vst [vmem:[%s248 + $0x30] sm:$0xf] %v564
      %597 = vst [vmem:[%s248 + $0x34] sm:$0xf] %v565
      %598 = vst [vmem:[%s248 + $0x38] sm:$0xf] %v566
      %599 = vst [vmem:[%s248 + $0x3c] sm:$0xf] %v567
      %v600 = vld [vmem:[%s5] sm:$0x1]
      %v601 = vadd.f32 %v458, %v461
      %v602 = vadd.f32 %v601, %v466
      %v603 = vadd.f32 %v602, %v469
      %v604 = vadd.f32 %v603, %v474
      %v605 = vadd.f32 %v604, %v477
      %v606 = vadd.f32 %v605, %v482
      %v607 = vadd.f32 %v606, %v485
      %v608 = vadd.f32 %v607, %v490
      %v609 = vadd.f32 %v608, %v493
      %v610 = vadd.f32 %v609, %v498
      %v611 = vadd.f32 %v610, %v501
      %v612 = vadd.f32 %v611, %v506
      %v613 = vadd.f32 %v612, %v509
      %v614 = vadd.f32 %v613, %v514
      %v615 = vadd.f32 %v614, %v517
      %v616 = vrot.slane %v615, 4
      %v617 = vadd.f32 %v615, %v616
      %v618 = vrot.slane %v617, 2
      %v619 = vadd.f32 %v617, %v618
      %v620 = vrot.slane %v619, 1
      %v621 = vadd.f32 %v619, %v620
      %v622 = vadd.f32 %v600, %v621
      %623 = vst [vmem:[%s5] sm:$0x1] %v622
      %v624 = vld [vmem:[%s6] sm:$0x1]
      %v625 = vmul.f32 %v458, %v458
      %v626 = vmul.f32 %v461, %v461
      %v627 = vmul.f32 %v466, %v466
      %v628 = vmul.f32 %v469, %v469
      %v629 = vmul.f32 %v474, %v474
      %v630 = vmul.f32 %v477, %v477
      %v631 = vmul.f32 %v482, %v482
      %v632 = vmul.f32 %v485, %v485
      %v633 = vmul.f32 %v490, %v490
      %v634 = vmul.f32 %v493, %v493
      %v635 = vmul.f32 %v498, %v498
      %v636 = vmul.f32 %v501, %v501
      %v637 = vmul.f32 %v506, %v506
      %v638 = vmul.f32 %v509, %v509
      %v639 = vmul.f32 %v514, %v514
      %v640 = vmul.f32 %v517, %v517
      %v641 = vadd.f32 %v625, %v626
      %v642 = vadd.f32 %v641, %v627
      %v643 = vadd.f32 %v642, %v628
      %v644 = vadd.f32 %v643, %v629
      %v645 = vadd.f32 %v644, %v630
      %v646 = vadd.f32 %v645, %v631
      %v647 = vadd.f32 %v646, %v632
      %v648 = vadd.f32 %v647, %v633
      %v649 = vadd.f32 %v648, %v634
      %v650 = vadd.f32 %v649, %v635
      %v651 = vadd.f32 %v650, %v636
      %v652 = vadd.f32 %v651, %v637
      %v653 = vadd.f32 %v652, %v638
      %v654 = vadd.f32 %v653, %v639
      %v655 = vadd.f32 %v654, %v640
      %v656 = vrot.slane %v655, 4
      %v657 = vadd.f32 %v655, %v656
      %v658 = vrot.slane %v657, 2
      %v659 = vadd.f32 %v657, %v658
      %v660 = vrot.slane %v659, 1
      %v661 = vadd.f32 %v659, %v660
      %v662 = vadd.f32 %v624, %v661
      %663 = vst [vmem:[%s6] sm:$0x1] %v662
      %s664 = smul.u32 16, %s18
      %p665 = scmp.lt.s32.totalorder %s664, 63
      %s666 = scalar_select %p665, %s664, 63
      %s667 = smul.addr %s666, 4
      %s668 = scalar_lea.vmem %s4, %s667
      // Predicated region
      $region41: #{residual_block_forward.6} parent=35 // pred_check
        %p669 = pneg %p125
      $region42: #{residual_block_forward.6} parent=35 // pred_check_branch
        %671 = sbr.rel (%p669) target = $region44
      $region43: #{residual_block_forward.6} parent=35 // pred_region
        %s672 = smul.u32 16, %s18
      $region44: #{residual_block_forward.6} parent=35 // pred_fallthru
        _
      // Predicated region
      $region45: #{residual_block_forward.6} parent=35 // pred_check
        %p673 = pneg %p146
      $region46: #{residual_block_forward.6} parent=35 // pred_check_branch
        %675 = sbr.rel (%p673) target = $region48
      $region47: #{residual_block_forward.6} parent=35 // pred_region
        _
      $region48: #{residual_block_forward.6} parent=35 // pred_fallthru
        _
      // Predicated region
      $region49: #{residual_block_forward.6} parent=35 // pred_check
        %p676 = pneg %p167
      $region50: #{residual_block_forward.6} parent=35 // pred_check_branch
        %678 = sbr.rel (%p676) target = $region52
      $region51: #{residual_block_forward.6} parent=35 // pred_region
        _
      $region52: #{residual_block_forward.6} parent=35 // pred_fallthru
        _
      // Predicated region
      $region53: #{residual_block_forward.6} parent=35 // pred_check
        %p679 = pneg %p146
      $region54: #{residual_block_forward.6} parent=35 // pred_check_branch
        %681 = sbr.rel (%p679) target = $region56
      $region55: #{residual_block_forward.6} parent=35 // pred_region
        _
      $region56: #{residual_block_forward.6} parent=35 // pred_fallthru
        _
      // Predicated region
      $region57: #{residual_block_forward.6} parent=35 // pred_check
        %p682 = pneg %p167
      $region58: #{residual_block_forward.6} parent=35 // pred_check_branch
        %684 = sbr.rel (%p682) target = $region60
      $region59: #{residual_block_forward.6} parent=35 // pred_region
        _
      $region60: #{residual_block_forward.6} parent=35 // pred_fallthru
        _
    $region36: #{residual_block_forward.6} parent=5 // pred_fallthru
      _
    %p685 = scmp.le.s32.totalorder 2, %s13
    // Predicated region
    $region61: #{residual_block_forward.6} parent=5 // pred_check
      %p686 = pneg %p685
    $region62: #{residual_block_forward.6} parent=5 // pred_check_branch
      %688 = sbr.rel (%p686) target = $region64
    $region63: #{residual_block_forward.6} parent=5 // pred_region
      %s689 = ssub.s32 %s13, 2
      // Predicated region
      $region65: #{residual_block_forward.6} parent=63 // pred_check
        %p690 = pneg %p131
      $region66: #{residual_block_forward.6} parent=63 // pred_check_branch
        %692 = sbr.rel (%p690) target = $region68
      $region67: #{residual_block_forward.6} parent=63 // pred_region
        %s693 = smul.u32 16, %s19
        %p694 = scmp.lt.s32.totalorder %s693, 63
        %s695 = scalar_select %p694, %s693, 63
        %s696 = smul.addr %s695, 4
        %s697 = scalar_lea.vmem %s4, %s696
      $region68: #{residual_block_forward.6} parent=63 // pred_fallthru
        _
    $region64: #{residual_block_forward.6} parent=5 // pred_fallthru
      _
  $region6: #{residual_block_forward.6} parent=0 // loop_footer
    %s17 = sadd.s32 1, %s13
  $region7: #{residual_block_forward.6} parent=0 // loop_footer_branch
    %12 = sbr.rel target = $region3
  $region8: #{residual_block_forward.6} parent=0 // loop_exit
    _

// kernel: residual_block_forward.4
$region0: #{residual_block_forward.4}
  #allocation0 [shape = 'u32[]', space=smem, size = 0x4, offset = 0x4, fixed_abs, tag = 'smem constant byte address 0x4 - core index']
  #allocation1 [shape = 'u32[144,128]{1,0:T(1,128)}', space=vmem, size = 0x12000, scoped, tag = 'internal scratch']
  %s0 = inlined_call_operand.vmem [shape: bf16[512,128], index: 0, kind: input, shape index: {}]
  %s1 = inlined_call_operand.vmem [shape: bf16[128,128], index: 1, kind: input, shape index: {}]
  %s2 = inlined_call_operand.vmem [shape: bf16[128,128], index: 2, kind: input, shape index: {}]
  %s3 = inlined_call_operand.vmem [shape: bf16[512,128], index: 3, kind: output, shape index: {0}]
  %s4 = inlined_call_operand.vmem [shape: f32[1,128], index: 4, kind: output, shape index: {1}]
  %s5 = inlined_call_operand.vmem [shape: f32[1,128], index: 5, kind: output, shape index: {2}]
  %s6 = inlined_call_operand.vmem [shape: bf16[512,128], index: 6, kind: output, shape index: {3}]
  %s7 = inlined_call_operand.vmem [shape: f32[1,128], index: 7, kind: output, shape index: {4}]
  %s8 = inlined_call_operand.vmem [shape: f32[1,128], index: 8, kind: output, shape index: {5}]
  %9 = xla_tuple %s3, %s4, %s5, %s6, %s7, %s8
  %s10 = sld [smem:[#allocation0]]
  $region89: #{residual_block_forward.4} parent=0
    _
  %s12 = ssub.s32 1, %s10
  %s13 = scalar_select 0, %s12, %s10
  loop: start=0, step=1, limit=6
  $region2: #{residual_block_forward.4} parent=0 // loop_pre_header
    _
  $region3: #{residual_block_forward.4} parent=0 // loop_header
    %s15 = sphi 0, %s19
    %p16 = scmp.ge.s32.totalorder %s15, 6
    %s25 = sphi 0, %s27
    %s28 = sphi 0, %s25
    %s29 = sphi 0, %s28
    %s45 = sphi 0, %s29
    %s49 = sphi 0, %s49
    %s51 = sphi 0, %s49
    %s52 = sphi 0, %s51
    %s66 = sphi 0, %s52
    %s70 = sphi 0, %s70
    %s72 = sphi 0, %s70
    %s73 = sphi 0, %s72
    %s87 = sphi 0, %s73
    %s93 = sphi 0, %s95
    %s96 = sphi 0, %s93
    %s97 = sphi 0, %s96
    %s113 = sphi 0, %s97
    %s117 = sphi 0, %s117
    %s119 = sphi 0, %s117
    %s120 = sphi 0, %s119
    %s134 = sphi 0, %s120
    %s138 = sphi 0, %s138
    %s140 = sphi 0, %s138
    %s141 = sphi 0, %s140
    %s155 = sphi 0, %s141
    %s161 = sphi 0, %s163
    %s164 = sphi 0, %s161
    %s165 = sphi 0, %s164
    %s181 = sphi 0, %s165
    %s185 = sphi 0, %s185
    %s187 = sphi 0, %s185
    %s188 = sphi 0, %s187
    %s202 = sphi 0, %s188
    %s206 = sphi 0, %s206
    %s208 = sphi 0, %s206
    %s209 = sphi 0, %s208
    %s223 = sphi 0, %s209
  $region4: #{residual_block_forward.4} parent=0 // loop_header_branch
    %18 = sbr.rel (%p16) target = $region8
  $region5: #{residual_block_forward.4} parent=0 // loop_body
    %s20 = ssub.s32 %s15, 1
    %s21 = ssub.s32 %s15, 2
    %s22 = sadd.s32 %s15, 1
    %s23 = ssub.s32 %s15, %s22
    %p24 = scmp.eq.s32.totalorder %s23, 0
    %s26 = sadd.s32 %s25, 1
    %s27 = scalar_select %p24, %s25, %s26
    %p30 = pneg %p24
    %p31 = scmp.eq.s32.totalorder %s15, 3
    %p32 = por %p30, %p31
    %p33 = scmp.ne.s32.totalorder %s25, %s28
    %p34 = scmp.eq.s32.totalorder %s15, 0
    %p35 = por %p33, %p34
    %p36 = scmp.ne.s32.totalorder %s25, %s28
    %p37 = scmp.eq.s32.totalorder %s20, 3
    %p38 = por %p36, %p37
    %p39 = scmp.ne.s32.totalorder %s28, %s29
    %p40 = scmp.eq.s32.totalorder %s20, 0
    %p41 = por %p39, %p40
    %p42 = scmp.ne.s32.totalorder %s28, %s29
    %p43 = scmp.eq.s32.totalorder %s21, 3
    %p44 = por %p42, %p43
    %p46 = scmp.ne.s32.totalorder %s29, %s45
    %p47 = scmp.eq.s32.totalorder %s21, 0
    %p48 = por %p46, %p47
    %s50 = sadd.s32 %s49, 1
    %p53 = scmp.eq.s32.totalorder %s15, 3
    %p54 = scmp.ne.s32.totalorder %s49, %s51
    %p55 = scmp.eq.s32.totalorder %s15, 0
    %p56 = por %p54, %p55
    %p57 = scmp.ne.s32.totalorder %s49, %s51
    %p58 = scmp.eq.s32.totalorder %s20, 3
    %p59 = por %p57, %p58
    %p60 = scmp.ne.s32.totalorder %s51, %s52
    %p61 = scmp.eq.s32.totalorder %s20, 0
    %p62 = por %p60, %p61
    %p63 = scmp.ne.s32.totalorder %s51, %s52
    %p64 = scmp.eq.s32.totalorder %s21, 3
    %p65 = por %p63, %p64
    %p67 = scmp.ne.s32.totalorder %s52, %s66
    %p68 = scmp.eq.s32.totalorder %s21, 0
    %p69 = por %p67, %p68
    %s71 = sadd.s32 %s70, 1
    %p74 = scmp.eq.s32.totalorder %s15, 3
    %p75 = scmp.ne.s32.totalorder %s70, %s72
    %p76 = scmp.eq.s32.totalorder %s15, 0
    %p77 = por %p75, %p76
    %p78 = scmp.ne.s32.totalorder %s70, %s72
    %p79 = scmp.eq.s32.totalorder %s20, 3
    %p80 = por %p78, %p79
    %p81 = scmp.ne.s32.totalorder %s72, %s73
    %p82 = scmp.eq.s32.totalorder %s20, 0
    %p83 = por %p81, %p82
    %p84 = scmp.ne.s32.totalorder %s72, %s73
    %p85 = scmp.eq.s32.totalorder %s21, 3
    %p86 = por %p84, %p85
    %p88 = scmp.ne.s32.totalorder %s73, %s87
    %p89 = scmp.eq.s32.totalorder %s21, 0
    %p90 = por %p88, %p89
    %s91 = ssub.s32 %s15, %s22
    %p92 = scmp.eq.s32.totalorder %s91, 0
    %s94 = sadd.s32 %s93, 1
    %s95 = scalar_select %p92, %s93, %s94
    %p98 = pneg %p92
    %p99 = scmp.eq.s32.totalorder %s15, 3
    %p100 = por %p98, %p99
    %p101 = scmp.ne.s32.totalorder %s93, %s96
    %p102 = scmp.eq.s32.totalorder %s15, 0
    %p103 = por %p101, %p102
    %p104 = scmp.ne.s32.totalorder %s93, %s96
    %p105 = scmp.eq.s32.totalorder %s20, 3
    %p106 = por %p104, %p105
    %p107 = scmp.ne.s32.totalorder %s96, %s97
    %p108 = scmp.eq.s32.totalorder %s20, 0
    %p109 = por %p107, %p108
    %p110 = scmp.ne.s32.totalorder %s96, %s97
    %p111 = scmp.eq.s32.totalorder %s21, 3
    %p112 = por %p110, %p111
    %p114 = scmp.ne.s32.totalorder %s97, %s113
    %p115 = scmp.eq.s32.totalorder %s21, 0
    %p116 = por %p114, %p115
    %s118 = sadd.s32 %s117, 1
    %p121 = scmp.eq.s32.totalorder %s15, 3
    %p122 = scmp.ne.s32.totalorder %s117, %s119
    %p123 = scmp.eq.s32.totalorder %s15, 0
    %p124 = por %p122, %p123
    %p125 = scmp.ne.s32.totalorder %s117, %s119
    %p126 = scmp.eq.s32.totalorder %s20, 3
    %p127 = por %p125, %p126
    %p128 = scmp.ne.s32.totalorder %s119, %s120
    %p129 = scmp.eq.s32.totalorder %s20, 0
    %p130 = por %p128, %p129
    %p131 = scmp.ne.s32.totalorder %s119, %s120
    %p132 = scmp.eq.s32.totalorder %s21, 3
    %p133 = por %p131, %p132
    %p135 = scmp.ne.s32.totalorder %s120, %s134
    %p136 = scmp.eq.s32.totalorder %s21, 0
    %p137 = por %p135, %p136
    %s139 = sadd.s32 %s138, 1
    %p142 = scmp.eq.s32.totalorder %s15, 3
    %p143 = scmp.ne.s32.totalorder %s138, %s140
    %p144 = scmp.eq.s32.totalorder %s15, 0
    %p145 = por %p143, %p144
    %p146 = scmp.ne.s32.totalorder %s138, %s140
    %p147 = scmp.eq.s32.totalorder %s20, 3
    %p148 = por %p146, %p147
    %p149 = scmp.ne.s32.totalorder %s140, %s141
    %p150 = scmp.eq.s32.totalorder %s20, 0
    %p151 = por %p149, %p150
    %p152 = scmp.ne.s32.totalorder %s140, %s141
    %p153 = scmp.eq.s32.totalorder %s21, 3
    %p154 = por %p152, %p153
    %p156 = scmp.ne.s32.totalorder %s141, %s155
    %p157 = scmp.eq.s32.totalorder %s21, 0
    %p158 = por %p156, %p157
    %s159 = ssub.s32 %s15, %s22
    %p160 = scmp.eq.s32.totalorder %s159, 0
    %s162 = sadd.s32 %s161, 1
    %s163 = scalar_select %p160, %s161, %s162
    %p166 = pneg %p160
    %p167 = scmp.eq.s32.totalorder %s15, 3
    %p168 = por %p166, %p167
    %p169 = scmp.ne.s32.totalorder %s161, %s164
    %p170 = scmp.eq.s32.totalorder %s15, 0
    %p171 = por %p169, %p170
    %p172 = scmp.ne.s32.totalorder %s161, %s164
    %p173 = scmp.eq.s32.totalorder %s20, 3
    %p174 = por %p172, %p173
    %p175 = scmp.ne.s32.totalorder %s164, %s165
    %p176 = scmp.eq.s32.totalorder %s20, 0
    %p177 = por %p175, %p176
    %p178 = scmp.ne.s32.totalorder %s164, %s165
    %p179 = scmp.eq.s32.totalorder %s21, 3
    %p180 = por %p178, %p179
    %p182 = scmp.ne.s32.totalorder %s165, %s181
    %p183 = scmp.eq.s32.totalorder %s21, 0
    %p184 = por %p182, %p183
    %s186 = sadd.s32 %s185, 1
    %p189 = scmp.eq.s32.totalorder %s15, 3
    %p190 = scmp.ne.s32.totalorder %s185, %s187
    %p191 = scmp.eq.s32.totalorder %s15, 0
    %p192 = por %p190, %p191
    %p193 = scmp.ne.s32.totalorder %s185, %s187
    %p194 = scmp.eq.s32.totalorder %s20, 3
    %p195 = por %p193, %p194
    %p196 = scmp.ne.s32.totalorder %s187, %s188
    %p197 = scmp.eq.s32.totalorder %s20, 0
    %p198 = por %p196, %p197
    %p199 = scmp.ne.s32.totalorder %s187, %s188
    %p200 = scmp.eq.s32.totalorder %s21, 3
    %p201 = por %p199, %p200
    %p203 = scmp.ne.s32.totalorder %s188, %s202
    %p204 = scmp.eq.s32.totalorder %s21, 0
    %p205 = por %p203, %p204
    %s207 = sadd.s32 %s206, 1
    %p210 = scmp.eq.s32.totalorder %s15, 3
    %p211 = scmp.ne.s32.totalorder %s206, %s208
    %p212 = scmp.eq.s32.totalorder %s15, 0
    %p213 = por %p211, %p212
    %p214 = scmp.ne.s32.totalorder %s206, %s208
    %p215 = scmp.eq.s32.totalorder %s20, 3
    %p216 = por %p214, %p215
    %p217 = scmp.ne.s32.totalorder %s208, %s209
    %p218 = scmp.eq.s32.totalorder %s20, 0
    %p219 = por %p217, %p218
    %p220 = scmp.ne.s32.totalorder %s208, %s209
    %p221 = scmp.eq.s32.totalorder %s21, 3
    %p222 = por %p220, %p221
    %p224 = scmp.ne.s32.totalorder %s209, %s223
    %p225 = scmp.eq.s32.totalorder %s21, 0
    %p226 = por %p224, %p225
    %p227 = scmp.le.s32.totalorder 1, %s15
    %p228 = scmp.lt.s32.totalorder %s15, 5
    %p229 = pnand %p227, %p228
    %p230 = pneg %p229
    // Predicated region
    $region9: #{residual_block_forward.4} parent=5 // pred_check
      _
    $region10: #{residual_block_forward.4} parent=5 // pred_check_branch
      %232 = sbr.rel (%p229) target = $region12
    $region11: #{residual_block_forward.4} parent=5 // pred_region
      %s233 = ssub.s32 %s15, 1
      // Predicated region
      $region13: #{residual_block_forward.4} parent=11 // pred_check
        %p234 = pneg %p62
      $region14: #{residual_block_forward.4} parent=11 // pred_check_branch
        %236 = sbr.rel (%p234) target = $region16
      $region15: #{residual_block_forward.4} parent=11 // pred_region
        _
      $region16: #{residual_block_forward.4} parent=11 // pred_fallthru
        _
      // Predicated region
      $region17: #{residual_block_forward.4} parent=11 // pred_check
        %p237 = pneg %p83
      $region18: #{residual_block_forward.4} parent=11 // pred_check_branch
        %239 = sbr.rel (%p237) target = $region20
      $region19: #{residual_block_forward.4} parent=11 // pred_region
        _
      $region20: #{residual_block_forward.4} parent=11 // pred_fallthru
        _
    $region12: #{residual_block_forward.4} parent=5 // pred_fallthru
      _
    %p240 = scmp.lt.s32.totalorder %s15, 4
    // Predicated region
    $region21: #{residual_block_forward.4} parent=5 // pred_check
      %p241 = pneg %p240
    $region22: #{residual_block_forward.4} parent=5 // pred_check_branch
      %243 = sbr.rel (%p241) target = $region24
    $region23: #{residual_block_forward.4} parent=5 // pred_region
      // Predicated region
      $region25: #{residual_block_forward.4} parent=23 // pred_check
        %p244 = pneg %p35
      $region26: #{residual_block_forward.4} parent=23 // pred_check_branch
        %246 = sbr.rel (%p244) target = $region28
      $region27: #{residual_block_forward.4} parent=23 // pred_region
        %s247 = smul.u32 16, %s15
        %p248 = scmp.lt.s32.totalorder %s247, 63
        %s249 = scalar_select %p248, %s247, 63
        %s250 = smul.addr %s249, 4
        %s251 = scalar_lea.vmem %s0, %s250
        %s252 = smul.u32 16, %s15
      $region28: #{residual_block_forward.4} parent=23 // pred_fallthru
        _
    $region24: #{residual_block_forward.4} parent=5 // pred_fallthru
      _
    %p253 = scmp.le.s32.totalorder 1, %s15
    %p254 = scmp.lt.s32.totalorder %s15, 5
    %p255 = pnand %p253, %p254
    %p256 = pneg %p255
    // Predicated region
    $region29: #{residual_block_forward.4} parent=5 // pred_check
      _
    $region30: #{residual_block_forward.4} parent=5 // pred_check_branch
      %258 = sbr.rel (%p255) target = $region32
    $region31: #{residual_block_forward.4} parent=5 // pred_region
      %s259 = ssub.s32 %s15, 1
      %s260 = smul.u32 16, %s20
      %p261 = scmp.lt.s32.totalorder %s260, 63
      %s262 = scalar_select %p261, %s260, 63
      %s263 = smul.addr %s262, 4
      %s264 = scalar_lea.vmem %s0, %s263
      %p265 = pneg %p41
      %p266 = pneg %p38
      %p267 = pneg %p62
      %p268 = pneg %p59
      %p269 = pneg %p83
      %p270 = pneg %p80
      %p271 = pneg %p109
      %p272 = pneg %p106
      %s273 = smul.u32 16, %s20
      %p274 = scmp.lt.s32.totalorder %s273, 63
      %s275 = scalar_select %p274, %s273, 63
      %s276 = smul.addr %s275, 4
      %s277 = scalar_lea.vmem %s3, %s276
      %p278 = pneg %p130
      %p279 = pneg %p127
      %p280 = pneg %p151
      %p281 = pneg %p148
      %p282 = pneg %p177
      %p283 = pneg %p174
      %s284 = smul.u32 16, %s20
      %p285 = scmp.lt.s32.totalorder %s284, 63
      %s286 = scalar_select %p285, %s284, 63
      %s287 = smul.addr %s286, 4
      %s288 = scalar_lea.vmem %s6, %s287
      %p289 = pneg %p198
      %p290 = pneg %p195
      %p291 = pneg %p219
      %p292 = pneg %p216
      %s293 = smul.u32 16, %s20
      %p294 = scmp.lt.s32.totalorder %s293, 63
      %s295 = scalar_select %p294, %s293, 63
      %s296 = smul.addr %s295, 4
      %s297 = scalar_lea.vmem %s0, %s296
      %s298 = smul.u32 16, %s20
      %s299 = smul.u32 16, %s20
      %p300 = scmp.lt.s32.totalorder %s299, 63
      %s301 = scalar_select %p300, %s299, 63
      %s302 = smul.addr %s301, 4
      %s303 = scalar_lea.vmem %s3, %s302
      %s304 = smul.u32 16, %s20
      %s305 = smul.u32 16, %s20
      %p306 = scmp.lt.s32.totalorder %s305, 63
      %s307 = scalar_select %p306, %s305, 63
      %s308 = smul.addr %s307, 4
      %s309 = scalar_lea.vmem %s6, %s308
      %s310 = smul.u32 16, %s20
      %p312 = scmp.eq.s32.totalorder %s20, 0
      // Predicated region
      $region33: #{residual_block_forward.4} parent=31 // pred_check
        %p313 = pneg %p312
      $region34: #{residual_block_forward.4} parent=31 // pred_check_branch
        %315 = sbr.rel (%p313) target = $region36
      $region35: #{residual_block_forward.4} parent=31 // pred_region
        %316 = vst [vmem:[%s4] sm:$0x1] 0.0
        %317 = vst [vmem:[%s5] sm:$0x1] 0.0
        %318 = vst [vmem:[%s7] sm:$0x1] 0.0
        %319 = vst [vmem:[%s8] sm:$0x1] 0.0
      $region36: #{residual_block_forward.4} parent=31 // pred_fallthru
        _
      %v320 = vld [vmem:[%s297] sm:$0xf]
      %v321 = vld [vmem:[%s297 + $0x4] sm:$0xf]
      %v322 = vld [vmem:[%s297 + $0x8] sm:$0xf]
      %v323 = vld [vmem:[%s297 + $0xc] sm:$0xf]
      %v324 = vld [vmem:[%s297 + $0x10] sm:$0xf]
      %v325 = vld [vmem:[%s297 + $0x14] sm:$0xf]
      %v326 = vld [vmem:[%s297 + $0x18] sm:$0xf]
      %v327 = vld [vmem:[%s297 + $0x1c] sm:$0xf]
      %v328 = vld [vmem:[%s297 + $0x20] sm:$0xf]
      %v329 = vld [vmem:[%s297 + $0x24] sm:$0xf]
      %v330 = vld [vmem:[%s297 + $0x28] sm:$0xf]
      %v331 = vld [vmem:[%s297 + $0x2c] sm:$0xf]
      %v332 = vld [vmem:[%s297 + $0x30] sm:$0xf]
      %v333 = vld [vmem:[%s297 + $0x34] sm:$0xf]
      %v334 = vld [vmem:[%s297 + $0x38] sm:$0xf]
      %v335 = vld [vmem:[%s297 + $0x3c] sm:$0xf]
      %v336 = vld [vmem:[%s1] sm:$0xf]
      %v337 = vld [vmem:[%s1 + $0x4] sm:$0xf]
      %v338 = vld [vmem:[%s1 + $0x8] sm:$0xf]
      %v339 = vld [vmem:[%s1 + $0xc] sm:$0xf]
      %v340 = vld [vmem:[%s1 + $0x10] sm:$0xf]
      %v341 = vld [vmem:[%s1 + $0x14] sm:$0xf]
      %v342 = vld [vmem:[%s1 + $0x18] sm:$0xf]
      %v343 = vld [vmem:[%s1 + $0x1c] sm:$0xf]
      %v344 = vld [vmem:[%s1 + $0x20] sm:$0xf]
      %v345 = vld [vmem:[%s1 + $0x24] sm:$0xf]
      %v346 = vld [vmem:[%s1 + $0x28] sm:$0xf]
      %v347 = vld [vmem:[%s1 + $0x2c] sm:$0xf]
      %v348 = vld [vmem:[%s1 + $0x30] sm:$0xf]
      %v349 = vld [vmem:[%s1 + $0x34] sm:$0xf]
      %v350 = vld [vmem:[%s1 + $0x38] sm:$0xf]
      %v351 = vld [vmem:[%s1 + $0x3c] sm:$0xf]
      %v368 = vunpack.c.l.b16 %v320
      %v369 = vunpack.c.l.b16 %v321
      %v370 = vunpack.c.l.b16 %v322
      %v371 = vunpack.c.l.b16 %v323
      %v372 = vunpack.c.l.b16 %v324
      %v373 = vunpack.c.l.b16 %v325
      %v374 = vunpack.c.l.b16 %v326
      %v375 = vunpack.c.l.b16 %v327
      %v376 = vunpack.c.l.b16 %v328
      %v377 = vunpack.c.l.b16 %v329
      %v378 = vunpack.c.l.b16 %v330
      %v379 = vunpack.c.l.b16 %v331
      %v380 = vunpack.c.l.b16 %v332
      %v381 = vunpack.c.l.b16 %v333
      %v382 = vunpack.c.l.b16 %v334
      %v383 = vunpack.c.l.b16 %v335
      %v384 = vpack.c.b16 %v369, %v368
      %v385 = vpack.c.b16 %v371, %v370
      %v386 = vpack.c.b16 %v373, %v372
      %v387 = vpack.c.b16 %v375, %v374
      %v388 = vpack.c.b16 %v377, %v376
      %v389 = vpack.c.b16 %v379, %v378
      %v390 = vpack.c.b16 %v381, %v380
      %v391 = vpack.c.b16 %v383, %v382
      %v416 = vunpack.c.l.b16 %v336
      %v417 = vunpack.c.l.b16 %v337
      %v418 = vunpack.c.l.b16 %v338
      %v419 = vunpack.c.l.b16 %v339
      %v420 = vunpack.c.l.b16 %v340
      %v421 = vunpack.c.l.b16 %v341
      %v422 = vunpack.c.l.b16 %v342
      %v423 = vunpack.c.l.b16 %v343
      %v424 = vunpack.c.l.b16 %v344
      %v425 = vunpack.c.l.b16 %v345
      %v426 = vunpack.c.l.b16 %v346
      %v427 = vunpack.c.l.b16 %v347
      %v428 = vunpack.c.l.b16 %v348
      %v429 = vunpack.c.l.b16 %v349
      %v430 = vunpack.c.l.b16 %v350
      %v431 = vunpack.c.l.b16 %v351
      %v432 = vpack.c.b16 %v417, %v416
      %v433 = vpack.c.b16 %v419, %v418
      %v434 = vpack.c.b16 %v421, %v420
      %v435 = vpack.c.b16 %v423, %v422
      %v436 = vpack.c.b16 %v425, %v424
      %v437 = vpack.c.b16 %v427, %v426
      %v438 = vpack.c.b16 %v429, %v428
      %v439 = vpack.c.b16 %v431, %v430
      %448 = vmatprep.subr.bf16.mxu0 0
      %449 = vmatpush1.bf16.msra.mxu0 %v439
      %450 = vmatprep.subr.bf16.mxu0 0
      %451 = vmatpush1.bf16.msra.mxu0 %v438
      %452 = vmatprep.subr.bf16.mxu0 0
      %453 = vmatpush1.bf16.msra.mxu0 %v437
      %454 = vmatprep.subr.bf16.mxu0 0
      %455 = vmatpush1.bf16.msra.mxu0 %v436
      %456 = vmatprep.subr.bf16.mxu0 0
      %457 = vmatpush1.bf16.msra.mxu0 %v435
      %458 = vmatprep.subr.bf16.mxu0 0
      %459 = vmatpush1.bf16.msra.mxu0 %v434
      %460 = vmatprep.subr.bf16.mxu0 0
      %461 = vmatpush1.bf16.msra.mxu0 %v433
      %462 = vmatprep.subr.bf16.mxu0 0
      %463 = vmatpush1.bf16.msra.mxu0 %v432
      %464 = vmatprep.subr.bf16.mxu0 0
      %465 = vmatpush2.bf16.msra.mxu0 0
      %466 = vmatprep.subr.bf16.mxu0 0
      %467 = vmatpush2.bf16.msra.mxu0 0
      %468 = vmatprep.subr.bf16.mxu0 0
      %469 = vmatpush2.bf16.msra.mxu0 0
      %470 = vmatprep.subr.bf16.mxu0 0
      %471 = vmatpush2.bf16.msra.mxu0 0
      %472 = vmatprep.subr.bf16.mxu0 0
      %473 = vmatpush2.bf16.msra.mxu0 0
      %474 = vmatprep.subr.bf16.mxu0 0
      %475 = vmatpush2.bf16.msra.mxu0 0
      %476 = vmatprep.subr.bf16.mxu0 0
      %477 = vmatpush2.bf16.msra.mxu0 0
      %478 = vmatprep.subr.bf16.mxu0 0
      %479 = vmatpush2.bf16.msra.mxu0 0
      %480 = vmatprep.mubr.bf16.mxu0 0
      %481 = vmatmul.mubr.bf16.gmra.mxu0 %v384
      %v482 = vpop.f32.mrf.mxu0
      %v483 = vadd.f32 0.0, %v482
      %v484 = vpop.f32.mrf.mxu0
      %v485 = vpop.f32.mrf.mxu0
      %v486 = vadd.f32 0.0, %v485
      %v487 = vpop.f32.mrf.mxu0
      %488 = vmatprep.mubr.bf16.mxu0 0
      %489 = vmatmul.mubr.bf16.gmra.mxu0 %v385
      %v490 = vpop.f32.mrf.mxu0
      %v491 = vadd.f32 0.0, %v490
      %v492 = vpop.f32.mrf.mxu0
      %v493 = vpop.f32.mrf.mxu0
      %v494 = vadd.f32 0.0, %v493
      %v495 = vpop.f32.mrf.mxu0
      %496 = vmatprep.mubr.bf16.mxu0 0
      %497 = vmatmul.mubr.bf16.gmra.mxu0 %v386
      %v498 = vpop.f32.mrf.mxu0
      %v499 = vadd.f32 0.0, %v498
      %v500 = vpop.f32.mrf.mxu0
      %v501 = vpop.f32.mrf.mxu0
      %v502 = vadd.f32 0.0, %v501
      %v503 = vpop.f32.mrf.mxu0
      %504 = vmatprep.mubr.bf16.mxu0 0
      %505 = vmatmul.mubr.bf16.gmra.mxu0 %v387
      %v506 = vpop.f32.mrf.mxu0
      %v507 = vadd.f32 0.0, %v506
      %v508 = vpop.f32.mrf.mxu0
      %v509 = vpop.f32.mrf.mxu0
      %v510 = vadd.f32 0.0, %v509
      %v511 = vpop.f32.mrf.mxu0
      %512 = vmatprep.mubr.bf16.mxu0 0
      %513 = vmatmul.mubr.bf16.gmra.mxu0 %v388
      %v514 = vpop.f32.mrf.mxu0
      %v515 = vadd.f32 0.0, %v514
      %v516 = vpop.f32.mrf.mxu0
      %v517 = vpop.f32.mrf.mxu0
      %v518 = vadd.f32 0.0, %v517
      %v519 = vpop.f32.mrf.mxu0
      %520 = vmatprep.mubr.bf16.mxu0 0
      %521 = vmatmul.mubr.bf16.gmra.mxu0 %v389
      %v522 = vpop.f32.mrf.mxu0
      %v523 = vadd.f32 0.0, %v522
      %v524 = vpop.f32.mrf.mxu0
      %v525 = vpop.f32.mrf.mxu0
      %v526 = vadd.f32 0.0, %v525
      %v527 = vpop.f32.mrf.mxu0
      %528 = vmatprep.mubr.bf16.mxu0 0
      %529 = vmatmul.mubr.bf16.gmra.mxu0 %v390
      %v530 = vpop.f32.mrf.mxu0
      %v531 = vadd.f32 0.0, %v530
      %v532 = vpop.f32.mrf.mxu0
      %v533 = vpop.f32.mrf.mxu0
      %v534 = vadd.f32 0.0, %v533
      %v535 = vpop.f32.mrf.mxu0
      %536 = vmatprep.mubr.bf16.mxu0 0
      %537 = vmatmul.mubr.bf16.gmra.mxu0 %v391
      %v538 = vpop.f32.mrf.mxu0
      %v539 = vadd.f32 0.0, %v538
      %v540 = vpop.f32.mrf.mxu0
      %v541 = vpop.f32.mrf.mxu0
      %v542 = vadd.f32 0.0, %v541
      %v543 = vpop.f32.mrf.mxu0
      %544 = vdwg.mxu0
      %v545 = vpack.c.bf16 %v486, %v483
      %v546 = vpack.c.bf16 %v494, %v491
      %v547 = vpack.c.bf16 %v502, %v499
      %v548 = vpack.c.bf16 %v510, %v507
      %v549 = vpack.c.bf16 %v518, %v515
      %v550 = vpack.c.bf16 %v526, %v523
      %v551 = vpack.c.bf16 %v534, %v531
      %v552 = vpack.c.bf16 %v542, %v539
      %v561 = vunpack.c.l.b16 %v545
      %v562 = vunpack.c.h.b16 %v545
      %v563 = vunpack.c.l.b16 %v546
      %v564 = vunpack.c.h.b16 %v546
      %v565 = vunpack.c.l.b16 %v547
      %v566 = vunpack.c.h.b16 %v547
      %v567 = vunpack.c.l.b16 %v548
      %v568 = vunpack.c.h.b16 %v548
      %v569 = vunpack.c.l.b16 %v549
      %v570 = vunpack.c.h.b16 %v549
      %v571 = vunpack.c.l.b16 %v550
      %v572 = vunpack.c.h.b16 %v550
      %v573 = vunpack.c.l.b16 %v551
      %v574 = vunpack.c.h.b16 %v551
      %v575 = vunpack.c.l.b16 %v552
      %v576 = vunpack.c.h.b16 %v552
      %v577 = vpack.c.b16 %v561, %v561
      %v578 = vpack.c.b16 %v562, %v562
      %v579 = vpack.c.b16 %v563, %v563
      %v580 = vpack.c.b16 %v564, %v564
      %v581 = vpack.c.b16 %v565, %v565
      %v582 = vpack.c.b16 %v566, %v566
      %v583 = vpack.c.b16 %v567, %v567
      %v584 = vpack.c.b16 %v568, %v568
      %v585 = vpack.c.b16 %v569, %v569
      %v586 = vpack.c.b16 %v570, %v570
      %v587 = vpack.c.b16 %v571, %v571
      %v588 = vpack.c.b16 %v572, %v572
      %v589 = vpack.c.b16 %v573, %v573
      %v590 = vpack.c.b16 %v574, %v574
      %v591 = vpack.c.b16 %v575, %v575
      %v592 = vpack.c.b16 %v576, %v576
      %609 = vst [vmem:[%s303] sm:$0xf] %v577
      %610 = vst [vmem:[%s303 + $0x4] sm:$0xf] %v578
      %611 = vst [vmem:[%s303 + $0x8] sm:$0xf] %v579
      %612 = vst [vmem:[%s303 + $0xc] sm:$0xf] %v580
      %613 = vst [vmem:[%s303 + $0x10] sm:$0xf] %v581
      %614 = vst [vmem:[%s303 + $0x14] sm:$0xf] %v582
      %615 = vst [vmem:[%s303 + $0x18] sm:$0xf] %v583
      %616 = vst [vmem:[%s303 + $0x1c] sm:$0xf] %v584
      %617 = vst [vmem:[%s303 + $0x20] sm:$0xf] %v585
      %618 = vst [vmem:[%s303 + $0x24] sm:$0xf] %v586
      %619 = vst [vmem:[%s303 + $0x28] sm:$0xf] %v587
      %620 = vst [vmem:[%s303 + $0x2c] sm:$0xf] %v588
      %621 = vst [vmem:[%s303 + $0x30] sm:$0xf] %v589
      %622 = vst [vmem:[%s303 + $0x34] sm:$0xf] %v590
      %623 = vst [vmem:[%s303 + $0x38] sm:$0xf] %v591
      %624 = vst [vmem:[%s303 + $0x3c] sm:$0xf] %v592
      %v625 = vld [vmem:[%s4] sm:$0x1]
      %v626 = vadd.f32 %v483, %v486
      %v627 = vadd.f32 %v626, %v491
      %v628 = vadd.f32 %v627, %v494
      %v629 = vadd.f32 %v628, %v499
      %v630 = vadd.f32 %v629, %v502
      %v631 = vadd.f32 %v630, %v507
      %v632 = vadd.f32 %v631, %v510
      %v633 = vadd.f32 %v632, %v515
      %v634 = vadd.f32 %v633, %v518
      %v635 = vadd.f32 %v634, %v523
      %v636 = vadd.f32 %v635, %v526
      %v637 = vadd.f32 %v636, %v531
      %v638 = vadd.f32 %v637, %v534
      %v639 = vadd.f32 %v638, %v539
      %v640 = vadd.f32 %v639, %v542
      %v641 = vrot.slane %v640, 4
      %v642 = vadd.f32 %v640, %v641
      %v643 = vrot.slane %v642, 2
      %v644 = vadd.f32 %v642, %v643
      %v645 = vrot.slane %v644, 1
      %v646 = vadd.f32 %v644, %v645
      %v647 = vadd.f32 %v625, %v646
      %648 = vst [vmem:[%s4] sm:$0x1] %v647
      %v649 = vld [vmem:[%s5] sm:$0x1]
      %v650 = vmul.f32 %v483, %v483
      %v651 = vmul.f32 %v486, %v486
      %v652 = vmul.f32 %v491, %v491
      %v653 = vmul.f32 %v494, %v494
      %v654 = vmul.f32 %v499, %v499
      %v655 = vmul.f32 %v502, %v502
      %v656 = vmul.f32 %v507, %v507
      %v657 = vmul.f32 %v510, %v510
      %v658 = vmul.f32 %v515, %v515
      %v659 = vmul.f32 %v518, %v518
      %v660 = vmul.f32 %v523, %v523
      %v661 = vmul.f32 %v526, %v526
      %v662 = vmul.f32 %v531, %v531
      %v663 = vmul.f32 %v534, %v534
      %v664 = vmul.f32 %v539, %v539
      %v665 = vmul.f32 %v542, %v542
      %v666 = vadd.f32 %v650, %v651
      %v667 = vadd.f32 %v666, %v652
      %v668 = vadd.f32 %v667, %v653
      %v669 = vadd.f32 %v668, %v654
      %v670 = vadd.f32 %v669, %v655
      %v671 = vadd.f32 %v670, %v656
      %v672 = vadd.f32 %v671, %v657
      %v673 = vadd.f32 %v672, %v658
      %v674 = vadd.f32 %v673, %v659
      %v675 = vadd.f32 %v674, %v660
      %v676 = vadd.f32 %v675, %v661
      %v677 = vadd.f32 %v676, %v662
      %v678 = vadd.f32 %v677, %v663
      %v679 = vadd.f32 %v678, %v664
      %v680 = vadd.f32 %v679, %v665
      %v681 = vrot.slane %v680, 4
      %v682 = vadd.f32 %v680, %v681
      %v683 = vrot.slane %v682, 2
      %v684 = vadd.f32 %v682, %v683
      %v685 = vrot.slane %v684, 1
      %v686 = vadd.f32 %v684, %v685
      %v687 = vadd.f32 %v649, %v686
      %688 = vst [vmem:[%s5] sm:$0x1] %v687
      %v689 = vld [vmem:[%s2] sm:$0xf]
      %v690 = vld [vmem:[%s2 + $0x4] sm:$0xf]
      %v691 = vld [vmem:[%s2 + $0x8] sm:$0xf]
      %v692 = vld [vmem:[%s2 + $0xc] sm:$0xf]
      %v693 = vld [vmem:[%s2 + $0x10] sm:$0xf]
      %v694 = vld [vmem:[%s2 + $0x14] sm:$0xf]
      %v695 = vld [vmem:[%s2 + $0x18] sm:$0xf]
      %v696 = vld [vmem:[%s2 + $0x1c] sm:$0xf]
      %v697 = vld [vmem:[%s2 + $0x20] sm:$0xf]
      %v698 = vld [vmem:[%s2 + $0x24] sm:$0xf]
      %v699 = vld [vmem:[%s2 + $0x28] sm:$0xf]
      %v700 = vld [vmem:[%s2 + $0x2c] sm:$0xf]
      %v701 = vld [vmem:[%s2 + $0x30] sm:$0xf]
      %v702 = vld [vmem:[%s2 + $0x34] sm:$0xf]
      %v703 = vld [vmem:[%s2 + $0x38] sm:$0xf]
      %v704 = vld [vmem:[%s2 + $0x3c] sm:$0xf]
      %v721 = vunpack.c.l.b16 %v689
      %v722 = vunpack.c.l.b16 %v690
      %v723 = vunpack.c.l.b16 %v691
      %v724 = vunpack.c.l.b16 %v692
      %v725 = vunpack.c.l.b16 %v693
      %v726 = vunpack.c.l.b16 %v694
      %v727 = vunpack.c.l.b16 %v695
      %v728 = vunpack.c.l.b16 %v696
      %v729 = vunpack.c.l.b16 %v697
      %v730 = vunpack.c.l.b16 %v698
      %v731 = vunpack.c.l.b16 %v699
      %v732 = vunpack.c.l.b16 %v700
      %v733 = vunpack.c.l.b16 %v701
      %v734 = vunpack.c.l.b16 %v702
      %v735 = vunpack.c.l.b16 %v703
      %v736 = vunpack.c.l.b16 %v704
      %v737 = vpack.c.b16 %v722, %v721
      %v738 = vpack.c.b16 %v724, %v723
      %v739 = vpack.c.b16 %v726, %v725
      %v740 = vpack.c.b16 %v728, %v727
      %v741 = vpack.c.b16 %v730, %v729
      %v742 = vpack.c.b16 %v732, %v731
      %v743 = vpack.c.b16 %v734, %v733
      %v744 = vpack.c.b16 %v736, %v735
      %753 = vmatprep.subr.bf16.mxu0 0
      %754 = vmatpush1.bf16.msra.mxu0 %v744
      %755 = vmatprep.subr.bf16.mxu0 0
      %756 = vmatpush1.bf16.msra.mxu0 %v743
      %757 = vmatprep.subr.bf16.mxu0 0
      %758 = vmatpush1.bf16.msra.mxu0 %v742
      %759 = vmatprep.subr.bf16.mxu0 0
      %760 = vmatpush1.bf16.msra.mxu0 %v741
      %761 = vmatprep.subr.bf16.mxu0 0
      %762 = vmatpush1.bf16.msra.mxu0 %v740
      %763 = vmatprep.subr.bf16.mxu0 0
      %764 = vmatpush1.bf16.msra.mxu0 %v739
      %765 = vmatprep.subr.bf16.mxu0 0
      %766 = vmatpush1.bf16.msra.mxu0 %v738
      %767 = vmatprep.subr.bf16.mxu0 0
      %768 = vmatpush1.bf16.msra.mxu0 %v737
      %769 = vmatprep.subr.bf16.mxu0 0
      %770 = vmatpush2.bf16.msra.mxu0 0
      %771 = vmatprep.subr.bf16.mxu0 0
      %772 = vmatpush2.bf16.msra.mxu0 0
      %773 = vmatprep.subr.bf16.mxu0 0
      %774 = vmatpush2.bf16.msra.mxu0 0
      %775 = vmatprep.subr.bf16.mxu0 0
      %776 = vmatpush2.bf16.msra.mxu0 0
      %777 = vmatprep.subr.bf16.mxu0 0
      %778 = vmatpush2.bf16.msra.mxu0 0
      %779 = vmatprep.subr.bf16.mxu0 0
      %780 = vmatpush2.bf16.msra.mxu0 0
      %781 = vmatprep.subr.bf16.mxu0 0
      %782 = vmatpush2.bf16.msra.mxu0 0
      %783 = vmatprep.subr.bf16.mxu0 0
      %784 = vmatpush2.bf16.msra.mxu0 0
      %785 = vmatprep.mubr.bf16.mxu0 0
      %786 = vmatmul.mubr.bf16.gmra.mxu0 %v384
      %v787 = vpop.f32.mrf.mxu0
      %v788 = vadd.f32 0.0, %v787
      %v789 = vpop.f32.mrf.mxu0
      %v790 = vpop.f32.mrf.mxu0
      %v791 = vadd.f32 0.0, %v790
      %v792 = vpop.f32.mrf.mxu0
      %793 = vmatprep.mubr.bf16.mxu0 0
      %794 = vmatmul.mubr.bf16.gmra.mxu0 %v385
      %v795 = vpop.f32.mrf.mxu0
      %v796 = vadd.f32 0.0, %v795
      %v797 = vpop.f32.mrf.mxu0
      %v798 = vpop.f32.mrf.mxu0
      %v799 = vadd.f32 0.0, %v798
      %v800 = vpop.f32.mrf.mxu0
      %801 = vmatprep.mubr.bf16.mxu0 0
      %802 = vmatmul.mubr.bf16.gmra.mxu0 %v386
      %v803 = vpop.f32.mrf.mxu0
      %v804 = vadd.f32 0.0, %v803
      %v805 = vpop.f32.mrf.mxu0
      %v806 = vpop.f32.mrf.mxu0
      %v807 = vadd.f32 0.0, %v806
      %v808 = vpop.f32.mrf.mxu0
      %809 = vmatprep.mubr.bf16.mxu0 0
      %810 = vmatmul.mubr.bf16.gmra.mxu0 %v387
      %v811 = vpop.f32.mrf.mxu0
      %v812 = vadd.f32 0.0, %v811
      %v813 = vpop.f32.mrf.mxu0
      %v814 = vpop.f32.mrf.mxu0
      %v815 = vadd.f32 0.0, %v814
      %v816 = vpop.f32.mrf.mxu0
      %817 = vmatprep.mubr.bf16.mxu0 0
      %818 = vmatmul.mubr.bf16.gmra.mxu0 %v388
      %v819 = vpop.f32.mrf.mxu0
      %v820 = vadd.f32 0.0, %v819
      %v821 = vpop.f32.mrf.mxu0
      %v822 = vpop.f32.mrf.mxu0
      %v823 = vadd.f32 0.0, %v822
      %v824 = vpop.f32.mrf.mxu0
      %825 = vmatprep.mubr.bf16.mxu0 0
      %826 = vmatmul.mubr.bf16.gmra.mxu0 %v389
      %v827 = vpop.f32.mrf.mxu0
      %v828 = vadd.f32 0.0, %v827
      %v829 = vpop.f32.mrf.mxu0
      %v830 = vpop.f32.mrf.mxu0
      %v831 = vadd.f32 0.0, %v830
      %v832 = vpop.f32.mrf.mxu0
      %833 = vmatprep.mubr.bf16.mxu0 0
      %834 = vmatmul.mubr.bf16.gmra.mxu0 %v390
      %v835 = vpop.f32.mrf.mxu0
      %v836 = vadd.f32 0.0, %v835
      %v837 = vpop.f32.mrf.mxu0
      %v838 = vpop.f32.mrf.mxu0
      %v839 = vadd.f32 0.0, %v838
      %v840 = vpop.f32.mrf.mxu0
      %841 = vmatprep.mubr.bf16.mxu0 0
      %842 = vmatmul.mubr.bf16.gmra.mxu0 %v391
      %v843 = vpop.f32.mrf.mxu0
      %v844 = vadd.f32 0.0, %v843
      %v845 = vpop.f32.mrf.mxu0
      %v846 = vpop.f32.mrf.mxu0
      %v847 = vadd.f32 0.0, %v846
      %v848 = vpop.f32.mrf.mxu0
      %849 = vdwg.mxu0
      %v850 = vpack.c.bf16 %v791, %v788
      %v851 = vpack.c.bf16 %v799, %v796
      %v852 = vpack.c.bf16 %v807, %v804
      %v853 = vpack.c.bf16 %v815, %v812
      %v854 = vpack.c.bf16 %v823, %v820
      %v855 = vpack.c.bf16 %v831, %v828
      %v856 = vpack.c.bf16 %v839, %v836
      %v857 = vpack.c.bf16 %v847, %v844
      %v866 = vunpack.c.l.b16 %v850
      %v867 = vunpack.c.h.b16 %v850
      %v868 = vunpack.c.l.b16 %v851
      %v869 = vunpack.c.h.b16 %v851
      %v870 = vunpack.c.l.b16 %v852
      %v871 = vunpack.c.h.b16 %v852
      %v872 = vunpack.c.l.b16 %v853
      %v873 = vunpack.c.h.b16 %v853
      %v874 = vunpack.c.l.b16 %v854
      %v875 = vunpack.c.h.b16 %v854
      %v876 = vunpack.c.l.b16 %v855
      %v877 = vunpack.c.h.b16 %v855
      %v878 = vunpack.c.l.b16 %v856
      %v879 = vunpack.c.h.b16 %v856
      %v880 = vunpack.c.l.b16 %v857
      %v881 = vunpack.c.h.b16 %v857
      %v882 = vpack.c.b16 %v866, %v866
      %v883 = vpack.c.b16 %v867, %v867
      %v884 = vpack.c.b16 %v868, %v868
      %v885 = vpack.c.b16 %v869, %v869
      %v886 = vpack.c.b16 %v870, %v870
      %v887 = vpack.c.b16 %v871, %v871
      %v888 = vpack.c.b16 %v872, %v872
      %v889 = vpack.c.b16 %v873, %v873
      %v890 = vpack.c.b16 %v874, %v874
      %v891 = vpack.c.b16 %v875, %v875
      %v892 = vpack.c.b16 %v876, %v876
      %v893 = vpack.c.b16 %v877, %v877
      %v894 = vpack.c.b16 %v878, %v878
      %v895 = vpack.c.b16 %v879, %v879
      %v896 = vpack.c.b16 %v880, %v880
      %v897 = vpack.c.b16 %v881, %v881
      %914 = vst [vmem:[%s309] sm:$0xf] %v882
      %915 = vst [vmem:[%s309 + $0x4] sm:$0xf] %v883
      %916 = vst [vmem:[%s309 + $0x8] sm:$0xf] %v884
      %917 = vst [vmem:[%s309 + $0xc] sm:$0xf] %v885
      %918 = vst [vmem:[%s309 + $0x10] sm:$0xf] %v886
      %919 = vst [vmem:[%s309 + $0x14] sm:$0xf] %v887
      %920 = vst [vmem:[%s309 + $0x18] sm:$0xf] %v888
      %921 = vst [vmem:[%s309 + $0x1c] sm:$0xf] %v889
      %922 = vst [vmem:[%s309 + $0x20] sm:$0xf] %v890
      %923 = vst [vmem:[%s309 + $0x24] sm:$0xf] %v891
      %924 = vst [vmem:[%s309 + $0x28] sm:$0xf] %v892
      %925 = vst [vmem:[%s309 + $0x2c] sm:$0xf] %v893
      %926 = vst [vmem:[%s309 + $0x30] sm:$0xf] %v894
      %927 = vst [vmem:[%s309 + $0x34] sm:$0xf] %v895
      %928 = vst [vmem:[%s309 + $0x38] sm:$0xf] %v896
      %929 = vst [vmem:[%s309 + $0x3c] sm:$0xf] %v897
      %v930 = vld [vmem:[%s7] sm:$0x1]
      %v931 = vadd.f32 %v788, %v791
      %v932 = vadd.f32 %v931, %v796
      %v933 = vadd.f32 %v932, %v799
      %v934 = vadd.f32 %v933, %v804
      %v935 = vadd.f32 %v934, %v807
      %v936 = vadd.f32 %v935, %v812
      %v937 = vadd.f32 %v936, %v815
      %v938 = vadd.f32 %v937, %v820
      %v939 = vadd.f32 %v938, %v823
      %v940 = vadd.f32 %v939, %v828
      %v941 = vadd.f32 %v940, %v831
      %v942 = vadd.f32 %v941, %v836
      %v943 = vadd.f32 %v942, %v839
      %v944 = vadd.f32 %v943, %v844
      %v945 = vadd.f32 %v944, %v847
      %v946 = vrot.slane %v945, 4
      %v947 = vadd.f32 %v945, %v946
      %v948 = vrot.slane %v947, 2
      %v949 = vadd.f32 %v947, %v948
      %v950 = vrot.slane %v949, 1
      %v951 = vadd.f32 %v949, %v950
      %v952 = vadd.f32 %v930, %v951
      %953 = vst [vmem:[%s7] sm:$0x1] %v952
      %v954 = vld [vmem:[%s8] sm:$0x1]
      %v955 = vmul.f32 %v788, %v788
      %v956 = vmul.f32 %v791, %v791
      %v957 = vmul.f32 %v796, %v796
      %v958 = vmul.f32 %v799, %v799
      %v959 = vmul.f32 %v804, %v804
      %v960 = vmul.f32 %v807, %v807
      %v961 = vmul.f32 %v812, %v812
      %v962 = vmul.f32 %v815, %v815
      %v963 = vmul.f32 %v820, %v820
      %v964 = vmul.f32 %v823, %v823
      %v965 = vmul.f32 %v828, %v828
      %v966 = vmul.f32 %v831, %v831
      %v967 = vmul.f32 %v836, %v836
      %v968 = vmul.f32 %v839, %v839
      %v969 = vmul.f32 %v844, %v844
      %v970 = vmul.f32 %v847, %v847
      %v971 = vadd.f32 %v955, %v956
      %v972 = vadd.f32 %v971, %v957
      %v973 = vadd.f32 %v972, %v958
      %v974 = vadd.f32 %v973, %v959
      %v975 = vadd.f32 %v974, %v960
      %v976 = vadd.f32 %v975, %v961
      %v977 = vadd.f32 %v976, %v962
      %v978 = vadd.f32 %v977, %v963
      %v979 = vadd.f32 %v978, %v964
      %v980 = vadd.f32 %v979, %v965
      %v981 = vadd.f32 %v980, %v966
      %v982 = vadd.f32 %v981, %v967
      %v983 = vadd.f32 %v982, %v968
      %v984 = vadd.f32 %v983, %v969
      %v985 = vadd.f32 %v984, %v970
      %v986 = vrot.slane %v985, 4
      %v987 = vadd.f32 %v985, %v986
      %v988 = vrot.slane %v987, 2
      %v989 = vadd.f32 %v987, %v988
      %v990 = vrot.slane %v989, 1
      %v991 = vadd.f32 %v989, %v990
      %v992 = vadd.f32 %v954, %v991
      %993 = vst [vmem:[%s8] sm:$0x1] %v992
      %s994 = smul.u32 16, %s20
      %p995 = scmp.lt.s32.totalorder %s994, 63
      %s996 = scalar_select %p995, %s994, 63
      %s997 = smul.addr %s996, 4
      %s998 = scalar_lea.vmem %s3, %s997
      %s999 = smul.u32 16, %s20
      %p1000 = scmp.lt.s32.totalorder %s999, 63
      %s1001 = scalar_select %p1000, %s999, 63
      %s1002 = smul.addr %s1001, 4
      %s1003 = scalar_lea.vmem %s6, %s1002
      // Predicated region
      $region37: #{residual_block_forward.4} parent=31 // pred_check
        %p1004 = pneg %p106
      $region38: #{residual_block_forward.4} parent=31 // pred_check_branch
        %1006 = sbr.rel (%p1004) target = $region40
      $region39: #{residual_block_forward.4} parent=31 // pred_region
        %s1007 = smul.u32 16, %s20
      $region40: #{residual_block_forward.4} parent=31 // pred_fallthru
        _
      // Predicated region
      $region41: #{residual_block_forward.4} parent=31 // pred_check
        %p1008 = pneg %p127
      $region42: #{residual_block_forward.4} parent=31 // pred_check_branch
        %1010 = sbr.rel (%p1008) target = $region44
      $region43: #{residual_block_forward.4} parent=31 // pred_region
        _
      $region44: #{residual_block_forward.4} parent=31 // pred_fallthru
        _
      // Predicated region
      $region45: #{residual_block_forward.4} parent=31 // pred_check
        %p1011 = pneg %p148
      $region46: #{residual_block_forward.4} parent=31 // pred_check_branch
        %1013 = sbr.rel (%p1011) target = $region48
      $region47: #{residual_block_forward.4} parent=31 // pred_region
        _
      $region48: #{residual_block_forward.4} parent=31 // pred_fallthru
        _
      // Predicated region
      $region49: #{residual_block_forward.4} parent=31 // pred_check
        %p1014 = pneg %p174
      $region50: #{residual_block_forward.4} parent=31 // pred_check_branch
        %1016 = sbr.rel (%p1014) target = $region52
      $region51: #{residual_block_forward.4} parent=31 // pred_region
        %s1017 = smul.u32 16, %s20
      $region52: #{residual_block_forward.4} parent=31 // pred_fallthru
        _
      // Predicated region
      $region53: #{residual_block_forward.4} parent=31 // pred_check
        %p1018 = pneg %p195
      $region54: #{residual_block_forward.4} parent=31 // pred_check_branch
        %1020 = sbr.rel (%p1018) target = $region56
      $region55: #{residual_block_forward.4} parent=31 // pred_region
        _
      $region56: #{residual_block_forward.4} parent=31 // pred_fallthru
        _
      // Predicated region
      $region57: #{residual_block_forward.4} parent=31 // pred_check
        %p1021 = pneg %p216
      $region58: #{residual_block_forward.4} parent=31 // pred_check_branch
        %1023 = sbr.rel (%p1021) target = $region60
      $region59: #{residual_block_forward.4} parent=31 // pred_region
        _
      $region60: #{residual_block_forward.4} parent=31 // pred_fallthru
        _
      // Predicated region
      $region61: #{residual_block_forward.4} parent=31 // pred_check
        %p1024 = pneg %p127
      $region62: #{residual_block_forward.4} parent=31 // pred_check_branch
        %1026 = sbr.rel (%p1024) target = $region64
      $region63: #{residual_block_forward.4} parent=31 // pred_region
        _
      $region64: #{residual_block_forward.4} parent=31 // pred_fallthru
        _
      // Predicated region
      $region65: #{residual_block_forward.4} parent=31 // pred_check
        %p1027 = pneg %p148
      $region66: #{residual_block_forward.4} parent=31 // pred_check_branch
        %1029 = sbr.rel (%p1027) target = $region68
      $region67: #{residual_block_forward.4} parent=31 // pred_region
        _
      $region68: #{residual_block_forward.4} parent=31 // pred_fallthru
        _
      // Predicated region
      $region69: #{residual_block_forward.4} parent=31 // pred_check
        %p1030 = pneg %p195
      $region70: #{residual_block_forward.4} parent=31 // pred_check_branch
        %1032 = sbr.rel (%p1030) target = $region72
      $region71: #{residual_block_forward.4} parent=31 // pred_region
        _
      $region72: #{residual_block_forward.4} parent=31 // pred_fallthru
        _
      // Predicated region
      $region73: #{residual_block_forward.4} parent=31 // pred_check
        %p1033 = pneg %p216
      $region74: #{residual_block_forward.4} parent=31 // pred_check_branch
        %1035 = sbr.rel (%p1033) target = $region76
      $region75: #{residual_block_forward.4} parent=31 // pred_region
        _
      $region76: #{residual_block_forward.4} parent=31 // pred_fallthru
        _
    $region32: #{residual_block_forward.4} parent=5 // pred_fallthru
      _
    %p1036 = scmp.le.s32.totalorder 2, %s15
    // Predicated region
    $region77: #{residual_block_forward.4} parent=5 // pred_check
      %p1037 = pneg %p1036
    $region78: #{residual_block_forward.4} parent=5 // pred_check_branch
      %1039 = sbr.rel (%p1037) target = $region80
    $region79: #{residual_block_forward.4} parent=5 // pred_region
      %s1040 = ssub.s32 %s15, 2
      // Predicated region
      $region81: #{residual_block_forward.4} parent=79 // pred_check
        %p1041 = pneg %p112
      $region82: #{residual_block_forward.4} parent=79 // pred_check_branch
        %1043 = sbr.rel (%p1041) target = $region84
      $region83: #{residual_block_forward.4} parent=79 // pred_region
        %s1044 = smul.u32 16, %s21
        %p1045 = scmp.lt.s32.totalorder %s1044, 63
        %s1046 = scalar_select %p1045, %s1044, 63
        %s1047 = smul.addr %s1046, 4
        %s1048 = scalar_lea.vmem %s3, %s1047
      $region84: #{residual_block_forward.4} parent=79 // pred_fallthru
        _
      // Predicated region
      $region85: #{residual_block_forward.4} parent=79 // pred_check
        %p1049 = pneg %p180
      $region86: #{residual_block_forward.4} parent=79 // pred_check_branch
        %1051 = sbr.rel (%p1049) target = $region88
      $region87: #{residual_block_forward.4} parent=79 // pred_region
        %s1052 = smul.u32 16, %s21
        %p1053 = scmp.lt.s32.totalorder %s1052, 63
        %s1054 = scalar_select %p1053, %s1052, 63
        %s1055 = smul.addr %s1054, 4
        %s1056 = scalar_lea.vmem %s6, %s1055
      $region88: #{residual_block_forward.4} parent=79 // pred_fallthru
        _
    $region80: #{residual_block_forward.4} parent=5 // pred_fallthru
      _
  $region6: #{residual_block_forward.4} parent=0 // loop_footer
    %s19 = sadd.s32 1, %s15
  $region7: #{residual_block_forward.4} parent=0 // loop_footer_branch
    %14 = sbr.rel target = $region3
  $region8: #{residual_block_forward.4} parent=0 // loop_exit
    _

// kernel: residual_block_forward.5
$region0: #{residual_block_forward.5}
  #allocation0 [shape = 'u32[]', space=smem, size = 0x4, offset = 0x4, fixed_abs, tag = 'smem constant byte address 0x4 - core index']
  #allocation1 [shape = 'u32[144,128]{1,0:T(1,128)}', space=vmem, size = 0x12000, scoped, tag = 'internal scratch']
  #allocation2 [shape = 'f32[18,18,128]{2,1,0:T(8,128)}', space=vmem, size = 0x36000, scoped, tag = 'scratch operand']
  %s0 = inlined_call_operand.vmem [shape: bf16[512,128], index: 0, kind: input, shape index: {}]
  %s1 = inlined_call_operand.vmem [shape: f32[1,128], index: 1, kind: input, shape index: {}]
  %s2 = inlined_call_operand.vmem [shape: f32[1,128], index: 2, kind: input, shape index: {}]
  %s3 = inlined_call_operand.vmem [shape: bf16[9,128,128], index: 3, kind: input, shape index: {}]
  %s4 = inlined_call_operand.vmem [shape: bf16[512,128], index: 4, kind: output, shape index: {0}]
  %s5 = inlined_call_operand.vmem [shape: f32[1,128], index: 5, kind: output, shape index: {1}]
  %s6 = inlined_call_operand.vmem [shape: f32[1,128], index: 6, kind: output, shape index: {2}]
  %7 = xla_tuple %s4, %s5, %s6
  %s8 = sld [smem:[#allocation0]]
  $region69: #{residual_block_forward.5} parent=0
    _
  %s10 = ssub.s32 1, %s8
  %s11 = scalar_select 0, %s10, %s8
  loop: start=0, step=1, limit=4
  $region2: #{residual_block_forward.5} parent=0 // loop_pre_header
    _
  $region3: #{residual_block_forward.5} parent=0 // loop_header
    %s13 = sphi 0, %s17
    %p14 = scmp.ge.s32.totalorder %s13, 4
    %s23 = sphi 0, %s25
    %s26 = sphi 0, %s23
    %s27 = sphi 0, %s26
    %s43 = sphi 0, %s27
    %s47 = sphi 0, %s47
    %s49 = sphi 0, %s47
    %s50 = sphi 0, %s49
    %s64 = sphi 0, %s50
    %s68 = sphi 0, %s68
    %s70 = sphi 0, %s68
    %s71 = sphi 0, %s70
    %s85 = sphi 0, %s71
    %s89 = sphi 0, %s89
    %s91 = sphi 0, %s89
    %s92 = sphi 0, %s91
    %s106 = sphi 0, %s92
    %s112 = sphi 0, %s114
    %s115 = sphi 0, %s112
    %s116 = sphi 0, %s115
    %s132 = sphi 0, %s116
    %s136 = sphi 0, %s136
    %s138 = sphi 0, %s136
    %s139 = sphi 0, %s138
    %s153 = sphi 0, %s139
    %s157 = sphi 0, %s157
    %s159 = sphi 0, %s157
    %s160 = sphi 0, %s159
    %s174 = sphi 0, %s160
  $region4: #{residual_block_forward.5} parent=0 // loop_header_branch
    %16 = sbr.rel (%p14) target = $region8
  $region5: #{residual_block_forward.5} parent=0 // loop_body
    %s18 = ssub.s32 %s13, 1
    %s19 = ssub.s32 %s13, 2
    %s20 = sadd.s32 %s13, 1
    %s21 = ssub.s32 %s13, %s20
    %p22 = scmp.eq.s32.totalorder %s21, 0
    %s24 = sadd.s32 %s23, 1
    %s25 = scalar_select %p22, %s23, %s24
    %p28 = pneg %p22
    %p29 = scmp.eq.s32.totalorder %s13, 1
    %p30 = por %p28, %p29
    %p31 = scmp.ne.s32.totalorder %s23, %s26
    %p32 = scmp.eq.s32.totalorder %s13, 0
    %p33 = por %p31, %p32
    %p34 = scmp.ne.s32.totalorder %s23, %s26
    %p35 = scmp.eq.s32.totalorder %s18, 1
    %p36 = por %p34, %p35
    %p37 = scmp.ne.s32.totalorder %s26, %s27
    %p38 = scmp.eq.s32.totalorder %s18, 0
    %p39 = por %p37, %p38
    %p40 = scmp.ne.s32.totalorder %s26, %s27
    %p41 = scmp.eq.s32.totalorder %s19, 1
    %p42 = por %p40, %p41
    %p44 = scmp.ne.s32.totalorder %s27, %s43
    %p45 = scmp.eq.s32.totalorder %s19, 0
    %p46 = por %p44, %p45
    %s48 = sadd.s32 %s47, 1
    %p51 = scmp.eq.s32.totalorder %s13, 1
    %p52 = scmp.ne.s32.totalorder %s47, %s49
    %p53 = scmp.eq.s32.totalorder %s13, 0
    %p54 = por %p52, %p53
    %p55 = scmp.ne.s32.totalorder %s47, %s49
    %p56 = scmp.eq.s32.totalorder %s18, 1
    %p57 = por %p55, %p56
    %p58 = scmp.ne.s32.totalorder %s49, %s50
    %p59 = scmp.eq.s32.totalorder %s18, 0
    %p60 = por %p58, %p59
    %p61 = scmp.ne.s32.totalorder %s49, %s50
    %p62 = scmp.eq.s32.totalorder %s19, 1
    %p63 = por %p61, %p62
    %p65 = scmp.ne.s32.totalorder %s50, %s64
    %p66 = scmp.eq.s32.totalorder %s19, 0
    %p67 = por %p65, %p66
    %s69 = sadd.s32 %s68, 1
    %p72 = scmp.eq.s32.totalorder %s13, 1
    %p73 = scmp.ne.s32.totalorder %s68, %s70
    %p74 = scmp.eq.s32.totalorder %s13, 0
    %p75 = por %p73, %p74
    %p76 = scmp.ne.s32.totalorder %s68, %s70
    %p77 = scmp.eq.s32.totalorder %s18, 1
    %p78 = por %p76, %p77
    %p79 = scmp.ne.s32.totalorder %s70, %s71
    %p80 = scmp.eq.s32.totalorder %s18, 0
    %p81 = por %p79, %p80
    %p82 = scmp.ne.s32.totalorder %s70, %s71
    %p83 = scmp.eq.s32.totalorder %s19, 1
    %p84 = por %p82, %p83
    %p86 = scmp.ne.s32.totalorder %s71, %s85
    %p87 = scmp.eq.s32.totalorder %s19, 0
    %p88 = por %p86, %p87
    %s90 = sadd.s32 %s89, 1
    %p93 = scmp.eq.s32.totalorder %s13, 1
    %p94 = scmp.ne.s32.totalorder %s89, %s91
    %p95 = scmp.eq.s32.totalorder %s13, 0
    %p96 = por %p94, %p95
    %p97 = scmp.ne.s32.totalorder %s89, %s91
    %p98 = scmp.eq.s32.totalorder %s18, 1
    %p99 = por %p97, %p98
    %p100 = scmp.ne.s32.totalorder %s91, %s92
    %p101 = scmp.eq.s32.totalorder %s18, 0
    %p102 = por %p100, %p101
    %p103 = scmp.ne.s32.totalorder %s91, %s92
    %p104 = scmp.eq.s32.totalorder %s19, 1
    %p105 = por %p103, %p104
    %p107 = scmp.ne.s32.totalorder %s92, %s106
    %p108 = scmp.eq.s32.totalorder %s19, 0
    %p109 = por %p107, %p108
    %s110 = ssub.s32 %s13, %s20
    %p111 = scmp.eq.s32.totalorder %s110, 0
    %s113 = sadd.s32 %s112, 1
    %s114 = scalar_select %p111, %s112, %s113
    %p117 = pneg %p111
    %p118 = scmp.eq.s32.totalorder %s13, 1
    %p119 = por %p117, %p118
    %p120 = scmp.ne.s32.totalorder %s112, %s115
    %p121 = scmp.eq.s32.totalorder %s13, 0
    %p122 = por %p120, %p121
    %p123 = scmp.ne.s32.totalorder %s112, %s115
    %p124 = scmp.eq.s32.totalorder %s18, 1
    %p125 = por %p123, %p124
    %p126 = scmp.ne.s32.totalorder %s115, %s116
    %p127 = scmp.eq.s32.totalorder %s18, 0
    %p128 = por %p126, %p127
    %p129 = scmp.ne.s32.totalorder %s115, %s116
    %p130 = scmp.eq.s32.totalorder %s19, 1
    %p131 = por %p129, %p130
    %p133 = scmp.ne.s32.totalorder %s116, %s132
    %p134 = scmp.eq.s32.totalorder %s19, 0
    %p135 = por %p133, %p134
    %s137 = sadd.s32 %s136, 1
    %p140 = scmp.eq.s32.totalorder %s13, 1
    %p141 = scmp.ne.s32.totalorder %s136, %s138
    %p142 = scmp.eq.s32.totalorder %s13, 0
    %p143 = por %p141, %p142
    %p144 = scmp.ne.s32.totalorder %s136, %s138
    %p145 = scmp.eq.s32.totalorder %s18, 1
    %p146 = por %p144, %p145
    %p147 = scmp.ne.s32.totalorder %s138, %s139
    %p148 = scmp.eq.s32.totalorder %s18, 0
    %p149 = por %p147, %p148
    %p150 = scmp.ne.s32.totalorder %s138, %s139
    %p151 = scmp.eq.s32.totalorder %s19, 1
    %p152 = por %p150, %p151
    %p154 = scmp.ne.s32.totalorder %s139, %s153
    %p155 = scmp.eq.s32.totalorder %s19, 0
    %p156 = por %p154, %p155
    %s158 = sadd.s32 %s157, 1
    %p161 = scmp.eq.s32.totalorder %s13, 1
    %p162 = scmp.ne.s32.totalorder %s157, %s159
    %p163 = scmp.eq.s32.totalorder %s13, 0
    %p164 = por %p162, %p163
    %p165 = scmp.ne.s32.totalorder %s157, %s159
    %p166 = scmp.eq.s32.totalorder %s18, 1
    %p167 = por %p165, %p166
    %p168 = scmp.ne.s32.totalorder %s159, %s160
    %p169 = scmp.eq.s32.totalorder %s18, 0
    %p170 = por %p168, %p169
    %p171 = scmp.ne.s32.totalorder %s159, %s160
    %p172 = scmp.eq.s32.totalorder %s19, 1
    %p173 = por %p171, %p172
    %p175 = scmp.ne.s32.totalorder %s160, %s174
    %p176 = scmp.eq.s32.totalorder %s19, 0
    %p177 = por %p175, %p176
    %p178 = scmp.le.s32.totalorder 1, %s13
    %p179 = scmp.lt.s32.totalorder %s13, 3
    %p180 = pnand %p178, %p179
    %p181 = pneg %p180
    // Predicated region
    $region9: #{residual_block_forward.5} parent=5 // pred_check
      _
    $region10: #{residual_block_forward.5} parent=5 // pred_check_branch
      %183 = sbr.rel (%p180) target = $region12
    $region11: #{residual_block_forward.5} parent=5 // pred_region
      %s184 = ssub.s32 %s13, 1
      // Predicated region
      $region13: #{residual_block_forward.5} parent=11 // pred_check
        %p185 = pneg %p60
      $region14: #{residual_block_forward.5} parent=11 // pred_check_branch
        %187 = sbr.rel (%p185) target = $region16
      $region15: #{residual_block_forward.5} parent=11 // pred_region
        _
      $region16: #{residual_block_forward.5} parent=11 // pred_fallthru
        _
      // Predicated region
      $region17: #{residual_block_forward.5} parent=11 // pred_check
        %p188 = pneg %p81
      $region18: #{residual_block_forward.5} parent=11 // pred_check_branch
        %190 = sbr.rel (%p188) target = $region20
      $region19: #{residual_block_forward.5} parent=11 // pred_region
        _
      $region20: #{residual_block_forward.5} parent=11 // pred_fallthru
        _
      // Predicated region
      $region21: #{residual_block_forward.5} parent=11 // pred_check
        %p191 = pneg %p102
      $region22: #{residual_block_forward.5} parent=11 // pred_check_branch
        %193 = sbr.rel (%p191) target = $region24
      $region23: #{residual_block_forward.5} parent=11 // pred_region
        _
      $region24: #{residual_block_forward.5} parent=11 // pred_fallthru
        _
    $region12: #{residual_block_forward.5} parent=5 // pred_fallthru
      _
    %p194 = scmp.lt.s32.totalorder %s13, 2
    // Predicated region
    $region25: #{residual_block_forward.5} parent=5 // pred_check
      %p195 = pneg %p194
    $region26: #{residual_block_forward.5} parent=5 // pred_check_branch
      %197 = sbr.rel (%p195) target = $region28
    $region27: #{residual_block_forward.5} parent=5 // pred_region
      // Predicated region
      $region29: #{residual_block_forward.5} parent=27 // pred_check
        %p198 = pneg %p33
      $region30: #{residual_block_forward.5} parent=27 // pred_check_branch
        %200 = sbr.rel (%p198) target = $region32
      $region31: #{residual_block_forward.5} parent=27 // pred_region
        %s201 = smul.u32 32, %s13
        %p202 = scmp.lt.s32.totalorder %s201, 63
        %s203 = scalar_select %p202, %s201, 63
        %s204 = smul.addr %s203, 4
        %s205 = scalar_lea.vmem %s0, %s204
        %s206 = smul.u32 32, %s13
      $region32: #{residual_block_forward.5} parent=27 // pred_fallthru
        _
    $region28: #{residual_block_forward.5} parent=5 // pred_fallthru
      _
    %p207 = scmp.le.s32.totalorder 1, %s13
    %p208 = scmp.lt.s32.totalorder %s13, 3
    %p209 = pnand %p207, %p208
    %p210 = pneg %p209
    // Predicated region
    $region33: #{residual_block_forward.5} parent=5 // pred_check
      _
    $region34: #{residual_block_forward.5} parent=5 // pred_check_branch
      %212 = sbr.rel (%p209) target = $region36
    $region35: #{residual_block_forward.5} parent=5 // pred_region
      %s213 = ssub.s32 %s13, 1
      %s214 = smul.u32 32, %s18
      %p215 = scmp.lt.s32.totalorder %s214, 63
      %s216 = scalar_select %p215, %s214, 63
      %s217 = smul.addr %s216, 4
      %s218 = scalar_lea.vmem %s0, %s217
      %p219 = pneg %p39
      %p220 = pneg %p36
      %p221 = pneg %p60
      %p222 = pneg %p57
      %p223 = pneg %p81
      %p224 = pneg %p78
      %p225 = pneg %p102
      %p226 = pneg %p99
      %p227 = pneg %p128
      %p228 = pneg %p125
      %s229 = smul.u32 32, %s18
      %p230 = scmp.lt.s32.totalorder %s229, 63
      %s231 = scalar_select %p230, %s229, 63
      %s232 = smul.addr %s231, 4
      %s233 = scalar_lea.vmem %s4, %s232
      %p234 = pneg %p149
      %p235 = pneg %p146
      %p236 = pneg %p170
      %p237 = pneg %p167
      %s238 = smul.u32 32, %s18
      %p239 = scmp.lt.s32.totalorder %s238, 63
      %s240 = scalar_select %p239, %s238, 63
      %s241 = smul.addr %s240, 4
      %s242 = scalar_lea.vmem %s0, %s241
      %s243 = smul.u32 32, %s18
      %s244 = smul.u32 32, %s18
      %p245 = scmp.lt.s32.totalorder %s244, 63
      %s246 = scalar_select %p245, %s244, 63
      %s247 = smul.addr %s246, 4
      %s248 = scalar_lea.vmem %s4, %s247
      %s249 = smul.u32 32, %s18
      %p251 = scmp.eq.s32.totalorder %s18, 0
      // Predicated region
      $region37: #{residual_block_forward.5} parent=35 // pred_check
        %p252 = pneg %p251
      $region38: #{residual_block_forward.5} parent=35 // pred_check_branch
        %254 = sbr.rel (%p252) target = $region40
      $region39: #{residual_block_forward.5} parent=35 // pred_region
        %255 = vst [vmem:[#allocation2] sm:$0xff] 0.0
        %256 = vst [vmem:[#allocation2 + $0x8] sm:$0xff] 0.0
        %257 = vst [vmem:[#allocation2 + $0x10] sm:$0x3] 0.0
        %258 = vst [vmem:[#allocation2 + $0x18] sm:$0xff] 0.0
        %259 = vst [vmem:[#allocation2 + $0x20] sm:$0xff] 0.0
        %260 = vst [vmem:[#allocation2 + $0x28] sm:$0x3] 0.0
        %261 = vst [vmem:[#allocation2 + $0x30] sm:$0xff] 0.0
        %262 = vst [vmem:[#allocation2 + $0x38] sm:$0xff] 0.0
        %263 = vst [vmem:[#allocation2 + $0x40] sm:$0x3] 0.0
        %264 = vst [vmem:[#allocation2 + $0x48] sm:$0xff] 0.0
        %265 = vst [vmem:[#allocation2 + $0x50] sm:$0xff] 0.0
        %266 = vst [vmem:[#allocation2 + $0x58] sm:$0x3] 0.0
        %267 = vst [vmem:[#allocation2 + $0x60] sm:$0xff] 0.0
        %268 = vst [vmem:[#allocation2 + $0x68] sm:$0xff] 0.0
        %269 = vst [vmem:[#allocation2 + $0x70] sm:$0x3] 0.0
        %270 = vst [vmem:[#allocation2 + $0x78] sm:$0xff] 0.0
        %271 = vst [vmem:[#allocation2 + $0x80] sm:$0xff] 0.0
        %272 = vst [vmem:[#allocation2 + $0x88] sm:$0x3] 0.0
        %273 = vst [vmem:[#allocation2 + $0x90] sm:$0xff] 0.0
        %274 = vst [vmem:[#allocation2 + $0x98] sm:$0xff] 0.0
        %275 = vst [vmem:[#allocation2 + $0xa0] sm:$0x3] 0.0
        %276 = vst [vmem:[#allocation2 + $0xa8] sm:$0xff] 0.0
        %277 = vst [vmem:[#allocation2 + $0xb0] sm:$0xff] 0.0
        %278 = vst [vmem:[#allocation2 + $0xb8] sm:$0x3] 0.0
        %279 = vst [vmem:[#allocation2 + $0xc0] sm:$0xff] 0.0
        %280 = vst [vmem:[#allocation2 + $0xc8] sm:$0xff] 0.0
        %281 = vst [vmem:[#allocation2 + $0xd0] sm:$0x3] 0.0
        %282 = vst [vmem:[#allocation2 + $0xd8] sm:$0xff] 0.0
        %283 = vst [vmem:[#allocation2 + $0xe0] sm:$0xff] 0.0
        %284 = vst [vmem:[#allocation2 + $0xe8] sm:$0x3] 0.0
        %285 = vst [vmem:[#allocation2 + $0xf0] sm:$0xff] 0.0
        %286 = vst [vmem:[#allocation2 + $0xf8] sm:$0xff] 0.0
        %287 = vst [vmem:[#allocation2 + $0x100] sm:$0x3] 0.0
        %288 = vst [vmem:[#allocation2 + $0x108] sm:$0xff] 0.0
        %289 = vst [vmem:[#allocation2 + $0x110] sm:$0xff] 0.0
        %290 = vst [vmem:[#allocation2 + $0x118] sm:$0x3] 0.0
        %291 = vst [vmem:[#allocation2 + $0x120] sm:$0xff] 0.0
        %292 = vst [vmem:[#allocation2 + $0x128] sm:$0xff] 0.0
        %293 = vst [vmem:[#allocation2 + $0x130] sm:$0x3] 0.0
        %294 = vst [vmem:[#allocation2 + $0x138] sm:$0xff] 0.0
        %295 = vst [vmem:[#allocation2 + $0x140] sm:$0xff] 0.0
        %296 = vst [vmem:[#allocation2 + $0x148] sm:$0x3] 0.0
        %297 = vst [vmem:[#allocation2 + $0x150] sm:$0xff] 0.0
        %298 = vst [vmem:[#allocation2 + $0x158] sm:$0xff] 0.0
        %299 = vst [vmem:[#allocation2 + $0x160] sm:$0x3] 0.0
        %300 = vst [vmem:[#allocation2 + $0x168] sm:$0xff] 0.0
        %301 = vst [vmem:[#allocation2 + $0x170] sm:$0xff] 0.0
        %302 = vst [vmem:[#allocation2 + $0x178] sm:$0x3] 0.0
        %303 = vst [vmem:[#allocation2 + $0x180] sm:$0xff] 0.0
        %304 = vst [vmem:[#allocation2 + $0x188] sm:$0xff] 0.0
        %305 = vst [vmem:[#allocation2 + $0x190] sm:$0x3] 0.0
        %306 = vst [vmem:[#allocation2 + $0x198] sm:$0xff] 0.0
        %307 = vst [vmem:[#allocation2 + $0x1a0] sm:$0xff] 0.0
        %308 = vst [vmem:[#allocation2 + $0x1a8] sm:$0x3] 0.0
        %309 = vst [vmem:[%s5] sm:$0x1] 0.0
        %310 = vst [vmem:[%s6] sm:$0x1] 0.0
      $region40: #{residual_block_forward.5} parent=35 // pred_fallthru
        _
      %v311 = vld [vmem:[%s242] sm:$0xf]
      %v312 = vld [vmem:[%s242 + $0x4] sm:$0xf]
      %v313 = vld [vmem:[%s242 + $0x8] sm:$0xf]
      %v314 = vld [vmem:[%s242 + $0xc] sm:$0xf]
      %v315 = vld [vmem:[%s242 + $0x10] sm:$0xf]
      %v316 = vld [vmem:[%s242 + $0x14] sm:$0xf]
      %v317 = vld [vmem:[%s242 + $0x18] sm:$0xf]
      %v318 = vld [vmem:[%s242 + $0x1c] sm:$0xf]
      %v319 = vld [vmem:[%s242 + $0x20] sm:$0xf]
      %v320 = vld [vmem:[%s242 + $0x24] sm:$0xf]
      %v321 = vld [vmem:[%s242 + $0x28] sm:$0xf]
      %v322 = vld [vmem:[%s242 + $0x2c] sm:$0xf]
      %v323 = vld [vmem:[%s242 + $0x30] sm:$0xf]
      %v324 = vld [vmem:[%s242 + $0x34] sm:$0xf]
      %v325 = vld [vmem:[%s242 + $0x38] sm:$0xf]
      %v326 = vld [vmem:[%s242 + $0x3c] sm:$0xf]
      %v327 = vld [vmem:[%s242 + $0x40] sm:$0xf]
      %v328 = vld [vmem:[%s242 + $0x44] sm:$0xf]
      %v329 = vld [vmem:[%s242 + $0x48] sm:$0xf]
      %v330 = vld [vmem:[%s242 + $0x4c] sm:$0xf]
      %v331 = vld [vmem:[%s242 + $0x50] sm:$0xf]
      %v332 = vld [vmem:[%s242 + $0x54] sm:$0xf]
      %v333 = vld [vmem:[%s242 + $0x58] sm:$0xf]
      %v334 = vld [vmem:[%s242 + $0x5c] sm:$0xf]
      %v335 = vld [vmem:[%s242 + $0x60] sm:$0xf]
      %v336 = vld [vmem:[%s242 + $0x64] sm:$0xf]
      %v337 = vld [vmem:[%s242 + $0x68] sm:$0xf]
      %v338 = vld [vmem:[%s242 + $0x6c] sm:$0xf]
      %v339 = vld [vmem:[%s242 + $0x70] sm:$0xf]
      %v340 = vld [vmem:[%s242 + $0x74] sm:$0xf]
      %v341 = vld [vmem:[%s242 + $0x78] sm:$0xf]
      %v342 = vld [vmem:[%s242 + $0x7c] sm:$0xf]
      %v343 = vunpack.c.l.bf16 %v311
      %v344 = vunpack.c.l.bf16 %v312
      %v345 = vunpack.c.l.bf16 %v313
      %v346 = vunpack.c.l.bf16 %v314
      %v347 = vunpack.c.l.bf16 %v315
      %v348 = vunpack.c.l.bf16 %v316
      %v349 = vunpack.c.l.bf16 %v317
      %v350 = vunpack.c.l.bf16 %v318
      %v351 = vunpack.c.l.bf16 %v319
      %v352 = vunpack.c.l.bf16 %v320
      %v353 = vunpack.c.l.bf16 %v321
      %v354 = vunpack.c.l.bf16 %v322
      %v355 = vunpack.c.l.bf16 %v323
      %v356 = vunpack.c.l.bf16 %v324
      %v357 = vunpack.c.l.bf16 %v325
      %v358 = vunpack.c.l.bf16 %v326
      %v359 = vunpack.c.l.bf16 %v327
      %v360 = vunpack.c.l.bf16 %v328
      %v361 = vunpack.c.l.bf16 %v329
      %v362 = vunpack.c.l.bf16 %v330
      %v363 = vunpack.c.l.bf16 %v331
      %v364 = vunpack.c.l.bf16 %v332
      %v365 = vunpack.c.l.bf16 %v333
      %v366 = vunpack.c.l.bf16 %v334
      %v367 = vunpack.c.l.bf16 %v335
      %v368 = vunpack.c.l.bf16 %v336
      %v369 = vunpack.c.l.bf16 %v337
      %v370 = vunpack.c.l.bf16 %v338
      %v371 = vunpack.c.l.bf16 %v339
      %v372 = vunpack.c.l.bf16 %v340
      %v373 = vunpack.c.l.bf16 %v341
      %v374 = vunpack.c.l.bf16 %v342
      %v375 = vld [vmem:[%s1] sm:$0x1]
      %v377 = vlaneseq
      %v378 = vshrl.u32 %v377, 7
      %v379 = vsub.s32 0, %v378
      %v380 = vrot.slane %v375, %v379
      %v382 = vmul.f32 %v343, %v380
      %v383 = vmul.f32 %v344, %v380
      %v384 = vmul.f32 %v345, %v380
      %v385 = vmul.f32 %v346, %v380
      %v386 = vmul.f32 %v347, %v380
      %v387 = vmul.f32 %v348, %v380
      %v388 = vmul.f32 %v349, %v380
      %v389 = vmul.f32 %v350, %v380
      %v390 = vmul.f32 %v351, %v380
      %v391 = vmul.f32 %v352, %v380
      %v392 = vmul.f32 %v353, %v380
      %v393 = vmul.f32 %v354, %v380
      %v394 = vmul.f32 %v355, %v380
      %v395 = vmul.f32 %v356, %v380
      %v396 = vmul.f32 %v357, %v380
      %v397 = vmul.f32 %v358, %v380
      %v398 = vmul.f32 %v359, %v380
      %v399 = vmul.f32 %v360, %v380
      %v400 = vmul.f32 %v361, %v380
      %v401 = vmul.f32 %v362, %v380
      %v402 = vmul.f32 %v363, %v380
      %v403 = vmul.f32 %v364, %v380
      %v404 = vmul.f32 %v365, %v380
      %v405 = vmul.f32 %v366, %v380
      %v406 = vmul.f32 %v367, %v380
      %v407 = vmul.f32 %v368, %v380
      %v408 = vmul.f32 %v369, %v380
      %v409 = vmul.f32 %v370, %v380
      %v410 = vmul.f32 %v371, %v380
      %v411 = vmul.f32 %v372, %v380
      %v412 = vmul.f32 %v373, %v380
      %v413 = vmul.f32 %v374, %v380
      %v414 = vld [vmem:[%s2] sm:$0x1]
      %v416 = vlaneseq
      %v417 = vshrl.u32 %v416, 7
      %v418 = vsub.s32 0, %v417
      %v419 = vrot.slane %v414, %v418
      %v421 = vadd.f32 %v382, %v419
      %v422 = vadd.f32 %v383, %v419
      %v423 = vadd.f32 %v384, %v419
      %v424 = vadd.f32 %v385, %v419
      %v425 = vadd.f32 %v386, %v419
      %v426 = vadd.f32 %v387, %v419
      %v427 = vadd.f32 %v388, %v419
      %v428 = vadd.f32 %v389, %v419
      %v429 = vadd.f32 %v390, %v419
      %v430 = vadd.f32 %v391, %v419
      %v431 = vadd.f32 %v392, %v419
      %v432 = vadd.f32 %v393, %v419
      %v433 = vadd.f32 %v394, %v419
      %v434 = vadd.f32 %v395, %v419
      %v435 = vadd.f32 %v396, %v419
      %v436 = vadd.f32 %v397, %v419
      %v437 = vadd.f32 %v398, %v419
      %v438 = vadd.f32 %v399, %v419
      %v439 = vadd.f32 %v400, %v419
      %v440 = vadd.f32 %v401, %v419
      %v441 = vadd.f32 %v402, %v419
      %v442 = vadd.f32 %v403, %v419
      %v443 = vadd.f32 %v404, %v419
      %v444 = vadd.f32 %v405, %v419
      %v445 = vadd.f32 %v406, %v419
      %v446 = vadd.f32 %v407, %v419
      %v447 = vadd.f32 %v408, %v419
      %v448 = vadd.f32 %v409, %v419
      %v449 = vadd.f32 %v410, %v419
      %v450 = vadd.f32 %v411, %v419
      %v451 = vadd.f32 %v412, %v419
      %v452 = vadd.f32 %v413, %v419
      %v453 = vmax.f32 %v421, 0.0
      %v454 = vmax.f32 %v422, 0.0
      %v455 = vmax.f32 %v423, 0.0
      %v456 = vmax.f32 %v424, 0.0
      %v457 = vmax.f32 %v425, 0.0
      %v458 = vmax.f32 %v426, 0.0
      %v459 = vmax.f32 %v427, 0.0
      %v460 = vmax.f32 %v428, 0.0
      %v461 = vmax.f32 %v429, 0.0
      %v462 = vmax.f32 %v430, 0.0
      %v463 = vmax.f32 %v431, 0.0
      %v464 = vmax.f32 %v432, 0.0
      %v465 = vmax.f32 %v433, 0.0
      %v466 = vmax.f32 %v434, 0.0
      %v467 = vmax.f32 %v435, 0.0
      %v468 = vmax.f32 %v436, 0.0
      %v469 = vmax.f32 %v437, 0.0
      %v470 = vmax.f32 %v438, 0.0
      %v471 = vmax.f32 %v439, 0.0
      %v472 = vmax.f32 %v440, 0.0
      %v473 = vmax.f32 %v441, 0.0
      %v474 = vmax.f32 %v442, 0.0
      %v475 = vmax.f32 %v443, 0.0
      %v476 = vmax.f32 %v444, 0.0
      %v477 = vmax.f32 %v445, 0.0
      %v478 = vmax.f32 %v446, 0.0
      %v479 = vmax.f32 %v447, 0.0
      %v480 = vmax.f32 %v448, 0.0
      %v481 = vmax.f32 %v449, 0.0
      %v482 = vmax.f32 %v450, 0.0
      %v483 = vmax.f32 %v451, 0.0
      %v484 = vmax.f32 %v452, 0.0
      %s485 = scalar_lea.vmem [#allocation2], 24
      %486 = vst [vmem:[%s485 + $0x1] sm:$0xff] %v453
      %487 = vst [vmem:[%s485 + $0x9] sm:$0xff] %v454
      %488 = vst [vmem:[%s485 + $0x19] sm:$0xff] %v455
      %489 = vst [vmem:[%s485 + $0x21] sm:$0xff] %v456
      %490 = vst [vmem:[%s485 + $0x31] sm:$0xff] %v457
      %491 = vst [vmem:[%s485 + $0x39] sm:$0xff] %v458
      %492 = vst [vmem:[%s485 + $0x49] sm:$0xff] %v459
      %493 = vst [vmem:[%s485 + $0x51] sm:$0xff] %v460
      %494 = vst [vmem:[%s485 + $0x61] sm:$0xff] %v461
      %495 = vst [vmem:[%s485 + $0x69] sm:$0xff] %v462
      %496 = vst [vmem:[%s485 + $0x79] sm:$0xff] %v463
      %497 = vst [vmem:[%s485 + $0x81] sm:$0xff] %v464
      %498 = vst [vmem:[%s485 + $0x91] sm:$0xff] %v465
      %499 = vst [vmem:[%s485 + $0x99] sm:$0xff] %v466
      %500 = vst [vmem:[%s485 + $0xa9] sm:$0xff] %v467
      %501 = vst [vmem:[%s485 + $0xb1] sm:$0xff] %v468
      %502 = vst [vmem:[%s485 + $0xc1] sm:$0xff] %v469
      %503 = vst [vmem:[%s485 + $0xc9] sm:$0xff] %v470
      %504 = vst [vmem:[%s485 + $0xd9] sm:$0xff] %v471
      %505 = vst [vmem:[%s485 + $0xe1] sm:$0xff] %v472
      %506 = vst [vmem:[%s485 + $0xf1] sm:$0xff] %v473
      %507 = vst [vmem:[%s485 + $0xf9] sm:$0xff] %v474
      %508 = vst [vmem:[%s485 + $0x109] sm:$0xff] %v475
      %509 = vst [vmem:[%s485 + $0x111] sm:$0xff] %v476
      %510 = vst [vmem:[%s485 + $0x121] sm:$0xff] %v477
      %511 = vst [vmem:[%s485 + $0x129] sm:$0xff] %v478
      %512 = vst [vmem:[%s485 + $0x139] sm:$0xff] %v479
      %513 = vst [vmem:[%s485 + $0x141] sm:$0xff] %v480
      %514 = vst [vmem:[%s485 + $0x151] sm:$0xff] %v481
      %515 = vst [vmem:[%s485 + $0x159] sm:$0xff] %v482
      %516 = vst [vmem:[%s485 + $0x169] sm:$0xff] %v483
      %517 = vst [vmem:[%s485 + $0x171] sm:$0xff] %v484
      %v518 = vld [vmem:[#allocation2] sm:$0xff]
      %v519 = vld [vmem:[#allocation2 + $0x8] sm:$0xff]
      %v520 = vld [vmem:[#allocation2 + $0x18] sm:$0xff]
      %v521 = vld [vmem:[#allocation2 + $0x20] sm:$0xff]
      %v522 = vld [vmem:[#allocation2 + $0x30] sm:$0xff]
      %v523 = vld [vmem:[#allocation2 + $0x38] sm:$0xff]
      %v524 = vld [vmem:[#allocation2 + $0x48] sm:$0xff]
      %v525 = vld [vmem:[#allocation2 + $0x50] sm:$0xff]
      %v526 = vld [vmem:[#allocation2 + $0x60] sm:$0xff]
      %v527 = vld [vmem:[#allocation2 + $0x68] sm:$0xff]
      %v528 = vld [vmem:[#allocation2 + $0x78] sm:$0xff]
      %v529 = vld [vmem:[#allocation2 + $0x80] sm:$0xff]
      %v530 = vld [vmem:[#allocation2 + $0x90] sm:$0xff]
      %v531 = vld [vmem:[#allocation2 + $0x98] sm:$0xff]
      %v532 = vld [vmem:[#allocation2 + $0xa8] sm:$0xff]
      %v533 = vld [vmem:[#allocation2 + $0xb0] sm:$0xff]
      %v534 = vld [vmem:[#allocation2 + $0xc0] sm:$0xff]
      %v535 = vld [vmem:[#allocation2 + $0xc8] sm:$0xff]
      %v536 = vld [vmem:[#allocation2 + $0xd8] sm:$0xff]
      %v537 = vld [vmem:[#allocation2 + $0xe0] sm:$0xff]
      %v538 = vld [vmem:[#allocation2 + $0xf0] sm:$0xff]
      %v539 = vld [vmem:[#allocation2 + $0xf8] sm:$0xff]
      %v540 = vld [vmem:[#allocation2 + $0x108] sm:$0xff]
      %v541 = vld [vmem:[#allocation2 + $0x110] sm:$0xff]
      %v542 = vld [vmem:[#allocation2 + $0x120] sm:$0xff]
      %v543 = vld [vmem:[#allocation2 + $0x128] sm:$0xff]
      %v544 = vld [vmem:[#allocation2 + $0x138] sm:$0xff]
      %v545 = vld [vmem:[#allocation2 + $0x140] sm:$0xff]
      %v546 = vld [vmem:[#allocation2 + $0x150] sm:$0xff]
      %v547 = vld [vmem:[#allocation2 + $0x158] sm:$0xff]
      %v548 = vld [vmem:[#allocation2 + $0x168] sm:$0xff]
      %v549 = vld [vmem:[#allocation2 + $0x170] sm:$0xff]
      %v550 = vpack.c.bf16 %v519, %v518
      %v551 = vpack.c.bf16 %v521, %v520
      %v552 = vpack.c.bf16 %v523, %v522
      %v553 = vpack.c.bf16 %v525, %v524
      %v554 = vpack.c.bf16 %v527, %v526
      %v555 = vpack.c.bf16 %v529, %v528
      %v556 = vpack.c.bf16 %v531, %v530
      %v557 = vpack.c.bf16 %v533, %v532
      %v558 = vpack.c.bf16 %v535, %v534
      %v559 = vpack.c.bf16 %v537, %v536
      %v560 = vpack.c.bf16 %v539, %v538
      %v561 = vpack.c.bf16 %v541, %v540
      %v562 = vpack.c.bf16 %v543, %v542
      %v563 = vpack.c.bf16 %v545, %v544
      %v564 = vpack.c.bf16 %v547, %v546
      %v565 = vpack.c.bf16 %v549, %v548
      %v566 = vld [vmem:[%s3] sm:$0xf]
      %v567 = vld [vmem:[%s3 + $0x4] sm:$0xf]
      %v568 = vld [vmem:[%s3 + $0x8] sm:$0xf]
      %v569 = vld [vmem:[%s3 + $0xc] sm:$0xf]
      %v570 = vld [vmem:[%s3 + $0x10] sm:$0xf]
      %v571 = vld [vmem:[%s3 + $0x14] sm:$0xf]
      %v572 = vld [vmem:[%s3 + $0x18] sm:$0xf]
      %v573 = vld [vmem:[%s3 + $0x1c] sm:$0xf]
      %v574 = vld [vmem:[%s3 + $0x20] sm:$0xf]
      %v575 = vld [vmem:[%s3 + $0x24] sm:$0xf]
      %v576 = vld [vmem:[%s3 + $0x28] sm:$0xf]
      %v577 = vld [vmem:[%s3 + $0x2c] sm:$0xf]
      %v578 = vld [vmem:[%s3 + $0x30] sm:$0xf]
      %v579 = vld [vmem:[%s3 + $0x34] sm:$0xf]
      %v580 = vld [vmem:[%s3 + $0x38] sm:$0xf]
      %v581 = vld [vmem:[%s3 + $0x3c] sm:$0xf]
      %v582 = vld [vmem:[#allocation2 + $0x1] sm:$0xff]
      %v583 = vld [vmem:[#allocation2 + $0x9] sm:$0xff]
      %v584 = vld [vmem:[#allocation2 + $0x19] sm:$0xff]
      %v585 = vld [vmem:[#allocation2 + $0x21] sm:$0xff]
      %v586 = vld [vmem:[#allocation2 + $0x31] sm:$0xff]
      %v587 = vld [vmem:[#allocation2 + $0x39] sm:$0xff]
      %v588 = vld [vmem:[#allocation2 + $0x49] sm:$0xff]
      %v589 = vld [vmem:[#allocation2 + $0x51] sm:$0xff]
      %v590 = vld [vmem:[#allocation2 + $0x61] sm:$0xff]
      %v591 = vld [vmem:[#allocation2 + $0x69] sm:$0xff]
      %v592 = vld [vmem:[#allocation2 + $0x79] sm:$0xff]
      %v593 = vld [vmem:[#allocation2 + $0x81] sm:$0xff]
      %v594 = vld [vmem:[#allocation2 + $0x91] sm:$0xff]
      %v595 = vld [vmem:[#allocation2 + $0x99] sm:$0xff]
      %v596 = vld [vmem:[#allocation2 + $0xa9] sm:$0xff]
      %v597 = vld [vmem:[#allocation2 + $0xb1] sm:$0xff]
      %v598 = vld [vmem:[#allocation2 + $0xc1] sm:$0xff]
      %v599 = vld [vmem:[#allocation2 + $0xc9] sm:$0xff]
      %v600 = vld [vmem:[#allocation2 + $0xd9] sm:$0xff]
      %v601 = vld [vmem:[#allocation2 + $0xe1] sm:$0xff]
      %v602 = vld [vmem:[#allocation2 + $0xf1] sm:$0xff]
      %v603 = vld [vmem:[#allocation2 + $0xf9] sm:$0xff]
      %v604 = vld [vmem:[#allocation2 + $0x109] sm:$0xff]
      %v605 = vld [vmem:[#allocation2 + $0x111] sm:$0xff]
      %v606 = vld [vmem:[#allocation2 + $0x121] sm:$0xff]
      %v607 = vld [vmem:[#allocation2 + $0x129] sm:$0xff]
      %v608 = vld [vmem:[#allocation2 + $0x139] sm:$0xff]
      %v609 = vld [vmem:[#allocation2 + $0x141] sm:$0xff]
      %v610 = vld [vmem:[#allocation2 + $0x151] sm:$0xff]
      %v611 = vld [vmem:[#allocation2 + $0x159] sm:$0xff]
      %v612 = vld [vmem:[#allocation2 + $0x169] sm:$0xff]
      %v613 = vld [vmem:[#allocation2 + $0x171] sm:$0xff]
      %v614 = vpack.c.bf16 %v583, %v582
      %v615 = vpack.c.bf16 %v585, %v584
      %v616 = vpack.c.bf16 %v587, %v586
      %v617 = vpack.c.bf16 %v589, %v588
      %v618 = vpack.c.bf16 %v591, %v590
      %v619 = vpack.c.bf16 %v593, %v592
      %v620 = vpack.c.bf16 %v595, %v594
      %v621 = vpack.c.bf16 %v597, %v596
      %v622 = vpack.c.bf16 %v599, %v598
      %v623 = vpack.c.bf16 %v601, %v600
      %v624 = vpack.c.bf16 %v603, %v602
      %v625 = vpack.c.bf16 %v605, %v604
      %v626 = vpack.c.bf16 %v607, %v606
      %v627 = vpack.c.bf16 %v609, %v608
      %v628 = vpack.c.bf16 %v611, %v610
      %v629 = vpack.c.bf16 %v613, %v612
      %s630 = scalar_lea.vmem %s3, 64
      %v631 = vld [vmem:[%s630] sm:$0xf]
      %v632 = vld [vmem:[%s630 + $0x4] sm:$0xf]
      %v633 = vld [vmem:[%s630 + $0x8] sm:$0xf]
      %v634 = vld [vmem:[%s630 + $0xc] sm:$0xf]
      %v635 = vld [vmem:[%s630 + $0x10] sm:$0xf]
      %v636 = vld [vmem:[%s630 + $0x14] sm:$0xf]
      %v637 = vld [vmem:[%s630 + $0x18] sm:$0xf]
      %v638 = vld [vmem:[%s630 + $0x1c] sm:$0xf]
      %v639 = vld [vmem:[%s630 + $0x20] sm:$0xf]
      %v640 = vld [vmem:[%s630 + $0x24] sm:$0xf]
      %v641 = vld [vmem:[%s630 + $0x28] sm:$0xf]
      %v642 = vld [vmem:[%s630 + $0x2c] sm:$0xf]
      %v643 = vld [vmem:[%s630 + $0x30] sm:$0xf]
      %v644 = vld [vmem:[%s630 + $0x34] sm:$0xf]
      %v645 = vld [vmem:[%s630 + $0x38] sm:$0xf]
      %v646 = vld [vmem:[%s630 + $0x3c] sm:$0xf]
      %v663 = vunpack.c.l.b16 %v631
      %v664 = vunpack.c.l.b16 %v632
      %v665 = vunpack.c.l.b16 %v633
      %v666 = vunpack.c.l.b16 %v634
      %v667 = vunpack.c.l.b16 %v635
      %v668 = vunpack.c.l.b16 %v636
      %v669 = vunpack.c.l.b16 %v637
      %v670 = vunpack.c.l.b16 %v638
      %v671 = vunpack.c.l.b16 %v639
      %v672 = vunpack.c.l.b16 %v640
      %v673 = vunpack.c.l.b16 %v641
      %v674 = vunpack.c.l.b16 %v642
      %v675 = vunpack.c.l.b16 %v643
      %v676 = vunpack.c.l.b16 %v644
      %v677 = vunpack.c.l.b16 %v645
      %v678 = vunpack.c.l.b16 %v646
      %v679 = vpack.c.b16 %v664, %v663
      %v680 = vpack.c.b16 %v666, %v665
      %v681 = vpack.c.b16 %v668, %v667
      %v682 = vpack.c.b16 %v670, %v669
      %v683 = vpack.c.b16 %v672, %v671
      %v684 = vpack.c.b16 %v674, %v673
      %v685 = vpack.c.b16 %v676, %v675
      %v686 = vpack.c.b16 %v678, %v677
      %695 = vmatprep.subr.bf16.mxu0 0
      %696 = vmatpush1.bf16.msra.mxu0 %v686
      %697 = vmatprep.subr.bf16.mxu0 0
      %698 = vmatpush1.bf16.msra.mxu0 %v685
      %699 = vmatprep.subr.bf16.mxu0 0
      %700 = vmatpush1.bf16.msra.mxu0 %v684
      %701 = vmatprep.subr.bf16.mxu0 0
      %702 = vmatpush1.bf16.msra.mxu0 %v683
      %703 = vmatprep.subr.bf16.mxu0 0
      %704 = vmatpush1.bf16.msra.mxu0 %v682
      %705 = vmatprep.subr.bf16.mxu0 0
      %706 = vmatpush1.bf16.msra.mxu0 %v681
      %707 = vmatprep.subr.bf16.mxu0 0
      %708 = vmatpush1.bf16.msra.mxu0 %v680
      %709 = vmatprep.subr.bf16.mxu0 0
      %710 = vmatpush1.bf16.msra.mxu0 %v679
      %711 = vmatprep.subr.bf16.mxu0 0
      %712 = vmatpush2.bf16.msra.mxu0 0
      %713 = vmatprep.subr.bf16.mxu0 0
      %714 = vmatpush2.bf16.msra.mxu0 0
      %715 = vmatprep.subr.bf16.mxu0 0
      %716 = vmatpush2.bf16.msra.mxu0 0
      %717 = vmatprep.subr.bf16.mxu0 0
      %718 = vmatpush2.bf16.msra.mxu0 0
      %719 = vmatprep.subr.bf16.mxu0 0
      %720 = vmatpush2.bf16.msra.mxu0 0
      %721 = vmatprep.subr.bf16.mxu0 0
      %722 = vmatpush2.bf16.msra.mxu0 0
      %723 = vmatprep.subr.bf16.mxu0 0
      %724 = vmatpush2.bf16.msra.mxu0 0
      %725 = vmatprep.subr.bf16.mxu0 0
      %726 = vmatpush2.bf16.msra.mxu0 0
      %727 = vmatprep.mubr.bf16.mxu0 0
      %728 = vmatmul.mubr.bf16.gmra.mxu0 %v614
      %v729 = vpop.f32.mrf.mxu0
      %v730 = vadd.f32 0.0, %v729
      %v731 = vpop.f32.mrf.mxu0
      %v732 = vpop.f32.mrf.mxu0
      %v733 = vadd.f32 0.0, %v732
      %v734 = vpop.f32.mrf.mxu0
      %735 = vmatprep.mubr.bf16.mxu0 0
      %736 = vmatmul.mubr.bf16.gmra.mxu0 %v615
      %v737 = vpop.f32.mrf.mxu0
      %v738 = vadd.f32 0.0, %v737
      %v739 = vpop.f32.mrf.mxu0
      %v740 = vpop.f32.mrf.mxu0
      %v741 = vadd.f32 0.0, %v740
      %v742 = vpop.f32.mrf.mxu0
      %743 = vmatprep.mubr.bf16.mxu0 0
      %744 = vmatmul.mubr.bf16.gmra.mxu0 %v616
      %v745 = vpop.f32.mrf.mxu0
      %v746 = vadd.f32 0.0, %v745
      %v747 = vpop.f32.mrf.mxu0
      %v748 = vpop.f32.mrf.mxu0
      %v749 = vadd.f32 0.0, %v748
      %v750 = vpop.f32.mrf.mxu0
      %751 = vmatprep.mubr.bf16.mxu0 0
      %752 = vmatmul.mubr.bf16.gmra.mxu0 %v617
      %v753 = vpop.f32.mrf.mxu0
      %v754 = vadd.f32 0.0, %v753
      %v755 = vpop.f32.mrf.mxu0
      %v756 = vpop.f32.mrf.mxu0
      %v757 = vadd.f32 0.0, %v756
      %v758 = vpop.f32.mrf.mxu0
      %759 = vmatprep.mubr.bf16.mxu0 0
      %760 = vmatmul.mubr.bf16.gmra.mxu0 %v618
      %v761 = vpop.f32.mrf.mxu0
      %v762 = vadd.f32 0.0, %v761
      %v763 = vpop.f32.mrf.mxu0
      %v764 = vpop.f32.mrf.mxu0
      %v765 = vadd.f32 0.0, %v764
      %v766 = vpop.f32.mrf.mxu0
      %767 = vmatprep.mubr.bf16.mxu0 0
      %768 = vmatmul.mubr.bf16.gmra.mxu0 %v619
      %v769 = vpop.f32.mrf.mxu0
      %v770 = vadd.f32 0.0, %v769
      %v771 = vpop.f32.mrf.mxu0
      %v772 = vpop.f32.mrf.mxu0
      %v773 = vadd.f32 0.0, %v772
      %v774 = vpop.f32.mrf.mxu0
      %775 = vmatprep.mubr.bf16.mxu0 0
      %776 = vmatmul.mubr.bf16.gmra.mxu0 %v620
      %v777 = vpop.f32.mrf.mxu0
      %v778 = vadd.f32 0.0, %v777
      %v779 = vpop.f32.mrf.mxu0
      %v780 = vpop.f32.mrf.mxu0
      %v781 = vadd.f32 0.0, %v780
      %v782 = vpop.f32.mrf.mxu0
      %783 = vmatprep.mubr.bf16.mxu0 0
      %784 = vmatmul.mubr.bf16.gmra.mxu0 %v621
      %v785 = vpop.f32.mrf.mxu0
      %v786 = vadd.f32 0.0, %v785
      %v787 = vpop.f32.mrf.mxu0
      %v788 = vpop.f32.mrf.mxu0
      %v789 = vadd.f32 0.0, %v788
      %v790 = vpop.f32.mrf.mxu0
      %791 = vmatprep.mubr.bf16.mxu0 0
      %792 = vmatmul.mubr.bf16.gmra.mxu0 %v622
      %v793 = vpop.f32.mrf.mxu0
      %v794 = vadd.f32 0.0, %v793
      %v795 = vpop.f32.mrf.mxu0
      %v796 = vpop.f32.mrf.mxu0
      %v797 = vadd.f32 0.0, %v796
      %v798 = vpop.f32.mrf.mxu0
      %799 = vmatprep.mubr.bf16.mxu0 0
      %800 = vmatmul.mubr.bf16.gmra.mxu0 %v623
      %v801 = vpop.f32.mrf.mxu0
      %v802 = vadd.f32 0.0, %v801
      %v803 = vpop.f32.mrf.mxu0
      %v804 = vpop.f32.mrf.mxu0
      %v805 = vadd.f32 0.0, %v804
      %v806 = vpop.f32.mrf.mxu0
      %807 = vmatprep.mubr.bf16.mxu0 0
      %808 = vmatmul.mubr.bf16.gmra.mxu0 %v624
      %v809 = vpop.f32.mrf.mxu0
      %v810 = vadd.f32 0.0, %v809
      %v811 = vpop.f32.mrf.mxu0
      %v812 = vpop.f32.mrf.mxu0
      %v813 = vadd.f32 0.0, %v812
      %v814 = vpop.f32.mrf.mxu0
      %815 = vmatprep.mubr.bf16.mxu0 0
      %816 = vmatmul.mubr.bf16.gmra.mxu0 %v625
      %v817 = vpop.f32.mrf.mxu0
      %v818 = vadd.f32 0.0, %v817
      %v819 = vpop.f32.mrf.mxu0
      %v820 = vpop.f32.mrf.mxu0
      %v821 = vadd.f32 0.0, %v820
      %v822 = vpop.f32.mrf.mxu0
      %823 = vmatprep.mubr.bf16.mxu0 0
      %824 = vmatmul.mubr.bf16.gmra.mxu0 %v626
      %v825 = vpop.f32.mrf.mxu0
      %v826 = vadd.f32 0.0, %v825
      %v827 = vpop.f32.mrf.mxu0
      %v828 = vpop.f32.mrf.mxu0
      %v829 = vadd.f32 0.0, %v828
      %v830 = vpop.f32.mrf.mxu0
      %831 = vmatprep.mubr.bf16.mxu0 0
      %832 = vmatmul.mubr.bf16.gmra.mxu0 %v627
      %v833 = vpop.f32.mrf.mxu0
      %v834 = vadd.f32 0.0, %v833
      %v835 = vpop.f32.mrf.mxu0
      %v836 = vpop.f32.mrf.mxu0
      %v837 = vadd.f32 0.0, %v836
      %v838 = vpop.f32.mrf.mxu0
      %839 = vmatprep.mubr.bf16.mxu0 0
      %840 = vmatmul.mubr.bf16.gmra.mxu0 %v628
      %v841 = vpop.f32.mrf.mxu0
      %v842 = vadd.f32 0.0, %v841
      %v843 = vpop.f32.mrf.mxu0
      %v844 = vpop.f32.mrf.mxu0
      %v845 = vadd.f32 0.0, %v844
      %v846 = vpop.f32.mrf.mxu0
      %847 = vmatprep.mubr.bf16.mxu0 0
      %848 = vmatmul.mubr.bf16.gmra.mxu0 %v629
      %v849 = vpop.f32.mrf.mxu0
      %v850 = vadd.f32 0.0, %v849
      %v851 = vpop.f32.mrf.mxu0
      %v852 = vpop.f32.mrf.mxu0
      %v853 = vadd.f32 0.0, %v852
      %v854 = vpop.f32.mrf.mxu0
      %855 = vdwg.mxu0
      %v872 = vunpack.c.l.b16 %v566
      %v873 = vunpack.c.l.b16 %v567
      %v874 = vunpack.c.l.b16 %v568
      %v875 = vunpack.c.l.b16 %v569
      %v876 = vunpack.c.l.b16 %v570
      %v877 = vunpack.c.l.b16 %v571
      %v878 = vunpack.c.l.b16 %v572
      %v879 = vunpack.c.l.b16 %v573
      %v880 = vunpack.c.l.b16 %v574
      %v881 = vunpack.c.l.b16 %v575
      %v882 = vunpack.c.l.b16 %v576
      %v883 = vunpack.c.l.b16 %v577
      %v884 = vunpack.c.l.b16 %v578
      %v885 = vunpack.c.l.b16 %v579
      %v886 = vunpack.c.l.b16 %v580
      %v887 = vunpack.c.l.b16 %v581
      %v888 = vpack.c.b16 %v873, %v872
      %v889 = vpack.c.b16 %v875, %v874
      %v890 = vpack.c.b16 %v877, %v876
      %v891 = vpack.c.b16 %v879, %v878
      %v892 = vpack.c.b16 %v881, %v880
      %v893 = vpack.c.b16 %v883, %v882
      %v894 = vpack.c.b16 %v885, %v884
      %v895 = vpack.c.b16 %v887, %v886
      %904 = vmatprep.subr.bf16.mxu0 0
      %905 = vmatpush1.bf16.msra.mxu0 %v895
      %906 = vmatprep.subr.bf16.mxu0 0
      %907 = vmatpush1.bf16.msra.mxu0 %v894
      %908 = vmatprep.subr.bf16.mxu0 0
      %909 = vmatpush1.bf16.msra.mxu0 %v893
      %910 = vmatprep.subr.bf16.mxu0 0
      %911 = vmatpush1.bf16.msra.mxu0 %v892
      %912 = vmatprep.subr.bf16.mxu0 0
      %913 = vmatpush1.bf16.msra.mxu0 %v891
      %914 = vmatprep.subr.bf16.mxu0 0
      %915 = vmatpush1.bf16.msra.mxu0 %v890
      %916 = vmatprep.subr.bf16.mxu0 0
      %917 = vmatpush1.bf16.msra.mxu0 %v889
      %918 = vmatprep.subr.bf16.mxu0 0
      %919 = vmatpush1.bf16.msra.mxu0 %v888
      %920 = vmatprep.subr.bf16.mxu0 0
      %921 = vmatpush2.bf16.msra.mxu0 0
      %922 = vmatprep.subr.bf16.mxu0 0
      %923 = vmatpush2.bf16.msra.mxu0 0
      %924 = vmatprep.subr.bf16.mxu0 0
      %925 = vmatpush2.bf16.msra.mxu0 0
      %926 = vmatprep.subr.bf16.mxu0 0
      %927 = vmatpush2.bf16.msra.mxu0 0
      %928 = vmatprep.subr.bf16.mxu0 0
      %929 = vmatpush2.bf16.msra.mxu0 0
      %930 = vmatprep.subr.bf16.mxu0 0
      %931 = vmatpush2.bf16.msra.mxu0 0
      %932 = vmatprep.subr.bf16.mxu0 0
      %933 = vmatpush2.bf16.msra.mxu0 0
      %934 = vmatprep.subr.bf16.mxu0 0
      %935 = vmatpush2.bf16.msra.mxu0 0
      %936 = vmatprep.mubr.bf16.mxu0 0
      %937 = vmatmul.mubr.bf16.gmra.mxu0 %v550
      %v938 = vpop.f32.mrf.mxu0
      %v939 = vadd.f32 %v730, %v938
      %v940 = vpop.f32.mrf.mxu0
      %v941 = vpop.f32.mrf.mxu0
      %v942 = vadd.f32 %v733, %v941
      %v943 = vpop.f32.mrf.mxu0
      %944 = vmatprep.mubr.bf16.mxu0 0
      %945 = vmatmul.mubr.bf16.gmra.mxu0 %v551
      %v946 = vpop.f32.mrf.mxu0
      %v947 = vadd.f32 %v738, %v946
      %v948 = vpop.f32.mrf.mxu0
      %v949 = vpop.f32.mrf.mxu0
      %v950 = vadd.f32 %v741, %v949
      %v951 = vpop.f32.mrf.mxu0
      %952 = vmatprep.mubr.bf16.mxu0 0
      %953 = vmatmul.mubr.bf16.gmra.mxu0 %v552
      %v954 = vpop.f32.mrf.mxu0
      %v955 = vadd.f32 %v746, %v954
      %v956 = vpop.f32.mrf.mxu0
      %v957 = vpop.f32.mrf.mxu0
      %v958 = vadd.f32 %v749, %v957
      %v959 = vpop.f32.mrf.mxu0
      %960 = vmatprep.mubr.bf16.mxu0 0
      %961 = vmatmul.mubr.bf16.gmra.mxu0 %v553
      %v962 = vpop.f32.mrf.mxu0
      %v963 = vadd.f32 %v754, %v962
      %v964 = vpop.f32.mrf.mxu0
      %v965 = vpop.f32.mrf.mxu0
      %v966 = vadd.f32 %v757, %v965
      %v967 = vpop.f32.mrf.mxu0
      %968 = vmatprep.mubr.bf16.mxu0 0
      %969 = vmatmul.mubr.bf16.gmra.mxu0 %v554
      %v970 = vpop.f32.mrf.mxu0
      %v971 = vadd.f32 %v762, %v970
      %v972 = vpop.f32.mrf.mxu0
      %v973 = vpop.f32.mrf.mxu0
      %v974 = vadd.f32 %v765, %v973
      %v975 = vpop.f32.mrf.mxu0
      %976 = vmatprep.mubr.bf16.mxu0 0
      %977 = vmatmul.mubr.bf16.gmra.mxu0 %v555
      %v978 = vpop.f32.mrf.mxu0
      %v979 = vadd.f32 %v770, %v978
      %v980 = vpop.f32.mrf.mxu0
      %v981 = vpop.f32.mrf.mxu0
      %v982 = vadd.f32 %v773, %v981
      %v983 = vpop.f32.mrf.mxu0
      %984 = vmatprep.mubr.bf16.mxu0 0
      %985 = vmatmul.mubr.bf16.gmra.mxu0 %v556
      %v986 = vpop.f32.mrf.mxu0
      %v987 = vadd.f32 %v778, %v986
      %v988 = vpop.f32.mrf.mxu0
      %v989 = vpop.f32.mrf.mxu0
      %v990 = vadd.f32 %v781, %v989
      %v991 = vpop.f32.mrf.mxu0
      %992 = vmatprep.mubr.bf16.mxu0 0
      %993 = vmatmul.mubr.bf16.gmra.mxu0 %v557
      %v994 = vpop.f32.mrf.mxu0
      %v995 = vadd.f32 %v786, %v994
      %v996 = vpop.f32.mrf.mxu0
      %v997 = vpop.f32.mrf.mxu0
      %v998 = vadd.f32 %v789, %v997
      %v999 = vpop.f32.mrf.mxu0
      %1000 = vmatprep.mubr.bf16.mxu0 0
      %1001 = vmatmul.mubr.bf16.gmra.mxu0 %v558
      %v1002 = vpop.f32.mrf.mxu0
      %v1003 = vadd.f32 %v794, %v1002
      %v1004 = vpop.f32.mrf.mxu0
      %v1005 = vpop.f32.mrf.mxu0
      %v1006 = vadd.f32 %v797, %v1005
      %v1007 = vpop.f32.mrf.mxu0
      %1008 = vmatprep.mubr.bf16.mxu0 0
      %1009 = vmatmul.mubr.bf16.gmra.mxu0 %v559
      %v1010 = vpop.f32.mrf.mxu0
      %v1011 = vadd.f32 %v802, %v1010
      %v1012 = vpop.f32.mrf.mxu0
      %v1013 = vpop.f32.mrf.mxu0
      %v1014 = vadd.f32 %v805, %v1013
      %v1015 = vpop.f32.mrf.mxu0
      %1016 = vmatprep.mubr.bf16.mxu0 0
      %1017 = vmatmul.mubr.bf16.gmra.mxu0 %v560
      %v1018 = vpop.f32.mrf.mxu0
      %v1019 = vadd.f32 %v810, %v1018
      %v1020 = vpop.f32.mrf.mxu0
      %v1021 = vpop.f32.mrf.mxu0
      %v1022 = vadd.f32 %v813, %v1021
      %v1023 = vpop.f32.mrf.mxu0
      %1024 = vmatprep.mubr.bf16.mxu0 0
      %1025 = vmatmul.mubr.bf16.gmra.mxu0 %v561
      %v1026 = vpop.f32.mrf.mxu0
      %v1027 = vadd.f32 %v818, %v1026
      %v1028 = vpop.f32.mrf.mxu0
      %v1029 = vpop.f32.mrf.mxu0
      %v1030 = vadd.f32 %v821, %v1029
      %v1031 = vpop.f32.mrf.mxu0
      %1032 = vmatprep.mubr.bf16.mxu0 0
      %1033 = vmatmul.mubr.bf16.gmra.mxu0 %v562
      %v1034 = vpop.f32.mrf.mxu0
      %v1035 = vadd.f32 %v826, %v1034
      %v1036 = vpop.f32.mrf.mxu0
      %v1037 = vpop.f32.mrf.mxu0
      %v1038 = vadd.f32 %v829, %v1037
      %v1039 = vpop.f32.mrf.mxu0
      %1040 = vmatprep.mubr.bf16.mxu0 0
      %1041 = vmatmul.mubr.bf16.gmra.mxu0 %v563
      %v1042 = vpop.f32.mrf.mxu0
      %v1043 = vadd.f32 %v834, %v1042
      %v1044 = vpop.f32.mrf.mxu0
      %v1045 = vpop.f32.mrf.mxu0
      %v1046 = vadd.f32 %v837, %v1045
      %v1047 = vpop.f32.mrf.mxu0
      %1048 = vmatprep.mubr.bf16.mxu0 0
      %1049 = vmatmul.mubr.bf16.gmra.mxu0 %v564
      %v1050 = vpop.f32.mrf.mxu0
      %v1051 = vadd.f32 %v842, %v1050
      %v1052 = vpop.f32.mrf.mxu0
      %v1053 = vpop.f32.mrf.mxu0
      %v1054 = vadd.f32 %v845, %v1053
      %v1055 = vpop.f32.mrf.mxu0
      %1056 = vmatprep.mubr.bf16.mxu0 0
      %1057 = vmatmul.mubr.bf16.gmra.mxu0 %v565
      %v1058 = vpop.f32.mrf.mxu0
      %v1059 = vadd.f32 %v850, %v1058
      %v1060 = vpop.f32.mrf.mxu0
      %v1061 = vpop.f32.mrf.mxu0
      %v1062 = vadd.f32 %v853, %v1061
      %v1063 = vpop.f32.mrf.mxu0
      %1064 = vdwg.mxu0
      %v1065 = vld [vmem:[#allocation2 + $0x2] sm:$0xff]
      %v1066 = vld [vmem:[#allocation2 + $0xa] sm:$0xff]
      %v1067 = vld [vmem:[#allocation2 + $0x1a] sm:$0xff]
      %v1068 = vld [vmem:[#allocation2 + $0x22] sm:$0xff]
      %v1069 = vld [vmem:[#allocation2 + $0x32] sm:$0xff]
      %v1070 = vld [vmem:[#allocation2 + $0x3a] sm:$0xff]
      %v1071 = vld [vmem:[#allocation2 + $0x4a] sm:$0xff]
      %v1072 = vld [vmem:[#allocation2 + $0x52] sm:$0xff]
      %v1073 = vld [vmem:[#allocation2 + $0x62] sm:$0xff]
      %v1074 = vld [vmem:[#allocation2 + $0x6a] sm:$0xff]
      %v1075 = vld [vmem:[#allocation2 + $0x7a] sm:$0xff]
      %v1076 = vld [vmem:[#allocation2 + $0x82] sm:$0xff]
      %v1077 = vld [vmem:[#allocation2 + $0x92] sm:$0xff]
      %v1078 = vld [vmem:[#allocation2 + $0x9a] sm:$0xff]
      %v1079 = vld [vmem:[#allocation2 + $0xaa] sm:$0xff]
      %v1080 = vld [vmem:[#allocation2 + $0xb2] sm:$0xff]
      %v1081 = vld [vmem:[#allocation2 + $0xc2] sm:$0xff]
      %v1082 = vld [vmem:[#allocation2 + $0xca] sm:$0xff]
      %v1083 = vld [vmem:[#allocation2 + $0xda] sm:$0xff]
      %v1084 = vld [vmem:[#allocation2 + $0xe2] sm:$0xff]
      %v1085 = vld [vmem:[#allocation2 + $0xf2] sm:$0xff]
      %v1086 = vld [vmem:[#allocation2 + $0xfa] sm:$0xff]
      %v1087 = vld [vmem:[#allocation2 + $0x10a] sm:$0xff]
      %v1088 = vld [vmem:[#allocation2 + $0x112] sm:$0xff]
      %v1089 = vld [vmem:[#allocation2 + $0x122] sm:$0xff]
      %v1090 = vld [vmem:[#allocation2 + $0x12a] sm:$0xff]
      %v1091 = vld [vmem:[#allocation2 + $0x13a] sm:$0xff]
      %v1092 = vld [vmem:[#allocation2 + $0x142] sm:$0xff]
      %v1093 = vld [vmem:[#allocation2 + $0x152] sm:$0xff]
      %v1094 = vld [vmem:[#allocation2 + $0x15a] sm:$0xff]
      %v1095 = vld [vmem:[#allocation2 + $0x16a] sm:$0xff]
      %v1096 = vld [vmem:[#allocation2 + $0x172] sm:$0xff]
      %v1097 = vpack.c.bf16 %v1066, %v1065
      %v1098 = vpack.c.bf16 %v1068, %v1067
      %v1099 = vpack.c.bf16 %v1070, %v1069
      %v1100 = vpack.c.bf16 %v1072, %v1071
      %v1101 = vpack.c.bf16 %v1074, %v1073
      %v1102 = vpack.c.bf16 %v1076, %v1075
      %v1103 = vpack.c.bf16 %v1078, %v1077
      %v1104 = vpack.c.bf16 %v1080, %v1079
      %v1105 = vpack.c.bf16 %v1082, %v1081
      %v1106 = vpack.c.bf16 %v1084, %v1083
      %v1107 = vpack.c.bf16 %v1086, %v1085
      %v1108 = vpack.c.bf16 %v1088, %v1087
      %v1109 = vpack.c.bf16 %v1090, %v1089
      %v1110 = vpack.c.bf16 %v1092, %v1091
      %v1111 = vpack.c.bf16 %v1094, %v1093
      %v1112 = vpack.c.bf16 %v1096, %v1095
      %s1113 = scalar_lea.vmem %s3, 128
      %v1114 = vld [vmem:[%s1113] sm:$0xf]
      %v1115 = vld [vmem:[%s1113 + $0x4] sm:$0xf]
      %v1116 = vld [vmem:[%s1113 + $0x8] sm:$0xf]
      %v1117 = vld [vmem:[%s1113 + $0xc] sm:$0xf]
      %v1118 = vld [vmem:[%s1113 + $0x10] sm:$0xf]
      %v1119 = vld [vmem:[%s1113 + $0x14] sm:$0xf]
      %v1120 = vld [vmem:[%s1113 + $0x18] sm:$0xf]
      %v1121 = vld [vmem:[%s1113 + $0x1c] sm:$0xf]
      %v1122 = vld [vmem:[%s1113 + $0x20] sm:$0xf]
      %v1123 = vld [vmem:[%s1113 + $0x24] sm:$0xf]
      %v1124 = vld [vmem:[%s1113 + $0x28] sm:$0xf]
      %v1125 = vld [vmem:[%s1113 + $0x2c] sm:$0xf]
      %v1126 = vld [vmem:[%s1113 + $0x30] sm:$0xf]
      %v1127 = vld [vmem:[%s1113 + $0x34] sm:$0xf]
      %v1128 = vld [vmem:[%s1113 + $0x38] sm:$0xf]
      %v1129 = vld [vmem:[%s1113 + $0x3c] sm:$0xf]
      %v1146 = vunpack.c.l.b16 %v1114
      %v1147 = vunpack.c.l.b16 %v1115
      %v1148 = vunpack.c.l.b16 %v1116
      %v1149 = vunpack.c.l.b16 %v1117
      %v1150 = vunpack.c.l.b16 %v1118
      %v1151 = vunpack.c.l.b16 %v1119
      %v1152 = vunpack.c.l.b16 %v1120
      %v1153 = vunpack.c.l.b16 %v1121
      %v1154 = vunpack.c.l.b16 %v1122
      %v1155 = vunpack.c.l.b16 %v1123
      %v1156 = vunpack.c.l.b16 %v1124
      %v1157 = vunpack.c.l.b16 %v1125
      %v1158 = vunpack.c.l.b16 %v1126
      %v1159 = vunpack.c.l.b16 %v1127
      %v1160 = vunpack.c.l.b16 %v1128
      %v1161 = vunpack.c.l.b16 %v1129
      %v1162 = vpack.c.b16 %v1147, %v1146
      %v1163 = vpack.c.b16 %v1149, %v1148
      %v1164 = vpack.c.b16 %v1151, %v1150
      %v1165 = vpack.c.b16 %v1153, %v1152
      %v1166 = vpack.c.b16 %v1155, %v1154
      %v1167 = vpack.c.b16 %v1157, %v1156
      %v1168 = vpack.c.b16 %v1159, %v1158
      %v1169 = vpack.c.b16 %v1161, %v1160
      %1178 = vmatprep.subr.bf16.mxu0 0
      %1179 = vmatpush1.bf16.msra.mxu0 %v1169
      %1180 = vmatprep.subr.bf16.mxu0 0
      %1181 = vmatpush1.bf16.msra.mxu0 %v1168
      %1182 = vmatprep.subr.bf16.mxu0 0
      %1183 = vmatpush1.bf16.msra.mxu0 %v1167
      %1184 = vmatprep.subr.bf16.mxu0 0
      %1185 = vmatpush1.bf16.msra.mxu0 %v1166
      %1186 = vmatprep.subr.bf16.mxu0 0
      %1187 = vmatpush1.bf16.msra.mxu0 %v1165
      %1188 = vmatprep.subr.bf16.mxu0 0
      %1189 = vmatpush1.bf16.msra.mxu0 %v1164
      %1190 = vmatprep.subr.bf16.mxu0 0
      %1191 = vmatpush1.bf16.msra.mxu0 %v1163
      %1192 = vmatprep.subr.bf16.mxu0 0
      %1193 = vmatpush1.bf16.msra.mxu0 %v1162
      %1194 = vmatprep.subr.bf16.mxu0 0
      %1195 = vmatpush2.bf16.msra.mxu0 0
      %1196 = vmatprep.subr.bf16.mxu0 0
      %1197 = vmatpush2.bf16.msra.mxu0 0
      %1198 = vmatprep.subr.bf16.mxu0 0
      %1199 = vmatpush2.bf16.msra.mxu0 0
      %1200 = vmatprep.subr.bf16.mxu0 0
      %1201 = vmatpush2.bf16.msra.mxu0 0
      %1202 = vmatprep.subr.bf16.mxu0 0
      %1203 = vmatpush2.bf16.msra.mxu0 0
      %1204 = vmatprep.subr.bf16.mxu0 0
      %1205 = vmatpush2.bf16.msra.mxu0 0
      %1206 = vmatprep.subr.bf16.mxu0 0
      %1207 = vmatpush2.bf16.msra.mxu0 0
      %1208 = vmatprep.subr.bf16.mxu0 0
      %1209 = vmatpush2.bf16.msra.mxu0 0
      %1210 = vmatprep.mubr.bf16.mxu0 0
      %1211 = vmatmul.mubr.bf16.gmra.mxu0 %v1097
      %v1212 = vpop.f32.mrf.mxu0
      %v1213 = vadd.f32 0.0, %v1212
      %v1214 = vpop.f32.mrf.mxu0
      %v1215 = vpop.f32.mrf.mxu0
      %v1216 = vadd.f32 0.0, %v1215
      %v1217 = vpop.f32.mrf.mxu0
      %1218 = vmatprep.mubr.bf16.mxu0 0
      %1219 = vmatmul.mubr.bf16.gmra.mxu0 %v1098
      %v1220 = vpop.f32.mrf.mxu0
      %v1221 = vadd.f32 0.0, %v1220
      %v1222 = vpop.f32.mrf.mxu0
      %v1223 = vpop.f32.mrf.mxu0
      %v1224 = vadd.f32 0.0, %v1223
      %v1225 = vpop.f32.mrf.mxu0
      %1226 = vmatprep.mubr.bf16.mxu0 0
      %1227 = vmatmul.mubr.bf16.gmra.mxu0 %v1099
      %v1228 = vpop.f32.mrf.mxu0
      %v1229 = vadd.f32 0.0, %v1228
      %v1230 = vpop.f32.mrf.mxu0
      %v1231 = vpop.f32.mrf.mxu0
      %v1232 = vadd.f32 0.0, %v1231
      %v1233 = vpop.f32.mrf.mxu0
      %1234 = vmatprep.mubr.bf16.mxu0 0
      %1235 = vmatmul.mubr.bf16.gmra.mxu0 %v1100
      %v1236 = vpop.f32.mrf.mxu0
      %v1237 = vadd.f32 0.0, %v1236
      %v1238 = vpop.f32.mrf.mxu0
      %v1239 = vpop.f32.mrf.mxu0
      %v1240 = vadd.f32 0.0, %v1239
      %v1241 = vpop.f32.mrf.mxu0
      %1242 = vmatprep.mubr.bf16.mxu0 0
      %1243 = vmatmul.mubr.bf16.gmra.mxu0 %v1101
      %v1244 = vpop.f32.mrf.mxu0
      %v1245 = vadd.f32 0.0, %v1244
      %v1246 = vpop.f32.mrf.mxu0
      %v1247 = vpop.f32.mrf.mxu0
      %v1248 = vadd.f32 0.0, %v1247
      %v1249 = vpop.f32.mrf.mxu0
      %1250 = vmatprep.mubr.bf16.mxu0 0
      %1251 = vmatmul.mubr.bf16.gmra.mxu0 %v1102
      %v1252 = vpop.f32.mrf.mxu0
      %v1253 = vadd.f32 0.0, %v1252
      %v1254 = vpop.f32.mrf.mxu0
      %v1255 = vpop.f32.mrf.mxu0
      %v1256 = vadd.f32 0.0, %v1255
      %v1257 = vpop.f32.mrf.mxu0
      %1258 = vmatprep.mubr.bf16.mxu0 0
      %1259 = vmatmul.mubr.bf16.gmra.mxu0 %v1103
      %v1260 = vpop.f32.mrf.mxu0
      %v1261 = vadd.f32 0.0, %v1260
      %v1262 = vpop.f32.mrf.mxu0
      %v1263 = vpop.f32.mrf.mxu0
      %v1264 = vadd.f32 0.0, %v1263
      %v1265 = vpop.f32.mrf.mxu0
      %1266 = vmatprep.mubr.bf16.mxu0 0
      %1267 = vmatmul.mubr.bf16.gmra.mxu0 %v1104
      %v1268 = vpop.f32.mrf.mxu0
      %v1269 = vadd.f32 0.0, %v1268
      %v1270 = vpop.f32.mrf.mxu0
      %v1271 = vpop.f32.mrf.mxu0
      %v1272 = vadd.f32 0.0, %v1271
      %v1273 = vpop.f32.mrf.mxu0
      %1274 = vmatprep.mubr.bf16.mxu0 0
      %1275 = vmatmul.mubr.bf16.gmra.mxu0 %v1105
      %v1276 = vpop.f32.mrf.mxu0
      %v1277 = vadd.f32 0.0, %v1276
      %v1278 = vpop.f32.mrf.mxu0
      %v1279 = vpop.f32.mrf.mxu0
      %v1280 = vadd.f32 0.0, %v1279
      %v1281 = vpop.f32.mrf.mxu0
      %1282 = vmatprep.mubr.bf16.mxu0 0
      %1283 = vmatmul.mubr.bf16.gmra.mxu0 %v1106
      %v1284 = vpop.f32.mrf.mxu0
      %v1285 = vadd.f32 0.0, %v1284
      %v1286 = vpop.f32.mrf.mxu0
      %v1287 = vpop.f32.mrf.mxu0
      %v1288 = vadd.f32 0.0, %v1287
      %v1289 = vpop.f32.mrf.mxu0
      %1290 = vmatprep.mubr.bf16.mxu0 0
      %1291 = vmatmul.mubr.bf16.gmra.mxu0 %v1107
      %v1292 = vpop.f32.mrf.mxu0
      %v1293 = vadd.f32 0.0, %v1292
      %v1294 = vpop.f32.mrf.mxu0
      %v1295 = vpop.f32.mrf.mxu0
      %v1296 = vadd.f32 0.0, %v1295
      %v1297 = vpop.f32.mrf.mxu0
      %1298 = vmatprep.mubr.bf16.mxu0 0
      %1299 = vmatmul.mubr.bf16.gmra.mxu0 %v1108
      %v1300 = vpop.f32.mrf.mxu0
      %v1301 = vadd.f32 0.0, %v1300
      %v1302 = vpop.f32.mrf.mxu0
      %v1303 = vpop.f32.mrf.mxu0
      %v1304 = vadd.f32 0.0, %v1303
      %v1305 = vpop.f32.mrf.mxu0
      %1306 = vmatprep.mubr.bf16.mxu0 0
      %1307 = vmatmul.mubr.bf16.gmra.mxu0 %v1109
      %v1308 = vpop.f32.mrf.mxu0
      %v1309 = vadd.f32 0.0, %v1308
      %v1310 = vpop.f32.mrf.mxu0
      %v1311 = vpop.f32.mrf.mxu0
      %v1312 = vadd.f32 0.0, %v1311
      %v1313 = vpop.f32.mrf.mxu0
      %1314 = vmatprep.mubr.bf16.mxu0 0
      %1315 = vmatmul.mubr.bf16.gmra.mxu0 %v1110
      %v1316 = vpop.f32.mrf.mxu0
      %v1317 = vadd.f32 0.0, %v1316
      %v1318 = vpop.f32.mrf.mxu0
      %v1319 = vpop.f32.mrf.mxu0
      %v1320 = vadd.f32 0.0, %v1319
      %v1321 = vpop.f32.mrf.mxu0
      %1322 = vmatprep.mubr.bf16.mxu0 0
      %1323 = vmatmul.mubr.bf16.gmra.mxu0 %v1111
      %v1324 = vpop.f32.mrf.mxu0
      %v1325 = vadd.f32 0.0, %v1324
      %v1326 = vpop.f32.mrf.mxu0
      %v1327 = vpop.f32.mrf.mxu0
      %v1328 = vadd.f32 0.0, %v1327
      %v1329 = vpop.f32.mrf.mxu0
      %1330 = vmatprep.mubr.bf16.mxu0 0
      %1331 = vmatmul.mubr.bf16.gmra.mxu0 %v1112
      %v1332 = vpop.f32.mrf.mxu0
      %v1333 = vadd.f32 0.0, %v1332
      %v1334 = vpop.f32.mrf.mxu0
      %v1335 = vpop.f32.mrf.mxu0
      %v1336 = vadd.f32 0.0, %v1335
      %v1337 = vpop.f32.mrf.mxu0
      %1338 = vdwg.mxu0
      %v1339 = vadd.f32 %v939, %v1213
      %v1340 = vadd.f32 %v942, %v1216
      %v1341 = vadd.f32 %v947, %v1221
      %v1342 = vadd.f32 %v950, %v1224
      %v1343 = vadd.f32 %v955, %v1229
      %v1344 = vadd.f32 %v958, %v1232
      %v1345 = vadd.f32 %v963, %v1237
      %v1346 = vadd.f32 %v966, %v1240
      %v1347 = vadd.f32 %v971, %v1245
      %v1348 = vadd.f32 %v974, %v1248
      %v1349 = vadd.f32 %v979, %v1253
      %v1350 = vadd.f32 %v982, %v1256
      %v1351 = vadd.f32 %v987, %v1261
      %v1352 = vadd.f32 %v990, %v1264
      %v1353 = vadd.f32 %v995, %v1269
      %v1354 = vadd.f32 %v998, %v1272
      %v1355 = vadd.f32 %v1003, %v1277
      %v1356 = vadd.f32 %v1006, %v1280
      %v1357 = vadd.f32 %v1011, %v1285
      %v1358 = vadd.f32 %v1014, %v1288
      %v1359 = vadd.f32 %v1019, %v1293
      %v1360 = vadd.f32 %v1022, %v1296
      %v1361 = vadd.f32 %v1027, %v1301
      %v1362 = vadd.f32 %v1030, %v1304
      %v1363 = vadd.f32 %v1035, %v1309
      %v1364 = vadd.f32 %v1038, %v1312
      %v1365 = vadd.f32 %v1043, %v1317
      %v1366 = vadd.f32 %v1046, %v1320
      %v1367 = vadd.f32 %v1051, %v1325
      %v1368 = vadd.f32 %v1054, %v1328
      %v1369 = vadd.f32 %v1059, %v1333
      %v1370 = vadd.f32 %v1062, %v1336
      %v1371 = vld [vmem:[%s485] sm:$0xff]
      %v1372 = vld [vmem:[%s485 + $0x8] sm:$0xff]
      %v1373 = vld [vmem:[%s485 + $0x18] sm:$0xff]
      %v1374 = vld [vmem:[%s485 + $0x20] sm:$0xff]
      %v1375 = vld [vmem:[%s485 + $0x30] sm:$0xff]
      %v1376 = vld [vmem:[%s485 + $0x38] sm:$0xff]
      %v1377 = vld [vmem:[%s485 + $0x48] sm:$0xff]
      %v1378 = vld [vmem:[%s485 + $0x50] sm:$0xff]
      %v1379 = vld [vmem:[%s485 + $0x60] sm:$0xff]
      %v1380 = vld [vmem:[%s485 + $0x68] sm:$0xff]
      %v1381 = vld [vmem:[%s485 + $0x78] sm:$0xff]
      %v1382 = vld [vmem:[%s485 + $0x80] sm:$0xff]
      %v1383 = vld [vmem:[%s485 + $0x90] sm:$0xff]
      %v1384 = vld [vmem:[%s485 + $0x98] sm:$0xff]
      %v1385 = vld [vmem:[%s485 + $0xa8] sm:$0xff]
      %v1386 = vld [vmem:[%s485 + $0xb0] sm:$0xff]
      %v1387 = vld [vmem:[%s485 + $0xc0] sm:$0xff]
      %v1388 = vld [vmem:[%s485 + $0xc8] sm:$0xff]
      %v1389 = vld [vmem:[%s485 + $0xd8] sm:$0xff]
      %v1390 = vld [vmem:[%s485 + $0xe0] sm:$0xff]
      %v1391 = vld [vmem:[%s485 + $0xf0] sm:$0xff]
      %v1392 = vld [vmem:[%s485 + $0xf8] sm:$0xff]
      %v1393 = vld [vmem:[%s485 + $0x108] sm:$0xff]
      %v1394 = vld [vmem:[%s485 + $0x110] sm:$0xff]
      %v1395 = vld [vmem:[%s485 + $0x120] sm:$0xff]
      %v1396 = vld [vmem:[%s485 + $0x128] sm:$0xff]
      %v1397 = vld [vmem:[%s485 + $0x138] sm:$0xff]
      %v1398 = vld [vmem:[%s485 + $0x140] sm:$0xff]
      %v1399 = vld [vmem:[%s485 + $0x150] sm:$0xff]
      %v1400 = vld [vmem:[%s485 + $0x158] sm:$0xff]
      %v1401 = vld [vmem:[%s485 + $0x168] sm:$0xff]
      %v1402 = vld [vmem:[%s485 + $0x170] sm:$0xff]
      %v1403 = vpack.c.bf16 %v1372, %v1371
      %v1404 = vpack.c.bf16 %v1374, %v1373
      %v1405 = vpack.c.bf16 %v1376, %v1375
      %v1406 = vpack.c.bf16 %v1378, %v1377
      %v1407 = vpack.c.bf16 %v1380, %v1379
      %v1408 = vpack.c.bf16 %v1382, %v1381
      %v1409 = vpack.c.bf16 %v1384, %v1383
      %v1410 = vpack.c.bf16 %v1386, %v1385
      %v1411 = vpack.c.bf16 %v1388, %v1387
      %v1412 = vpack.c.bf16 %v1390, %v1389
      %v1413 = vpack.c.bf16 %v1392, %v1391
      %v1414 = vpack.c.bf16 %v1394, %v1393
      %v1415 = vpack.c.bf16 %v1396, %v1395
      %v1416 = vpack.c.bf16 %v1398, %v1397
      %v1417 = vpack.c.bf16 %v1400, %v1399
      %v1418 = vpack.c.bf16 %v1402, %v1401
      %s1419 = scalar_lea.vmem %s3, 192
      %v1420 = vld [vmem:[%s1419] sm:$0xf]
      %v1421 = vld [vmem:[%s1419 + $0x4] sm:$0xf]
      %v1422 = vld [vmem:[%s1419 + $0x8] sm:$0xf]
      %v1423 = vld [vmem:[%s1419 + $0xc] sm:$0xf]
      %v1424 = vld [vmem:[%s1419 + $0x10] sm:$0xf]
      %v1425 = vld [vmem:[%s1419 + $0x14] sm:$0xf]
      %v1426 = vld [vmem:[%s1419 + $0x18] sm:$0xf]
      %v1427 = vld [vmem:[%s1419 + $0x1c] sm:$0xf]
      %v1428 = vld [vmem:[%s1419 + $0x20] sm:$0xf]
      %v1429 = vld [vmem:[%s1419 + $0x24] sm:$0xf]
      %v1430 = vld [vmem:[%s1419 + $0x28] sm:$0xf]
      %v1431 = vld [vmem:[%s1419 + $0x2c] sm:$0xf]
      %v1432 = vld [vmem:[%s1419 + $0x30] sm:$0xf]
      %v1433 = vld [vmem:[%s1419 + $0x34] sm:$0xf]
      %v1434 = vld [vmem:[%s1419 + $0x38] sm:$0xf]
      %v1435 = vld [vmem:[%s1419 + $0x3c] sm:$0xf]
      %v1452 = vunpack.c.l.b16 %v1420
      %v1453 = vunpack.c.l.b16 %v1421
      %v1454 = vunpack.c.l.b16 %v1422
      %v1455 = vunpack.c.l.b16 %v1423
      %v1456 = vunpack.c.l.b16 %v1424
      %v1457 = vunpack.c.l.b16 %v1425
      %v1458 = vunpack.c.l.b16 %v1426
      %v1459 = vunpack.c.l.b16 %v1427
      %v1460 = vunpack.c.l.b16 %v1428
      %v1461 = vunpack.c.l.b16 %v1429
      %v1462 = vunpack.c.l.b16 %v1430
      %v1463 = vunpack.c.l.b16 %v1431
      %v1464 = vunpack.c.l.b16 %v1432
      %v1465 = vunpack.c.l.b16 %v1433
      %v1466 = vunpack.c.l.b16 %v1434
      %v1467 = vunpack.c.l.b16 %v1435
      %v1468 = vpack.c.b16 %v1453, %v1452
      %v1469 = vpack.c.b16 %v1455, %v1454
      %v1470 = vpack.c.b16 %v1457, %v1456
      %v1471 = vpack.c.b16 %v1459, %v1458
      %v1472 = vpack.c.b16 %v1461, %v1460
      %v1473 = vpack.c.b16 %v1463, %v1462
      %v1474 = vpack.c.b16 %v1465, %v1464
      %v1475 = vpack.c.b16 %v1467, %v1466
      %1484 = vmatprep.subr.bf16.mxu0 0
      %1485 = vmatpush1.bf16.msra.mxu0 %v1475
      %1486 = vmatprep.subr.bf16.mxu0 0
      %1487 = vmatpush1.bf16.msra.mxu0 %v1474
      %1488 = vmatprep.subr.bf16.mxu0 0
      %1489 = vmatpush1.bf16.msra.mxu0 %v1473
      %1490 = vmatprep.subr.bf16.mxu0 0
      %1491 = vmatpush1.bf16.msra.mxu0 %v1472
      %1492 = vmatprep.subr.bf16.mxu0 0
      %1493 = vmatpush1.bf16.msra.mxu0 %v1471
      %1494 = vmatprep.subr.bf16.mxu0 0
      %1495 = vmatpush1.bf16.msra.mxu0 %v1470
      %1496 = vmatprep.subr.bf16.mxu0 0
      %1497 = vmatpush1.bf16.msra.mxu0 %v1469
      %1498 = vmatprep.subr.bf16.mxu0 0
      %1499 = vmatpush1.bf16.msra.mxu0 %v1468
      %1500 = vmatprep.subr.bf16.mxu0 0
      %1501 = vmatpush2.bf16.msra.mxu0 0
      %1502 = vmatprep.subr.bf16.mxu0 0
      %1503 = vmatpush2.bf16.msra.mxu0 0
      %1504 = vmatprep.subr.bf16.mxu0 0
      %1505 = vmatpush2.bf16.msra.mxu0 0
      %1506 = vmatprep.subr.bf16.mxu0 0
      %1507 = vmatpush2.bf16.msra.mxu0 0
      %1508 = vmatprep.subr.bf16.mxu0 0
      %1509 = vmatpush2.bf16.msra.mxu0 0
      %1510 = vmatprep.subr.bf16.mxu0 0
      %1511 = vmatpush2.bf16.msra.mxu0 0
      %1512 = vmatprep.subr.bf16.mxu0 0
      %1513 = vmatpush2.bf16.msra.mxu0 0
      %1514 = vmatprep.subr.bf16.mxu0 0
      %1515 = vmatpush2.bf16.msra.mxu0 0
      %1516 = vmatprep.mubr.bf16.mxu0 0
      %1517 = vmatmul.mubr.bf16.gmra.mxu0 %v1403
      %v1518 = vpop.f32.mrf.mxu0
      %v1519 = vadd.f32 0.0, %v1518
      %v1520 = vpop.f32.mrf.mxu0
      %v1521 = vpop.f32.mrf.mxu0
      %v1522 = vadd.f32 0.0, %v1521
      %v1523 = vpop.f32.mrf.mxu0
      %1524 = vmatprep.mubr.bf16.mxu0 0
      %1525 = vmatmul.mubr.bf16.gmra.mxu0 %v1404
      %v1526 = vpop.f32.mrf.mxu0
      %v1527 = vadd.f32 0.0, %v1526
      %v1528 = vpop.f32.mrf.mxu0
      %v1529 = vpop.f32.mrf.mxu0
      %v1530 = vadd.f32 0.0, %v1529
      %v1531 = vpop.f32.mrf.mxu0
      %1532 = vmatprep.mubr.bf16.mxu0 0
      %1533 = vmatmul.mubr.bf16.gmra.mxu0 %v1405
      %v1534 = vpop.f32.mrf.mxu0
      %v1535 = vadd.f32 0.0, %v1534
      %v1536 = vpop.f32.mrf.mxu0
      %v1537 = vpop.f32.mrf.mxu0
      %v1538 = vadd.f32 0.0, %v1537
      %v1539 = vpop.f32.mrf.mxu0
      %1540 = vmatprep.mubr.bf16.mxu0 0
      %1541 = vmatmul.mubr.bf16.gmra.mxu0 %v1406
      %v1542 = vpop.f32.mrf.mxu0
      %v1543 = vadd.f32 0.0, %v1542
      %v1544 = vpop.f32.mrf.mxu0
      %v1545 = vpop.f32.mrf.mxu0
      %v1546 = vadd.f32 0.0, %v1545
      %v1547 = vpop.f32.mrf.mxu0
      %1548 = vmatprep.mubr.bf16.mxu0 0
      %1549 = vmatmul.mubr.bf16.gmra.mxu0 %v1407
      %v1550 = vpop.f32.mrf.mxu0
      %v1551 = vadd.f32 0.0, %v1550
      %v1552 = vpop.f32.mrf.mxu0
      %v1553 = vpop.f32.mrf.mxu0
      %v1554 = vadd.f32 0.0, %v1553
      %v1555 = vpop.f32.mrf.mxu0
      %1556 = vmatprep.mubr.bf16.mxu0 0
      %1557 = vmatmul.mubr.bf16.gmra.mxu0 %v1408
      %v1558 = vpop.f32.mrf.mxu0
      %v1559 = vadd.f32 0.0, %v1558
      %v1560 = vpop.f32.mrf.mxu0
      %v1561 = vpop.f32.mrf.mxu0
      %v1562 = vadd.f32 0.0, %v1561
      %v1563 = vpop.f32.mrf.mxu0
      %1564 = vmatprep.mubr.bf16.mxu0 0
      %1565 = vmatmul.mubr.bf16.gmra.mxu0 %v1409
      %v1566 = vpop.f32.mrf.mxu0
      %v1567 = vadd.f32 0.0, %v1566
      %v1568 = vpop.f32.mrf.mxu0
      %v1569 = vpop.f32.mrf.mxu0
      %v1570 = vadd.f32 0.0, %v1569
      %v1571 = vpop.f32.mrf.mxu0
      %1572 = vmatprep.mubr.bf16.mxu0 0
      %1573 = vmatmul.mubr.bf16.gmra.mxu0 %v1410
      %v1574 = vpop.f32.mrf.mxu0
      %v1575 = vadd.f32 0.0, %v1574
      %v1576 = vpop.f32.mrf.mxu0
      %v1577 = vpop.f32.mrf.mxu0
      %v1578 = vadd.f32 0.0, %v1577
      %v1579 = vpop.f32.mrf.mxu0
      %1580 = vmatprep.mubr.bf16.mxu0 0
      %1581 = vmatmul.mubr.bf16.gmra.mxu0 %v1411
      %v1582 = vpop.f32.mrf.mxu0
      %v1583 = vadd.f32 0.0, %v1582
      %v1584 = vpop.f32.mrf.mxu0
      %v1585 = vpop.f32.mrf.mxu0
      %v1586 = vadd.f32 0.0, %v1585
      %v1587 = vpop.f32.mrf.mxu0
      %1588 = vmatprep.mubr.bf16.mxu0 0
      %1589 = vmatmul.mubr.bf16.gmra.mxu0 %v1412
      %v1590 = vpop.f32.mrf.mxu0
      %v1591 = vadd.f32 0.0, %v1590
      %v1592 = vpop.f32.mrf.mxu0
      %v1593 = vpop.f32.mrf.mxu0
      %v1594 = vadd.f32 0.0, %v1593
      %v1595 = vpop.f32.mrf.mxu0
      %1596 = vmatprep.mubr.bf16.mxu0 0
      %1597 = vmatmul.mubr.bf16.gmra.mxu0 %v1413
      %v1598 = vpop.f32.mrf.mxu0
      %v1599 = vadd.f32 0.0, %v1598
      %v1600 = vpop.f32.mrf.mxu0
      %v1601 = vpop.f32.mrf.mxu0
      %v1602 = vadd.f32 0.0, %v1601
      %v1603 = vpop.f32.mrf.mxu0
      %1604 = vmatprep.mubr.bf16.mxu0 0
      %1605 = vmatmul.mubr.bf16.gmra.mxu0 %v1414
      %v1606 = vpop.f32.mrf.mxu0
      %v1607 = vadd.f32 0.0, %v1606
      %v1608 = vpop.f32.mrf.mxu0
      %v1609 = vpop.f32.mrf.mxu0
      %v1610 = vadd.f32 0.0, %v1609
      %v1611 = vpop.f32.mrf.mxu0
      %1612 = vmatprep.mubr.bf16.mxu0 0
      %1613 = vmatmul.mubr.bf16.gmra.mxu0 %v1415
      %v1614 = vpop.f32.mrf.mxu0
      %v1615 = vadd.f32 0.0, %v1614
      %v1616 = vpop.f32.mrf.mxu0
      %v1617 = vpop.f32.mrf.mxu0
      %v1618 = vadd.f32 0.0, %v1617
      %v1619 = vpop.f32.mrf.mxu0
      %1620 = vmatprep.mubr.bf16.mxu0 0
      %1621 = vmatmul.mubr.bf16.gmra.mxu0 %v1416
      %v1622 = vpop.f32.mrf.mxu0
      %v1623 = vadd.f32 0.0, %v1622
      %v1624 = vpop.f32.mrf.mxu0
      %v1625 = vpop.f32.mrf.mxu0
      %v1626 = vadd.f32 0.0, %v1625
      %v1627 = vpop.f32.mrf.mxu0
      %1628 = vmatprep.mubr.bf16.mxu0 0
      %1629 = vmatmul.mubr.bf16.gmra.mxu0 %v1417
      %v1630 = vpop.f32.mrf.mxu0
      %v1631 = vadd.f32 0.0, %v1630
      %v1632 = vpop.f32.mrf.mxu0
      %v1633 = vpop.f32.mrf.mxu0
      %v1634 = vadd.f32 0.0, %v1633
      %v1635 = vpop.f32.mrf.mxu0
      %1636 = vmatprep.mubr.bf16.mxu0 0
      %1637 = vmatmul.mubr.bf16.gmra.mxu0 %v1418
      %v1638 = vpop.f32.mrf.mxu0
      %v1639 = vadd.f32 0.0, %v1638
      %v1640 = vpop.f32.mrf.mxu0
      %v1641 = vpop.f32.mrf.mxu0
      %v1642 = vadd.f32 0.0, %v1641
      %v1643 = vpop.f32.mrf.mxu0
      %1644 = vdwg.mxu0
      %v1645 = vadd.f32 %v1339, %v1519
      %v1646 = vadd.f32 %v1340, %v1522
      %v1647 = vadd.f32 %v1341, %v1527
      %v1648 = vadd.f32 %v1342, %v1530
      %v1649 = vadd.f32 %v1343, %v1535
      %v1650 = vadd.f32 %v1344, %v1538
      %v1651 = vadd.f32 %v1345, %v1543
      %v1652 = vadd.f32 %v1346, %v1546
      %v1653 = vadd.f32 %v1347, %v1551
      %v1654 = vadd.f32 %v1348, %v1554
      %v1655 = vadd.f32 %v1349, %v1559
      %v1656 = vadd.f32 %v1350, %v1562
      %v1657 = vadd.f32 %v1351, %v1567
      %v1658 = vadd.f32 %v1352, %v1570
      %v1659 = vadd.f32 %v1353, %v1575
      %v1660 = vadd.f32 %v1354, %v1578
      %v1661 = vadd.f32 %v1355, %v1583
      %v1662 = vadd.f32 %v1356, %v1586
      %v1663 = vadd.f32 %v1357, %v1591
      %v1664 = vadd.f32 %v1358, %v1594
      %v1665 = vadd.f32 %v1359, %v1599
      %v1666 = vadd.f32 %v1360, %v1602
      %v1667 = vadd.f32 %v1361, %v1607
      %v1668 = vadd.f32 %v1362, %v1610
      %v1669 = vadd.f32 %v1363, %v1615
      %v1670 = vadd.f32 %v1364, %v1618
      %v1671 = vadd.f32 %v1365, %v1623
      %v1672 = vadd.f32 %v1366, %v1626
      %v1673 = vadd.f32 %v1367, %v1631
      %v1674 = vadd.f32 %v1368, %v1634
      %v1675 = vadd.f32 %v1369, %v1639
      %v1676 = vadd.f32 %v1370, %v1642
      %v1677 = vld [vmem:[%s485 + $0x1] sm:$0xff]
      %v1678 = vld [vmem:[%s485 + $0x9] sm:$0xff]
      %v1679 = vld [vmem:[%s485 + $0x19] sm:$0xff]
      %v1680 = vld [vmem:[%s485 + $0x21] sm:$0xff]
      %v1681 = vld [vmem:[%s485 + $0x31] sm:$0xff]
      %v1682 = vld [vmem:[%s485 + $0x39] sm:$0xff]
      %v1683 = vld [vmem:[%s485 + $0x49] sm:$0xff]
      %v1684 = vld [vmem:[%s485 + $0x51] sm:$0xff]
      %v1685 = vld [vmem:[%s485 + $0x61] sm:$0xff]
      %v1686 = vld [vmem:[%s485 + $0x69] sm:$0xff]
      %v1687 = vld [vmem:[%s485 + $0x79] sm:$0xff]
      %v1688 = vld [vmem:[%s485 + $0x81] sm:$0xff]
      %v1689 = vld [vmem:[%s485 + $0x91] sm:$0xff]
      %v1690 = vld [vmem:[%s485 + $0x99] sm:$0xff]
      %v1691 = vld [vmem:[%s485 + $0xa9] sm:$0xff]
      %v1692 = vld [vmem:[%s485 + $0xb1] sm:$0xff]
      %v1693 = vld [vmem:[%s485 + $0xc1] sm:$0xff]
      %v1694 = vld [vmem:[%s485 + $0xc9] sm:$0xff]
      %v1695 = vld [vmem:[%s485 + $0xd9] sm:$0xff]
      %v1696 = vld [vmem:[%s485 + $0xe1] sm:$0xff]
      %v1697 = vld [vmem:[%s485 + $0xf1] sm:$0xff]
      %v1698 = vld [vmem:[%s485 + $0xf9] sm:$0xff]
      %v1699 = vld [vmem:[%s485 + $0x109] sm:$0xff]
      %v1700 = vld [vmem:[%s485 + $0x111] sm:$0xff]
      %v1701 = vld [vmem:[%s485 + $0x121] sm:$0xff]
      %v1702 = vld [vmem:[%s485 + $0x129] sm:$0xff]
      %v1703 = vld [vmem:[%s485 + $0x139] sm:$0xff]
      %v1704 = vld [vmem:[%s485 + $0x141] sm:$0xff]
      %v1705 = vld [vmem:[%s485 + $0x151] sm:$0xff]
      %v1706 = vld [vmem:[%s485 + $0x159] sm:$0xff]
      %v1707 = vld [vmem:[%s485 + $0x169] sm:$0xff]
      %v1708 = vld [vmem:[%s485 + $0x171] sm:$0xff]
      %v1709 = vpack.c.bf16 %v1678, %v1677
      %v1710 = vpack.c.bf16 %v1680, %v1679
      %v1711 = vpack.c.bf16 %v1682, %v1681
      %v1712 = vpack.c.bf16 %v1684, %v1683
      %v1713 = vpack.c.bf16 %v1686, %v1685
      %v1714 = vpack.c.bf16 %v1688, %v1687
      %v1715 = vpack.c.bf16 %v1690, %v1689
      %v1716 = vpack.c.bf16 %v1692, %v1691
      %v1717 = vpack.c.bf16 %v1694, %v1693
      %v1718 = vpack.c.bf16 %v1696, %v1695
      %v1719 = vpack.c.bf16 %v1698, %v1697
      %v1720 = vpack.c.bf16 %v1700, %v1699
      %v1721 = vpack.c.bf16 %v1702, %v1701
      %v1722 = vpack.c.bf16 %v1704, %v1703
      %v1723 = vpack.c.bf16 %v1706, %v1705
      %v1724 = vpack.c.bf16 %v1708, %v1707
      %s1725 = scalar_lea.vmem %s3, 256
      %v1726 = vld [vmem:[%s1725] sm:$0xf]
      %v1727 = vld [vmem:[%s1725 + $0x4] sm:$0xf]
      %v1728 = vld [vmem:[%s1725 + $0x8] sm:$0xf]
      %v1729 = vld [vmem:[%s1725 + $0xc] sm:$0xf]
      %v1730 = vld [vmem:[%s1725 + $0x10] sm:$0xf]
      %v1731 = vld [vmem:[%s1725 + $0x14] sm:$0xf]
      %v1732 = vld [vmem:[%s1725 + $0x18] sm:$0xf]
      %v1733 = vld [vmem:[%s1725 + $0x1c] sm:$0xf]
      %v1734 = vld [vmem:[%s1725 + $0x20] sm:$0xf]
      %v1735 = vld [vmem:[%s1725 + $0x24] sm:$0xf]
      %v1736 = vld [vmem:[%s1725 + $0x28] sm:$0xf]
      %v1737 = vld [vmem:[%s1725 + $0x2c] sm:$0xf]
      %v1738 = vld [vmem:[%s1725 + $0x30] sm:$0xf]
      %v1739 = vld [vmem:[%s1725 + $0x34] sm:$0xf]
      %v1740 = vld [vmem:[%s1725 + $0x38] sm:$0xf]
      %v1741 = vld [vmem:[%s1725 + $0x3c] sm:$0xf]
      %v1758 = vunpack.c.l.b16 %v1726
      %v1759 = vunpack.c.l.b16 %v1727
      %v1760 = vunpack.c.l.b16 %v1728
      %v1761 = vunpack.c.l.b16 %v1729
      %v1762 = vunpack.c.l.b16 %v1730
      %v1763 = vunpack.c.l.b16 %v1731
      %v1764 = vunpack.c.l.b16 %v1732
      %v1765 = vunpack.c.l.b16 %v1733
      %v1766 = vunpack.c.l.b16 %v1734
      %v1767 = vunpack.c.l.b16 %v1735
      %v1768 = vunpack.c.l.b16 %v1736
      %v1769 = vunpack.c.l.b16 %v1737
      %v1770 = vunpack.c.l.b16 %v1738
      %v1771 = vunpack.c.l.b16 %v1739
      %v1772 = vunpack.c.l.b16 %v1740
      %v1773 = vunpack.c.l.b16 %v1741
      %v1774 = vpack.c.b16 %v1759, %v1758
      %v1775 = vpack.c.b16 %v1761, %v1760
      %v1776 = vpack.c.b16 %v1763, %v1762
      %v1777 = vpack.c.b16 %v1765, %v1764
      %v1778 = vpack.c.b16 %v1767, %v1766
      %v1779 = vpack.c.b16 %v1769, %v1768
      %v1780 = vpack.c.b16 %v1771, %v1770
      %v1781 = vpack.c.b16 %v1773, %v1772
      %1790 = vmatprep.subr.bf16.mxu0 0
      %1791 = vmatpush1.bf16.msra.mxu0 %v1781
      %1792 = vmatprep.subr.bf16.mxu0 0
      %1793 = vmatpush1.bf16.msra.mxu0 %v1780
      %1794 = vmatprep.subr.bf16.mxu0 0
      %1795 = vmatpush1.bf16.msra.mxu0 %v1779
      %1796 = vmatprep.subr.bf16.mxu0 0
      %1797 = vmatpush1.bf16.msra.mxu0 %v1778
      %1798 = vmatprep.subr.bf16.mxu0 0
      %1799 = vmatpush1.bf16.msra.mxu0 %v1777
      %1800 = vmatprep.subr.bf16.mxu0 0
      %1801 = vmatpush1.bf16.msra.mxu0 %v1776
      %1802 = vmatprep.subr.bf16.mxu0 0
      %1803 = vmatpush1.bf16.msra.mxu0 %v1775
      %1804 = vmatprep.subr.bf16.mxu0 0
      %1805 = vmatpush1.bf16.msra.mxu0 %v1774
      %1806 = vmatprep.subr.bf16.mxu0 0
      %1807 = vmatpush2.bf16.msra.mxu0 0
      %1808 = vmatprep.subr.bf16.mxu0 0
      %1809 = vmatpush2.bf16.msra.mxu0 0
      %1810 = vmatprep.subr.bf16.mxu0 0
      %1811 = vmatpush2.bf16.msra.mxu0 0
      %1812 = vmatprep.subr.bf16.mxu0 0
      %1813 = vmatpush2.bf16.msra.mxu0 0
      %1814 = vmatprep.subr.bf16.mxu0 0
      %1815 = vmatpush2.bf16.msra.mxu0 0
      %1816 = vmatprep.subr.bf16.mxu0 0
      %1817 = vmatpush2.bf16.msra.mxu0 0
      %1818 = vmatprep.subr.bf16.mxu0 0
      %1819 = vmatpush2.bf16.msra.mxu0 0
      %1820 = vmatprep.subr.bf16.mxu0 0
      %1821 = vmatpush2.bf16.msra.mxu0 0
      %1822 = vmatprep.mubr.bf16.mxu0 0
      %1823 = vmatmul.mubr.bf16.gmra.mxu0 %v1709
      %v1824 = vpop.f32.mrf.mxu0
      %v1825 = vadd.f32 0.0, %v1824
      %v1826 = vpop.f32.mrf.mxu0
      %v1827 = vpop.f32.mrf.mxu0
      %v1828 = vadd.f32 0.0, %v1827
      %v1829 = vpop.f32.mrf.mxu0
      %1830 = vmatprep.mubr.bf16.mxu0 0
      %1831 = vmatmul.mubr.bf16.gmra.mxu0 %v1710
      %v1832 = vpop.f32.mrf.mxu0
      %v1833 = vadd.f32 0.0, %v1832
      %v1834 = vpop.f32.mrf.mxu0
      %v1835 = vpop.f32.mrf.mxu0
      %v1836 = vadd.f32 0.0, %v1835
      %v1837 = vpop.f32.mrf.mxu0
      %1838 = vmatprep.mubr.bf16.mxu0 0
      %1839 = vmatmul.mubr.bf16.gmra.mxu0 %v1711
      %v1840 = vpop.f32.mrf.mxu0
      %v1841 = vadd.f32 0.0, %v1840
      %v1842 = vpop.f32.mrf.mxu0
      %v1843 = vpop.f32.mrf.mxu0
      %v1844 = vadd.f32 0.0, %v1843
      %v1845 = vpop.f32.mrf.mxu0
      %1846 = vmatprep.mubr.bf16.mxu0 0
      %1847 = vmatmul.mubr.bf16.gmra.mxu0 %v1712
      %v1848 = vpop.f32.mrf.mxu0
      %v1849 = vadd.f32 0.0, %v1848
      %v1850 = vpop.f32.mrf.mxu0
      %v1851 = vpop.f32.mrf.mxu0
      %v1852 = vadd.f32 0.0, %v1851
      %v1853 = vpop.f32.mrf.mxu0
      %1854 = vmatprep.mubr.bf16.mxu0 0
      %1855 = vmatmul.mubr.bf16.gmra.mxu0 %v1713
      %v1856 = vpop.f32.mrf.mxu0
      %v1857 = vadd.f32 0.0, %v1856
      %v1858 = vpop.f32.mrf.mxu0
      %v1859 = vpop.f32.mrf.mxu0
      %v1860 = vadd.f32 0.0, %v1859
      %v1861 = vpop.f32.mrf.mxu0
      %1862 = vmatprep.mubr.bf16.mxu0 0
      %1863 = vmatmul.mubr.bf16.gmra.mxu0 %v1714
      %v1864 = vpop.f32.mrf.mxu0
      %v1865 = vadd.f32 0.0, %v1864
      %v1866 = vpop.f32.mrf.mxu0
      %v1867 = vpop.f32.mrf.mxu0
      %v1868 = vadd.f32 0.0, %v1867
      %v1869 = vpop.f32.mrf.mxu0
      %1870 = vmatprep.mubr.bf16.mxu0 0
      %1871 = vmatmul.mubr.bf16.gmra.mxu0 %v1715
      %v1872 = vpop.f32.mrf.mxu0
      %v1873 = vadd.f32 0.0, %v1872
      %v1874 = vpop.f32.mrf.mxu0
      %v1875 = vpop.f32.mrf.mxu0
      %v1876 = vadd.f32 0.0, %v1875
      %v1877 = vpop.f32.mrf.mxu0
      %1878 = vmatprep.mubr.bf16.mxu0 0
      %1879 = vmatmul.mubr.bf16.gmra.mxu0 %v1716
      %v1880 = vpop.f32.mrf.mxu0
      %v1881 = vadd.f32 0.0, %v1880
      %v1882 = vpop.f32.mrf.mxu0
      %v1883 = vpop.f32.mrf.mxu0
      %v1884 = vadd.f32 0.0, %v1883
      %v1885 = vpop.f32.mrf.mxu0
      %1886 = vmatprep.mubr.bf16.mxu0 0
      %1887 = vmatmul.mubr.bf16.gmra.mxu0 %v1717
      %v1888 = vpop.f32.mrf.mxu0
      %v1889 = vadd.f32 0.0, %v1888
      %v1890 = vpop.f32.mrf.mxu0
      %v1891 = vpop.f32.mrf.mxu0
      %v1892 = vadd.f32 0.0, %v1891
      %v1893 = vpop.f32.mrf.mxu0
      %1894 = vmatprep.mubr.bf16.mxu0 0
      %1895 = vmatmul.mubr.bf16.gmra.mxu0 %v1718
      %v1896 = vpop.f32.mrf.mxu0
      %v1897 = vadd.f32 0.0, %v1896
      %v1898 = vpop.f32.mrf.mxu0
      %v1899 = vpop.f32.mrf.mxu0
      %v1900 = vadd.f32 0.0, %v1899
      %v1901 = vpop.f32.mrf.mxu0
      %1902 = vmatprep.mubr.bf16.mxu0 0
      %1903 = vmatmul.mubr.bf16.gmra.mxu0 %v1719
      %v1904 = vpop.f32.mrf.mxu0
      %v1905 = vadd.f32 0.0, %v1904
      %v1906 = vpop.f32.mrf.mxu0
      %v1907 = vpop.f32.mrf.mxu0
      %v1908 = vadd.f32 0.0, %v1907
      %v1909 = vpop.f32.mrf.mxu0
      %1910 = vmatprep.mubr.bf16.mxu0 0
      %1911 = vmatmul.mubr.bf16.gmra.mxu0 %v1720
      %v1912 = vpop.f32.mrf.mxu0
      %v1913 = vadd.f32 0.0, %v1912
      %v1914 = vpop.f32.mrf.mxu0
      %v1915 = vpop.f32.mrf.mxu0
      %v1916 = vadd.f32 0.0, %v1915
      %v1917 = vpop.f32.mrf.mxu0
      %1918 = vmatprep.mubr.bf16.mxu0 0
      %1919 = vmatmul.mubr.bf16.gmra.mxu0 %v1721
      %v1920 = vpop.f32.mrf.mxu0
      %v1921 = vadd.f32 0.0, %v1920
      %v1922 = vpop.f32.mrf.mxu0
      %v1923 = vpop.f32.mrf.mxu0
      %v1924 = vadd.f32 0.0, %v1923
      %v1925 = vpop.f32.mrf.mxu0
      %1926 = vmatprep.mubr.bf16.mxu0 0
      %1927 = vmatmul.mubr.bf16.gmra.mxu0 %v1722
      %v1928 = vpop.f32.mrf.mxu0
      %v1929 = vadd.f32 0.0, %v1928
      %v1930 = vpop.f32.mrf.mxu0
      %v1931 = vpop.f32.mrf.mxu0
      %v1932 = vadd.f32 0.0, %v1931
      %v1933 = vpop.f32.mrf.mxu0
      %1934 = vmatprep.mubr.bf16.mxu0 0
      %1935 = vmatmul.mubr.bf16.gmra.mxu0 %v1723
      %v1936 = vpop.f32.mrf.mxu0
      %v1937 = vadd.f32 0.0, %v1936
      %v1938 = vpop.f32.mrf.mxu0
      %v1939 = vpop.f32.mrf.mxu0
      %v1940 = vadd.f32 0.0, %v1939
      %v1941 = vpop.f32.mrf.mxu0
      %1942 = vmatprep.mubr.bf16.mxu0 0
      %1943 = vmatmul.mubr.bf16.gmra.mxu0 %v1724
      %v1944 = vpop.f32.mrf.mxu0
      %v1945 = vadd.f32 0.0, %v1944
      %v1946 = vpop.f32.mrf.mxu0
      %v1947 = vpop.f32.mrf.mxu0
      %v1948 = vadd.f32 0.0, %v1947
      %v1949 = vpop.f32.mrf.mxu0
      %1950 = vdwg.mxu0
      %v1951 = vadd.f32 %v1645, %v1825
      %v1952 = vadd.f32 %v1646, %v1828
      %v1953 = vadd.f32 %v1647, %v1833
      %v1954 = vadd.f32 %v1648, %v1836
      %v1955 = vadd.f32 %v1649, %v1841
      %v1956 = vadd.f32 %v1650, %v1844
      %v1957 = vadd.f32 %v1651, %v1849
      %v1958 = vadd.f32 %v1652, %v1852
      %v1959 = vadd.f32 %v1653, %v1857
      %v1960 = vadd.f32 %v1654, %v1860
      %v1961 = vadd.f32 %v1655, %v1865
      %v1962 = vadd.f32 %v1656, %v1868
      %v1963 = vadd.f32 %v1657, %v1873
      %v1964 = vadd.f32 %v1658, %v1876
      %v1965 = vadd.f32 %v1659, %v1881
      %v1966 = vadd.f32 %v1660, %v1884
      %v1967 = vadd.f32 %v1661, %v1889
      %v1968 = vadd.f32 %v1662, %v1892
      %v1969 = vadd.f32 %v1663, %v1897
      %v1970 = vadd.f32 %v1664, %v1900
      %v1971 = vadd.f32 %v1665, %v1905
      %v1972 = vadd.f32 %v1666, %v1908
      %v1973 = vadd.f32 %v1667, %v1913
      %v1974 = vadd.f32 %v1668, %v1916
      %v1975 = vadd.f32 %v1669, %v1921
      %v1976 = vadd.f32 %v1670, %v1924
      %v1977 = vadd.f32 %v1671, %v1929
      %v1978 = vadd.f32 %v1672, %v1932
      %v1979 = vadd.f32 %v1673, %v1937
      %v1980 = vadd.f32 %v1674, %v1940
      %v1981 = vadd.f32 %v1675, %v1945
      %v1982 = vadd.f32 %v1676, %v1948
      %v1983 = vld [vmem:[%s485 + $0x2] sm:$0xff]
      %v1984 = vld [vmem:[%s485 + $0xa] sm:$0xff]
      %v1985 = vld [vmem:[%s485 + $0x1a] sm:$0xff]
      %v1986 = vld [vmem:[%s485 + $0x22] sm:$0xff]
      %v1987 = vld [vmem:[%s485 + $0x32] sm:$0xff]
      %v1988 = vld [vmem:[%s485 + $0x3a] sm:$0xff]
      %v1989 = vld [vmem:[%s485 + $0x4a] sm:$0xff]
      %v1990 = vld [vmem:[%s485 + $0x52] sm:$0xff]
      %v1991 = vld [vmem:[%s485 + $0x62] sm:$0xff]
      %v1992 = vld [vmem:[%s485 + $0x6a] sm:$0xff]
      %v1993 = vld [vmem:[%s485 + $0x7a] sm:$0xff]
      %v1994 = vld [vmem:[%s485 + $0x82] sm:$0xff]
      %v1995 = vld [vmem:[%s485 + $0x92] sm:$0xff]
      %v1996 = vld [vmem:[%s485 + $0x9a] sm:$0xff]
      %v1997 = vld [vmem:[%s485 + $0xaa] sm:$0xff]
      %v1998 = vld [vmem:[%s485 + $0xb2] sm:$0xff]
      %v1999 = vld [vmem:[%s485 + $0xc2] sm:$0xff]
      %v2000 = vld [vmem:[%s485 + $0xca] sm:$0xff]
      %v2001 = vld [vmem:[%s485 + $0xda] sm:$0xff]
      %v2002 = vld [vmem:[%s485 + $0xe2] sm:$0xff]
      %v2003 = vld [vmem:[%s485 + $0xf2] sm:$0xff]
      %v2004 = vld [vmem:[%s485 + $0xfa] sm:$0xff]
      %v2005 = vld [vmem:[%s485 + $0x10a] sm:$0xff]
      %v2006 = vld [vmem:[%s485 + $0x112] sm:$0xff]
      %v2007 = vld [vmem:[%s485 + $0x122] sm:$0xff]
      %v2008 = vld [vmem:[%s485 + $0x12a] sm:$0xff]
      %v2009 = vld [vmem:[%s485 + $0x13a] sm:$0xff]
      %v2010 = vld [vmem:[%s485 + $0x142] sm:$0xff]
      %v2011 = vld [vmem:[%s485 + $0x152] sm:$0xff]
      %v2012 = vld [vmem:[%s485 + $0x15a] sm:$0xff]
      %v2013 = vld [vmem:[%s485 + $0x16a] sm:$0xff]
      %v2014 = vld [vmem:[%s485 + $0x172] sm:$0xff]
      %v2015 = vpack.c.bf16 %v1984, %v1983
      %v2016 = vpack.c.bf16 %v1986, %v1985
      %v2017 = vpack.c.bf16 %v1988, %v1987
      %v2018 = vpack.c.bf16 %v1990, %v1989
      %v2019 = vpack.c.bf16 %v1992, %v1991
      %v2020 = vpack.c.bf16 %v1994, %v1993
      %v2021 = vpack.c.bf16 %v1996, %v1995
      %v2022 = vpack.c.bf16 %v1998, %v1997
      %v2023 = vpack.c.bf16 %v2000, %v1999
      %v2024 = vpack.c.bf16 %v2002, %v2001
      %v2025 = vpack.c.bf16 %v2004, %v2003
      %v2026 = vpack.c.bf16 %v2006, %v2005
      %v2027 = vpack.c.bf16 %v2008, %v2007
      %v2028 = vpack.c.bf16 %v2010, %v2009
      %v2029 = vpack.c.bf16 %v2012, %v2011
      %v2030 = vpack.c.bf16 %v2014, %v2013
      %s2031 = scalar_lea.vmem %s3, 320
      %v2032 = vld [vmem:[%s2031] sm:$0xf]
      %v2033 = vld [vmem:[%s2031 + $0x4] sm:$0xf]
      %v2034 = vld [vmem:[%s2031 + $0x8] sm:$0xf]
      %v2035 = vld [vmem:[%s2031 + $0xc] sm:$0xf]
      %v2036 = vld [vmem:[%s2031 + $0x10] sm:$0xf]
      %v2037 = vld [vmem:[%s2031 + $0x14] sm:$0xf]
      %v2038 = vld [vmem:[%s2031 + $0x18] sm:$0xf]
      %v2039 = vld [vmem:[%s2031 + $0x1c] sm:$0xf]
      %v2040 = vld [vmem:[%s2031 + $0x20] sm:$0xf]
      %v2041 = vld [vmem:[%s2031 + $0x24] sm:$0xf]
      %v2042 = vld [vmem:[%s2031 + $0x28] sm:$0xf]
      %v2043 = vld [vmem:[%s2031 + $0x2c] sm:$0xf]
      %v2044 = vld [vmem:[%s2031 + $0x30] sm:$0xf]
      %v2045 = vld [vmem:[%s2031 + $0x34] sm:$0xf]
      %v2046 = vld [vmem:[%s2031 + $0x38] sm:$0xf]
      %v2047 = vld [vmem:[%s2031 + $0x3c] sm:$0xf]
      %v2064 = vunpack.c.l.b16 %v2032
      %v2065 = vunpack.c.l.b16 %v2033
      %v2066 = vunpack.c.l.b16 %v2034
      %v2067 = vunpack.c.l.b16 %v2035
      %v2068 = vunpack.c.l.b16 %v2036
      %v2069 = vunpack.c.l.b16 %v2037
      %v2070 = vunpack.c.l.b16 %v2038
      %v2071 = vunpack.c.l.b16 %v2039
      %v2072 = vunpack.c.l.b16 %v2040
      %v2073 = vunpack.c.l.b16 %v2041
      %v2074 = vunpack.c.l.b16 %v2042
      %v2075 = vunpack.c.l.b16 %v2043
      %v2076 = vunpack.c.l.b16 %v2044
      %v2077 = vunpack.c.l.b16 %v2045
      %v2078 = vunpack.c.l.b16 %v2046
      %v2079 = vunpack.c.l.b16 %v2047
      %v2080 = vpack.c.b16 %v2065, %v2064
      %v2081 = vpack.c.b16 %v2067, %v2066
      %v2082 = vpack.c.b16 %v2069, %v2068
      %v2083 = vpack.c.b16 %v2071, %v2070
      %v2084 = vpack.c.b16 %v2073, %v2072
      %v2085 = vpack.c.b16 %v2075, %v2074
      %v2086 = vpack.c.b16 %v2077, %v2076
      %v2087 = vpack.c.b16 %v2079, %v2078
      %2096 = vmatprep.subr.bf16.mxu0 0
      %2097 = vmatpush1.bf16.msra.mxu0 %v2087
      %2098 = vmatprep.subr.bf16.mxu0 0
      %2099 = vmatpush1.bf16.msra.mxu0 %v2086
      %2100 = vmatprep.subr.bf16.mxu0 0
      %2101 = vmatpush1.bf16.msra.mxu0 %v2085
      %2102 = vmatprep.subr.bf16.mxu0 0
      %2103 = vmatpush1.bf16.msra.mxu0 %v2084
      %2104 = vmatprep.subr.bf16.mxu0 0
      %2105 = vmatpush1.bf16.msra.mxu0 %v2083
      %2106 = vmatprep.subr.bf16.mxu0 0
      %2107 = vmatpush1.bf16.msra.mxu0 %v2082
      %2108 = vmatprep.subr.bf16.mxu0 0
      %2109 = vmatpush1.bf16.msra.mxu0 %v2081
      %2110 = vmatprep.subr.bf16.mxu0 0
      %2111 = vmatpush1.bf16.msra.mxu0 %v2080
      %2112 = vmatprep.subr.bf16.mxu0 0
      %2113 = vmatpush2.bf16.msra.mxu0 0
      %2114 = vmatprep.subr.bf16.mxu0 0
      %2115 = vmatpush2.bf16.msra.mxu0 0
      %2116 = vmatprep.subr.bf16.mxu0 0
      %2117 = vmatpush2.bf16.msra.mxu0 0
      %2118 = vmatprep.subr.bf16.mxu0 0
      %2119 = vmatpush2.bf16.msra.mxu0 0
      %2120 = vmatprep.subr.bf16.mxu0 0
      %2121 = vmatpush2.bf16.msra.mxu0 0
      %2122 = vmatprep.subr.bf16.mxu0 0
      %2123 = vmatpush2.bf16.msra.mxu0 0
      %2124 = vmatprep.subr.bf16.mxu0 0
      %2125 = vmatpush2.bf16.msra.mxu0 0
      %2126 = vmatprep.subr.bf16.mxu0 0
      %2127 = vmatpush2.bf16.msra.mxu0 0
      %2128 = vmatprep.mubr.bf16.mxu0 0
      %2129 = vmatmul.mubr.bf16.gmra.mxu0 %v2015
      %v2130 = vpop.f32.mrf.mxu0
      %v2131 = vadd.f32 0.0, %v2130
      %v2132 = vpop.f32.mrf.mxu0
      %v2133 = vpop.f32.mrf.mxu0
      %v2134 = vadd.f32 0.0, %v2133
      %v2135 = vpop.f32.mrf.mxu0
      %2136 = vmatprep.mubr.bf16.mxu0 0
      %2137 = vmatmul.mubr.bf16.gmra.mxu0 %v2016
      %v2138 = vpop.f32.mrf.mxu0
      %v2139 = vadd.f32 0.0, %v2138
      %v2140 = vpop.f32.mrf.mxu0
      %v2141 = vpop.f32.mrf.mxu0
      %v2142 = vadd.f32 0.0, %v2141
      %v2143 = vpop.f32.mrf.mxu0
      %2144 = vmatprep.mubr.bf16.mxu0 0
      %2145 = vmatmul.mubr.bf16.gmra.mxu0 %v2017
      %v2146 = vpop.f32.mrf.mxu0
      %v2147 = vadd.f32 0.0, %v2146
      %v2148 = vpop.f32.mrf.mxu0
      %v2149 = vpop.f32.mrf.mxu0
      %v2150 = vadd.f32 0.0, %v2149
      %v2151 = vpop.f32.mrf.mxu0
      %2152 = vmatprep.mubr.bf16.mxu0 0
      %2153 = vmatmul.mubr.bf16.gmra.mxu0 %v2018
      %v2154 = vpop.f32.mrf.mxu0
      %v2155 = vadd.f32 0.0, %v2154
      %v2156 = vpop.f32.mrf.mxu0
      %v2157 = vpop.f32.mrf.mxu0
      %v2158 = vadd.f32 0.0, %v2157
      %v2159 = vpop.f32.mrf.mxu0
      %2160 = vmatprep.mubr.bf16.mxu0 0
      %2161 = vmatmul.mubr.bf16.gmra.mxu0 %v2019
      %v2162 = vpop.f32.mrf.mxu0
      %v2163 = vadd.f32 0.0, %v2162
      %v2164 = vpop.f32.mrf.mxu0
      %v2165 = vpop.f32.mrf.mxu0
      %v2166 = vadd.f32 0.0, %v2165
      %v2167 = vpop.f32.mrf.mxu0
      %2168 = vmatprep.mubr.bf16.mxu0 0
      %2169 = vmatmul.mubr.bf16.gmra.mxu0 %v2020
      %v2170 = vpop.f32.mrf.mxu0
      %v2171 = vadd.f32 0.0, %v2170
      %v2172 = vpop.f32.mrf.mxu0
      %v2173 = vpop.f32.mrf.mxu0
      %v2174 = vadd.f32 0.0, %v2173
      %v2175 = vpop.f32.mrf.mxu0
      %2176 = vmatprep.mubr.bf16.mxu0 0
      %2177 = vmatmul.mubr.bf16.gmra.mxu0 %v2021
      %v2178 = vpop.f32.mrf.mxu0
      %v2179 = vadd.f32 0.0, %v2178
      %v2180 = vpop.f32.mrf.mxu0
      %v2181 = vpop.f32.mrf.mxu0
      %v2182 = vadd.f32 0.0, %v2181
      %v2183 = vpop.f32.mrf.mxu0
      %2184 = vmatprep.mubr.bf16.mxu0 0
      %2185 = vmatmul.mubr.bf16.gmra.mxu0 %v2022
      %v2186 = vpop.f32.mrf.mxu0
      %v2187 = vadd.f32 0.0, %v2186
      %v2188 = vpop.f32.mrf.mxu0
      %v2189 = vpop.f32.mrf.mxu0
      %v2190 = vadd.f32 0.0, %v2189
      %v2191 = vpop.f32.mrf.mxu0
      %2192 = vmatprep.mubr.bf16.mxu0 0
      %2193 = vmatmul.mubr.bf16.gmra.mxu0 %v2023
      %v2194 = vpop.f32.mrf.mxu0
      %v2195 = vadd.f32 0.0, %v2194
      %v2196 = vpop.f32.mrf.mxu0
      %v2197 = vpop.f32.mrf.mxu0
      %v2198 = vadd.f32 0.0, %v2197
      %v2199 = vpop.f32.mrf.mxu0
      %2200 = vmatprep.mubr.bf16.mxu0 0
      %2201 = vmatmul.mubr.bf16.gmra.mxu0 %v2024
      %v2202 = vpop.f32.mrf.mxu0
      %v2203 = vadd.f32 0.0, %v2202
      %v2204 = vpop.f32.mrf.mxu0
      %v2205 = vpop.f32.mrf.mxu0
      %v2206 = vadd.f32 0.0, %v2205
      %v2207 = vpop.f32.mrf.mxu0
      %2208 = vmatprep.mubr.bf16.mxu0 0
      %2209 = vmatmul.mubr.bf16.gmra.mxu0 %v2025
      %v2210 = vpop.f32.mrf.mxu0
      %v2211 = vadd.f32 0.0, %v2210
      %v2212 = vpop.f32.mrf.mxu0
      %v2213 = vpop.f32.mrf.mxu0
      %v2214 = vadd.f32 0.0, %v2213
      %v2215 = vpop.f32.mrf.mxu0
      %2216 = vmatprep.mubr.bf16.mxu0 0
      %2217 = vmatmul.mubr.bf16.gmra.mxu0 %v2026
      %v2218 = vpop.f32.mrf.mxu0
      %v2219 = vadd.f32 0.0, %v2218
      %v2220 = vpop.f32.mrf.mxu0
      %v2221 = vpop.f32.mrf.mxu0
      %v2222 = vadd.f32 0.0, %v2221
      %v2223 = vpop.f32.mrf.mxu0
      %2224 = vmatprep.mubr.bf16.mxu0 0
      %2225 = vmatmul.mubr.bf16.gmra.mxu0 %v2027
      %v2226 = vpop.f32.mrf.mxu0
      %v2227 = vadd.f32 0.0, %v2226
      %v2228 = vpop.f32.mrf.mxu0
      %v2229 = vpop.f32.mrf.mxu0
      %v2230 = vadd.f32 0.0, %v2229
      %v2231 = vpop.f32.mrf.mxu0
      %2232 = vmatprep.mubr.bf16.mxu0 0
      %2233 = vmatmul.mubr.bf16.gmra.mxu0 %v2028
      %v2234 = vpop.f32.mrf.mxu0
      %v2235 = vadd.f32 0.0, %v2234
      %v2236 = vpop.f32.mrf.mxu0
      %v2237 = vpop.f32.mrf.mxu0
      %v2238 = vadd.f32 0.0, %v2237
      %v2239 = vpop.f32.mrf.mxu0
      %2240 = vmatprep.mubr.bf16.mxu0 0
      %2241 = vmatmul.mubr.bf16.gmra.mxu0 %v2029
      %v2242 = vpop.f32.mrf.mxu0
      %v2243 = vadd.f32 0.0, %v2242
      %v2244 = vpop.f32.mrf.mxu0
      %v2245 = vpop.f32.mrf.mxu0
      %v2246 = vadd.f32 0.0, %v2245
      %v2247 = vpop.f32.mrf.mxu0
      %2248 = vmatprep.mubr.bf16.mxu0 0
      %2249 = vmatmul.mubr.bf16.gmra.mxu0 %v2030
      %v2250 = vpop.f32.mrf.mxu0
      %v2251 = vadd.f32 0.0, %v2250
      %v2252 = vpop.f32.mrf.mxu0
      %v2253 = vpop.f32.mrf.mxu0
      %v2254 = vadd.f32 0.0, %v2253
      %v2255 = vpop.f32.mrf.mxu0
      %2256 = vdwg.mxu0
      %v2257 = vadd.f32 %v1951, %v2131
      %v2258 = vadd.f32 %v1952, %v2134
      %v2259 = vadd.f32 %v1953, %v2139
      %v2260 = vadd.f32 %v1954, %v2142
      %v2261 = vadd.f32 %v1955, %v2147
      %v2262 = vadd.f32 %v1956, %v2150
      %v2263 = vadd.f32 %v1957, %v2155
      %v2264 = vadd.f32 %v1958, %v2158
      %v2265 = vadd.f32 %v1959, %v2163
      %v2266 = vadd.f32 %v1960, %v2166
      %v2267 = vadd.f32 %v1961, %v2171
      %v2268 = vadd.f32 %v1962, %v2174
      %v2269 = vadd.f32 %v1963, %v2179
      %v2270 = vadd.f32 %v1964, %v2182
      %v2271 = vadd.f32 %v1965, %v2187
      %v2272 = vadd.f32 %v1966, %v2190
      %v2273 = vadd.f32 %v1967, %v2195
      %v2274 = vadd.f32 %v1968, %v2198
      %v2275 = vadd.f32 %v1969, %v2203
      %v2276 = vadd.f32 %v1970, %v2206
      %v2277 = vadd.f32 %v1971, %v2211
      %v2278 = vadd.f32 %v1972, %v2214
      %v2279 = vadd.f32 %v1973, %v2219
      %v2280 = vadd.f32 %v1974, %v2222
      %v2281 = vadd.f32 %v1975, %v2227
      %v2282 = vadd.f32 %v1976, %v2230
      %v2283 = vadd.f32 %v1977, %v2235
      %v2284 = vadd.f32 %v1978, %v2238
      %v2285 = vadd.f32 %v1979, %v2243
      %v2286 = vadd.f32 %v1980, %v2246
      %v2287 = vadd.f32 %v1981, %v2251
      %v2288 = vadd.f32 %v1982, %v2254
      %s2289 = scalar_lea.vmem [#allocation2], 48
      %v2290 = vld [vmem:[%s2289] sm:$0xff]
      %v2291 = vld [vmem:[%s2289 + $0x8] sm:$0xff]
      %v2292 = vld [vmem:[%s2289 + $0x18] sm:$0xff]
      %v2293 = vld [vmem:[%s2289 + $0x20] sm:$0xff]
      %v2294 = vld [vmem:[%s2289 + $0x30] sm:$0xff]
      %v2295 = vld [vmem:[%s2289 + $0x38] sm:$0xff]
      %v2296 = vld [vmem:[%s2289 + $0x48] sm:$0xff]
      %v2297 = vld [vmem:[%s2289 + $0x50] sm:$0xff]
      %v2298 = vld [vmem:[%s2289 + $0x60] sm:$0xff]
      %v2299 = vld [vmem:[%s2289 + $0x68] sm:$0xff]
      %v2300 = vld [vmem:[%s2289 + $0x78] sm:$0xff]
      %v2301 = vld [vmem:[%s2289 + $0x80] sm:$0xff]
      %v2302 = vld [vmem:[%s2289 + $0x90] sm:$0xff]
      %v2303 = vld [vmem:[%s2289 + $0x98] sm:$0xff]
      %v2304 = vld [vmem:[%s2289 + $0xa8] sm:$0xff]
      %v2305 = vld [vmem:[%s2289 + $0xb0] sm:$0xff]
      %v2306 = vld [vmem:[%s2289 + $0xc0] sm:$0xff]
      %v2307 = vld [vmem:[%s2289 + $0xc8] sm:$0xff]
      %v2308 = vld [vmem:[%s2289 + $0xd8] sm:$0xff]
      %v2309 = vld [vmem:[%s2289 + $0xe0] sm:$0xff]
      %v2310 = vld [vmem:[%s2289 + $0xf0] sm:$0xff]
      %v2311 = vld [vmem:[%s2289 + $0xf8] sm:$0xff]
      %v2312 = vld [vmem:[%s2289 + $0x108] sm:$0xff]
      %v2313 = vld [vmem:[%s2289 + $0x110] sm:$0xff]
      %v2314 = vld [vmem:[%s2289 + $0x120] sm:$0xff]
      %v2315 = vld [vmem:[%s2289 + $0x128] sm:$0xff]
      %v2316 = vld [vmem:[%s2289 + $0x138] sm:$0xff]
      %v2317 = vld [vmem:[%s2289 + $0x140] sm:$0xff]
      %v2318 = vld [vmem:[%s2289 + $0x150] sm:$0xff]
      %v2319 = vld [vmem:[%s2289 + $0x158] sm:$0xff]
      %v2320 = vld [vmem:[%s2289 + $0x168] sm:$0xff]
      %v2321 = vld [vmem:[%s2289 + $0x170] sm:$0xff]
      %v2322 = vpack.c.bf16 %v2291, %v2290
      %v2323 = vpack.c.bf16 %v2293, %v2292
      %v2324 = vpack.c.bf16 %v2295, %v2294
      %v2325 = vpack.c.bf16 %v2297, %v2296
      %v2326 = vpack.c.bf16 %v2299, %v2298
      %v2327 = vpack.c.bf16 %v2301, %v2300
      %v2328 = vpack.c.bf16 %v2303, %v2302
      %v2329 = vpack.c.bf16 %v2305, %v2304
      %v2330 = vpack.c.bf16 %v2307, %v2306
      %v2331 = vpack.c.bf16 %v2309, %v2308
      %v2332 = vpack.c.bf16 %v2311, %v2310
      %v2333 = vpack.c.bf16 %v2313, %v2312
      %v2334 = vpack.c.bf16 %v2315, %v2314
      %v2335 = vpack.c.bf16 %v2317, %v2316
      %v2336 = vpack.c.bf16 %v2319, %v2318
      %v2337 = vpack.c.bf16 %v2321, %v2320
      %s2338 = scalar_lea.vmem %s3, 384
      %v2339 = vld [vmem:[%s2338] sm:$0xf]
      %v2340 = vld [vmem:[%s2338 + $0x4] sm:$0xf]
      %v2341 = vld [vmem:[%s2338 + $0x8] sm:$0xf]
      %v2342 = vld [vmem:[%s2338 + $0xc] sm:$0xf]
      %v2343 = vld [vmem:[%s2338 + $0x10] sm:$0xf]
      %v2344 = vld [vmem:[%s2338 + $0x14] sm:$0xf]
      %v2345 = vld [vmem:[%s2338 + $0x18] sm:$0xf]
      %v2346 = vld [vmem:[%s2338 + $0x1c] sm:$0xf]
      %v2347 = vld [vmem:[%s2338 + $0x20] sm:$0xf]
      %v2348 = vld [vmem:[%s2338 + $0x24] sm:$0xf]
      %v2349 = vld [vmem:[%s2338 + $0x28] sm:$0xf]
      %v2350 = vld [vmem:[%s2338 + $0x2c] sm:$0xf]
      %v2351 = vld [vmem:[%s2338 + $0x30] sm:$0xf]
      %v2352 = vld [vmem:[%s2338 + $0x34] sm:$0xf]
      %v2353 = vld [vmem:[%s2338 + $0x38] sm:$0xf]
      %v2354 = vld [vmem:[%s2338 + $0x3c] sm:$0xf]
      %v2371 = vunpack.c.l.b16 %v2339
      %v2372 = vunpack.c.l.b16 %v2340
      %v2373 = vunpack.c.l.b16 %v2341
      %v2374 = vunpack.c.l.b16 %v2342
      %v2375 = vunpack.c.l.b16 %v2343
      %v2376 = vunpack.c.l.b16 %v2344
      %v2377 = vunpack.c.l.b16 %v2345
      %v2378 = vunpack.c.l.b16 %v2346
      %v2379 = vunpack.c.l.b16 %v2347
      %v2380 = vunpack.c.l.b16 %v2348
      %v2381 = vunpack.c.l.b16 %v2349
      %v2382 = vunpack.c.l.b16 %v2350
      %v2383 = vunpack.c.l.b16 %v2351
      %v2384 = vunpack.c.l.b16 %v2352
      %v2385 = vunpack.c.l.b16 %v2353
      %v2386 = vunpack.c.l.b16 %v2354
      %v2387 = vpack.c.b16 %v2372, %v2371
      %v2388 = vpack.c.b16 %v2374, %v2373
      %v2389 = vpack.c.b16 %v2376, %v2375
      %v2390 = vpack.c.b16 %v2378, %v2377
      %v2391 = vpack.c.b16 %v2380, %v2379
      %v2392 = vpack.c.b16 %v2382, %v2381
      %v2393 = vpack.c.b16 %v2384, %v2383
      %v2394 = vpack.c.b16 %v2386, %v2385
      %2403 = vmatprep.subr.bf16.mxu0 0
      %2404 = vmatpush1.bf16.msra.mxu0 %v2394
      %2405 = vmatprep.subr.bf16.mxu0 0
      %2406 = vmatpush1.bf16.msra.mxu0 %v2393
      %2407 = vmatprep.subr.bf16.mxu0 0
      %2408 = vmatpush1.bf16.msra.mxu0 %v2392
      %2409 = vmatprep.subr.bf16.mxu0 0
      %2410 = vmatpush1.bf16.msra.mxu0 %v2391
      %2411 = vmatprep.subr.bf16.mxu0 0
      %2412 = vmatpush1.bf16.msra.mxu0 %v2390
      %2413 = vmatprep.subr.bf16.mxu0 0
      %2414 = vmatpush1.bf16.msra.mxu0 %v2389
      %2415 = vmatprep.subr.bf16.mxu0 0
      %2416 = vmatpush1.bf16.msra.mxu0 %v2388
      %2417 = vmatprep.subr.bf16.mxu0 0
      %2418 = vmatpush1.bf16.msra.mxu0 %v2387
      %2419 = vmatprep.subr.bf16.mxu0 0
      %2420 = vmatpush2.bf16.msra.mxu0 0
      %2421 = vmatprep.subr.bf16.mxu0 0
      %2422 = vmatpush2.bf16.msra.mxu0 0
      %2423 = vmatprep.subr.bf16.mxu0 0
      %2424 = vmatpush2.bf16.msra.mxu0 0
      %2425 = vmatprep.subr.bf16.mxu0 0
      %2426 = vmatpush2.bf16.msra.mxu0 0
      %2427 = vmatprep.subr.bf16.mxu0 0
      %2428 = vmatpush2.bf16.msra.mxu0 0
      %2429 = vmatprep.subr.bf16.mxu0 0
      %2430 = vmatpush2.bf16.msra.mxu0 0
      %2431 = vmatprep.subr.bf16.mxu0 0
      %2432 = vmatpush2.bf16.msra.mxu0 0
      %2433 = vmatprep.subr.bf16.mxu0 0
      %2434 = vmatpush2.bf16.msra.mxu0 0
      %2435 = vmatprep.mubr.bf16.mxu0 0
      %2436 = vmatmul.mubr.bf16.gmra.mxu0 %v2322
      %v2437 = vpop.f32.mrf.mxu0
      %v2438 = vadd.f32 0.0, %v2437
      %v2439 = vpop.f32.mrf.mxu0
      %v2440 = vpop.f32.mrf.mxu0
      %v2441 = vadd.f32 0.0, %v2440
      %v2442 = vpop.f32.mrf.mxu0
      %2443 = vmatprep.mubr.bf16.mxu0 0
      %2444 = vmatmul.mubr.bf16.gmra.mxu0 %v2323
      %v2445 = vpop.f32.mrf.mxu0
      %v2446 = vadd.f32 0.0, %v2445
      %v2447 = vpop.f32.mrf.mxu0
      %v2448 = vpop.f32.mrf.mxu0
      %v2449 = vadd.f32 0.0, %v2448
      %v2450 = vpop.f32.mrf.mxu0
      %2451 = vmatprep.mubr.bf16.mxu0 0
      %2452 = vmatmul.mubr.bf16.gmra.mxu0 %v2324
      %v2453 = vpop.f32.mrf.mxu0
      %v2454 = vadd.f32 0.0, %v2453
      %v2455 = vpop.f32.mrf.mxu0
      %v2456 = vpop.f32.mrf.mxu0
      %v2457 = vadd.f32 0.0, %v2456
      %v2458 = vpop.f32.mrf.mxu0
      %2459 = vmatprep.mubr.bf16.mxu0 0
      %2460 = vmatmul.mubr.bf16.gmra.mxu0 %v2325
      %v2461 = vpop.f32.mrf.mxu0
      %v2462 = vadd.f32 0.0, %v2461
      %v2463 = vpop.f32.mrf.mxu0
      %v2464 = vpop.f32.mrf.mxu0
      %v2465 = vadd.f32 0.0, %v2464
      %v2466 = vpop.f32.mrf.mxu0
      %2467 = vmatprep.mubr.bf16.mxu0 0
      %2468 = vmatmul.mubr.bf16.gmra.mxu0 %v2326
      %v2469 = vpop.f32.mrf.mxu0
      %v2470 = vadd.f32 0.0, %v2469
      %v2471 = vpop.f32.mrf.mxu0
      %v2472 = vpop.f32.mrf.mxu0
      %v2473 = vadd.f32 0.0, %v2472
      %v2474 = vpop.f32.mrf.mxu0
      %2475 = vmatprep.mubr.bf16.mxu0 0
      %2476 = vmatmul.mubr.bf16.gmra.mxu0 %v2327
      %v2477 = vpop.f32.mrf.mxu0
      %v2478 = vadd.f32 0.0, %v2477
      %v2479 = vpop.f32.mrf.mxu0
      %v2480 = vpop.f32.mrf.mxu0
      %v2481 = vadd.f32 0.0, %v2480
      %v2482 = vpop.f32.mrf.mxu0
      %2483 = vmatprep.mubr.bf16.mxu0 0
      %2484 = vmatmul.mubr.bf16.gmra.mxu0 %v2328
      %v2485 = vpop.f32.mrf.mxu0
      %v2486 = vadd.f32 0.0, %v2485
      %v2487 = vpop.f32.mrf.mxu0
      %v2488 = vpop.f32.mrf.mxu0
      %v2489 = vadd.f32 0.0, %v2488
      %v2490 = vpop.f32.mrf.mxu0
      %2491 = vmatprep.mubr.bf16.mxu0 0
      %2492 = vmatmul.mubr.bf16.gmra.mxu0 %v2329
      %v2493 = vpop.f32.mrf.mxu0
      %v2494 = vadd.f32 0.0, %v2493
      %v2495 = vpop.f32.mrf.mxu0
      %v2496 = vpop.f32.mrf.mxu0
      %v2497 = vadd.f32 0.0, %v2496
      %v2498 = vpop.f32.mrf.mxu0
      %2499 = vmatprep.mubr.bf16.mxu0 0
      %2500 = vmatmul.mubr.bf16.gmra.mxu0 %v2330
      %v2501 = vpop.f32.mrf.mxu0
      %v2502 = vadd.f32 0.0, %v2501
      %v2503 = vpop.f32.mrf.mxu0
      %v2504 = vpop.f32.mrf.mxu0
      %v2505 = vadd.f32 0.0, %v2504
      %v2506 = vpop.f32.mrf.mxu0
      %2507 = vmatprep.mubr.bf16.mxu0 0
      %2508 = vmatmul.mubr.bf16.gmra.mxu0 %v2331
      %v2509 = vpop.f32.mrf.mxu0
      %v2510 = vadd.f32 0.0, %v2509
      %v2511 = vpop.f32.mrf.mxu0
      %v2512 = vpop.f32.mrf.mxu0
      %v2513 = vadd.f32 0.0, %v2512
      %v2514 = vpop.f32.mrf.mxu0
      %2515 = vmatprep.mubr.bf16.mxu0 0
      %2516 = vmatmul.mubr.bf16.gmra.mxu0 %v2332
      %v2517 = vpop.f32.mrf.mxu0
      %v2518 = vadd.f32 0.0, %v2517
      %v2519 = vpop.f32.mrf.mxu0
      %v2520 = vpop.f32.mrf.mxu0
      %v2521 = vadd.f32 0.0, %v2520
      %v2522 = vpop.f32.mrf.mxu0
      %2523 = vmatprep.mubr.bf16.mxu0 0
      %2524 = vmatmul.mubr.bf16.gmra.mxu0 %v2333
      %v2525 = vpop.f32.mrf.mxu0
      %v2526 = vadd.f32 0.0, %v2525
      %v2527 = vpop.f32.mrf.mxu0
      %v2528 = vpop.f32.mrf.mxu0
      %v2529 = vadd.f32 0.0, %v2528
      %v2530 = vpop.f32.mrf.mxu0
      %2531 = vmatprep.mubr.bf16.mxu0 0
      %2532 = vmatmul.mubr.bf16.gmra.mxu0 %v2334
      %v2533 = vpop.f32.mrf.mxu0
      %v2534 = vadd.f32 0.0, %v2533
      %v2535 = vpop.f32.mrf.mxu0
      %v2536 = vpop.f32.mrf.mxu0
      %v2537 = vadd.f32 0.0, %v2536
      %v2538 = vpop.f32.mrf.mxu0
      %2539 = vmatprep.mubr.bf16.mxu0 0
      %2540 = vmatmul.mubr.bf16.gmra.mxu0 %v2335
      %v2541 = vpop.f32.mrf.mxu0
      %v2542 = vadd.f32 0.0, %v2541
      %v2543 = vpop.f32.mrf.mxu0
      %v2544 = vpop.f32.mrf.mxu0
      %v2545 = vadd.f32 0.0, %v2544
      %v2546 = vpop.f32.mrf.mxu0
      %2547 = vmatprep.mubr.bf16.mxu0 0
      %2548 = vmatmul.mubr.bf16.gmra.mxu0 %v2336
      %v2549 = vpop.f32.mrf.mxu0
      %v2550 = vadd.f32 0.0, %v2549
      %v2551 = vpop.f32.mrf.mxu0
      %v2552 = vpop.f32.mrf.mxu0
      %v2553 = vadd.f32 0.0, %v2552
      %v2554 = vpop.f32.mrf.mxu0
      %2555 = vmatprep.mubr.bf16.mxu0 0
      %2556 = vmatmul.mubr.bf16.gmra.mxu0 %v2337
      %v2557 = vpop.f32.mrf.mxu0
      %v2558 = vadd.f32 0.0, %v2557
      %v2559 = vpop.f32.mrf.mxu0
      %v2560 = vpop.f32.mrf.mxu0
      %v2561 = vadd.f32 0.0, %v2560
      %v2562 = vpop.f32.mrf.mxu0
      %2563 = vdwg.mxu0
      %v2564 = vadd.f32 %v2257, %v2438
      %v2565 = vadd.f32 %v2258, %v2441
      %v2566 = vadd.f32 %v2259, %v2446
      %v2567 = vadd.f32 %v2260, %v2449
      %v2568 = vadd.f32 %v2261, %v2454
      %v2569 = vadd.f32 %v2262, %v2457
      %v2570 = vadd.f32 %v2263, %v2462
      %v2571 = vadd.f32 %v2264, %v2465
      %v2572 = vadd.f32 %v2265, %v2470
      %v2573 = vadd.f32 %v2266, %v2473
      %v2574 = vadd.f32 %v2267, %v2478
      %v2575 = vadd.f32 %v2268, %v2481
      %v2576 = vadd.f32 %v2269, %v2486
      %v2577 = vadd.f32 %v2270, %v2489
      %v2578 = vadd.f32 %v2271, %v2494
      %v2579 = vadd.f32 %v2272, %v2497
      %v2580 = vadd.f32 %v2273, %v2502
      %v2581 = vadd.f32 %v2274, %v2505
      %v2582 = vadd.f32 %v2275, %v2510
      %v2583 = vadd.f32 %v2276, %v2513
      %v2584 = vadd.f32 %v2277, %v2518
      %v2585 = vadd.f32 %v2278, %v2521
      %v2586 = vadd.f32 %v2279, %v2526
      %v2587 = vadd.f32 %v2280, %v2529
      %v2588 = vadd.f32 %v2281, %v2534
      %v2589 = vadd.f32 %v2282, %v2537
      %v2590 = vadd.f32 %v2283, %v2542
      %v2591 = vadd.f32 %v2284, %v2545
      %v2592 = vadd.f32 %v2285, %v2550
      %v2593 = vadd.f32 %v2286, %v2553
      %v2594 = vadd.f32 %v2287, %v2558
      %v2595 = vadd.f32 %v2288, %v2561
      %v2596 = vld [vmem:[%s2289 + $0x1] sm:$0xff]
      %v2597 = vld [vmem:[%s2289 + $0x9] sm:$0xff]
      %v2598 = vld [vmem:[%s2289 + $0x19] sm:$0xff]
      %v2599 = vld [vmem:[%s2289 + $0x21] sm:$0xff]
      %v2600 = vld [vmem:[%s2289 + $0x31] sm:$0xff]
      %v2601 = vld [vmem:[%s2289 + $0x39] sm:$0xff]
      %v2602 = vld [vmem:[%s2289 + $0x49] sm:$0xff]
      %v2603 = vld [vmem:[%s2289 + $0x51] sm:$0xff]
      %v2604 = vld [vmem:[%s2289 + $0x61] sm:$0xff]
      %v2605 = vld [vmem:[%s2289 + $0x69] sm:$0xff]
      %v2606 = vld [vmem:[%s2289 + $0x79] sm:$0xff]
      %v2607 = vld [vmem:[%s2289 + $0x81] sm:$0xff]
      %v2608 = vld [vmem:[%s2289 + $0x91] sm:$0xff]
      %v2609 = vld [vmem:[%s2289 + $0x99] sm:$0xff]
      %v2610 = vld [vmem:[%s2289 + $0xa9] sm:$0xff]
      %v2611 = vld [vmem:[%s2289 + $0xb1] sm:$0xff]
      %v2612 = vld [vmem:[%s2289 + $0xc1] sm:$0xff]
      %v2613 = vld [vmem:[%s2289 + $0xc9] sm:$0xff]
      %v2614 = vld [vmem:[%s2289 + $0xd9] sm:$0xff]
      %v2615 = vld [vmem:[%s2289 + $0xe1] sm:$0xff]
      %v2616 = vld [vmem:[%s2289 + $0xf1] sm:$0xff]
      %v2617 = vld [vmem:[%s2289 + $0xf9] sm:$0xff]
      %v2618 = vld [vmem:[%s2289 + $0x109] sm:$0xff]
      %v2619 = vld [vmem:[%s2289 + $0x111] sm:$0xff]
      %v2620 = vld [vmem:[%s2289 + $0x121] sm:$0xff]
      %v2621 = vld [vmem:[%s2289 + $0x129] sm:$0xff]
      %v2622 = vld [vmem:[%s2289 + $0x139] sm:$0xff]
      %v2623 = vld [vmem:[%s2289 + $0x141] sm:$0xff]
      %v2624 = vld [vmem:[%s2289 + $0x151] sm:$0xff]
      %v2625 = vld [vmem:[%s2289 + $0x159] sm:$0xff]
      %v2626 = vld [vmem:[%s2289 + $0x169] sm:$0xff]
      %v2627 = vld [vmem:[%s2289 + $0x171] sm:$0xff]
      %v2628 = vpack.c.bf16 %v2597, %v2596
      %v2629 = vpack.c.bf16 %v2599, %v2598
      %v2630 = vpack.c.bf16 %v2601, %v2600
      %v2631 = vpack.c.bf16 %v2603, %v2602
      %v2632 = vpack.c.bf16 %v2605, %v2604
      %v2633 = vpack.c.bf16 %v2607, %v2606
      %v2634 = vpack.c.bf16 %v2609, %v2608
      %v2635 = vpack.c.bf16 %v2611, %v2610
      %v2636 = vpack.c.bf16 %v2613, %v2612
      %v2637 = vpack.c.bf16 %v2615, %v2614
      %v2638 = vpack.c.bf16 %v2617, %v2616
      %v2639 = vpack.c.bf16 %v2619, %v2618
      %v2640 = vpack.c.bf16 %v2621, %v2620
      %v2641 = vpack.c.bf16 %v2623, %v2622
      %v2642 = vpack.c.bf16 %v2625, %v2624
      %v2643 = vpack.c.bf16 %v2627, %v2626
      %s2644 = scalar_lea.vmem %s3, 448
      %v2645 = vld [vmem:[%s2644] sm:$0xf]
      %v2646 = vld [vmem:[%s2644 + $0x4] sm:$0xf]
      %v2647 = vld [vmem:[%s2644 + $0x8] sm:$0xf]
      %v2648 = vld [vmem:[%s2644 + $0xc] sm:$0xf]
      %v2649 = vld [vmem:[%s2644 + $0x10] sm:$0xf]
      %v2650 = vld [vmem:[%s2644 + $0x14] sm:$0xf]
      %v2651 = vld [vmem:[%s2644 + $0x18] sm:$0xf]
      %v2652 = vld [vmem:[%s2644 + $0x1c] sm:$0xf]
      %v2653 = vld [vmem:[%s2644 + $0x20] sm:$0xf]
      %v2654 = vld [vmem:[%s2644 + $0x24] sm:$0xf]
      %v2655 = vld [vmem:[%s2644 + $0x28] sm:$0xf]
      %v2656 = vld [vmem:[%s2644 + $0x2c] sm:$0xf]
      %v2657 = vld [vmem:[%s2644 + $0x30] sm:$0xf]
      %v2658 = vld [vmem:[%s2644 + $0x34] sm:$0xf]
      %v2659 = vld [vmem:[%s2644 + $0x38] sm:$0xf]
      %v2660 = vld [vmem:[%s2644 + $0x3c] sm:$0xf]
      %v2677 = vunpack.c.l.b16 %v2645
      %v2678 = vunpack.c.l.b16 %v2646
      %v2679 = vunpack.c.l.b16 %v2647
      %v2680 = vunpack.c.l.b16 %v2648
      %v2681 = vunpack.c.l.b16 %v2649
      %v2682 = vunpack.c.l.b16 %v2650
      %v2683 = vunpack.c.l.b16 %v2651
      %v2684 = vunpack.c.l.b16 %v2652
      %v2685 = vunpack.c.l.b16 %v2653
      %v2686 = vunpack.c.l.b16 %v2654
      %v2687 = vunpack.c.l.b16 %v2655
      %v2688 = vunpack.c.l.b16 %v2656
      %v2689 = vunpack.c.l.b16 %v2657
      %v2690 = vunpack.c.l.b16 %v2658
      %v2691 = vunpack.c.l.b16 %v2659
      %v2692 = vunpack.c.l.b16 %v2660
      %v2693 = vpack.c.b16 %v2678, %v2677
      %v2694 = vpack.c.b16 %v2680, %v2679
      %v2695 = vpack.c.b16 %v2682, %v2681
      %v2696 = vpack.c.b16 %v2684, %v2683
      %v2697 = vpack.c.b16 %v2686, %v2685
      %v2698 = vpack.c.b16 %v2688, %v2687
      %v2699 = vpack.c.b16 %v2690, %v2689
      %v2700 = vpack.c.b16 %v2692, %v2691
      %2709 = vmatprep.subr.bf16.mxu0 0
      %2710 = vmatpush1.bf16.msra.mxu0 %v2700
      %2711 = vmatprep.subr.bf16.mxu0 0
      %2712 = vmatpush1.bf16.msra.mxu0 %v2699
      %2713 = vmatprep.subr.bf16.mxu0 0
      %2714 = vmatpush1.bf16.msra.mxu0 %v2698
      %2715 = vmatprep.subr.bf16.mxu0 0
      %2716 = vmatpush1.bf16.msra.mxu0 %v2697
      %2717 = vmatprep.subr.bf16.mxu0 0
      %2718 = vmatpush1.bf16.msra.mxu0 %v2696
      %2719 = vmatprep.subr.bf16.mxu0 0
      %2720 = vmatpush1.bf16.msra.mxu0 %v2695
      %2721 = vmatprep.subr.bf16.mxu0 0
      %2722 = vmatpush1.bf16.msra.mxu0 %v2694
      %2723 = vmatprep.subr.bf16.mxu0 0
      %2724 = vmatpush1.bf16.msra.mxu0 %v2693
      %2725 = vmatprep.subr.bf16.mxu0 0
      %2726 = vmatpush2.bf16.msra.mxu0 0
      %2727 = vmatprep.subr.bf16.mxu0 0
      %2728 = vmatpush2.bf16.msra.mxu0 0
      %2729 = vmatprep.subr.bf16.mxu0 0
      %2730 = vmatpush2.bf16.msra.mxu0 0
      %2731 = vmatprep.subr.bf16.mxu0 0
      %2732 = vmatpush2.bf16.msra.mxu0 0
      %2733 = vmatprep.subr.bf16.mxu0 0
      %2734 = vmatpush2.bf16.msra.mxu0 0
      %2735 = vmatprep.subr.bf16.mxu0 0
      %2736 = vmatpush2.bf16.msra.mxu0 0
      %2737 = vmatprep.subr.bf16.mxu0 0
      %2738 = vmatpush2.bf16.msra.mxu0 0
      %2739 = vmatprep.subr.bf16.mxu0 0
      %2740 = vmatpush2.bf16.msra.mxu0 0
      %2741 = vmatprep.mubr.bf16.mxu0 0
      %2742 = vmatmul.mubr.bf16.gmra.mxu0 %v2628
      %v2743 = vpop.f32.mrf.mxu0
      %v2744 = vadd.f32 0.0, %v2743
      %v2745 = vpop.f32.mrf.mxu0
      %v2746 = vpop.f32.mrf.mxu0
      %v2747 = vadd.f32 0.0, %v2746
      %v2748 = vpop.f32.mrf.mxu0
      %2749 = vmatprep.mubr.bf16.mxu0 0
      %2750 = vmatmul.mubr.bf16.gmra.mxu0 %v2629
      %v2751 = vpop.f32.mrf.mxu0
      %v2752 = vadd.f32 0.0, %v2751
      %v2753 = vpop.f32.mrf.mxu0
      %v2754 = vpop.f32.mrf.mxu0
      %v2755 = vadd.f32 0.0, %v2754
      %v2756 = vpop.f32.mrf.mxu0
      %2757 = vmatprep.mubr.bf16.mxu0 0
      %2758 = vmatmul.mubr.bf16.gmra.mxu0 %v2630
      %v2759 = vpop.f32.mrf.mxu0
      %v2760 = vadd.f32 0.0, %v2759
      %v2761 = vpop.f32.mrf.mxu0
      %v2762 = vpop.f32.mrf.mxu0
      %v2763 = vadd.f32 0.0, %v2762
      %v2764 = vpop.f32.mrf.mxu0
      %2765 = vmatprep.mubr.bf16.mxu0 0
      %2766 = vmatmul.mubr.bf16.gmra.mxu0 %v2631
      %v2767 = vpop.f32.mrf.mxu0
      %v2768 = vadd.f32 0.0, %v2767
      %v2769 = vpop.f32.mrf.mxu0
      %v2770 = vpop.f32.mrf.mxu0
      %v2771 = vadd.f32 0.0, %v2770
      %v2772 = vpop.f32.mrf.mxu0
      %2773 = vmatprep.mubr.bf16.mxu0 0
      %2774 = vmatmul.mubr.bf16.gmra.mxu0 %v2632
      %v2775 = vpop.f32.mrf.mxu0
      %v2776 = vadd.f32 0.0, %v2775
      %v2777 = vpop.f32.mrf.mxu0
      %v2778 = vpop.f32.mrf.mxu0
      %v2779 = vadd.f32 0.0, %v2778
      %v2780 = vpop.f32.mrf.mxu0
      %2781 = vmatprep.mubr.bf16.mxu0 0
      %2782 = vmatmul.mubr.bf16.gmra.mxu0 %v2633
      %v2783 = vpop.f32.mrf.mxu0
      %v2784 = vadd.f32 0.0, %v2783
      %v2785 = vpop.f32.mrf.mxu0
      %v2786 = vpop.f32.mrf.mxu0
      %v2787 = vadd.f32 0.0, %v2786
      %v2788 = vpop.f32.mrf.mxu0
      %2789 = vmatprep.mubr.bf16.mxu0 0
      %2790 = vmatmul.mubr.bf16.gmra.mxu0 %v2634
      %v2791 = vpop.f32.mrf.mxu0
      %v2792 = vadd.f32 0.0, %v2791
      %v2793 = vpop.f32.mrf.mxu0
      %v2794 = vpop.f32.mrf.mxu0
      %v2795 = vadd.f32 0.0, %v2794
      %v2796 = vpop.f32.mrf.mxu0
      %2797 = vmatprep.mubr.bf16.mxu0 0
      %2798 = vmatmul.mubr.bf16.gmra.mxu0 %v2635
      %v2799 = vpop.f32.mrf.mxu0
      %v2800 = vadd.f32 0.0, %v2799
      %v2801 = vpop.f32.mrf.mxu0
      %v2802 = vpop.f32.mrf.mxu0
      %v2803 = vadd.f32 0.0, %v2802
      %v2804 = vpop.f32.mrf.mxu0
      %2805 = vmatprep.mubr.bf16.mxu0 0
      %2806 = vmatmul.mubr.bf16.gmra.mxu0 %v2636
      %v2807 = vpop.f32.mrf.mxu0
      %v2808 = vadd.f32 0.0, %v2807
      %v2809 = vpop.f32.mrf.mxu0
      %v2810 = vpop.f32.mrf.mxu0
      %v2811 = vadd.f32 0.0, %v2810
      %v2812 = vpop.f32.mrf.mxu0
      %2813 = vmatprep.mubr.bf16.mxu0 0
      %2814 = vmatmul.mubr.bf16.gmra.mxu0 %v2637
      %v2815 = vpop.f32.mrf.mxu0
      %v2816 = vadd.f32 0.0, %v2815
      %v2817 = vpop.f32.mrf.mxu0
      %v2818 = vpop.f32.mrf.mxu0
      %v2819 = vadd.f32 0.0, %v2818
      %v2820 = vpop.f32.mrf.mxu0
      %2821 = vmatprep.mubr.bf16.mxu0 0
      %2822 = vmatmul.mubr.bf16.gmra.mxu0 %v2638
      %v2823 = vpop.f32.mrf.mxu0
      %v2824 = vadd.f32 0.0, %v2823
      %v2825 = vpop.f32.mrf.mxu0
      %v2826 = vpop.f32.mrf.mxu0
      %v2827 = vadd.f32 0.0, %v2826
      %v2828 = vpop.f32.mrf.mxu0
      %2829 = vmatprep.mubr.bf16.mxu0 0
      %2830 = vmatmul.mubr.bf16.gmra.mxu0 %v2639
      %v2831 = vpop.f32.mrf.mxu0
      %v2832 = vadd.f32 0.0, %v2831
      %v2833 = vpop.f32.mrf.mxu0
      %v2834 = vpop.f32.mrf.mxu0
      %v2835 = vadd.f32 0.0, %v2834
      %v2836 = vpop.f32.mrf.mxu0
      %2837 = vmatprep.mubr.bf16.mxu0 0
      %2838 = vmatmul.mubr.bf16.gmra.mxu0 %v2640
      %v2839 = vpop.f32.mrf.mxu0
      %v2840 = vadd.f32 0.0, %v2839
      %v2841 = vpop.f32.mrf.mxu0
      %v2842 = vpop.f32.mrf.mxu0
      %v2843 = vadd.f32 0.0, %v2842
      %v2844 = vpop.f32.mrf.mxu0
      %2845 = vmatprep.mubr.bf16.mxu0 0
      %2846 = vmatmul.mubr.bf16.gmra.mxu0 %v2641
      %v2847 = vpop.f32.mrf.mxu0
      %v2848 = vadd.f32 0.0, %v2847
      %v2849 = vpop.f32.mrf.mxu0
      %v2850 = vpop.f32.mrf.mxu0
      %v2851 = vadd.f32 0.0, %v2850
      %v2852 = vpop.f32.mrf.mxu0
      %2853 = vmatprep.mubr.bf16.mxu0 0
      %2854 = vmatmul.mubr.bf16.gmra.mxu0 %v2642
      %v2855 = vpop.f32.mrf.mxu0
      %v2856 = vadd.f32 0.0, %v2855
      %v2857 = vpop.f32.mrf.mxu0
      %v2858 = vpop.f32.mrf.mxu0
      %v2859 = vadd.f32 0.0, %v2858
      %v2860 = vpop.f32.mrf.mxu0
      %2861 = vmatprep.mubr.bf16.mxu0 0
      %2862 = vmatmul.mubr.bf16.gmra.mxu0 %v2643
      %v2863 = vpop.f32.mrf.mxu0
      %v2864 = vadd.f32 0.0, %v2863
      %v2865 = vpop.f32.mrf.mxu0
      %v2866 = vpop.f32.mrf.mxu0
      %v2867 = vadd.f32 0.0, %v2866
      %v2868 = vpop.f32.mrf.mxu0
      %2869 = vdwg.mxu0
      %v2870 = vadd.f32 %v2564, %v2744
      %v2871 = vadd.f32 %v2565, %v2747
      %v2872 = vadd.f32 %v2566, %v2752
      %v2873 = vadd.f32 %v2567, %v2755
      %v2874 = vadd.f32 %v2568, %v2760
      %v2875 = vadd.f32 %v2569, %v2763
      %v2876 = vadd.f32 %v2570, %v2768
      %v2877 = vadd.f32 %v2571, %v2771
      %v2878 = vadd.f32 %v2572, %v2776
      %v2879 = vadd.f32 %v2573, %v2779
      %v2880 = vadd.f32 %v2574, %v2784
      %v2881 = vadd.f32 %v2575, %v2787
      %v2882 = vadd.f32 %v2576, %v2792
      %v2883 = vadd.f32 %v2577, %v2795
      %v2884 = vadd.f32 %v2578, %v2800
      %v2885 = vadd.f32 %v2579, %v2803
      %v2886 = vadd.f32 %v2580, %v2808
      %v2887 = vadd.f32 %v2581, %v2811
      %v2888 = vadd.f32 %v2582, %v2816
      %v2889 = vadd.f32 %v2583, %v2819
      %v2890 = vadd.f32 %v2584, %v2824
      %v2891 = vadd.f32 %v2585, %v2827
      %v2892 = vadd.f32 %v2586, %v2832
      %v2893 = vadd.f32 %v2587, %v2835
      %v2894 = vadd.f32 %v2588, %v2840
      %v2895 = vadd.f32 %v2589, %v2843
      %v2896 = vadd.f32 %v2590, %v2848
      %v2897 = vadd.f32 %v2591, %v2851
      %v2898 = vadd.f32 %v2592, %v2856
      %v2899 = vadd.f32 %v2593, %v2859
      %v2900 = vadd.f32 %v2594, %v2864
      %v2901 = vadd.f32 %v2595, %v2867
      %v2902 = vld [vmem:[%s2289 + $0x2] sm:$0xff]
      %v2903 = vld [vmem:[%s2289 + $0xa] sm:$0xff]
      %v2904 = vld [vmem:[%s2289 + $0x1a] sm:$0xff]
      %v2905 = vld [vmem:[%s2289 + $0x22] sm:$0xff]
      %v2906 = vld [vmem:[%s2289 + $0x32] sm:$0xff]
      %v2907 = vld [vmem:[%s2289 + $0x3a] sm:$0xff]
      %v2908 = vld [vmem:[%s2289 + $0x4a] sm:$0xff]
      %v2909 = vld [vmem:[%s2289 + $0x52] sm:$0xff]
      %v2910 = vld [vmem:[%s2289 + $0x62] sm:$0xff]
      %v2911 = vld [vmem:[%s2289 + $0x6a] sm:$0xff]
      %v2912 = vld [vmem:[%s2289 + $0x7a] sm:$0xff]
      %v2913 = vld [vmem:[%s2289 + $0x82] sm:$0xff]
      %v2914 = vld [vmem:[%s2289 + $0x92] sm:$0xff]
      %v2915 = vld [vmem:[%s2289 + $0x9a] sm:$0xff]
      %v2916 = vld [vmem:[%s2289 + $0xaa] sm:$0xff]
      %v2917 = vld [vmem:[%s2289 + $0xb2] sm:$0xff]
      %v2918 = vld [vmem:[%s2289 + $0xc2] sm:$0xff]
      %v2919 = vld [vmem:[%s2289 + $0xca] sm:$0xff]
      %v2920 = vld [vmem:[%s2289 + $0xda] sm:$0xff]
      %v2921 = vld [vmem:[%s2289 + $0xe2] sm:$0xff]
      %v2922 = vld [vmem:[%s2289 + $0xf2] sm:$0xff]
      %v2923 = vld [vmem:[%s2289 + $0xfa] sm:$0xff]
      %v2924 = vld [vmem:[%s2289 + $0x10a] sm:$0xff]
      %v2925 = vld [vmem:[%s2289 + $0x112] sm:$0xff]
      %v2926 = vld [vmem:[%s2289 + $0x122] sm:$0xff]
      %v2927 = vld [vmem:[%s2289 + $0x12a] sm:$0xff]
      %v2928 = vld [vmem:[%s2289 + $0x13a] sm:$0xff]
      %v2929 = vld [vmem:[%s2289 + $0x142] sm:$0xff]
      %v2930 = vld [vmem:[%s2289 + $0x152] sm:$0xff]
      %v2931 = vld [vmem:[%s2289 + $0x15a] sm:$0xff]
      %v2932 = vld [vmem:[%s2289 + $0x16a] sm:$0xff]
      %v2933 = vld [vmem:[%s2289 + $0x172] sm:$0xff]
      %v2934 = vpack.c.bf16 %v2903, %v2902
      %v2935 = vpack.c.bf16 %v2905, %v2904
      %v2936 = vpack.c.bf16 %v2907, %v2906
      %v2937 = vpack.c.bf16 %v2909, %v2908
      %v2938 = vpack.c.bf16 %v2911, %v2910
      %v2939 = vpack.c.bf16 %v2913, %v2912
      %v2940 = vpack.c.bf16 %v2915, %v2914
      %v2941 = vpack.c.bf16 %v2917, %v2916
      %v2942 = vpack.c.bf16 %v2919, %v2918
      %v2943 = vpack.c.bf16 %v2921, %v2920
      %v2944 = vpack.c.bf16 %v2923, %v2922
      %v2945 = vpack.c.bf16 %v2925, %v2924
      %v2946 = vpack.c.bf16 %v2927, %v2926
      %v2947 = vpack.c.bf16 %v2929, %v2928
      %v2948 = vpack.c.bf16 %v2931, %v2930
      %v2949 = vpack.c.bf16 %v2933, %v2932
      %s2950 = scalar_lea.vmem %s3, 512
      %v2951 = vld [vmem:[%s2950] sm:$0xf]
      %v2952 = vld [vmem:[%s2950 + $0x4] sm:$0xf]
      %v2953 = vld [vmem:[%s2950 + $0x8] sm:$0xf]
      %v2954 = vld [vmem:[%s2950 + $0xc] sm:$0xf]
      %v2955 = vld [vmem:[%s2950 + $0x10] sm:$0xf]
      %v2956 = vld [vmem:[%s2950 + $0x14] sm:$0xf]
      %v2957 = vld [vmem:[%s2950 + $0x18] sm:$0xf]
      %v2958 = vld [vmem:[%s2950 + $0x1c] sm:$0xf]
      %v2959 = vld [vmem:[%s2950 + $0x20] sm:$0xf]
      %v2960 = vld [vmem:[%s2950 + $0x24] sm:$0xf]
      %v2961 = vld [vmem:[%s2950 + $0x28] sm:$0xf]
      %v2962 = vld [vmem:[%s2950 + $0x2c] sm:$0xf]
      %v2963 = vld [vmem:[%s2950 + $0x30] sm:$0xf]
      %v2964 = vld [vmem:[%s2950 + $0x34] sm:$0xf]
      %v2965 = vld [vmem:[%s2950 + $0x38] sm:$0xf]
      %v2966 = vld [vmem:[%s2950 + $0x3c] sm:$0xf]
      %v2983 = vunpack.c.l.b16 %v2951
      %v2984 = vunpack.c.l.b16 %v2952
      %v2985 = vunpack.c.l.b16 %v2953
      %v2986 = vunpack.c.l.b16 %v2954
      %v2987 = vunpack.c.l.b16 %v2955
      %v2988 = vunpack.c.l.b16 %v2956
      %v2989 = vunpack.c.l.b16 %v2957
      %v2990 = vunpack.c.l.b16 %v2958
      %v2991 = vunpack.c.l.b16 %v2959
      %v2992 = vunpack.c.l.b16 %v2960
      %v2993 = vunpack.c.l.b16 %v2961
      %v2994 = vunpack.c.l.b16 %v2962
      %v2995 = vunpack.c.l.b16 %v2963
      %v2996 = vunpack.c.l.b16 %v2964
      %v2997 = vunpack.c.l.b16 %v2965
      %v2998 = vunpack.c.l.b16 %v2966
      %v2999 = vpack.c.b16 %v2984, %v2983
      %v3000 = vpack.c.b16 %v2986, %v2985
      %v3001 = vpack.c.b16 %v2988, %v2987
      %v3002 = vpack.c.b16 %v2990, %v2989
      %v3003 = vpack.c.b16 %v2992, %v2991
      %v3004 = vpack.c.b16 %v2994, %v2993
      %v3005 = vpack.c.b16 %v2996, %v2995
      %v3006 = vpack.c.b16 %v2998, %v2997
      %3015 = vmatprep.subr.bf16.mxu0 0
      %3016 = vmatpush1.bf16.msra.mxu0 %v3006
      %3017 = vmatprep.subr.bf16.mxu0 0
      %3018 = vmatpush1.bf16.msra.mxu0 %v3005
      %3019 = vmatprep.subr.bf16.mxu0 0
      %3020 = vmatpush1.bf16.msra.mxu0 %v3004
      %3021 = vmatprep.subr.bf16.mxu0 0
      %3022 = vmatpush1.bf16.msra.mxu0 %v3003
      %3023 = vmatprep.subr.bf16.mxu0 0
      %3024 = vmatpush1.bf16.msra.mxu0 %v3002
      %3025 = vmatprep.subr.bf16.mxu0 0
      %3026 = vmatpush1.bf16.msra.mxu0 %v3001
      %3027 = vmatprep.subr.bf16.mxu0 0
      %3028 = vmatpush1.bf16.msra.mxu0 %v3000
      %3029 = vmatprep.subr.bf16.mxu0 0
      %3030 = vmatpush1.bf16.msra.mxu0 %v2999
      %3031 = vmatprep.subr.bf16.mxu0 0
      %3032 = vmatpush2.bf16.msra.mxu0 0
      %3033 = vmatprep.subr.bf16.mxu0 0
      %3034 = vmatpush2.bf16.msra.mxu0 0
      %3035 = vmatprep.subr.bf16.mxu0 0
      %3036 = vmatpush2.bf16.msra.mxu0 0
      %3037 = vmatprep.subr.bf16.mxu0 0
      %3038 = vmatpush2.bf16.msra.mxu0 0
      %3039 = vmatprep.subr.bf16.mxu0 0
      %3040 = vmatpush2.bf16.msra.mxu0 0
      %3041 = vmatprep.subr.bf16.mxu0 0
      %3042 = vmatpush2.bf16.msra.mxu0 0
      %3043 = vmatprep.subr.bf16.mxu0 0
      %3044 = vmatpush2.bf16.msra.mxu0 0
      %3045 = vmatprep.subr.bf16.mxu0 0
      %3046 = vmatpush2.bf16.msra.mxu0 0
      %3047 = vmatprep.mubr.bf16.mxu0 0
      %3048 = vmatmul.mubr.bf16.gmra.mxu0 %v2934
      %v3049 = vpop.f32.mrf.mxu0
      %v3050 = vadd.f32 0.0, %v3049
      %v3051 = vpop.f32.mrf.mxu0
      %v3052 = vpop.f32.mrf.mxu0
      %v3053 = vadd.f32 0.0, %v3052
      %v3054 = vpop.f32.mrf.mxu0
      %3055 = vmatprep.mubr.bf16.mxu0 0
      %3056 = vmatmul.mubr.bf16.gmra.mxu0 %v2935
      %v3057 = vpop.f32.mrf.mxu0
      %v3058 = vadd.f32 0.0, %v3057
      %v3059 = vpop.f32.mrf.mxu0
      %v3060 = vpop.f32.mrf.mxu0
      %v3061 = vadd.f32 0.0, %v3060
      %v3062 = vpop.f32.mrf.mxu0
      %3063 = vmatprep.mubr.bf16.mxu0 0
      %3064 = vmatmul.mubr.bf16.gmra.mxu0 %v2936
      %v3065 = vpop.f32.mrf.mxu0
      %v3066 = vadd.f32 0.0, %v3065
      %v3067 = vpop.f32.mrf.mxu0
      %v3068 = vpop.f32.mrf.mxu0
      %v3069 = vadd.f32 0.0, %v3068
      %v3070 = vpop.f32.mrf.mxu0
      %3071 = vmatprep.mubr.bf16.mxu0 0
      %3072 = vmatmul.mubr.bf16.gmra.mxu0 %v2937
      %v3073 = vpop.f32.mrf.mxu0
      %v3074 = vadd.f32 0.0, %v3073
      %v3075 = vpop.f32.mrf.mxu0
      %v3076 = vpop.f32.mrf.mxu0
      %v3077 = vadd.f32 0.0, %v3076
      %v3078 = vpop.f32.mrf.mxu0
      %3079 = vmatprep.mubr.bf16.mxu0 0
      %3080 = vmatmul.mubr.bf16.gmra.mxu0 %v2938
      %v3081 = vpop.f32.mrf.mxu0
      %v3082 = vadd.f32 0.0, %v3081
      %v3083 = vpop.f32.mrf.mxu0
      %v3084 = vpop.f32.mrf.mxu0
      %v3085 = vadd.f32 0.0, %v3084
      %v3086 = vpop.f32.mrf.mxu0
      %3087 = vmatprep.mubr.bf16.mxu0 0
      %3088 = vmatmul.mubr.bf16.gmra.mxu0 %v2939
      %v3089 = vpop.f32.mrf.mxu0
      %v3090 = vadd.f32 0.0, %v3089
      %v3091 = vpop.f32.mrf.mxu0
      %v3092 = vpop.f32.mrf.mxu0
      %v3093 = vadd.f32 0.0, %v3092
      %v3094 = vpop.f32.mrf.mxu0
      %3095 = vmatprep.mubr.bf16.mxu0 0
      %3096 = vmatmul.mubr.bf16.gmra.mxu0 %v2940
      %v3097 = vpop.f32.mrf.mxu0
      %v3098 = vadd.f32 0.0, %v3097
      %v3099 = vpop.f32.mrf.mxu0
      %v3100 = vpop.f32.mrf.mxu0
      %v3101 = vadd.f32 0.0, %v3100
      %v3102 = vpop.f32.mrf.mxu0
      %3103 = vmatprep.mubr.bf16.mxu0 0
      %3104 = vmatmul.mubr.bf16.gmra.mxu0 %v2941
      %v3105 = vpop.f32.mrf.mxu0
      %v3106 = vadd.f32 0.0, %v3105
      %v3107 = vpop.f32.mrf.mxu0
      %v3108 = vpop.f32.mrf.mxu0
      %v3109 = vadd.f32 0.0, %v3108
      %v3110 = vpop.f32.mrf.mxu0
      %3111 = vmatprep.mubr.bf16.mxu0 0
      %3112 = vmatmul.mubr.bf16.gmra.mxu0 %v2942
      %v3113 = vpop.f32.mrf.mxu0
      %v3114 = vadd.f32 0.0, %v3113
      %v3115 = vpop.f32.mrf.mxu0
      %v3116 = vpop.f32.mrf.mxu0
      %v3117 = vadd.f32 0.0, %v3116
      %v3118 = vpop.f32.mrf.mxu0
      %3119 = vmatprep.mubr.bf16.mxu0 0
      %3120 = vmatmul.mubr.bf16.gmra.mxu0 %v2943
      %v3121 = vpop.f32.mrf.mxu0
      %v3122 = vadd.f32 0.0, %v3121
      %v3123 = vpop.f32.mrf.mxu0
      %v3124 = vpop.f32.mrf.mxu0
      %v3125 = vadd.f32 0.0, %v3124
      %v3126 = vpop.f32.mrf.mxu0
      %3127 = vmatprep.mubr.bf16.mxu0 0
      %3128 = vmatmul.mubr.bf16.gmra.mxu0 %v2944
      %v3129 = vpop.f32.mrf.mxu0
      %v3130 = vadd.f32 0.0, %v3129
      %v3131 = vpop.f32.mrf.mxu0
      %v3132 = vpop.f32.mrf.mxu0
      %v3133 = vadd.f32 0.0, %v3132
      %v3134 = vpop.f32.mrf.mxu0
      %3135 = vmatprep.mubr.bf16.mxu0 0
      %3136 = vmatmul.mubr.bf16.gmra.mxu0 %v2945
      %v3137 = vpop.f32.mrf.mxu0
      %v3138 = vadd.f32 0.0, %v3137
      %v3139 = vpop.f32.mrf.mxu0
      %v3140 = vpop.f32.mrf.mxu0
      %v3141 = vadd.f32 0.0, %v3140
      %v3142 = vpop.f32.mrf.mxu0
      %3143 = vmatprep.mubr.bf16.mxu0 0
      %3144 = vmatmul.mubr.bf16.gmra.mxu0 %v2946
      %v3145 = vpop.f32.mrf.mxu0
      %v3146 = vadd.f32 0.0, %v3145
      %v3147 = vpop.f32.mrf.mxu0
      %v3148 = vpop.f32.mrf.mxu0
      %v3149 = vadd.f32 0.0, %v3148
      %v3150 = vpop.f32.mrf.mxu0
      %3151 = vmatprep.mubr.bf16.mxu0 0
      %3152 = vmatmul.mubr.bf16.gmra.mxu0 %v2947
      %v3153 = vpop.f32.mrf.mxu0
      %v3154 = vadd.f32 0.0, %v3153
      %v3155 = vpop.f32.mrf.mxu0
      %v3156 = vpop.f32.mrf.mxu0
      %v3157 = vadd.f32 0.0, %v3156
      %v3158 = vpop.f32.mrf.mxu0
      %3159 = vmatprep.mubr.bf16.mxu0 0
      %3160 = vmatmul.mubr.bf16.gmra.mxu0 %v2948
      %v3161 = vpop.f32.mrf.mxu0
      %v3162 = vadd.f32 0.0, %v3161
      %v3163 = vpop.f32.mrf.mxu0
      %v3164 = vpop.f32.mrf.mxu0
      %v3165 = vadd.f32 0.0, %v3164
      %v3166 = vpop.f32.mrf.mxu0
      %3167 = vmatprep.mubr.bf16.mxu0 0
      %3168 = vmatmul.mubr.bf16.gmra.mxu0 %v2949
      %v3169 = vpop.f32.mrf.mxu0
      %v3170 = vadd.f32 0.0, %v3169
      %v3171 = vpop.f32.mrf.mxu0
      %v3172 = vpop.f32.mrf.mxu0
      %v3173 = vadd.f32 0.0, %v3172
      %v3174 = vpop.f32.mrf.mxu0
      %3175 = vdwg.mxu0
      %v3176 = vadd.f32 %v2870, %v3050
      %v3177 = vadd.f32 %v2871, %v3053
      %v3178 = vadd.f32 %v2872, %v3058
      %v3179 = vadd.f32 %v2873, %v3061
      %v3180 = vadd.f32 %v2874, %v3066
      %v3181 = vadd.f32 %v2875, %v3069
      %v3182 = vadd.f32 %v2876, %v3074
      %v3183 = vadd.f32 %v2877, %v3077
      %v3184 = vadd.f32 %v2878, %v3082
      %v3185 = vadd.f32 %v2879, %v3085
      %v3186 = vadd.f32 %v2880, %v3090
      %v3187 = vadd.f32 %v2881, %v3093
      %v3188 = vadd.f32 %v2882, %v3098
      %v3189 = vadd.f32 %v2883, %v3101
      %v3190 = vadd.f32 %v2884, %v3106
      %v3191 = vadd.f32 %v2885, %v3109
      %v3192 = vadd.f32 %v2886, %v3114
      %v3193 = vadd.f32 %v2887, %v3117
      %v3194 = vadd.f32 %v2888, %v3122
      %v3195 = vadd.f32 %v2889, %v3125
      %v3196 = vadd.f32 %v2890, %v3130
      %v3197 = vadd.f32 %v2891, %v3133
      %v3198 = vadd.f32 %v2892, %v3138
      %v3199 = vadd.f32 %v2893, %v3141
      %v3200 = vadd.f32 %v2894, %v3146
      %v3201 = vadd.f32 %v2895, %v3149
      %v3202 = vadd.f32 %v2896, %v3154
      %v3203 = vadd.f32 %v2897, %v3157
      %v3204 = vadd.f32 %v2898, %v3162
      %v3205 = vadd.f32 %v2899, %v3165
      %v3206 = vadd.f32 %v2900, %v3170
      %v3207 = vadd.f32 %v2901, %v3173
      %v3208 = vpack.c.bf16 %v3177, %v3176
      %v3209 = vpack.c.bf16 %v3179, %v3178
      %v3210 = vpack.c.bf16 %v3181, %v3180
      %v3211 = vpack.c.bf16 %v3183, %v3182
      %v3212 = vpack.c.bf16 %v3185, %v3184
      %v3213 = vpack.c.bf16 %v3187, %v3186
      %v3214 = vpack.c.bf16 %v3189, %v3188
      %v3215 = vpack.c.bf16 %v3191, %v3190
      %v3216 = vpack.c.bf16 %v3193, %v3192
      %v3217 = vpack.c.bf16 %v3195, %v3194
      %v3218 = vpack.c.bf16 %v3197, %v3196
      %v3219 = vpack.c.bf16 %v3199, %v3198
      %v3220 = vpack.c.bf16 %v3201, %v3200
      %v3221 = vpack.c.bf16 %v3203, %v3202
      %v3222 = vpack.c.bf16 %v3205, %v3204
      %v3223 = vpack.c.bf16 %v3207, %v3206
      %v3240 = vunpack.c.l.b16 %v3208
      %v3241 = vunpack.c.h.b16 %v3208
      %v3242 = vunpack.c.l.b16 %v3209
      %v3243 = vunpack.c.h.b16 %v3209
      %v3244 = vunpack.c.l.b16 %v3210
      %v3245 = vunpack.c.h.b16 %v3210
      %v3246 = vunpack.c.l.b16 %v3211
      %v3247 = vunpack.c.h.b16 %v3211
      %v3248 = vunpack.c.l.b16 %v3212
      %v3249 = vunpack.c.h.b16 %v3212
      %v3250 = vunpack.c.l.b16 %v3213
      %v3251 = vunpack.c.h.b16 %v3213
      %v3252 = vunpack.c.l.b16 %v3214
      %v3253 = vunpack.c.h.b16 %v3214
      %v3254 = vunpack.c.l.b16 %v3215
      %v3255 = vunpack.c.h.b16 %v3215
      %v3256 = vunpack.c.l.b16 %v3216
      %v3257 = vunpack.c.h.b16 %v3216
      %v3258 = vunpack.c.l.b16 %v3217
      %v3259 = vunpack.c.h.b16 %v3217
      %v3260 = vunpack.c.l.b16 %v3218
      %v3261 = vunpack.c.h.b16 %v3218
      %v3262 = vunpack.c.l.b16 %v3219
      %v3263 = vunpack.c.h.b16 %v3219
      %v3264 = vunpack.c.l.b16 %v3220
      %v3265 = vunpack.c.h.b16 %v3220
      %v3266 = vunpack.c.l.b16 %v3221
      %v3267 = vunpack.c.h.b16 %v3221
      %v3268 = vunpack.c.l.b16 %v3222
      %v3269 = vunpack.c.h.b16 %v3222
      %v3270 = vunpack.c.l.b16 %v3223
      %v3271 = vunpack.c.h.b16 %v3223
      %v3272 = vpack.c.b16 %v3240, %v3240
      %v3273 = vpack.c.b16 %v3241, %v3241
      %v3274 = vpack.c.b16 %v3242, %v3242
      %v3275 = vpack.c.b16 %v3243, %v3243
      %v3276 = vpack.c.b16 %v3244, %v3244
      %v3277 = vpack.c.b16 %v3245, %v3245
      %v3278 = vpack.c.b16 %v3246, %v3246
      %v3279 = vpack.c.b16 %v3247, %v3247
      %v3280 = vpack.c.b16 %v3248, %v3248
      %v3281 = vpack.c.b16 %v3249, %v3249
      %v3282 = vpack.c.b16 %v3250, %v3250
      %v3283 = vpack.c.b16 %v3251, %v3251
      %v3284 = vpack.c.b16 %v3252, %v3252
      %v3285 = vpack.c.b16 %v3253, %v3253
      %v3286 = vpack.c.b16 %v3254, %v3254
      %v3287 = vpack.c.b16 %v3255, %v3255
      %v3288 = vpack.c.b16 %v3256, %v3256
      %v3289 = vpack.c.b16 %v3257, %v3257
      %v3290 = vpack.c.b16 %v3258, %v3258
      %v3291 = vpack.c.b16 %v3259, %v3259
      %v3292 = vpack.c.b16 %v3260, %v3260
      %v3293 = vpack.c.b16 %v3261, %v3261
      %v3294 = vpack.c.b16 %v3262, %v3262
      %v3295 = vpack.c.b16 %v3263, %v3263
      %v3296 = vpack.c.b16 %v3264, %v3264
      %v3297 = vpack.c.b16 %v3265, %v3265
      %v3298 = vpack.c.b16 %v3266, %v3266
      %v3299 = vpack.c.b16 %v3267, %v3267
      %v3300 = vpack.c.b16 %v3268, %v3268
      %v3301 = vpack.c.b16 %v3269, %v3269
      %v3302 = vpack.c.b16 %v3270, %v3270
      %v3303 = vpack.c.b16 %v3271, %v3271
      %3336 = vst [vmem:[%s248] sm:$0xf] %v3272
      %3337 = vst [vmem:[%s248 + $0x4] sm:$0xf] %v3273
      %3338 = vst [vmem:[%s248 + $0x8] sm:$0xf] %v3274
      %3339 = vst [vmem:[%s248 + $0xc] sm:$0xf] %v3275
      %3340 = vst [vmem:[%s248 + $0x10] sm:$0xf] %v3276
      %3341 = vst [vmem:[%s248 + $0x14] sm:$0xf] %v3277
      %3342 = vst [vmem:[%s248 + $0x18] sm:$0xf] %v3278
      %3343 = vst [vmem:[%s248 + $0x1c] sm:$0xf] %v3279
      %3344 = vst [vmem:[%s248 + $0x20] sm:$0xf] %v3280
      %3345 = vst [vmem:[%s248 + $0x24] sm:$0xf] %v3281
      %3346 = vst [vmem:[%s248 + $0x28] sm:$0xf] %v3282
      %3347 = vst [vmem:[%s248 + $0x2c] sm:$0xf] %v3283
      %3348 = vst [vmem:[%s248 + $0x30] sm:$0xf] %v3284
      %3349 = vst [vmem:[%s248 + $0x34] sm:$0xf] %v3285
      %3350 = vst [vmem:[%s248 + $0x38] sm:$0xf] %v3286
      %3351 = vst [vmem:[%s248 + $0x3c] sm:$0xf] %v3287
      %3352 = vst [vmem:[%s248 + $0x40] sm:$0xf] %v3288
      %3353 = vst [vmem:[%s248 + $0x44] sm:$0xf] %v3289
      %3354 = vst [vmem:[%s248 + $0x48] sm:$0xf] %v3290
      %3355 = vst [vmem:[%s248 + $0x4c] sm:$0xf] %v3291
      %3356 = vst [vmem:[%s248 + $0x50] sm:$0xf] %v3292
      %3357 = vst [vmem:[%s248 + $0x54] sm:$0xf] %v3293
      %3358 = vst [vmem:[%s248 + $0x58] sm:$0xf] %v3294
      %3359 = vst [vmem:[%s248 + $0x5c] sm:$0xf] %v3295
      %3360 = vst [vmem:[%s248 + $0x60] sm:$0xf] %v3296
      %3361 = vst [vmem:[%s248 + $0x64] sm:$0xf] %v3297
      %3362 = vst [vmem:[%s248 + $0x68] sm:$0xf] %v3298
      %3363 = vst [vmem:[%s248 + $0x6c] sm:$0xf] %v3299
      %3364 = vst [vmem:[%s248 + $0x70] sm:$0xf] %v3300
      %3365 = vst [vmem:[%s248 + $0x74] sm:$0xf] %v3301
      %3366 = vst [vmem:[%s248 + $0x78] sm:$0xf] %v3302
      %3367 = vst [vmem:[%s248 + $0x7c] sm:$0xf] %v3303
      %v3368 = vld [vmem:[%s5] sm:$0x1]
      %v3369 = vadd.f32 %v3176, %v3177
      %v3370 = vadd.f32 %v3369, %v3178
      %v3371 = vadd.f32 %v3370, %v3179
      %v3372 = vadd.f32 %v3371, %v3180
      %v3373 = vadd.f32 %v3372, %v3181
      %v3374 = vadd.f32 %v3373, %v3182
      %v3375 = vadd.f32 %v3374, %v3183
      %v3376 = vadd.f32 %v3375, %v3184
      %v3377 = vadd.f32 %v3376, %v3185
      %v3378 = vadd.f32 %v3377, %v3186
      %v3379 = vadd.f32 %v3378, %v3187
      %v3380 = vadd.f32 %v3379, %v3188
      %v3381 = vadd.f32 %v3380, %v3189
      %v3382 = vadd.f32 %v3381, %v3190
      %v3383 = vadd.f32 %v3382, %v3191
      %v3384 = vadd.f32 %v3383, %v3192
      %v3385 = vadd.f32 %v3384, %v3193
      %v3386 = vadd.f32 %v3385, %v3194
      %v3387 = vadd.f32 %v3386, %v3195
      %v3388 = vadd.f32 %v3387, %v3196
      %v3389 = vadd.f32 %v3388, %v3197
      %v3390 = vadd.f32 %v3389, %v3198
      %v3391 = vadd.f32 %v3390, %v3199
      %v3392 = vadd.f32 %v3391, %v3200
      %v3393 = vadd.f32 %v3392, %v3201
      %v3394 = vadd.f32 %v3393, %v3202
      %v3395 = vadd.f32 %v3394, %v3203
      %v3396 = vadd.f32 %v3395, %v3204
      %v3397 = vadd.f32 %v3396, %v3205
      %v3398 = vadd.f32 %v3397, %v3206
      %v3399 = vadd.f32 %v3398, %v3207
      %v3400 = vrot.slane %v3399, 4
      %v3401 = vadd.f32 %v3399, %v3400
      %v3402 = vrot.slane %v3401, 2
      %v3403 = vadd.f32 %v3401, %v3402
      %v3404 = vrot.slane %v3403, 1
      %v3405 = vadd.f32 %v3403, %v3404
      %v3406 = vadd.f32 %v3368, %v3405
      %3407 = vst [vmem:[%s5] sm:$0x1] %v3406
      %v3408 = vld [vmem:[%s6] sm:$0x1]
      %v3409 = vmul.f32 %v3176, %v3176
      %v3410 = vmul.f32 %v3177, %v3177
      %v3411 = vmul.f32 %v3178, %v3178
      %v3412 = vmul.f32 %v3179, %v3179
      %v3413 = vmul.f32 %v3180, %v3180
      %v3414 = vmul.f32 %v3181, %v3181
      %v3415 = vmul.f32 %v3182, %v3182
      %v3416 = vmul.f32 %v3183, %v3183
      %v3417 = vmul.f32 %v3184, %v3184
      %v3418 = vmul.f32 %v3185, %v3185
      %v3419 = vmul.f32 %v3186, %v3186
      %v3420 = vmul.f32 %v3187, %v3187
      %v3421 = vmul.f32 %v3188, %v3188
      %v3422 = vmul.f32 %v3189, %v3189
      %v3423 = vmul.f32 %v3190, %v3190
      %v3424 = vmul.f32 %v3191, %v3191
      %v3425 = vmul.f32 %v3192, %v3192
      %v3426 = vmul.f32 %v3193, %v3193
      %v3427 = vmul.f32 %v3194, %v3194
      %v3428 = vmul.f32 %v3195, %v3195
      %v3429 = vmul.f32 %v3196, %v3196
      %v3430 = vmul.f32 %v3197, %v3197
      %v3431 = vmul.f32 %v3198, %v3198
      %v3432 = vmul.f32 %v3199, %v3199
      %v3433 = vmul.f32 %v3200, %v3200
      %v3434 = vmul.f32 %v3201, %v3201
      %v3435 = vmul.f32 %v3202, %v3202
      %v3436 = vmul.f32 %v3203, %v3203
      %v3437 = vmul.f32 %v3204, %v3204
      %v3438 = vmul.f32 %v3205, %v3205
      %v3439 = vmul.f32 %v3206, %v3206
      %v3440 = vmul.f32 %v3207, %v3207
      %v3441 = vadd.f32 %v3409, %v3410
      %v3442 = vadd.f32 %v3441, %v3411
      %v3443 = vadd.f32 %v3442, %v3412
      %v3444 = vadd.f32 %v3443, %v3413
      %v3445 = vadd.f32 %v3444, %v3414
      %v3446 = vadd.f32 %v3445, %v3415
      %v3447 = vadd.f32 %v3446, %v3416
      %v3448 = vadd.f32 %v3447, %v3417
      %v3449 = vadd.f32 %v3448, %v3418
      %v3450 = vadd.f32 %v3449, %v3419
      %v3451 = vadd.f32 %v3450, %v3420
      %v3452 = vadd.f32 %v3451, %v3421
      %v3453 = vadd.f32 %v3452, %v3422
      %v3454 = vadd.f32 %v3453, %v3423
      %v3455 = vadd.f32 %v3454, %v3424
      %v3456 = vadd.f32 %v3455, %v3425
      %v3457 = vadd.f32 %v3456, %v3426
      %v3458 = vadd.f32 %v3457, %v3427
      %v3459 = vadd.f32 %v3458, %v3428
      %v3460 = vadd.f32 %v3459, %v3429
      %v3461 = vadd.f32 %v3460, %v3430
      %v3462 = vadd.f32 %v3461, %v3431
      %v3463 = vadd.f32 %v3462, %v3432
      %v3464 = vadd.f32 %v3463, %v3433
      %v3465 = vadd.f32 %v3464, %v3434
      %v3466 = vadd.f32 %v3465, %v3435
      %v3467 = vadd.f32 %v3466, %v3436
      %v3468 = vadd.f32 %v3467, %v3437
      %v3469 = vadd.f32 %v3468, %v3438
      %v3470 = vadd.f32 %v3469, %v3439
      %v3471 = vadd.f32 %v3470, %v3440
      %v3472 = vrot.slane %v3471, 4
      %v3473 = vadd.f32 %v3471, %v3472
      %v3474 = vrot.slane %v3473, 2
      %v3475 = vadd.f32 %v3473, %v3474
      %v3476 = vrot.slane %v3475, 1
      %v3477 = vadd.f32 %v3475, %v3476
      %v3478 = vadd.f32 %v3408, %v3477
      %3479 = vst [vmem:[%s6] sm:$0x1] %v3478
      %s3480 = smul.u32 32, %s18
      %p3481 = scmp.lt.s32.totalorder %s3480, 63
      %s3482 = scalar_select %p3481, %s3480, 63
      %s3483 = smul.addr %s3482, 4
      %s3484 = scalar_lea.vmem %s4, %s3483
      // Predicated region
      $region41: #{residual_block_forward.5} parent=35 // pred_check
        %p3485 = pneg %p125
      $region42: #{residual_block_forward.5} parent=35 // pred_check_branch
        %3487 = sbr.rel (%p3485) target = $region44
      $region43: #{residual_block_forward.5} parent=35 // pred_region
        %s3488 = smul.u32 32, %s18
      $region44: #{residual_block_forward.5} parent=35 // pred_fallthru
        _
      // Predicated region
      $region45: #{residual_block_forward.5} parent=35 // pred_check
        %p3489 = pneg %p146
      $region46: #{residual_block_forward.5} parent=35 // pred_check_branch
        %3491 = sbr.rel (%p3489) target = $region48
      $region47: #{residual_block_forward.5} parent=35 // pred_region
        _
      $region48: #{residual_block_forward.5} parent=35 // pred_fallthru
        _
      // Predicated region
      $region49: #{residual_block_forward.5} parent=35 // pred_check
        %p3492 = pneg %p167
      $region50: #{residual_block_forward.5} parent=35 // pred_check_branch
        %3494 = sbr.rel (%p3492) target = $region52
      $region51: #{residual_block_forward.5} parent=35 // pred_region
        _
      $region52: #{residual_block_forward.5} parent=35 // pred_fallthru
        _
      // Predicated region
      $region53: #{residual_block_forward.5} parent=35 // pred_check
        %p3495 = pneg %p146
      $region54: #{residual_block_forward.5} parent=35 // pred_check_branch
        %3497 = sbr.rel (%p3495) target = $region56
      $region55: #{residual_block_forward.5} parent=35 // pred_region
        _
      $region56: #{residual_block_forward.5} parent=35 // pred_fallthru
        _
      // Predicated region
      $region57: #{residual_block_forward.5} parent=35 // pred_check
        %p3498 = pneg %p167
      $region58: #{residual_block_forward.5} parent=35 // pred_check_branch
        %3500 = sbr.rel (%p3498) target = $region60
      $region59: #{residual_block_forward.5} parent=35 // pred_region
        _
      $region60: #{residual_block_forward.5} parent=35 // pred_fallthru
        _
    $region36: #{residual_block_forward.5} parent=5 // pred_fallthru
      _
    %p3501 = scmp.le.s32.totalorder 2, %s13
    // Predicated region
    $region61: #{residual_block_forward.5} parent=5 // pred_check
      %p3502 = pneg %p3501
    $region62: #{residual_block_forward.5} parent=5 // pred_check_branch
      %3504 = sbr.rel (%p3502) target = $region64
    $region63: #{residual_block_forward.5} parent=5 // pred_region
      %s3505 = ssub.s32 %s13, 2
      // Predicated region
      $region65: #{residual_block_forward.5} parent=63 // pred_check
        %p3506 = pneg %p131
      $region66: #{residual_block_forward.5} parent=63 // pred_check_branch
        %3508 = sbr.rel (%p3506) target = $region68
      $region67: #{residual_block_forward.5} parent=63 // pred_region
        %s3509 = smul.u32 32, %s19
        %p3510 = scmp.lt.s32.totalorder %s3509, 63
        %s3511 = scalar_select %p3510, %s3509, 63
        %s3512 = smul.addr %s3511, 4
        %s3513 = scalar_lea.vmem %s4, %s3512
      $region68: #{residual_block_forward.5} parent=63 // pred_fallthru
        _
    $region64: #{residual_block_forward.5} parent=5 // pred_fallthru
      _
  $region6: #{residual_block_forward.5} parent=0 // loop_footer
    %s17 = sadd.s32 1, %s13
  $region7: #{residual_block_forward.5} parent=0 // loop_footer_branch
    %12 = sbr.rel target = $region3
  $region8: #{residual_block_forward.5} parent=0 // loop_exit
    _

</llo_original>
